<compile_context>
chip_gen: v7x
topology: tpu7x:2x2x1
jax: 0.10.0
libtpu: 0.0.40
codegen_flags: <defaults>
</compile_context>

<pallas_src>
import functools
import math

import jax
import jax.numpy as jnp
from jax.experimental import pallas as pl
from jax.experimental.pallas import tpu as pltpu

_EPS = 1e-5


def _bn_relu(y, g, be):
    """Training-mode BatchNorm1d (biased batch stats over (N, L)) + ReLU."""
    mean = jnp.mean(y, axis=(0, 1), keepdims=True)
    var = jnp.mean(jnp.square(y - mean), axis=(0, 1), keepdims=True)
    yhat = (y - mean) * jax.lax.rsqrt(var + _EPS)
    return jnp.maximum(yhat * g[None] + be[None], 0.0)


def _conv_vpu(x, w_ref, k):
    """'valid' conv with tiny Cin as broadcast FMAs on the VPU.

    x: (N, Lin, Cin) f32, w_ref: (K*Cin, Cout) bf16.  Returns (N, Lout, Cout) f32.
    """
    n, lin, cin = x.shape
    lout = lin - k + 1
    w = w_ref[...].astype(jnp.float32)
    cout = w.shape[1]
    acc = jnp.zeros((n, lout, cout), jnp.float32)
    for kk in range(k):                      # k, cin are small static ints -> unrolled
        for ci in range(cin):
            row = w[kk * cin + ci:kk * cin + ci + 1, :]            # (1, Cout)
            acc = acc + x[:, kk:kk + lout, ci:ci + 1] * row[None, :, :]
    return acc


def _conv_mxu(h, w_ref, k):
    """'valid' conv via im2col: one wide-contraction MXU dot per batch element.

    h: (N, Lin, Cin) f32, w_ref: (K*Cin, Cout_tile) bf16.  Returns (N, Lout, Cout_tile) f32.
    """
    n, lin, cin = h.shape
    lout = lin - k + 1
    w = w_ref[...]                                                 # bf16, stays bf16 for MXU
    outs = []
    for b in range(n):                                             # N is a small static int
        patches = jnp.concatenate(
            [h[b, kk:kk + lout, :] for kk in range(k)], axis=-1)   # (Lout, K*Cin), lane-aligned
        outs.append(jnp.dot(patches.astype(jnp.bfloat16), w,
                            preferred_element_type=jnp.float32))   # (Lout, Cout_tile) f32
    return jnp.stack(outs, axis=0)


def convnet_kernel(x_ref,
                   w1_ref, g1_ref, be1_ref,
                   w2_ref, g2_ref, be2_ref,
                   w3_ref, g3_ref, be3_ref,
                   out_ref, *, k1, k2, k3):
    x = x_ref[...].astype(jnp.float32)

    # Layers 1 & 2 are tiny (< 15 MFLOP); recomputed per Cout3 tile so the grid
    # axis stays embarrassingly parallel (safe to shard across TensorCores).
    h1 = _bn_relu(_conv_vpu(x, w1_ref, k1), g1_ref[...], be1_ref[...])
    h2 = _bn_relu(_conv_mxu(h1, w2_ref, k2), g2_ref[...], be2_ref[...])

    # Layer 3: only the output-channel tile selected by the grid index.
    h3 = _bn_relu(_conv_mxu(h2, w3_ref, k3), g3_ref[...], be3_ref[...])

    # MaxPool1d(kernel_size=2, stride=1) along the length axis (per-channel => exact
    # under Cout tiling).
    out_ref[...] = jnp.maximum(h3[:, :-1, :], h3[:, 1:, :])


def convnet_forward(x_ncl, params, *, cout_tile=256):
    """x_ncl: (N, 3, L) float32 (PyTorch NCL layout).  Returns (N, 1024*scale, L_out)."""
    x_nlc = jnp.transpose(x_ncl, (0, 2, 1)).astype(jnp.float32)    # NCL -> NLC
    n, l, cin = x_nlc.shape

    w1, w2, w3 = params["w1"], params["w2"], params["w3"]          # (K, Cin, Cout) bf16
    k1, _, c1 = w1.shape
    k2, _, c2 = w2.shape
    k3, _, c3 = w3.shape
    # Pre-reshape weights to (K*Cin, Cout): row index = k*Cin + ci, matching the
    # in-kernel im2col patch layout.
    w1_2d = w1.reshape(k1 * cin, c1)
    w2_2d = w2.reshape(k2 * c1, c2)
    w3_2d = w3.reshape(k3 * c2, c3)
    g1, be1 = params["g1"], params["be1"]
    g2, be2 = params["g2"], params["be2"]
    g3, be3 = params["g3"], params["be3"]

    l1 = l - k1 + 1
    l2 = l1 - k2 + 1
    l3 = l2 - k3 + 1
    l_out = l3 - 1                                                 # MaxPool1d(2, stride=1)

    tc3 = min(cout_tile, c3)
    assert c3 % tc3 == 0 and tc3 % 128 == 0, (c3, tc3)
    grid = (c3 // tc3,)

    kernel = functools.partial(convnet_kernel, k1=k1, k2=k2, k3=k3)

    flops = 2 * n * (l1 * k1 * cin * c1 + l2 * k2 * c1 * c2 + l3 * k3 * c2 * c3)
    bytes_accessed = (x_nlc.size * 4
                      + (w1_2d.size + w2_2d.size + w3_2d.size) * 2  # bf16 weights
                      + 2 * (c1 + c2 + c3) * 4                      # gamma / beta
                      + n * l_out * c3 * 4)                         # output
    cost = pl.CostEstimate(flops=flops, transcendentals=c1 + c2 + c3,
                           bytes_accessed=bytes_accessed)

    out_nlc = pl.pallas_call(
        kernel,
        out_shape=jax.ShapeDtypeStruct((n, l_out, c3), jnp.float32),
        grid_spec=pltpu.PrefetchScalarGridSpec(
            num_scalar_prefetch=0,
            grid=grid,
            in_specs=[
                pl.BlockSpec((n, l, cin), lambda j: (0, 0, 0)),      # x        (constant)
                pl.BlockSpec((k1 * cin, c1), lambda j: (0, 0)),      # w1       (constant)
                pl.BlockSpec((1, c1), lambda j: (0, 0)),             # gamma1   (constant)
                pl.BlockSpec((1, c1), lambda j: (0, 0)),             # beta1    (constant)
                pl.BlockSpec((k2 * c1, c2), lambda j: (0, 0)),       # w2       (constant)
                pl.BlockSpec((1, c2), lambda j: (0, 0)),             # gamma2   (constant)
                pl.BlockSpec((1, c2), lambda j: (0, 0)),             # beta2    (constant)
                pl.BlockSpec((k3 * c2, tc3), lambda j: (0, j)),      # w3 Cout tile
                pl.BlockSpec((1, tc3), lambda j: (0, j)),            # gamma3 tile
                pl.BlockSpec((1, tc3), lambda j: (0, j)),            # beta3 tile
            ],
            out_specs=pl.BlockSpec((n, l_out, tc3), lambda j: (0, 0, j)),
        ),
        compiler_params=pltpu.CompilerParams(
            dimension_semantics=("parallel",)),
        cost_estimate=cost,
    )(x_nlc, w1_2d, g1, be1, w2_2d, g2, be2, w3_2d, g3, be3)

    # TODO(synk): if the downstream consumer can accept NLC, skip this transpose
    # (it puts a length-4 axis on the lane dimension in the XLA epilogue).
    return jnp.transpose(out_nlc, (0, 2, 1))                        # NLC -> NCL


def init_params(key, scale=1):
    """Deterministic synthetic parameters matching the PyTorch module shapes."""
    c1, c2, c3 = 256 * scale, 512 * scale, 1024 * scale

    def conv_w(key, kernel, cin, cout):
        bound = 1.0 / math.sqrt(cin * kernel)
        # Stored as (K, Cin, Cout)  (PyTorch weight (Cout, Cin, K) transposed),
        # cast to bf16 for HBM->VMEM bandwidth; dots accumulate in f32.
        w = jax.random.uniform(key, (kernel, cin, cout), jnp.float32, -bound, bound)
        return w.astype(jnp.bfloat16)

    k1, k2, k3 = jax.random.split(key, 3)
    # Conv biases are omitted on purpose: each conv is immediately followed by
    # training-mode BatchNorm, whose batch-mean subtraction cancels any per-channel
    # constant exactly, so dropping the bias is mathematically identical.
    return dict(
        w1=conv_w(k1, 2, 3, c1),
        w2=conv_w(k2, 4, c1, c2),
        w3=conv_w(k3, 8, c2, c3),
        g1=jnp.ones((1, c1), jnp.float32), be1=jnp.zeros((1, c1), jnp.float32),
        g2=jnp.ones((1, c2), jnp.float32), be2=jnp.zeros((1, c2), jnp.float32),
        g3=jnp.ones((1, c3), jnp.float32), be3=jnp.zeros((1, c3), jnp.float32),
    )


if __name__ == "__main__":
    key = jax.random.PRNGKey(0)
    kx, kp = jax.random.split(key)

    # Small input consistent with the module: (batch=2, channels=3, length=16).
    x = jax.random.normal(kx, (2, 3, 16), jnp.float32)
    params = init_params(kp, scale=1)

    fwd = jax.jit(convnet_forward)
    out = jax.block_until_ready(fwd(x, params))

    assert out.shape == (2, 1024, 4), out.shape
    assert bool(jnp.all(jnp.isfinite(out)))
    print("KERNEL_OK")
</pallas_src>

<mosaic_0001>
module attributes {stable_mosaic.version = 11 : i64} {
  func.func @convnet_kernel(%arg0: i32, %arg1: memref<2x16x3xf32, #tpu.memory_space<vmem>>, %arg2: memref<6x256xbf16, #tpu.memory_space<vmem>>, %arg3: memref<1x256xf32, #tpu.memory_space<vmem>>, %arg4: memref<1x256xf32, #tpu.memory_space<vmem>>, %arg5: memref<1024x512xbf16, #tpu.memory_space<vmem>>, %arg6: memref<1x512xf32, #tpu.memory_space<vmem>>, %arg7: memref<1x512xf32, #tpu.memory_space<vmem>>, %arg8: memref<4096x256xbf16, #tpu.memory_space<vmem>>, %arg9: memref<1x256xf32, #tpu.memory_space<vmem>>, %arg10: memref<1x256xf32, #tpu.memory_space<vmem>>, %arg11: memref<2x4x256xf32, #tpu.memory_space<vmem>>) attributes {dimension_semantics = [#tpu.dimension_semantics<parallel>], iteration_bounds = array<i64: 4>, scalar_prefetch = 0 : i64, scratch_operands = 0 : i64, tpu.core_type = #tpu.core_type<tc>, window_params = [{pipeline_mode = #tpu.pipeline_mode<synchronous>, transform_indices = @transform_0, window_bounds = array<i64: 2, 16, 3>}, {pipeline_mode = #tpu.pipeline_mode<synchronous>, transform_indices = @transform_1, window_bounds = array<i64: 6, 256>}, {pipeline_mode = #tpu.pipeline_mode<synchronous>, transform_indices = @transform_2, window_bounds = array<i64: 1, 256>}, {pipeline_mode = #tpu.pipeline_mode<synchronous>, transform_indices = @transform_3, window_bounds = array<i64: 1, 256>}, {pipeline_mode = #tpu.pipeline_mode<synchronous>, transform_indices = @transform_4, window_bounds = array<i64: 1024, 512>}, {pipeline_mode = #tpu.pipeline_mode<synchronous>, transform_indices = @transform_5, window_bounds = array<i64: 1, 512>}, {pipeline_mode = #tpu.pipeline_mode<synchronous>, transform_indices = @transform_6, window_bounds = array<i64: 1, 512>}, {transform_indices = @transform_7, window_bounds = array<i64: 4096, 256>}, {transform_indices = @transform_8, window_bounds = array<i64: 1, 256>}, {transform_indices = @transform_9, window_bounds = array<i64: 1, 256>}, {transform_indices = @transform_10, window_bounds = array<i64: 2, 4, 256>}]} {
    %c0 = arith.constant 0 : index
    %c0_0 = arith.constant 0 : index
    %c0_1 = arith.constant 0 : index
    %0 = vector.load %arg1[%c0, %c0_0, %c0_1] : memref<2x16x3xf32, #tpu.memory_space<vmem>>, vector<2x16x3xf32>
    %c0_2 = arith.constant 0 : index
    %c0_3 = arith.constant 0 : index
    %1 = vector.load %arg2[%c0_2, %c0_3] : memref<6x256xbf16, #tpu.memory_space<vmem>>, vector<6x256xbf16>
    %2 = arith.extf %1 : vector<6x256xbf16> to vector<6x256xf32>
    %cst = arith.constant 0.000000e+00 : f32
    %3 = vector.broadcast %cst : f32 to vector<2x15x256xf32>
    %4 = vector.extract_strided_slice %2 {offsets = [0, 0], sizes = [1, 256], strides = [1, 1]} : vector<6x256xf32> to vector<1x256xf32>
    %5 = vector.extract_strided_slice %0 {offsets = [0, 0, 0], sizes = [2, 15, 1], strides = [1, 1, 1]} : vector<2x16x3xf32> to vector<2x15x1xf32>
    %6 = vector.shape_cast %4 : vector<1x256xf32> to vector<1x1x256xf32>
    %7 = vector.broadcast %5 : vector<2x15x1xf32> to vector<2x15x256xf32>
    %8 = vector.broadcast %6 : vector<1x1x256xf32> to vector<2x15x256xf32>
    %9 = arith.mulf %7, %8 : vector<2x15x256xf32>
    %10 = arith.addf %3, %9 : vector<2x15x256xf32>
    %11 = vector.extract_strided_slice %2 {offsets = [1, 0], sizes = [1, 256], strides = [1, 1]} : vector<6x256xf32> to vector<1x256xf32>
    %12 = vector.extract_strided_slice %0 {offsets = [0, 0, 1], sizes = [2, 15, 1], strides = [1, 1, 1]} : vector<2x16x3xf32> to vector<2x15x1xf32>
    %13 = vector.shape_cast %11 : vector<1x256xf32> to vector<1x1x256xf32>
    %14 = vector.broadcast %12 : vector<2x15x1xf32> to vector<2x15x256xf32>
    %15 = vector.broadcast %13 : vector<1x1x256xf32> to vector<2x15x256xf32>
    %16 = arith.mulf %14, %15 : vector<2x15x256xf32>
    %17 = arith.addf %10, %16 : vector<2x15x256xf32>
    %18 = vector.extract_strided_slice %2 {offsets = [2, 0], sizes = [1, 256], strides = [1, 1]} : vector<6x256xf32> to vector<1x256xf32>
    %19 = vector.extract_strided_slice %0 {offsets = [0, 0, 2], sizes = [2, 15, 1], strides = [1, 1, 1]} : vector<2x16x3xf32> to vector<2x15x1xf32>
    %20 = vector.shape_cast %18 : vector<1x256xf32> to vector<1x1x256xf32>
    %21 = vector.broadcast %19 : vector<2x15x1xf32> to vector<2x15x256xf32>
    %22 = vector.broadcast %20 : vector<1x1x256xf32> to vector<2x15x256xf32>
    %23 = arith.mulf %21, %22 : vector<2x15x256xf32>
    %24 = arith.addf %17, %23 : vector<2x15x256xf32>
    %25 = vector.extract_strided_slice %2 {offsets = [3, 0], sizes = [1, 256], strides = [1, 1]} : vector<6x256xf32> to vector<1x256xf32>
    %26 = vector.extract_strided_slice %0 {offsets = [0, 1, 0], sizes = [2, 15, 1], strides = [1, 1, 1]} : vector<2x16x3xf32> to vector<2x15x1xf32>
    %27 = vector.shape_cast %25 : vector<1x256xf32> to vector<1x1x256xf32>
    %28 = vector.broadcast %26 : vector<2x15x1xf32> to vector<2x15x256xf32>
    %29 = vector.broadcast %27 : vector<1x1x256xf32> to vector<2x15x256xf32>
    %30 = arith.mulf %28, %29 : vector<2x15x256xf32>
    %31 = arith.addf %24, %30 : vector<2x15x256xf32>
    %32 = vector.extract_strided_slice %2 {offsets = [4, 0], sizes = [1, 256], strides = [1, 1]} : vector<6x256xf32> to vector<1x256xf32>
    %33 = vector.extract_strided_slice %0 {offsets = [0, 1, 1], sizes = [2, 15, 1], strides = [1, 1, 1]} : vector<2x16x3xf32> to vector<2x15x1xf32>
    %34 = vector.shape_cast %32 : vector<1x256xf32> to vector<1x1x256xf32>
    %35 = vector.broadcast %33 : vector<2x15x1xf32> to vector<2x15x256xf32>
    %36 = vector.broadcast %34 : vector<1x1x256xf32> to vector<2x15x256xf32>
    %37 = arith.mulf %35, %36 : vector<2x15x256xf32>
    %38 = arith.addf %31, %37 : vector<2x15x256xf32>
    %39 = vector.extract_strided_slice %2 {offsets = [5, 0], sizes = [1, 256], strides = [1, 1]} : vector<6x256xf32> to vector<1x256xf32>
    %40 = vector.extract_strided_slice %0 {offsets = [0, 1, 2], sizes = [2, 15, 1], strides = [1, 1, 1]} : vector<2x16x3xf32> to vector<2x15x1xf32>
    %41 = vector.shape_cast %39 : vector<1x256xf32> to vector<1x1x256xf32>
    %42 = vector.broadcast %40 : vector<2x15x1xf32> to vector<2x15x256xf32>
    %43 = vector.broadcast %41 : vector<1x1x256xf32> to vector<2x15x256xf32>
    %44 = arith.mulf %42, %43 : vector<2x15x256xf32>
    %45 = arith.addf %38, %44 : vector<2x15x256xf32>
    %c0_4 = arith.constant 0 : index
    %c0_5 = arith.constant 0 : index
    %46 = vector.load %arg3[%c0_4, %c0_5] : memref<1x256xf32, #tpu.memory_space<vmem>>, vector<1x256xf32>
    %c0_6 = arith.constant 0 : index
    %c0_7 = arith.constant 0 : index
    %47 = vector.load %arg4[%c0_6, %c0_7] : memref<1x256xf32, #tpu.memory_space<vmem>>, vector<1x256xf32>
    %cst_8 = arith.constant dense<0.000000e+00> : vector<256xf32>
    %48 = vector.multi_reduction <add>, %45, %cst_8 [0, 1] : vector<2x15x256xf32> to vector<256xf32>
    %49 = vector.shape_cast %48 : vector<256xf32> to vector<1x1x256xf32>
    %cst_9 = arith.constant 3.000000e+01 : f32
    %50 = vector.broadcast %cst_9 : f32 to vector<1x1x256xf32>
    %51 = arith.divf %49, %50 : vector<1x1x256xf32>
    %52 = vector.broadcast %51 : vector<1x1x256xf32> to vector<2x15x256xf32>
    %53 = arith.subf %45, %52 : vector<2x15x256xf32>
    %54 = arith.mulf %53, %53 : vector<2x15x256xf32>
    %cst_10 = arith.constant dense<0.000000e+00> : vector<256xf32>
    %55 = vector.multi_reduction <add>, %54, %cst_10 [0, 1] : vector<2x15x256xf32> to vector<256xf32>
    %56 = vector.shape_cast %55 : vector<256xf32> to vector<1x1x256xf32>
    %cst_11 = arith.constant 3.000000e+01 : f32
    %57 = vector.broadcast %cst_11 : f32 to vector<1x1x256xf32>
    %58 = arith.divf %56, %57 : vector<1x1x256xf32>
    %59 = vector.broadcast %51 : vector<1x1x256xf32> to vector<2x15x256xf32>
    %60 = arith.subf %45, %59 : vector<2x15x256xf32>
    %cst_12 = arith.constant 9.99999974E-6 : f32
    %61 = vector.broadcast %cst_12 : f32 to vector<1x1x256xf32>
    %62 = arith.addf %58, %61 : vector<1x1x256xf32>
    %63 = math.rsqrt %62 : vector<1x1x256xf32>
    %64 = vector.broadcast %63 : vector<1x1x256xf32> to vector<2x15x256xf32>
    %65 = arith.mulf %60, %64 : vector<2x15x256xf32>
    %66 = vector.shape_cast %46 : vector<1x256xf32> to vector<1x1x256xf32>
    %67 = vector.broadcast %66 : vector<1x1x256xf32> to vector<2x15x256xf32>
    %68 = arith.mulf %65, %67 : vector<2x15x256xf32>
    %69 = vector.shape_cast %47 : vector<1x256xf32> to vector<1x1x256xf32>
    %70 = vector.broadcast %69 : vector<1x1x256xf32> to vector<2x15x256xf32>
    %71 = arith.addf %68, %70 : vector<2x15x256xf32>
    %cst_13 = arith.constant 0.000000e+00 : f32
    %72 = vector.broadcast %cst_13 : f32 to vector<2x15x256xf32>
    %73 = arith.maximumf %71, %72 : vector<2x15x256xf32>
    %c0_14 = arith.constant 0 : index
    %c0_15 = arith.constant 0 : index
    %74 = vector.load %arg5[%c0_14, %c0_15] : memref<1024x512xbf16, #tpu.memory_space<vmem>>, vector<1024x512xbf16>
    %75 = vector.extract_strided_slice %73 {offsets = [0, 0, 0], sizes = [1, 12, 256], strides = [1, 1, 1]} : vector<2x15x256xf32> to vector<1x12x256xf32>
    %76 = vector.shape_cast %75 : vector<1x12x256xf32> to vector<12x256xf32>
    %77 = vector.extract_strided_slice %73 {offsets = [0, 1, 0], sizes = [1, 12, 256], strides = [1, 1, 1]} : vector<2x15x256xf32> to vector<1x12x256xf32>
    %78 = vector.shape_cast %77 : vector<1x12x256xf32> to vector<12x256xf32>
    %79 = vector.extract_strided_slice %73 {offsets = [0, 2, 0], sizes = [1, 12, 256], strides = [1, 1, 1]} : vector<2x15x256xf32> to vector<1x12x256xf32>
    %80 = vector.shape_cast %79 : vector<1x12x256xf32> to vector<12x256xf32>
    %81 = vector.extract_strided_slice %73 {offsets = [0, 3, 0], sizes = [1, 12, 256], strides = [1, 1, 1]} : vector<2x15x256xf32> to vector<1x12x256xf32>
    %82 = vector.shape_cast %81 : vector<1x12x256xf32> to vector<12x256xf32>
    %83 = tpu.concatenate %76, %78, %80, %82 in 1 : vector<12x256xf32>, vector<12x256xf32>, vector<12x256xf32>, vector<12x256xf32> -> vector<12x1024xf32>
    %84 = arith.truncf %83 : vector<12x1024xf32> to vector<12x1024xbf16>
    %cst_16 = arith.constant dense<0.000000e+00> : vector<12x512xf32>
    %85 = tpu.matmul %84, %74, %cst_16 {dimension_numbers = #tpu.dot_dimension_numbers<[1], [0], [0], [1], [0, 0, 1, 1], [], []>} : vector<12x1024xbf16>, vector<1024x512xbf16>, vector<12x512xf32> -> vector<12x512xf32>
    %86 = vector.extract_strided_slice %73 {offsets = [1, 0, 0], sizes = [1, 12, 256], strides = [1, 1, 1]} : vector<2x15x256xf32> to vector<1x12x256xf32>
    %87 = vector.shape_cast %86 : vector<1x12x256xf32> to vector<12x256xf32>
    %88 = vector.extract_strided_slice %73 {offsets = [1, 1, 0], sizes = [1, 12, 256], strides = [1, 1, 1]} : vector<2x15x256xf32> to vector<1x12x256xf32>
    %89 = vector.shape_cast %88 : vector<1x12x256xf32> to vector<12x256xf32>
    %90 = vector.extract_strided_slice %73 {offsets = [1, 2, 0], sizes = [1, 12, 256], strides = [1, 1, 1]} : vector<2x15x256xf32> to vector<1x12x256xf32>
    %91 = vector.shape_cast %90 : vector<1x12x256xf32> to vector<12x256xf32>
    %92 = vector.extract_strided_slice %73 {offsets = [1, 3, 0], sizes = [1, 12, 256], strides = [1, 1, 1]} : vector<2x15x256xf32> to vector<1x12x256xf32>
    %93 = vector.shape_cast %92 : vector<1x12x256xf32> to vector<12x256xf32>
    %94 = tpu.concatenate %87, %89, %91, %93 in 1 : vector<12x256xf32>, vector<12x256xf32>, vector<12x256xf32>, vector<12x256xf32> -> vector<12x1024xf32>
    %95 = arith.truncf %94 : vector<12x1024xf32> to vector<12x1024xbf16>
    %cst_17 = arith.constant dense<0.000000e+00> : vector<12x512xf32>
    %96 = tpu.matmul %95, %74, %cst_17 {dimension_numbers = #tpu.dot_dimension_numbers<[1], [0], [0], [1], [0, 0, 1, 1], [], []>} : vector<12x1024xbf16>, vector<1024x512xbf16>, vector<12x512xf32> -> vector<12x512xf32>
    %97 = vector.shape_cast %85 : vector<12x512xf32> to vector<1x12x512xf32>
    %98 = vector.shape_cast %96 : vector<12x512xf32> to vector<1x12x512xf32>
    %99 = tpu.concatenate %97, %98 in 0 : vector<1x12x512xf32>, vector<1x12x512xf32> -> vector<2x12x512xf32>
    %c0_18 = arith.constant 0 : index
    %c0_19 = arith.constant 0 : index
    %100 = vector.load %arg6[%c0_18, %c0_19] : memref<1x512xf32, #tpu.memory_space<vmem>>, vector<1x512xf32>
    %c0_20 = arith.constant 0 : index
    %c0_21 = arith.constant 0 : index
    %101 = vector.load %arg7[%c0_20, %c0_21] : memref<1x512xf32, #tpu.memory_space<vmem>>, vector<1x512xf32>
    %cst_22 = arith.constant dense<0.000000e+00> : vector<512xf32>
    %102 = vector.multi_reduction <add>, %99, %cst_22 [0, 1] : vector<2x12x512xf32> to vector<512xf32>
    %103 = vector.shape_cast %102 : vector<512xf32> to vector<1x1x512xf32>
    %cst_23 = arith.constant 2.400000e+01 : f32
    %104 = vector.broadcast %cst_23 : f32 to vector<1x1x512xf32>
    %105 = arith.divf %103, %104 : vector<1x1x512xf32>
    %106 = vector.broadcast %105 : vector<1x1x512xf32> to vector<2x12x512xf32>
    %107 = arith.subf %99, %106 : vector<2x12x512xf32>
    %108 = arith.mulf %107, %107 : vector<2x12x512xf32>
    %cst_24 = arith.constant dense<0.000000e+00> : vector<512xf32>
    %109 = vector.multi_reduction <add>, %108, %cst_24 [0, 1] : vector<2x12x512xf32> to vector<512xf32>
    %110 = vector.shape_cast %109 : vector<512xf32> to vector<1x1x512xf32>
    %cst_25 = arith.constant 2.400000e+01 : f32
    %111 = vector.broadcast %cst_25 : f32 to vector<1x1x512xf32>
    %112 = arith.divf %110, %111 : vector<1x1x512xf32>
    %113 = vector.broadcast %105 : vector<1x1x512xf32> to vector<2x12x512xf32>
    %114 = arith.subf %99, %113 : vector<2x12x512xf32>
    %cst_26 = arith.constant 9.99999974E-6 : f32
    %115 = vector.broadcast %cst_26 : f32 to vector<1x1x512xf32>
    %116 = arith.addf %112, %115 : vector<1x1x512xf32>
    %117 = math.rsqrt %116 : vector<1x1x512xf32>
    %118 = vector.broadcast %117 : vector<1x1x512xf32> to vector<2x12x512xf32>
    %119 = arith.mulf %114, %118 : vector<2x12x512xf32>
    %120 = vector.shape_cast %100 : vector<1x512xf32> to vector<1x1x512xf32>
    %121 = vector.broadcast %120 : vector<1x1x512xf32> to vector<2x12x512xf32>
    %122 = arith.mulf %119, %121 : vector<2x12x512xf32>
    %123 = vector.shape_cast %101 : vector<1x512xf32> to vector<1x1x512xf32>
    %124 = vector.broadcast %123 : vector<1x1x512xf32> to vector<2x12x512xf32>
    %125 = arith.addf %122, %124 : vector<2x12x512xf32>
    %cst_27 = arith.constant 0.000000e+00 : f32
    %126 = vector.broadcast %cst_27 : f32 to vector<2x12x512xf32>
    %127 = arith.maximumf %125, %126 : vector<2x12x512xf32>
    %c0_28 = arith.constant 0 : index
    %c0_29 = arith.constant 0 : index
    %128 = vector.load %arg8[%c0_28, %c0_29] : memref<4096x256xbf16, #tpu.memory_space<vmem>>, vector<4096x256xbf16>
    %129 = vector.extract_strided_slice %127 {offsets = [0, 0, 0], sizes = [1, 5, 512], strides = [1, 1, 1]} : vector<2x12x512xf32> to vector<1x5x512xf32>
    %130 = vector.shape_cast %129 : vector<1x5x512xf32> to vector<5x512xf32>
    %131 = vector.extract_strided_slice %127 {offsets = [0, 1, 0], sizes = [1, 5, 512], strides = [1, 1, 1]} : vector<2x12x512xf32> to vector<1x5x512xf32>
    %132 = vector.shape_cast %131 : vector<1x5x512xf32> to vector<5x512xf32>
    %133 = vector.extract_strided_slice %127 {offsets = [0, 2, 0], sizes = [1, 5, 512], strides = [1, 1, 1]} : vector<2x12x512xf32> to vector<1x5x512xf32>
    %134 = vector.shape_cast %133 : vector<1x5x512xf32> to vector<5x512xf32>
    %135 = vector.extract_strided_slice %127 {offsets = [0, 3, 0], sizes = [1, 5, 512], strides = [1, 1, 1]} : vector<2x12x512xf32> to vector<1x5x512xf32>
    %136 = vector.shape_cast %135 : vector<1x5x512xf32> to vector<5x512xf32>
    %137 = vector.extract_strided_slice %127 {offsets = [0, 4, 0], sizes = [1, 5, 512], strides = [1, 1, 1]} : vector<2x12x512xf32> to vector<1x5x512xf32>
    %138 = vector.shape_cast %137 : vector<1x5x512xf32> to vector<5x512xf32>
    %139 = vector.extract_strided_slice %127 {offsets = [0, 5, 0], sizes = [1, 5, 512], strides = [1, 1, 1]} : vector<2x12x512xf32> to vector<1x5x512xf32>
    %140 = vector.shape_cast %139 : vector<1x5x512xf32> to vector<5x512xf32>
    %141 = vector.extract_strided_slice %127 {offsets = [0, 6, 0], sizes = [1, 5, 512], strides = [1, 1, 1]} : vector<2x12x512xf32> to vector<1x5x512xf32>
    %142 = vector.shape_cast %141 : vector<1x5x512xf32> to vector<5x512xf32>
    %143 = vector.extract_strided_slice %127 {offsets = [0, 7, 0], sizes = [1, 5, 512], strides = [1, 1, 1]} : vector<2x12x512xf32> to vector<1x5x512xf32>
    %144 = vector.shape_cast %143 : vector<1x5x512xf32> to vector<5x512xf32>
    %145 = tpu.concatenate %130, %132, %134, %136, %138, %140, %142, %144 in 1 : vector<5x512xf32>, vector<5x512xf32>, vector<5x512xf32>, vector<5x512xf32>, vector<5x512xf32>, vector<5x512xf32>, vector<5x512xf32>, vector<5x512xf32> -> vector<5x4096xf32>
    %146 = arith.truncf %145 : vector<5x4096xf32> to vector<5x4096xbf16>
    %cst_30 = arith.constant dense<0.000000e+00> : vector<5x256xf32>
    %147 = tpu.matmul %146, %128, %cst_30 {dimension_numbers = #tpu.dot_dimension_numbers<[1], [0], [0], [1], [0, 0, 1, 1], [], []>} : vector<5x4096xbf16>, vector<4096x256xbf16>, vector<5x256xf32> -> vector<5x256xf32>
    %148 = vector.extract_strided_slice %127 {offsets = [1, 0, 0], sizes = [1, 5, 512], strides = [1, 1, 1]} : vector<2x12x512xf32> to vector<1x5x512xf32>
    %149 = vector.shape_cast %148 : vector<1x5x512xf32> to vector<5x512xf32>
    %150 = vector.extract_strided_slice %127 {offsets = [1, 1, 0], sizes = [1, 5, 512], strides = [1, 1, 1]} : vector<2x12x512xf32> to vector<1x5x512xf32>
    %151 = vector.shape_cast %150 : vector<1x5x512xf32> to vector<5x512xf32>
    %152 = vector.extract_strided_slice %127 {offsets = [1, 2, 0], sizes = [1, 5, 512], strides = [1, 1, 1]} : vector<2x12x512xf32> to vector<1x5x512xf32>
    %153 = vector.shape_cast %152 : vector<1x5x512xf32> to vector<5x512xf32>
    %154 = vector.extract_strided_slice %127 {offsets = [1, 3, 0], sizes = [1, 5, 512], strides = [1, 1, 1]} : vector<2x12x512xf32> to vector<1x5x512xf32>
    %155 = vector.shape_cast %154 : vector<1x5x512xf32> to vector<5x512xf32>
    %156 = vector.extract_strided_slice %127 {offsets = [1, 4, 0], sizes = [1, 5, 512], strides = [1, 1, 1]} : vector<2x12x512xf32> to vector<1x5x512xf32>
    %157 = vector.shape_cast %156 : vector<1x5x512xf32> to vector<5x512xf32>
    %158 = vector.extract_strided_slice %127 {offsets = [1, 5, 0], sizes = [1, 5, 512], strides = [1, 1, 1]} : vector<2x12x512xf32> to vector<1x5x512xf32>
    %159 = vector.shape_cast %158 : vector<1x5x512xf32> to vector<5x512xf32>
    %160 = vector.extract_strided_slice %127 {offsets = [1, 6, 0], sizes = [1, 5, 512], strides = [1, 1, 1]} : vector<2x12x512xf32> to vector<1x5x512xf32>
    %161 = vector.shape_cast %160 : vector<1x5x512xf32> to vector<5x512xf32>
    %162 = vector.extract_strided_slice %127 {offsets = [1, 7, 0], sizes = [1, 5, 512], strides = [1, 1, 1]} : vector<2x12x512xf32> to vector<1x5x512xf32>
    %163 = vector.shape_cast %162 : vector<1x5x512xf32> to vector<5x512xf32>
    %164 = tpu.concatenate %149, %151, %153, %155, %157, %159, %161, %163 in 1 : vector<5x512xf32>, vector<5x512xf32>, vector<5x512xf32>, vector<5x512xf32>, vector<5x512xf32>, vector<5x512xf32>, vector<5x512xf32>, vector<5x512xf32> -> vector<5x4096xf32>
    %165 = arith.truncf %164 : vector<5x4096xf32> to vector<5x4096xbf16>
    %cst_31 = arith.constant dense<0.000000e+00> : vector<5x256xf32>
    %166 = tpu.matmul %165, %128, %cst_31 {dimension_numbers = #tpu.dot_dimension_numbers<[1], [0], [0], [1], [0, 0, 1, 1], [], []>} : vector<5x4096xbf16>, vector<4096x256xbf16>, vector<5x256xf32> -> vector<5x256xf32>
    %167 = vector.shape_cast %147 : vector<5x256xf32> to vector<1x5x256xf32>
    %168 = vector.shape_cast %166 : vector<5x256xf32> to vector<1x5x256xf32>
    %169 = tpu.concatenate %167, %168 in 0 : vector<1x5x256xf32>, vector<1x5x256xf32> -> vector<2x5x256xf32>
    %c0_32 = arith.constant 0 : index
    %c0_33 = arith.constant 0 : index
    %170 = vector.load %arg9[%c0_32, %c0_33] : memref<1x256xf32, #tpu.memory_space<vmem>>, vector<1x256xf32>
    %c0_34 = arith.constant 0 : index
    %c0_35 = arith.constant 0 : index
    %171 = vector.load %arg10[%c0_34, %c0_35] : memref<1x256xf32, #tpu.memory_space<vmem>>, vector<1x256xf32>
    %cst_36 = arith.constant dense<0.000000e+00> : vector<256xf32>
    %172 = vector.multi_reduction <add>, %169, %cst_36 [0, 1] : vector<2x5x256xf32> to vector<256xf32>
    %173 = vector.shape_cast %172 : vector<256xf32> to vector<1x1x256xf32>
    %cst_37 = arith.constant 1.000000e+01 : f32
    %174 = vector.broadcast %cst_37 : f32 to vector<1x1x256xf32>
    %175 = arith.divf %173, %174 : vector<1x1x256xf32>
    %176 = vector.broadcast %175 : vector<1x1x256xf32> to vector<2x5x256xf32>
    %177 = arith.subf %169, %176 : vector<2x5x256xf32>
    %178 = arith.mulf %177, %177 : vector<2x5x256xf32>
    %cst_38 = arith.constant dense<0.000000e+00> : vector<256xf32>
    %179 = vector.multi_reduction <add>, %178, %cst_38 [0, 1] : vector<2x5x256xf32> to vector<256xf32>
    %180 = vector.shape_cast %179 : vector<256xf32> to vector<1x1x256xf32>
    %cst_39 = arith.constant 1.000000e+01 : f32
    %181 = vector.broadcast %cst_39 : f32 to vector<1x1x256xf32>
    %182 = arith.divf %180, %181 : vector<1x1x256xf32>
    %183 = vector.broadcast %175 : vector<1x1x256xf32> to vector<2x5x256xf32>
    %184 = arith.subf %169, %183 : vector<2x5x256xf32>
    %cst_40 = arith.constant 9.99999974E-6 : f32
    %185 = vector.broadcast %cst_40 : f32 to vector<1x1x256xf32>
    %186 = arith.addf %182, %185 : vector<1x1x256xf32>
    %187 = math.rsqrt %186 : vector<1x1x256xf32>
    %188 = vector.broadcast %187 : vector<1x1x256xf32> to vector<2x5x256xf32>
    %189 = arith.mulf %184, %188 : vector<2x5x256xf32>
    %190 = vector.shape_cast %170 : vector<1x256xf32> to vector<1x1x256xf32>
    %191 = vector.broadcast %190 : vector<1x1x256xf32> to vector<2x5x256xf32>
    %192 = arith.mulf %189, %191 : vector<2x5x256xf32>
    %193 = vector.shape_cast %171 : vector<1x256xf32> to vector<1x1x256xf32>
    %194 = vector.broadcast %193 : vector<1x1x256xf32> to vector<2x5x256xf32>
    %195 = arith.addf %192, %194 : vector<2x5x256xf32>
    %cst_41 = arith.constant 0.000000e+00 : f32
    %196 = vector.broadcast %cst_41 : f32 to vector<2x5x256xf32>
    %197 = arith.maximumf %195, %196 : vector<2x5x256xf32>
    %198 = vector.extract_strided_slice %197 {offsets = [0, 0, 0], sizes = [2, 4, 256], strides = [1, 1, 1]} : vector<2x5x256xf32> to vector<2x4x256xf32>
    %199 = vector.extract_strided_slice %197 {offsets = [0, 1, 0], sizes = [2, 4, 256], strides = [1, 1, 1]} : vector<2x5x256xf32> to vector<2x4x256xf32>
    %200 = arith.maximumf %198, %199 : vector<2x4x256xf32>
    %c0_42 = arith.constant 0 : index
    %c0_43 = arith.constant 0 : index
    %c0_44 = arith.constant 0 : index
    %201 = vector.load %arg11[%c0_42, %c0_43, %c0_44] : memref<2x4x256xf32, #tpu.memory_space<vmem>>, vector<2x4x256xf32>
    tpu.vector_store %arg11[%c0_42, %c0_43, %c0_44], %200 {strides = array<i32>} : memref<2x4x256xf32, #tpu.memory_space<vmem>>, vector<2x4x256xf32>,
    return
  }
  func.func @transform_0(%arg0: i32) -> (i32, i32, i32) {
    %c0_i32 = arith.constant 0 : i32
    %c0_i32_0 = arith.constant 0 : i32
    %c0_i32_1 = arith.constant 0 : i32
    %c0_i32_2 = arith.constant 0 : i32
    return %c0_i32, %c0_i32_0, %c0_i32_1 : i32, i32, i32
  }
  func.func @transform_1(%arg0: i32) -> (i32, i32) {
    %c0_i32 = arith.constant 0 : i32
    %c0_i32_0 = arith.constant 0 : i32
    %c0_i32_1 = arith.constant 0 : i32
    return %c0_i32, %c0_i32_0 : i32, i32
  }
  func.func @transform_2(%arg0: i32) -> (i32, i32) {
    %c0_i32 = arith.constant 0 : i32
    %c0_i32_0 = arith.constant 0 : i32
    %c0_i32_1 = arith.constant 0 : i32
    return %c0_i32, %c0_i32_0 : i32, i32
  }
  func.func @transform_3(%arg0: i32) -> (i32, i32) {
    %c0_i32 = arith.constant 0 : i32
    %c0_i32_0 = arith.constant 0 : i32
    %c0_i32_1 = arith.constant 0 : i32
    return %c0_i32, %c0_i32_0 : i32, i32
  }
  func.func @transform_4(%arg0: i32) -> (i32, i32) {
    %c0_i32 = arith.constant 0 : i32
    %c0_i32_0 = arith.constant 0 : i32
    %c0_i32_1 = arith.constant 0 : i32
    return %c0_i32, %c0_i32_0 : i32, i32
  }
  func.func @transform_5(%arg0: i32) -> (i32, i32) {
    %c0_i32 = arith.constant 0 : i32
    %c0_i32_0 = arith.constant 0 : i32
    %c0_i32_1 = arith.constant 0 : i32
    return %c0_i32, %c0_i32_0 : i32, i32
  }
  func.func @transform_6(%arg0: i32) -> (i32, i32) {
    %c0_i32 = arith.constant 0 : i32
    %c0_i32_0 = arith.constant 0 : i32
    %c0_i32_1 = arith.constant 0 : i32
    return %c0_i32, %c0_i32_0 : i32, i32
  }
  func.func @transform_7(%arg0: i32) -> (i32, i32) {
    %c0_i32 = arith.constant 0 : i32
    %c0_i32_0 = arith.constant 0 : i32
    return %c0_i32, %arg0 : i32, i32
  }
  func.func @transform_8(%arg0: i32) -> (i32, i32) {
    %c0_i32 = arith.constant 0 : i32
    %c0_i32_0 = arith.constant 0 : i32
    return %c0_i32, %arg0 : i32, i32
  }
  func.func @transform_9(%arg0: i32) -> (i32, i32) {
    %c0_i32 = arith.constant 0 : i32
    %c0_i32_0 = arith.constant 0 : i32
    return %c0_i32, %arg0 : i32, i32
  }
  func.func @transform_10(%arg0: i32) -> (i32, i32, i32) {
    %c0_i32 = arith.constant 0 : i32
    %c0_i32_0 = arith.constant 0 : i32
    %c0_i32_1 = arith.constant 0 : i32
    return %c0_i32, %c0_i32_0, %arg0 : i32, i32, i32
  }
}

</mosaic_0001>

<llo_original>
// kernel: convnet_forward.1
$region0: #{convnet_forward.1}
  #allocation0 [shape = 'u32[]', space=smem, size = 0x4, offset = 0x4, fixed_abs, tag = 'smem constant byte address 0x4 - core index']
  #allocation1 [shape = 'u32[144,128]{1,0:T(1,128)}', space=vmem, size = 0x12000, scoped, tag = 'internal scratch']
  %s0 = inlined_call_operand.vmem [shape: f32[2,16,3], index: 0, kind: input, shape index: {}]
  %s1 = inlined_call_operand.vmem [shape: bf16[6,256], index: 1, kind: input, shape index: {}]
  %s2 = inlined_call_operand.hbm [shape: f32[1,256], index: 2, kind: input, shape index: {}]
  %s3 = inlined_call_operand.hbm [shape: f32[1,256], index: 3, kind: input, shape index: {}]
  %s4 = inlined_call_operand.hbm [shape: bf16[1024,512], index: 4, kind: input, shape index: {}]
  %s5 = inlined_call_operand.hbm [shape: f32[1,512], index: 5, kind: input, shape index: {}]
  %s6 = inlined_call_operand.hbm [shape: f32[1,512], index: 6, kind: input, shape index: {}]
  %s7 = inlined_call_operand.hbm [shape: bf16[4096,1024], index: 7, kind: input, shape index: {}]
  %s8 = inlined_call_operand.hbm [shape: f32[1,1024], index: 8, kind: input, shape index: {}]
  %s9 = inlined_call_operand.hbm [shape: f32[1,1024], index: 9, kind: input, shape index: {}]
  %s10 = inlined_call_operand.hbm [shape: f32[2,4,1024], index: 10, kind: output, shape index: {}]
  %s11 = sld [smem:[#allocation0]]
  $region105: #{convnet_forward.1} parent=0
    _
  %s13 = ssub.s32 1, %s11
  %s14 = scalar_select 0, %s13, %s11
  $region1: #{convnet_forward.1} parent=0
    #allocation2 [shape = 'u8[1024]{0}', space=vmem, size = 0x400, scoped, tag = 'input window, operand 2, single buffered']
    #allocation3 [shape = 's32[2]{0}', space=sflag, size = 0x8, scoped, tag = 'scoped memory for convnet_forward.1']
    #allocation4 [shape = 's32[2]{0}', space=sflag, size = 0x8, scoped, tag = 'scoped memory for convnet_forward.1']
    #allocation5 [shape = 'u8[1024]{0}', space=vmem, size = 0x400, scoped, tag = 'input window, operand 3, single buffered']
    #allocation6 [shape = 's32[1]{0}', space=sflag, size = 0x4, scoped, tag = 'scoped memory for convnet_forward.1']
    #allocation7 [shape = 'u8[1048576]{0}', space=vmem, size = 0x100000, scoped, tag = 'input window, operand 4, single buffered']
    #allocation8 [shape = 'u8[2048]{0}', space=vmem, size = 0x800, scoped, tag = 'input window, operand 5, single buffered']
    #allocation9 [shape = 's32[1]{0}', space=sflag, size = 0x4, scoped, tag = 'scoped memory for convnet_forward.1']
    #allocation10 [shape = 'u8[2048]{0}', space=vmem, size = 0x800, scoped, tag = 'input window, operand 6, single buffered']
    #allocation11 [shape = 'u8[4194304]{0}', space=vmem, size = 0x400000, scoped, tag = 'input window, operand 7']
    #allocation12 [shape = 's32[2]{0}', space=sflag, size = 0x8, scoped, tag = 'scoped memory for convnet_forward.1']
    #allocation13 [shape = 'u8[2048]{0}', space=vmem, size = 0x800, scoped, tag = 'input window, operand 8']
    #allocation14 [shape = 'u8[2048]{0}', space=vmem, size = 0x800, scoped, tag = 'input window, operand 9']
    #allocation15 [shape = 's32[2]{0}', space=sflag, size = 0x8, scoped, tag = 'scoped memory for convnet_forward.1']
    #allocation16 [shape = 'u8[16384]{0}', space=vmem, size = 0x4000, scoped, tag = 'output window, operand 0']
    %15 = vsyncpa [#allocation3], 0
    %16 = vsyncpa [#allocation6], 0
    %17 = vsyncpa [#allocation9], 0
    %18 = vsyncpa [#allocation12], 0
    %s19 = scalar_lea.sflag [#allocation12], 1
    %20 = vsyncpa %s19, 0
    %21 = vsyncpa [#allocation15], 0
    %s22 = scalar_lea.sflag [#allocation15], 1
    %23 = vsyncpa %s22, 0
    %24 = vsyncpa [#allocation4], 0
    %s25 = scalar_lea.sflag [#allocation4], 1
    %26 = vsyncpa %s25, 0
    loop: start=0, step=1, limit=6
    $region2: #{convnet_forward.1} parent=1 // loop_pre_header
      _
    $region3: #{convnet_forward.1} parent=1 // loop_header
      %s28 = sphi 0, %s32
      %p29 = scmp.ge.s32.totalorder %s28, 6
      %s36 = sphi 0, %s36
      %s38 = sphi 0, %s36
      %s39 = sphi 0, %s38
      %s53 = sphi 0, %s39
      %s57 = sphi 0, %s57
      %s59 = sphi 0, %s57
      %s60 = sphi 0, %s59
      %s74 = sphi 0, %s60
      %s78 = sphi 0, %s78
      %s80 = sphi 0, %s78
      %s81 = sphi 0, %s80
      %s95 = sphi 0, %s81
      %s99 = sphi 0, %s99
      %s101 = sphi 0, %s99
      %s102 = sphi 0, %s101
      %s116 = sphi 0, %s102
      %s120 = sphi 0, %s120
      %s122 = sphi 0, %s120
      %s123 = sphi 0, %s122
      %s137 = sphi 0, %s123
      %s141 = sphi 0, %s141
      %s143 = sphi 0, %s141
      %s144 = sphi 0, %s143
      %s158 = sphi 0, %s144
      %s162 = sphi 0, %s162
      %s164 = sphi 0, %s162
      %s165 = sphi 0, %s164
      %s179 = sphi 0, %s165
      %s185 = sphi 0, %s187
      %s188 = sphi 0, %s185
      %s189 = sphi 0, %s188
      %s205 = sphi 0, %s189
      %s211 = sphi 0, %s213
      %s214 = sphi 0, %s211
      %s215 = sphi 0, %s214
      %s231 = sphi 0, %s215
      %s237 = sphi 0, %s239
      %s240 = sphi 0, %s237
      %s241 = sphi 0, %s240
      %s257 = sphi 0, %s241
      %s263 = sphi 0, %s265
      %s266 = sphi 0, %s263
      %s267 = sphi 0, %s266
      %s283 = sphi 0, %s267
    $region4: #{convnet_forward.1} parent=1 // loop_header_branch
      %31 = sbr.rel (%p29) target = $region8
    $region5: #{convnet_forward.1} parent=1 // loop_body
      %s33 = ssub.s32 %s28, 1
      %s34 = ssub.s32 %s28, 2
      %s35 = sadd.s32 %s28, 1
      %s37 = sadd.s32 %s36, 1
      %p40 = scmp.eq.s32.totalorder %s28, 3
      %p41 = scmp.ne.s32.totalorder %s36, %s38
      %p42 = scmp.eq.s32.totalorder %s28, 0
      %p43 = por %p41, %p42
      %p44 = scmp.ne.s32.totalorder %s36, %s38
      %p45 = scmp.eq.s32.totalorder %s33, 3
      %p46 = por %p44, %p45
      %p47 = scmp.ne.s32.totalorder %s38, %s39
      %p48 = scmp.eq.s32.totalorder %s33, 0
      %p49 = por %p47, %p48
      %p50 = scmp.ne.s32.totalorder %s38, %s39
      %p51 = scmp.eq.s32.totalorder %s34, 3
      %p52 = por %p50, %p51
      %p54 = scmp.ne.s32.totalorder %s39, %s53
      %p55 = scmp.eq.s32.totalorder %s34, 0
      %p56 = por %p54, %p55
      %s58 = sadd.s32 %s57, 1
      %p61 = scmp.eq.s32.totalorder %s28, 3
      %p62 = scmp.ne.s32.totalorder %s57, %s59
      %p63 = scmp.eq.s32.totalorder %s28, 0
      %p64 = por %p62, %p63
      %p65 = scmp.ne.s32.totalorder %s57, %s59
      %p66 = scmp.eq.s32.totalorder %s33, 3
      %p67 = por %p65, %p66
      %p68 = scmp.ne.s32.totalorder %s59, %s60
      %p69 = scmp.eq.s32.totalorder %s33, 0
      %p70 = por %p68, %p69
      %p71 = scmp.ne.s32.totalorder %s59, %s60
      %p72 = scmp.eq.s32.totalorder %s34, 3
      %p73 = por %p71, %p72
      %p75 = scmp.ne.s32.totalorder %s60, %s74
      %p76 = scmp.eq.s32.totalorder %s34, 0
      %p77 = por %p75, %p76
      %s79 = sadd.s32 %s78, 1
      %p82 = scmp.eq.s32.totalorder %s28, 3
      %p83 = scmp.ne.s32.totalorder %s78, %s80
      %p84 = scmp.eq.s32.totalorder %s28, 0
      %p85 = por %p83, %p84
      %p86 = scmp.ne.s32.totalorder %s78, %s80
      %p87 = scmp.eq.s32.totalorder %s33, 3
      %p88 = por %p86, %p87
      %p89 = scmp.ne.s32.totalorder %s80, %s81
      %p90 = scmp.eq.s32.totalorder %s33, 0
      %p91 = por %p89, %p90
      %p92 = scmp.ne.s32.totalorder %s80, %s81
      %p93 = scmp.eq.s32.totalorder %s34, 3
      %p94 = por %p92, %p93
      %p96 = scmp.ne.s32.totalorder %s81, %s95
      %p97 = scmp.eq.s32.totalorder %s34, 0
      %p98 = por %p96, %p97
      %s100 = sadd.s32 %s99, 1
      %p103 = scmp.eq.s32.totalorder %s28, 3
      %p104 = scmp.ne.s32.totalorder %s99, %s101
      %p105 = scmp.eq.s32.totalorder %s28, 0
      %p106 = por %p104, %p105
      %p107 = scmp.ne.s32.totalorder %s99, %s101
      %p108 = scmp.eq.s32.totalorder %s33, 3
      %p109 = por %p107, %p108
      %p110 = scmp.ne.s32.totalorder %s101, %s102
      %p111 = scmp.eq.s32.totalorder %s33, 0
      %p112 = por %p110, %p111
      %p113 = scmp.ne.s32.totalorder %s101, %s102
      %p114 = scmp.eq.s32.totalorder %s34, 3
      %p115 = por %p113, %p114
      %p117 = scmp.ne.s32.totalorder %s102, %s116
      %p118 = scmp.eq.s32.totalorder %s34, 0
      %p119 = por %p117, %p118
      %s121 = sadd.s32 %s120, 1
      %p124 = scmp.eq.s32.totalorder %s28, 3
      %p125 = scmp.ne.s32.totalorder %s120, %s122
      %p126 = scmp.eq.s32.totalorder %s28, 0
      %p127 = por %p125, %p126
      %p128 = scmp.ne.s32.totalorder %s120, %s122
      %p129 = scmp.eq.s32.totalorder %s33, 3
      %p130 = por %p128, %p129
      %p131 = scmp.ne.s32.totalorder %s122, %s123
      %p132 = scmp.eq.s32.totalorder %s33, 0
      %p133 = por %p131, %p132
      %p134 = scmp.ne.s32.totalorder %s122, %s123
      %p135 = scmp.eq.s32.totalorder %s34, 3
      %p136 = por %p134, %p135
      %p138 = scmp.ne.s32.totalorder %s123, %s137
      %p139 = scmp.eq.s32.totalorder %s34, 0
      %p140 = por %p138, %p139
      %s142 = sadd.s32 %s141, 1
      %p145 = scmp.eq.s32.totalorder %s28, 3
      %p146 = scmp.ne.s32.totalorder %s141, %s143
      %p147 = scmp.eq.s32.totalorder %s28, 0
      %p148 = por %p146, %p147
      %p149 = scmp.ne.s32.totalorder %s141, %s143
      %p150 = scmp.eq.s32.totalorder %s33, 3
      %p151 = por %p149, %p150
      %p152 = scmp.ne.s32.totalorder %s143, %s144
      %p153 = scmp.eq.s32.totalorder %s33, 0
      %p154 = por %p152, %p153
      %p155 = scmp.ne.s32.totalorder %s143, %s144
      %p156 = scmp.eq.s32.totalorder %s34, 3
      %p157 = por %p155, %p156
      %p159 = scmp.ne.s32.totalorder %s144, %s158
      %p160 = scmp.eq.s32.totalorder %s34, 0
      %p161 = por %p159, %p160
      %s163 = sadd.s32 %s162, 1
      %p166 = scmp.eq.s32.totalorder %s28, 3
      %p167 = scmp.ne.s32.totalorder %s162, %s164
      %p168 = scmp.eq.s32.totalorder %s28, 0
      %p169 = por %p167, %p168
      %p170 = scmp.ne.s32.totalorder %s162, %s164
      %p171 = scmp.eq.s32.totalorder %s33, 3
      %p172 = por %p170, %p171
      %p173 = scmp.ne.s32.totalorder %s164, %s165
      %p174 = scmp.eq.s32.totalorder %s33, 0
      %p175 = por %p173, %p174
      %p176 = scmp.ne.s32.totalorder %s164, %s165
      %p177 = scmp.eq.s32.totalorder %s34, 3
      %p178 = por %p176, %p177
      %p180 = scmp.ne.s32.totalorder %s165, %s179
      %p181 = scmp.eq.s32.totalorder %s34, 0
      %p182 = por %p180, %p181
      %s183 = ssub.s32 %s28, %s35
      %p184 = scmp.eq.s32.totalorder %s183, 0
      %s186 = sadd.s32 %s185, 1
      %s187 = scalar_select %p184, %s185, %s186
      %p190 = pneg %p184
      %p191 = scmp.eq.s32.totalorder %s28, 3
      %p192 = por %p190, %p191
      %p193 = scmp.ne.s32.totalorder %s185, %s188
      %p194 = scmp.eq.s32.totalorder %s28, 0
      %p195 = por %p193, %p194
      %p196 = scmp.ne.s32.totalorder %s185, %s188
      %p197 = scmp.eq.s32.totalorder %s33, 3
      %p198 = por %p196, %p197
      %p199 = scmp.ne.s32.totalorder %s188, %s189
      %p200 = scmp.eq.s32.totalorder %s33, 0
      %p201 = por %p199, %p200
      %p202 = scmp.ne.s32.totalorder %s188, %s189
      %p203 = scmp.eq.s32.totalorder %s34, 3
      %p204 = por %p202, %p203
      %p206 = scmp.ne.s32.totalorder %s189, %s205
      %p207 = scmp.eq.s32.totalorder %s34, 0
      %p208 = por %p206, %p207
      %s209 = ssub.s32 %s28, %s35
      %p210 = scmp.eq.s32.totalorder %s209, 0
      %s212 = sadd.s32 %s211, 1
      %s213 = scalar_select %p210, %s211, %s212
      %p216 = pneg %p210
      %p217 = scmp.eq.s32.totalorder %s28, 3
      %p218 = por %p216, %p217
      %p219 = scmp.ne.s32.totalorder %s211, %s214
      %p220 = scmp.eq.s32.totalorder %s28, 0
      %p221 = por %p219, %p220
      %p222 = scmp.ne.s32.totalorder %s211, %s214
      %p223 = scmp.eq.s32.totalorder %s33, 3
      %p224 = por %p222, %p223
      %p225 = scmp.ne.s32.totalorder %s214, %s215
      %p226 = scmp.eq.s32.totalorder %s33, 0
      %p227 = por %p225, %p226
      %p228 = scmp.ne.s32.totalorder %s214, %s215
      %p229 = scmp.eq.s32.totalorder %s34, 3
      %p230 = por %p228, %p229
      %p232 = scmp.ne.s32.totalorder %s215, %s231
      %p233 = scmp.eq.s32.totalorder %s34, 0
      %p234 = por %p232, %p233
      %s235 = ssub.s32 %s28, %s35
      %p236 = scmp.eq.s32.totalorder %s235, 0
      %s238 = sadd.s32 %s237, 1
      %s239 = scalar_select %p236, %s237, %s238
      %p242 = pneg %p236
      %p243 = scmp.eq.s32.totalorder %s28, 3
      %p244 = por %p242, %p243
      %p245 = scmp.ne.s32.totalorder %s237, %s240
      %p246 = scmp.eq.s32.totalorder %s28, 0
      %p247 = por %p245, %p246
      %p248 = scmp.ne.s32.totalorder %s237, %s240
      %p249 = scmp.eq.s32.totalorder %s33, 3
      %p250 = por %p248, %p249
      %p251 = scmp.ne.s32.totalorder %s240, %s241
      %p252 = scmp.eq.s32.totalorder %s33, 0
      %p253 = por %p251, %p252
      %p254 = scmp.ne.s32.totalorder %s240, %s241
      %p255 = scmp.eq.s32.totalorder %s34, 3
      %p256 = por %p254, %p255
      %p258 = scmp.ne.s32.totalorder %s241, %s257
      %p259 = scmp.eq.s32.totalorder %s34, 0
      %p260 = por %p258, %p259
      %s261 = ssub.s32 %s28, %s35
      %p262 = scmp.eq.s32.totalorder %s261, 0
      %s264 = sadd.s32 %s263, 1
      %s265 = scalar_select %p262, %s263, %s264
      %p268 = pneg %p262
      %p269 = scmp.eq.s32.totalorder %s28, 3
      %p270 = por %p268, %p269
      %p271 = scmp.ne.s32.totalorder %s263, %s266
      %p272 = scmp.eq.s32.totalorder %s28, 0
      %p273 = por %p271, %p272
      %p274 = scmp.ne.s32.totalorder %s263, %s266
      %p275 = scmp.eq.s32.totalorder %s33, 3
      %p276 = por %p274, %p275
      %p277 = scmp.ne.s32.totalorder %s266, %s267
      %p278 = scmp.eq.s32.totalorder %s33, 0
      %p279 = por %p277, %p278
      %p280 = scmp.ne.s32.totalorder %s266, %s267
      %p281 = scmp.eq.s32.totalorder %s34, 3
      %p282 = por %p280, %p281
      %p284 = scmp.ne.s32.totalorder %s267, %s283
      %p285 = scmp.eq.s32.totalorder %s34, 0
      %p286 = por %p284, %p285
      %p287 = scmp.le.s32.totalorder 1, %s28
      %p288 = scmp.lt.s32.totalorder %s28, 5
      %p289 = pnand %p287, %p288
      %p290 = pneg %p289
      // Predicated region
      $region9: #{convnet_forward.1} parent=5 // pred_check
        _
      $region10: #{convnet_forward.1} parent=5 // pred_check_branch
        %292 = sbr.rel (%p289) target = $region12
      $region11: #{convnet_forward.1} parent=5 // pred_region
        %s293 = ssub.s32 %s28, 1
        // Predicated region
        $region13: #{convnet_forward.1} parent=11 // pred_check
          %p294 = pneg %p49
        $region14: #{convnet_forward.1} parent=11 // pred_check_branch
          %296 = sbr.rel (%p294) target = $region16
        $region15: #{convnet_forward.1} parent=11 // pred_region
          _
        $region16: #{convnet_forward.1} parent=11 // pred_fallthru
          _
        // Predicated region
        $region17: #{convnet_forward.1} parent=11 // pred_check
          %p297 = pneg %p70
        $region18: #{convnet_forward.1} parent=11 // pred_check_branch
          %299 = sbr.rel (%p297) target = $region20
        $region19: #{convnet_forward.1} parent=11 // pred_region
          _
        $region20: #{convnet_forward.1} parent=11 // pred_fallthru
          _
        // Predicated region
        $region21: #{convnet_forward.1} parent=11 // pred_check
          %p300 = pneg %p91
        $region22: #{convnet_forward.1} parent=11 // pred_check_branch
          %302 = sbr.rel (%p300) target = $region24
        $region23: #{convnet_forward.1} parent=11 // pred_region
          %s304 = ssub.s32 32, 32
          %305 = vsyncadd [#allocation3], %s304
          %s307 = sshll.u32 [#allocation2], 4
          %s308 = int_to_ptr.vmem [resolvable:$true] %s307
          %310 = dma.hbm_to_vmem [thread:$0]  %s2, 32, %s308, [#allocation3]
        $region24: #{convnet_forward.1} parent=11 // pred_fallthru
          _
        // Predicated region
        $region25: #{convnet_forward.1} parent=11 // pred_check
          %p311 = pneg %p112
        $region26: #{convnet_forward.1} parent=11 // pred_check_branch
          %313 = sbr.rel (%p311) target = $region28
        $region27: #{convnet_forward.1} parent=11 // pred_region
          %s315 = ssub.s32 32, 32
          %316 = vsyncadd [#allocation6], %s315
          %s318 = sshll.u32 [#allocation5], 4
          %s319 = int_to_ptr.vmem [resolvable:$true] %s318
          %321 = dma.hbm_to_vmem [thread:$0]  %s3, 32, %s319, [#allocation6]
        $region28: #{convnet_forward.1} parent=11 // pred_fallthru
          _
        // Predicated region
        $region29: #{convnet_forward.1} parent=11 // pred_check
          %p322 = pneg %p133
        $region30: #{convnet_forward.1} parent=11 // pred_check_branch
          %324 = sbr.rel (%p322) target = $region32
        $region31: #{convnet_forward.1} parent=11 // pred_region
          %s326 = ssub.s32 32768, 32768
          %327 = vsyncadd [#allocation6], %s326
          %s328 = sshll.u32 [#allocation7], 4
          %s329 = int_to_ptr.vmem [resolvable:$true] %s328
          %334 = dma.hbm_to_vmem [thread:$0]  %s4, 32768, %s329, [#allocation6], 256, 256, 16
        $region32: #{convnet_forward.1} parent=11 // pred_fallthru
          _
        // Predicated region
        $region33: #{convnet_forward.1} parent=11 // pred_check
          %p335 = pneg %p154
        $region34: #{convnet_forward.1} parent=11 // pred_check_branch
          %337 = sbr.rel (%p335) target = $region36
        $region35: #{convnet_forward.1} parent=11 // pred_region
          %s339 = ssub.s32 64, 64
          %340 = vsyncadd [#allocation9], %s339
          %s342 = sshll.u32 [#allocation8], 4
          %s343 = int_to_ptr.vmem [resolvable:$true] %s342
          %345 = dma.hbm_to_vmem [thread:$0]  %s5, 64, %s343, [#allocation9]
        $region36: #{convnet_forward.1} parent=11 // pred_fallthru
          _
        // Predicated region
        $region37: #{convnet_forward.1} parent=11 // pred_check
          %p346 = pneg %p175
        $region38: #{convnet_forward.1} parent=11 // pred_check_branch
          %348 = sbr.rel (%p346) target = $region40
        $region39: #{convnet_forward.1} parent=11 // pred_region
          %s350 = ssub.s32 64, 64
          %351 = vsyncadd [#allocation9], %s350
          %s353 = sshll.u32 [#allocation10], 4
          %s354 = int_to_ptr.vmem [resolvable:$true] %s353
          %356 = dma.hbm_to_vmem [thread:$0]  %s6, 64, %s354, [#allocation9]
        $region40: #{convnet_forward.1} parent=11 // pred_fallthru
          _
      $region12: #{convnet_forward.1} parent=5 // pred_fallthru
        _
      %p357 = scmp.lt.s32.totalorder %s28, 4
      // Predicated region
      $region41: #{convnet_forward.1} parent=5 // pred_check
        %p358 = pneg %p357
      $region42: #{convnet_forward.1} parent=5 // pred_check_branch
        %360 = sbr.rel (%p358) target = $region44
      $region43: #{convnet_forward.1} parent=5 // pred_region
        // Predicated region
        $region45: #{convnet_forward.1} parent=43 // pred_check
          %p361 = pneg %p195
        $region46: #{convnet_forward.1} parent=43 // pred_check_branch
          %363 = sbr.rel (%p361) target = $region48
        $region47: #{convnet_forward.1} parent=43 // pred_region
          %s364 = sand.u32 %s28, 1
          %s365 = scalar_lea.sflag [#allocation12], %s364
          %s366 = sand.u32 %s185, 1
          %s367 = smul.addr %s366, 4096
          %s368 = scalar_lea.vmem [#allocation11], %s367
          %s369 = smul.u32 2, %s28
          %s371 = ssub.s32 65536, 65536
          %372 = vsyncadd %s365, %s371
          %s373 = smul.addr %s369, 64
          %s374 = scalar_lea.hbm %s7, %s373
          %s375 = sshll.u32 %s368, 4
          %s376 = int_to_ptr.vmem [resolvable:$true] %s375
          %381 = dma.hbm_to_vmem [thread:$0]  %s374, 65536, %s376, %s365, 512, 128, 8
        $region48: #{convnet_forward.1} parent=43 // pred_fallthru
          _
        // Predicated region
        $region49: #{convnet_forward.1} parent=43 // pred_check
          %p382 = pneg %p221
        $region50: #{convnet_forward.1} parent=43 // pred_check_branch
          %384 = sbr.rel (%p382) target = $region52
        $region51: #{convnet_forward.1} parent=43 // pred_region
          %s385 = sand.u32 %s28, 1
          %s386 = scalar_lea.sflag [#allocation12], %s385
          %s387 = sand.u32 %s211, 1
          %s388 = smul.addr %s387, 2
          %s389 = scalar_lea.vmem [#allocation13], %s388
          %s390 = smul.u32 2, %s28
          %s392 = ssub.s32 32, 32
          %393 = vsyncadd %s386, %s392
          %s394 = smul.addr %s390, 16
          %s395 = scalar_lea.hbm %s8, %s394
          %s397 = sshll.u32 %s389, 4
          %s398 = int_to_ptr.vmem [resolvable:$true] %s397
          %400 = dma.hbm_to_vmem [thread:$0]  %s395, 32, %s398, %s386
        $region52: #{convnet_forward.1} parent=43 // pred_fallthru
          _
        // Predicated region
        $region53: #{convnet_forward.1} parent=43 // pred_check
          %p401 = pneg %p247
        $region54: #{convnet_forward.1} parent=43 // pred_check_branch
          %403 = sbr.rel (%p401) target = $region56
        $region55: #{convnet_forward.1} parent=43 // pred_region
          %s404 = sand.u32 %s237, 1
          %s405 = scalar_lea.sflag [#allocation15], %s404
          %s406 = sand.u32 %s237, 1
          %s407 = smul.addr %s406, 2
          %s408 = scalar_lea.vmem [#allocation14], %s407
          %s409 = smul.u32 2, %s28
          %s411 = ssub.s32 32, 32
          %412 = vsyncadd %s405, %s411
          %s413 = smul.addr %s409, 16
          %s414 = scalar_lea.hbm %s9, %s413
          %s416 = sshll.u32 %s408, 4
          %s417 = int_to_ptr.vmem [resolvable:$true] %s416
          %419 = dma.hbm_to_vmem [thread:$0]  %s414, 32, %s417, %s405
        $region56: #{convnet_forward.1} parent=43 // pred_fallthru
          _
      $region44: #{convnet_forward.1} parent=5 // pred_fallthru
        _
      %p420 = scmp.le.s32.totalorder 1, %s28
      %p421 = scmp.lt.s32.totalorder %s28, 5
      %p422 = pnand %p420, %p421
      %p423 = pneg %p422
      // Predicated region
      $region57: #{convnet_forward.1} parent=5 // pred_check
        _
      $region58: #{convnet_forward.1} parent=5 // pred_check_branch
        %425 = sbr.rel (%p422) target = $region60
      $region59: #{convnet_forward.1} parent=5 // pred_region
        %s426 = ssub.s32 %s28, 1
        // Predicated region
        $region61: #{convnet_forward.1} parent=59 // pred_check
          %p427 = pneg %p91
        $region62: #{convnet_forward.1} parent=59 // pred_check_branch
          %429 = sbr.rel (%p427) target = $region64
        $region63: #{convnet_forward.1} parent=59 // pred_region
          %430 = dma.done [#allocation3], 32
        $region64: #{convnet_forward.1} parent=59 // pred_fallthru
          _
        // Predicated region
        $region65: #{convnet_forward.1} parent=59 // pred_check
          %p431 = pneg %p112
        $region66: #{convnet_forward.1} parent=59 // pred_check_branch
          %433 = sbr.rel (%p431) target = $region68
        $region67: #{convnet_forward.1} parent=59 // pred_region
          %434 = dma.done [#allocation6], 32
        $region68: #{convnet_forward.1} parent=59 // pred_fallthru
          _
        // Predicated region
        $region69: #{convnet_forward.1} parent=59 // pred_check
          %p435 = pneg %p133
        $region70: #{convnet_forward.1} parent=59 // pred_check_branch
          %437 = sbr.rel (%p435) target = $region72
        $region71: #{convnet_forward.1} parent=59 // pred_region
          %438 = dma.done [#allocation6], 32768
        $region72: #{convnet_forward.1} parent=59 // pred_fallthru
          _
        // Predicated region
        $region73: #{convnet_forward.1} parent=59 // pred_check
          %p439 = pneg %p154
        $region74: #{convnet_forward.1} parent=59 // pred_check_branch
          %441 = sbr.rel (%p439) target = $region76
        $region75: #{convnet_forward.1} parent=59 // pred_region
          %442 = dma.done [#allocation9], 64
        $region76: #{convnet_forward.1} parent=59 // pred_fallthru
          _
        // Predicated region
        $region77: #{convnet_forward.1} parent=59 // pred_check
          %p443 = pneg %p175
        $region78: #{convnet_forward.1} parent=59 // pred_check_branch
          %445 = sbr.rel (%p443) target = $region80
        $region79: #{convnet_forward.1} parent=59 // pred_region
          %446 = dma.done [#allocation9], 64
        $region80: #{convnet_forward.1} parent=59 // pred_fallthru
          _
        %s447 = sand.u32 %s33, 1
        %s448 = scalar_lea.sflag [#allocation12], %s447
        %s449 = sand.u32 %s188, 1
        %s450 = smul.addr %s449, 4096
        %s451 = scalar_lea.vmem [#allocation11], %s450
        // Predicated region
        $region81: #{convnet_forward.1} parent=59 // pred_check
          %p452 = pneg %p201
        $region82: #{convnet_forward.1} parent=59 // pred_check_branch
          %454 = sbr.rel (%p452) target = $region84
        $region83: #{convnet_forward.1} parent=59 // pred_region
          %455 = dma.done %s448, 65536
        $region84: #{convnet_forward.1} parent=59 // pred_fallthru
          _
        %s456 = sand.u32 %s33, 1
        %s457 = scalar_lea.sflag [#allocation12], %s456
        %s458 = sand.u32 %s214, 1
        %s459 = smul.addr %s458, 2
        %s460 = scalar_lea.vmem [#allocation13], %s459
        // Predicated region
        $region85: #{convnet_forward.1} parent=59 // pred_check
          %p461 = pneg %p227
        $region86: #{convnet_forward.1} parent=59 // pred_check_branch
          %463 = sbr.rel (%p461) target = $region88
        $region87: #{convnet_forward.1} parent=59 // pred_region
          %464 = dma.done %s457, 32
        $region88: #{convnet_forward.1} parent=59 // pred_fallthru
          _
        %s465 = sand.u32 %s240, 1
        %s466 = scalar_lea.sflag [#allocation15], %s465
        %s467 = sand.u32 %s240, 1
        %s468 = smul.addr %s467, 2
        %s469 = scalar_lea.vmem [#allocation14], %s468
        // Predicated region
        $region89: #{convnet_forward.1} parent=59 // pred_check
          %p470 = pneg %p253
        $region90: #{convnet_forward.1} parent=59 // pred_check_branch
          %472 = sbr.rel (%p470) target = $region92
        $region91: #{convnet_forward.1} parent=59 // pred_region
          %473 = dma.done %s466, 32
        $region92: #{convnet_forward.1} parent=59 // pred_fallthru
          _
        %p474 = pneg %p49
        %p475 = pneg %p46
        %p476 = pneg %p70
        %p477 = pneg %p67
        %p478 = pneg %p91
        %p479 = pneg %p88
        %p480 = pneg %p112
        %p481 = pneg %p109
        %p482 = pneg %p133
        %p483 = pneg %p130
        %p484 = pneg %p154
        %p485 = pneg %p151
        %p486 = pneg %p175
        %p487 = pneg %p172
        %s488 = sand.u32 %s33, 1
        %s489 = scalar_lea.sflag [#allocation12], %s488
        %s490 = sand.u32 %s188, 1
        %s491 = smul.addr %s490, 4096
        %s492 = scalar_lea.vmem [#allocation11], %s491
        %p493 = pneg %p201
        %p494 = pneg %p198
        %s495 = sand.u32 %s33, 1
        %s496 = scalar_lea.sflag [#allocation12], %s495
        %s497 = sand.u32 %s214, 1
        %s498 = smul.addr %s497, 2
        %s499 = scalar_lea.vmem [#allocation13], %s498
        %p500 = pneg %p227
        %p501 = pneg %p224
        %s502 = sand.u32 %s240, 1
        %s503 = scalar_lea.sflag [#allocation15], %s502
        %s504 = sand.u32 %s240, 1
        %s505 = smul.addr %s504, 2
        %s506 = scalar_lea.vmem [#allocation14], %s505
        %p507 = pneg %p253
        %p508 = pneg %p250
        %p509 = pneg %p279
        %p510 = pneg %p276
        %s511 = sand.u32 %s266, 1
        %s512 = scalar_lea.sflag [#allocation4], %s511
        %s513 = sand.u32 %s266, 1
        %s514 = smul.addr %s513, 16
        %s515 = scalar_lea.vmem [#allocation16], %s514
        %s516 = smul.u32 2, %s33
        %s517 = smul.u32 2, %s33
        %s518 = smul.u32 2, %s33
        %s519 = smul.u32 2, %s33
        %v520 = vld [vmem:[%s0] sm:$0xff]
        %v521 = vld [vmem:[%s0 + $0x8] sm:$0xff]
        %v522 = vld [vmem:[%s0 + $0x10] sm:$0xff]
        %v523 = vld [vmem:[%s0 + $0x18] sm:$0xff]
        %v524 = vld [vmem:[%s1] sm:$0x77]
        %v525 = vunpack.c.l.bf16 %v524
        %v526 = vunpack.c.h.bf16 %v524
        %528 = vset.pattern.permute.xlu0 0
        %529 = vperm.xlu0 %528, %v520
        %v530 = vpop.permute.xlu0 %529
        %533 = vset.pattern.permute.xlu0 0
        %534 = vperm.xlu0 %533, %v521
        %v535 = vpop.permute.xlu0 %534
        %538 = vset.pattern.permute.xlu0 0
        %539 = vperm.xlu0 %538, %v522
        %v540 = vpop.permute.xlu0 %539
        %543 = vset.pattern.permute.xlu0 0
        %544 = vperm.xlu0 %543, %v523
        %v545 = vpop.permute.xlu0 %544
        %v547 = vlaneseq
        %v548 = vshrl.u32 %v547, 7
        %v549 = vsub.s32 0, %v548
        %v550 = vrot.slane %v525, %v549
        %v551 = vlaneseq
        %v552 = vshrl.u32 %v551, 7
        %v553 = vsub.s32 0, %v552
        %v554 = vrot.slane %v526, %v553
        %v555 = vmul.f32 %v530, %v550
        %v556 = vmul.f32 %v530, %v554
        %v557 = vmul.f32 %v535, %v550
        %v558 = vmul.f32 %v535, %v554
        %v559 = vmul.f32 %v540, %v550
        %v560 = vmul.f32 %v540, %v554
        %v561 = vmul.f32 %v545, %v550
        %v562 = vmul.f32 %v545, %v554
        %v563 = vadd.f32 %v555, 0.0
        %v564 = vadd.f32 %v556, 0.0
        %v565 = vadd.f32 %v557, 0.0
        %v566 = vadd.f32 %v558, 0.0
        %v567 = vadd.f32 %v559, 0.0
        %v568 = vadd.f32 %v560, 0.0
        %v569 = vadd.f32 %v561, 0.0
        %v570 = vadd.f32 %v562, 0.0
        %571 = vset.pattern.permute.xlu0 1
        %572 = vperm.xlu0 %571, %v520
        %v573 = vpop.permute.xlu0 %572
        %575 = vset.pattern.permute.xlu0 1
        %576 = vperm.xlu0 %575, %v521
        %v577 = vpop.permute.xlu0 %576
        %579 = vset.pattern.permute.xlu0 1
        %580 = vperm.xlu0 %579, %v522
        %v581 = vpop.permute.xlu0 %580
        %583 = vset.pattern.permute.xlu0 1
        %584 = vperm.xlu0 %583, %v523
        %v585 = vpop.permute.xlu0 %584
        %v587 = vlaneseq
        %v588 = vshrl.u32 %v587, 7
        %v589 = vsub.s32 1, %v588
        %v590 = vrot.slane %v525, %v589
        %v591 = vlaneseq
        %v592 = vshrl.u32 %v591, 7
        %v593 = vsub.s32 1, %v592
        %v594 = vrot.slane %v526, %v593
        %v595 = vmul.f32 %v573, %v590
        %v596 = vmul.f32 %v573, %v594
        %v597 = vmul.f32 %v577, %v590
        %v598 = vmul.f32 %v577, %v594
        %v599 = vmul.f32 %v581, %v590
        %v600 = vmul.f32 %v581, %v594
        %v601 = vmul.f32 %v585, %v590
        %v602 = vmul.f32 %v585, %v594
        %v603 = vadd.f32 %v563, %v595
        %v604 = vadd.f32 %v564, %v596
        %v605 = vadd.f32 %v565, %v597
        %v606 = vadd.f32 %v566, %v598
        %v607 = vadd.f32 %v567, %v599
        %v608 = vadd.f32 %v568, %v600
        %v609 = vadd.f32 %v569, %v601
        %v610 = vadd.f32 %v570, %v602
        %611 = vset.pattern.permute.xlu0 2
        %612 = vperm.xlu0 %611, %v520
        %v613 = vpop.permute.xlu0 %612
        %615 = vset.pattern.permute.xlu0 2
        %616 = vperm.xlu0 %615, %v521
        %v617 = vpop.permute.xlu0 %616
        %619 = vset.pattern.permute.xlu0 2
        %620 = vperm.xlu0 %619, %v522
        %v621 = vpop.permute.xlu0 %620
        %623 = vset.pattern.permute.xlu0 2
        %624 = vperm.xlu0 %623, %v523
        %v625 = vpop.permute.xlu0 %624
        %v627 = vlaneseq
        %v628 = vshrl.u32 %v627, 7
        %v629 = vsub.s32 2, %v628
        %v630 = vrot.slane %v525, %v629
        %v631 = vlaneseq
        %v632 = vshrl.u32 %v631, 7
        %v633 = vsub.s32 2, %v632
        %v634 = vrot.slane %v526, %v633
        %v635 = vmul.f32 %v613, %v630
        %v636 = vmul.f32 %v613, %v634
        %v637 = vmul.f32 %v617, %v630
        %v638 = vmul.f32 %v617, %v634
        %v639 = vmul.f32 %v621, %v630
        %v640 = vmul.f32 %v621, %v634
        %v641 = vmul.f32 %v625, %v630
        %v642 = vmul.f32 %v625, %v634
        %v643 = vadd.f32 %v603, %v635
        %v644 = vadd.f32 %v604, %v636
        %v645 = vadd.f32 %v605, %v637
        %v646 = vadd.f32 %v606, %v638
        %v647 = vadd.f32 %v607, %v639
        %v648 = vadd.f32 %v608, %v640
        %v649 = vadd.f32 %v609, %v641
        %v650 = vadd.f32 %v610, %v642
        %v651 = vlaneseq
        %v652 = vshrl.u32 %v651, 7
        %v653 = vsub.s32 3, %v652
        %v654 = vrot.slane %v525, %v653
        %v655 = vlaneseq
        %v656 = vshrl.u32 %v655, 7
        %v657 = vsub.s32 3, %v656
        %v658 = vrot.slane %v526, %v657
        %v659 = vmul.f32 %v530, %v654
        %v660 = vmul.f32 %v530, %v658
        %v661 = vmul.f32 %v535, %v654
        %v662 = vmul.f32 %v535, %v658
        %v663 = vmul.f32 %v540, %v654
        %v664 = vmul.f32 %v540, %v658
        %v665 = vmul.f32 %v545, %v654
        %v666 = vmul.f32 %v545, %v658
        %vm675 = vcmask 1046528
        %v676 = vrot.slane %v659, 1
        %v677 = vrot.slane %v661, 1
        %v678 = vsel %vm675, %v676, %v677
        %v679 = vrot.slane %v660, 1
        %v680 = vrot.slane %v662, 1
        %v681 = vsel %vm675, %v679, %v680
        %v682 = vrot.slane %v663, 1
        %v683 = vrot.slane %v665, 1
        %v684 = vsel %vm675, %v682, %v683
        %v685 = vrot.slane %v664, 1
        %v686 = vrot.slane %v666, 1
        %v687 = vsel %vm675, %v685, %v686
        %v696 = vadd.f32 %v643, %v678
        %v697 = vadd.f32 %v644, %v681
        %v698 = vadd.f32 %v645, %v677
        %v699 = vadd.f32 %v646, %v680
        %v700 = vadd.f32 %v647, %v684
        %v701 = vadd.f32 %v648, %v687
        %v702 = vadd.f32 %v649, %v683
        %v703 = vadd.f32 %v650, %v686
        %v704 = vlaneseq
        %v705 = vshrl.u32 %v704, 7
        %v706 = vsub.s32 4, %v705
        %v707 = vrot.slane %v525, %v706
        %v708 = vlaneseq
        %v709 = vshrl.u32 %v708, 7
        %v710 = vsub.s32 4, %v709
        %v711 = vrot.slane %v526, %v710
        %v712 = vmul.f32 %v573, %v707
        %v713 = vmul.f32 %v573, %v711
        %v714 = vmul.f32 %v577, %v707
        %v715 = vmul.f32 %v577, %v711
        %v716 = vmul.f32 %v581, %v707
        %v717 = vmul.f32 %v581, %v711
        %v718 = vmul.f32 %v585, %v707
        %v719 = vmul.f32 %v585, %v711
        %v728 = vrot.slane %v712, 1
        %v729 = vrot.slane %v714, 1
        %v730 = vsel %vm675, %v728, %v729
        %v731 = vrot.slane %v713, 1
        %v732 = vrot.slane %v715, 1
        %v733 = vsel %vm675, %v731, %v732
        %v734 = vrot.slane %v716, 1
        %v735 = vrot.slane %v718, 1
        %v736 = vsel %vm675, %v734, %v735
        %v737 = vrot.slane %v717, 1
        %v738 = vrot.slane %v719, 1
        %v739 = vsel %vm675, %v737, %v738
        %v748 = vadd.f32 %v696, %v730
        %v749 = vadd.f32 %v697, %v733
        %v750 = vadd.f32 %v698, %v729
        %v751 = vadd.f32 %v699, %v732
        %v752 = vadd.f32 %v700, %v736
        %v753 = vadd.f32 %v701, %v739
        %v754 = vadd.f32 %v702, %v735
        %v755 = vadd.f32 %v703, %v738
        %v756 = vlaneseq
        %v757 = vshrl.u32 %v756, 7
        %v758 = vsub.s32 5, %v757
        %v759 = vrot.slane %v525, %v758
        %v760 = vlaneseq
        %v761 = vshrl.u32 %v760, 7
        %v762 = vsub.s32 5, %v761
        %v763 = vrot.slane %v526, %v762
        %v764 = vmul.f32 %v613, %v759
        %v765 = vmul.f32 %v613, %v763
        %v766 = vmul.f32 %v617, %v759
        %v767 = vmul.f32 %v617, %v763
        %v768 = vmul.f32 %v621, %v759
        %v769 = vmul.f32 %v621, %v763
        %v770 = vmul.f32 %v625, %v759
        %v771 = vmul.f32 %v625, %v763
        %v780 = vrot.slane %v764, 1
        %v781 = vrot.slane %v766, 1
        %v782 = vsel %vm675, %v780, %v781
        %v783 = vrot.slane %v765, 1
        %v784 = vrot.slane %v767, 1
        %v785 = vsel %vm675, %v783, %v784
        %v786 = vrot.slane %v768, 1
        %v787 = vrot.slane %v770, 1
        %v788 = vsel %vm675, %v786, %v787
        %v789 = vrot.slane %v769, 1
        %v790 = vrot.slane %v771, 1
        %v791 = vsel %vm675, %v789, %v790
        %v800 = vadd.f32 %v748, %v782
        %v801 = vadd.f32 %v749, %v785
        %v802 = vadd.f32 %v750, %v781
        %v803 = vadd.f32 %v751, %v784
        %v804 = vadd.f32 %v752, %v788
        %v805 = vadd.f32 %v753, %v791
        %v806 = vadd.f32 %v754, %v787
        %v807 = vadd.f32 %v755, %v790
        %v808 = vld [vmem:[#allocation2] sm:$0x3]
        %v809 = vld [vmem:[#allocation5] sm:$0x3]
        %v810 = vsel %vm675, %v802, 0.0
        %v811 = vadd.f32 %v800, %v810
        %v812 = vadd.f32 %v811, %v804
        %v813 = vsel %vm675, %v806, 0.0
        %v814 = vadd.f32 %v812, %v813
        %v815 = vrot.slane %v814, 4
        %v816 = vadd.f32 %v814, %v815
        %v817 = vrot.slane %v816, 2
        %v818 = vadd.f32 %v816, %v817
        %v819 = vrot.slane %v818, 1
        %v820 = vadd.f32 %v818, %v819
        %v821 = vsel %vm675, %v803, 0.0
        %v822 = vadd.f32 %v801, %v821
        %v823 = vadd.f32 %v822, %v805
        %v824 = vsel %vm675, %v807, 0.0
        %v825 = vadd.f32 %v823, %v824
        %v826 = vrot.slane %v825, 4
        %v827 = vadd.f32 %v825, %v826
        %v828 = vrot.slane %v827, 2
        %v829 = vadd.f32 %v827, %v828
        %v830 = vrot.slane %v829, 1
        %v831 = vadd.f32 %v829, %v830
        %v832 = vrcp.pop 30.0
        %v833 = vmul.f32 %v820, %v832
        %v834 = vmul.f32 %v831, %v832
        %v835 = vsub.f32 %v800, %v833
        %v836 = vsub.f32 %v801, %v834
        %v837 = vsub.f32 %v802, %v833
        %v838 = vsub.f32 %v803, %v834
        %v839 = vsub.f32 %v804, %v833
        %v840 = vsub.f32 %v805, %v834
        %v841 = vsub.f32 %v806, %v833
        %v842 = vsub.f32 %v807, %v834
        %v843 = vmul.f32 %v835, %v835
        %v844 = vmul.f32 %v836, %v836
        %v845 = vmul.f32 %v837, %v837
        %v846 = vmul.f32 %v838, %v838
        %v847 = vmul.f32 %v839, %v839
        %v848 = vmul.f32 %v840, %v840
        %v849 = vmul.f32 %v841, %v841
        %v850 = vmul.f32 %v842, %v842
        %v851 = vsel %vm675, %v845, 0.0
        %v852 = vadd.f32 %v843, %v851
        %v853 = vadd.f32 %v852, %v847
        %v854 = vsel %vm675, %v849, 0.0
        %v855 = vadd.f32 %v853, %v854
        %v856 = vrot.slane %v855, 4
        %v857 = vadd.f32 %v855, %v856
        %v858 = vrot.slane %v857, 2
        %v859 = vadd.f32 %v857, %v858
        %v860 = vrot.slane %v859, 1
        %v861 = vadd.f32 %v859, %v860
        %v862 = vsel %vm675, %v846, 0.0
        %v863 = vadd.f32 %v844, %v862
        %v864 = vadd.f32 %v863, %v848
        %v865 = vsel %vm675, %v850, 0.0
        %v866 = vadd.f32 %v864, %v865
        %v867 = vrot.slane %v866, 4
        %v868 = vadd.f32 %v866, %v867
        %v869 = vrot.slane %v868, 2
        %v870 = vadd.f32 %v868, %v869
        %v871 = vrot.slane %v870, 1
        %v872 = vadd.f32 %v870, %v871
        %v873 = vmul.f32 %v861, %v832
        %v874 = vmul.f32 %v872, %v832
        %v875 = vadd.f32 %v873, 1e-05
        %v876 = vadd.f32 %v874, 1e-05
        %v877 = vrsqrt.pop %v875
        %v878 = vrsqrt.pop %v876
        %v879 = vmul.f32 %v835, %v877
        %v880 = vmul.f32 %v836, %v878
        %v881 = vmul.f32 %v837, %v877
        %v882 = vmul.f32 %v838, %v878
        %v883 = vmul.f32 %v839, %v877
        %v884 = vmul.f32 %v840, %v878
        %v885 = vmul.f32 %v841, %v877
        %v886 = vmul.f32 %v842, %v878
        %v888 = vlaneseq
        %v889 = vshrl.u32 %v888, 7
        %v890 = vsub.s32 0, %v889
        %v891 = vrot.slane %v808, %v890
        %v892 = vlaneseq
        %v893 = vshrl.u32 %v892, 7
        %v894 = vsub.s32 1, %v893
        %v895 = vrot.slane %v808, %v894
        %v898 = vmul.f32 %v879, %v891
        %v899 = vmul.f32 %v880, %v895
        %v900 = vmul.f32 %v881, %v891
        %v901 = vmul.f32 %v882, %v895
        %v902 = vmul.f32 %v883, %v891
        %v903 = vmul.f32 %v884, %v895
        %v904 = vmul.f32 %v885, %v891
        %v905 = vmul.f32 %v886, %v895
        %v907 = vlaneseq
        %v908 = vshrl.u32 %v907, 7
        %v909 = vsub.s32 0, %v908
        %v910 = vrot.slane %v809, %v909
        %v911 = vlaneseq
        %v912 = vshrl.u32 %v911, 7
        %v913 = vsub.s32 1, %v912
        %v914 = vrot.slane %v809, %v913
        %v917 = vadd.f32 %v898, %v910
        %v918 = vadd.f32 %v899, %v914
        %v919 = vadd.f32 %v900, %v910
        %v920 = vadd.f32 %v901, %v914
        %v921 = vadd.f32 %v902, %v910
        %v922 = vadd.f32 %v903, %v914
        %v923 = vadd.f32 %v904, %v910
        %v924 = vadd.f32 %v905, %v914
        %v925 = vmax.f32 %v917, 0.0
        %v926 = vmax.f32 %v918, 0.0
        %v927 = vmax.f32 %v919, 0.0
        %v928 = vmax.f32 %v920, 0.0
        %v929 = vmax.f32 %v921, 0.0
        %v930 = vmax.f32 %v922, 0.0
        %v931 = vmax.f32 %v923, 0.0
        %v932 = vmax.f32 %v924, 0.0
        %v933 = vld [vmem:[#allocation7] sm:$0xff]
        %v934 = vld [vmem:[#allocation7 + $0x8] sm:$0xff]
        %v935 = vld [vmem:[#allocation7 + $0x10] sm:$0xff]
        %v936 = vld [vmem:[#allocation7 + $0x18] sm:$0xff]
        %v937 = vld [vmem:[#allocation7 + $0x20] sm:$0xff]
        %v938 = vld [vmem:[#allocation7 + $0x28] sm:$0xff]
        %v939 = vld [vmem:[#allocation7 + $0x30] sm:$0xff]
        %v940 = vld [vmem:[#allocation7 + $0x38] sm:$0xff]
        %v941 = vld [vmem:[#allocation7 + $0x40] sm:$0xff]
        %v942 = vld [vmem:[#allocation7 + $0x48] sm:$0xff]
        %v943 = vld [vmem:[#allocation7 + $0x50] sm:$0xff]
        %v944 = vld [vmem:[#allocation7 + $0x58] sm:$0xff]
        %v945 = vld [vmem:[#allocation7 + $0x60] sm:$0xff]
        %v946 = vld [vmem:[#allocation7 + $0x68] sm:$0xff]
        %v947 = vld [vmem:[#allocation7 + $0x70] sm:$0xff]
        %v948 = vld [vmem:[#allocation7 + $0x78] sm:$0xff]
        %v949 = vld [vmem:[#allocation7 + $0x80] sm:$0xff]
        %v950 = vld [vmem:[#allocation7 + $0x88] sm:$0xff]
        %v951 = vld [vmem:[#allocation7 + $0x90] sm:$0xff]
        %v952 = vld [vmem:[#allocation7 + $0x98] sm:$0xff]
        %v953 = vld [vmem:[#allocation7 + $0xa0] sm:$0xff]
        %v954 = vld [vmem:[#allocation7 + $0xa8] sm:$0xff]
        %v955 = vld [vmem:[#allocation7 + $0xb0] sm:$0xff]
        %v956 = vld [vmem:[#allocation7 + $0xb8] sm:$0xff]
        %v957 = vld [vmem:[#allocation7 + $0xc0] sm:$0xff]
        %v958 = vld [vmem:[#allocation7 + $0xc8] sm:$0xff]
        %v959 = vld [vmem:[#allocation7 + $0xd0] sm:$0xff]
        %v960 = vld [vmem:[#allocation7 + $0xd8] sm:$0xff]
        %v961 = vld [vmem:[#allocation7 + $0xe0] sm:$0xff]
        %v962 = vld [vmem:[#allocation7 + $0xe8] sm:$0xff]
        %v963 = vld [vmem:[#allocation7 + $0xf0] sm:$0xff]
        %v964 = vld [vmem:[#allocation7 + $0xf8] sm:$0xff]
        %v965 = vld [vmem:[#allocation7 + $0x100] sm:$0xff]
        %v966 = vld [vmem:[#allocation7 + $0x108] sm:$0xff]
        %v967 = vld [vmem:[#allocation7 + $0x110] sm:$0xff]
        %v968 = vld [vmem:[#allocation7 + $0x118] sm:$0xff]
        %v969 = vld [vmem:[#allocation7 + $0x120] sm:$0xff]
        %v970 = vld [vmem:[#allocation7 + $0x128] sm:$0xff]
        %v971 = vld [vmem:[#allocation7 + $0x130] sm:$0xff]
        %v972 = vld [vmem:[#allocation7 + $0x138] sm:$0xff]
        %v973 = vld [vmem:[#allocation7 + $0x140] sm:$0xff]
        %v974 = vld [vmem:[#allocation7 + $0x148] sm:$0xff]
        %v975 = vld [vmem:[#allocation7 + $0x150] sm:$0xff]
        %v976 = vld [vmem:[#allocation7 + $0x158] sm:$0xff]
        %v977 = vld [vmem:[#allocation7 + $0x160] sm:$0xff]
        %v978 = vld [vmem:[#allocation7 + $0x168] sm:$0xff]
        %v979 = vld [vmem:[#allocation7 + $0x170] sm:$0xff]
        %v980 = vld [vmem:[#allocation7 + $0x178] sm:$0xff]
        %v981 = vld [vmem:[#allocation7 + $0x180] sm:$0xff]
        %v982 = vld [vmem:[#allocation7 + $0x188] sm:$0xff]
        %v983 = vld [vmem:[#allocation7 + $0x190] sm:$0xff]
        %v984 = vld [vmem:[#allocation7 + $0x198] sm:$0xff]
        %v985 = vld [vmem:[#allocation7 + $0x1a0] sm:$0xff]
        %v986 = vld [vmem:[#allocation7 + $0x1a8] sm:$0xff]
        %v987 = vld [vmem:[#allocation7 + $0x1b0] sm:$0xff]
        %v988 = vld [vmem:[#allocation7 + $0x1b8] sm:$0xff]
        %v989 = vld [vmem:[#allocation7 + $0x1c0] sm:$0xff]
        %v990 = vld [vmem:[#allocation7 + $0x1c8] sm:$0xff]
        %v991 = vld [vmem:[#allocation7 + $0x1d0] sm:$0xff]
        %v992 = vld [vmem:[#allocation7 + $0x1d8] sm:$0xff]
        %v993 = vld [vmem:[#allocation7 + $0x1e0] sm:$0xff]
        %v994 = vld [vmem:[#allocation7 + $0x1e8] sm:$0xff]
        %v995 = vld [vmem:[#allocation7 + $0x1f0] sm:$0xff]
        %v996 = vld [vmem:[#allocation7 + $0x1f8] sm:$0xff]
        %v997 = vld [vmem:[#allocation7 + $0x200] sm:$0xff]
        %v998 = vld [vmem:[#allocation7 + $0x208] sm:$0xff]
        %v999 = vld [vmem:[#allocation7 + $0x210] sm:$0xff]
        %v1000 = vld [vmem:[#allocation7 + $0x218] sm:$0xff]
        %v1001 = vld [vmem:[#allocation7 + $0x220] sm:$0xff]
        %v1002 = vld [vmem:[#allocation7 + $0x228] sm:$0xff]
        %v1003 = vld [vmem:[#allocation7 + $0x230] sm:$0xff]
        %v1004 = vld [vmem:[#allocation7 + $0x238] sm:$0xff]
        %v1005 = vld [vmem:[#allocation7 + $0x240] sm:$0xff]
        %v1006 = vld [vmem:[#allocation7 + $0x248] sm:$0xff]
        %v1007 = vld [vmem:[#allocation7 + $0x250] sm:$0xff]
        %v1008 = vld [vmem:[#allocation7 + $0x258] sm:$0xff]
        %v1009 = vld [vmem:[#allocation7 + $0x260] sm:$0xff]
        %v1010 = vld [vmem:[#allocation7 + $0x268] sm:$0xff]
        %v1011 = vld [vmem:[#allocation7 + $0x270] sm:$0xff]
        %v1012 = vld [vmem:[#allocation7 + $0x278] sm:$0xff]
        %v1013 = vld [vmem:[#allocation7 + $0x280] sm:$0xff]
        %v1014 = vld [vmem:[#allocation7 + $0x288] sm:$0xff]
        %v1015 = vld [vmem:[#allocation7 + $0x290] sm:$0xff]
        %v1016 = vld [vmem:[#allocation7 + $0x298] sm:$0xff]
        %v1017 = vld [vmem:[#allocation7 + $0x2a0] sm:$0xff]
        %v1018 = vld [vmem:[#allocation7 + $0x2a8] sm:$0xff]
        %v1019 = vld [vmem:[#allocation7 + $0x2b0] sm:$0xff]
        %v1020 = vld [vmem:[#allocation7 + $0x2b8] sm:$0xff]
        %v1021 = vld [vmem:[#allocation7 + $0x2c0] sm:$0xff]
        %v1022 = vld [vmem:[#allocation7 + $0x2c8] sm:$0xff]
        %v1023 = vld [vmem:[#allocation7 + $0x2d0] sm:$0xff]
        %v1024 = vld [vmem:[#allocation7 + $0x2d8] sm:$0xff]
        %v1025 = vld [vmem:[#allocation7 + $0x2e0] sm:$0xff]
        %v1026 = vld [vmem:[#allocation7 + $0x2e8] sm:$0xff]
        %v1027 = vld [vmem:[#allocation7 + $0x2f0] sm:$0xff]
        %v1028 = vld [vmem:[#allocation7 + $0x2f8] sm:$0xff]
        %v1029 = vld [vmem:[#allocation7 + $0x300] sm:$0xff]
        %v1030 = vld [vmem:[#allocation7 + $0x308] sm:$0xff]
        %v1031 = vld [vmem:[#allocation7 + $0x310] sm:$0xff]
        %v1032 = vld [vmem:[#allocation7 + $0x318] sm:$0xff]
        %v1033 = vld [vmem:[#allocation7 + $0x320] sm:$0xff]
        %v1034 = vld [vmem:[#allocation7 + $0x328] sm:$0xff]
        %v1035 = vld [vmem:[#allocation7 + $0x330] sm:$0xff]
        %v1036 = vld [vmem:[#allocation7 + $0x338] sm:$0xff]
        %v1037 = vld [vmem:[#allocation7 + $0x340] sm:$0xff]
        %v1038 = vld [vmem:[#allocation7 + $0x348] sm:$0xff]
        %v1039 = vld [vmem:[#allocation7 + $0x350] sm:$0xff]
        %v1040 = vld [vmem:[#allocation7 + $0x358] sm:$0xff]
        %v1041 = vld [vmem:[#allocation7 + $0x360] sm:$0xff]
        %v1042 = vld [vmem:[#allocation7 + $0x368] sm:$0xff]
        %v1043 = vld [vmem:[#allocation7 + $0x370] sm:$0xff]
        %v1044 = vld [vmem:[#allocation7 + $0x378] sm:$0xff]
        %v1045 = vld [vmem:[#allocation7 + $0x380] sm:$0xff]
        %v1046 = vld [vmem:[#allocation7 + $0x388] sm:$0xff]
        %v1047 = vld [vmem:[#allocation7 + $0x390] sm:$0xff]
        %v1048 = vld [vmem:[#allocation7 + $0x398] sm:$0xff]
        %v1049 = vld [vmem:[#allocation7 + $0x3a0] sm:$0xff]
        %v1050 = vld [vmem:[#allocation7 + $0x3a8] sm:$0xff]
        %v1051 = vld [vmem:[#allocation7 + $0x3b0] sm:$0xff]
        %v1052 = vld [vmem:[#allocation7 + $0x3b8] sm:$0xff]
        %v1053 = vld [vmem:[#allocation7 + $0x3c0] sm:$0xff]
        %v1054 = vld [vmem:[#allocation7 + $0x3c8] sm:$0xff]
        %v1055 = vld [vmem:[#allocation7 + $0x3d0] sm:$0xff]
        %v1056 = vld [vmem:[#allocation7 + $0x3d8] sm:$0xff]
        %v1057 = vld [vmem:[#allocation7 + $0x3e0] sm:$0xff]
        %v1058 = vld [vmem:[#allocation7 + $0x3e8] sm:$0xff]
        %v1059 = vld [vmem:[#allocation7 + $0x3f0] sm:$0xff]
        %v1060 = vld [vmem:[#allocation7 + $0x3f8] sm:$0xff]
        %v1061 = vld [vmem:[#allocation7 + $0x400] sm:$0xff]
        %v1062 = vld [vmem:[#allocation7 + $0x408] sm:$0xff]
        %v1063 = vld [vmem:[#allocation7 + $0x410] sm:$0xff]
        %v1064 = vld [vmem:[#allocation7 + $0x418] sm:$0xff]
        %v1065 = vld [vmem:[#allocation7 + $0x420] sm:$0xff]
        %v1066 = vld [vmem:[#allocation7 + $0x428] sm:$0xff]
        %v1067 = vld [vmem:[#allocation7 + $0x430] sm:$0xff]
        %v1068 = vld [vmem:[#allocation7 + $0x438] sm:$0xff]
        %v1069 = vld [vmem:[#allocation7 + $0x440] sm:$0xff]
        %v1070 = vld [vmem:[#allocation7 + $0x448] sm:$0xff]
        %v1071 = vld [vmem:[#allocation7 + $0x450] sm:$0xff]
        %v1072 = vld [vmem:[#allocation7 + $0x458] sm:$0xff]
        %v1073 = vld [vmem:[#allocation7 + $0x460] sm:$0xff]
        %v1074 = vld [vmem:[#allocation7 + $0x468] sm:$0xff]
        %v1075 = vld [vmem:[#allocation7 + $0x470] sm:$0xff]
        %v1076 = vld [vmem:[#allocation7 + $0x478] sm:$0xff]
        %v1077 = vld [vmem:[#allocation7 + $0x480] sm:$0xff]
        %v1078 = vld [vmem:[#allocation7 + $0x488] sm:$0xff]
        %v1079 = vld [vmem:[#allocation7 + $0x490] sm:$0xff]
        %v1080 = vld [vmem:[#allocation7 + $0x498] sm:$0xff]
        %v1081 = vld [vmem:[#allocation7 + $0x4a0] sm:$0xff]
        %v1082 = vld [vmem:[#allocation7 + $0x4a8] sm:$0xff]
        %v1083 = vld [vmem:[#allocation7 + $0x4b0] sm:$0xff]
        %v1084 = vld [vmem:[#allocation7 + $0x4b8] sm:$0xff]
        %v1085 = vld [vmem:[#allocation7 + $0x4c0] sm:$0xff]
        %v1086 = vld [vmem:[#allocation7 + $0x4c8] sm:$0xff]
        %v1087 = vld [vmem:[#allocation7 + $0x4d0] sm:$0xff]
        %v1088 = vld [vmem:[#allocation7 + $0x4d8] sm:$0xff]
        %v1089 = vld [vmem:[#allocation7 + $0x4e0] sm:$0xff]
        %v1090 = vld [vmem:[#allocation7 + $0x4e8] sm:$0xff]
        %v1091 = vld [vmem:[#allocation7 + $0x4f0] sm:$0xff]
        %v1092 = vld [vmem:[#allocation7 + $0x4f8] sm:$0xff]
        %v1093 = vld [vmem:[#allocation7 + $0x500] sm:$0xff]
        %v1094 = vld [vmem:[#allocation7 + $0x508] sm:$0xff]
        %v1095 = vld [vmem:[#allocation7 + $0x510] sm:$0xff]
        %v1096 = vld [vmem:[#allocation7 + $0x518] sm:$0xff]
        %v1097 = vld [vmem:[#allocation7 + $0x520] sm:$0xff]
        %v1098 = vld [vmem:[#allocation7 + $0x528] sm:$0xff]
        %v1099 = vld [vmem:[#allocation7 + $0x530] sm:$0xff]
        %v1100 = vld [vmem:[#allocation7 + $0x538] sm:$0xff]
        %v1101 = vld [vmem:[#allocation7 + $0x540] sm:$0xff]
        %v1102 = vld [vmem:[#allocation7 + $0x548] sm:$0xff]
        %v1103 = vld [vmem:[#allocation7 + $0x550] sm:$0xff]
        %v1104 = vld [vmem:[#allocation7 + $0x558] sm:$0xff]
        %v1105 = vld [vmem:[#allocation7 + $0x560] sm:$0xff]
        %v1106 = vld [vmem:[#allocation7 + $0x568] sm:$0xff]
        %v1107 = vld [vmem:[#allocation7 + $0x570] sm:$0xff]
        %v1108 = vld [vmem:[#allocation7 + $0x578] sm:$0xff]
        %v1109 = vld [vmem:[#allocation7 + $0x580] sm:$0xff]
        %v1110 = vld [vmem:[#allocation7 + $0x588] sm:$0xff]
        %v1111 = vld [vmem:[#allocation7 + $0x590] sm:$0xff]
        %v1112 = vld [vmem:[#allocation7 + $0x598] sm:$0xff]
        %v1113 = vld [vmem:[#allocation7 + $0x5a0] sm:$0xff]
        %v1114 = vld [vmem:[#allocation7 + $0x5a8] sm:$0xff]
        %v1115 = vld [vmem:[#allocation7 + $0x5b0] sm:$0xff]
        %v1116 = vld [vmem:[#allocation7 + $0x5b8] sm:$0xff]
        %v1117 = vld [vmem:[#allocation7 + $0x5c0] sm:$0xff]
        %v1118 = vld [vmem:[#allocation7 + $0x5c8] sm:$0xff]
        %v1119 = vld [vmem:[#allocation7 + $0x5d0] sm:$0xff]
        %v1120 = vld [vmem:[#allocation7 + $0x5d8] sm:$0xff]
        %v1121 = vld [vmem:[#allocation7 + $0x5e0] sm:$0xff]
        %v1122 = vld [vmem:[#allocation7 + $0x5e8] sm:$0xff]
        %v1123 = vld [vmem:[#allocation7 + $0x5f0] sm:$0xff]
        %v1124 = vld [vmem:[#allocation7 + $0x5f8] sm:$0xff]
        %v1125 = vld [vmem:[#allocation7 + $0x600] sm:$0xff]
        %v1126 = vld [vmem:[#allocation7 + $0x608] sm:$0xff]
        %v1127 = vld [vmem:[#allocation7 + $0x610] sm:$0xff]
        %v1128 = vld [vmem:[#allocation7 + $0x618] sm:$0xff]
        %v1129 = vld [vmem:[#allocation7 + $0x620] sm:$0xff]
        %v1130 = vld [vmem:[#allocation7 + $0x628] sm:$0xff]
        %v1131 = vld [vmem:[#allocation7 + $0x630] sm:$0xff]
        %v1132 = vld [vmem:[#allocation7 + $0x638] sm:$0xff]
        %v1133 = vld [vmem:[#allocation7 + $0x640] sm:$0xff]
        %v1134 = vld [vmem:[#allocation7 + $0x648] sm:$0xff]
        %v1135 = vld [vmem:[#allocation7 + $0x650] sm:$0xff]
        %v1136 = vld [vmem:[#allocation7 + $0x658] sm:$0xff]
        %v1137 = vld [vmem:[#allocation7 + $0x660] sm:$0xff]
        %v1138 = vld [vmem:[#allocation7 + $0x668] sm:$0xff]
        %v1139 = vld [vmem:[#allocation7 + $0x670] sm:$0xff]
        %v1140 = vld [vmem:[#allocation7 + $0x678] sm:$0xff]
        %v1141 = vld [vmem:[#allocation7 + $0x680] sm:$0xff]
        %v1142 = vld [vmem:[#allocation7 + $0x688] sm:$0xff]
        %v1143 = vld [vmem:[#allocation7 + $0x690] sm:$0xff]
        %v1144 = vld [vmem:[#allocation7 + $0x698] sm:$0xff]
        %v1145 = vld [vmem:[#allocation7 + $0x6a0] sm:$0xff]
        %v1146 = vld [vmem:[#allocation7 + $0x6a8] sm:$0xff]
        %v1147 = vld [vmem:[#allocation7 + $0x6b0] sm:$0xff]
        %v1148 = vld [vmem:[#allocation7 + $0x6b8] sm:$0xff]
        %v1149 = vld [vmem:[#allocation7 + $0x6c0] sm:$0xff]
        %v1150 = vld [vmem:[#allocation7 + $0x6c8] sm:$0xff]
        %v1151 = vld [vmem:[#allocation7 + $0x6d0] sm:$0xff]
        %v1152 = vld [vmem:[#allocation7 + $0x6d8] sm:$0xff]
        %v1153 = vld [vmem:[#allocation7 + $0x6e0] sm:$0xff]
        %v1154 = vld [vmem:[#allocation7 + $0x6e8] sm:$0xff]
        %v1155 = vld [vmem:[#allocation7 + $0x6f0] sm:$0xff]
        %v1156 = vld [vmem:[#allocation7 + $0x6f8] sm:$0xff]
        %v1157 = vld [vmem:[#allocation7 + $0x700] sm:$0xff]
        %v1158 = vld [vmem:[#allocation7 + $0x708] sm:$0xff]
        %v1159 = vld [vmem:[#allocation7 + $0x710] sm:$0xff]
        %v1160 = vld [vmem:[#allocation7 + $0x718] sm:$0xff]
        %v1161 = vld [vmem:[#allocation7 + $0x720] sm:$0xff]
        %v1162 = vld [vmem:[#allocation7 + $0x728] sm:$0xff]
        %v1163 = vld [vmem:[#allocation7 + $0x730] sm:$0xff]
        %v1164 = vld [vmem:[#allocation7 + $0x738] sm:$0xff]
        %v1165 = vld [vmem:[#allocation7 + $0x740] sm:$0xff]
        %v1166 = vld [vmem:[#allocation7 + $0x748] sm:$0xff]
        %v1167 = vld [vmem:[#allocation7 + $0x750] sm:$0xff]
        %v1168 = vld [vmem:[#allocation7 + $0x758] sm:$0xff]
        %v1169 = vld [vmem:[#allocation7 + $0x760] sm:$0xff]
        %v1170 = vld [vmem:[#allocation7 + $0x768] sm:$0xff]
        %v1171 = vld [vmem:[#allocation7 + $0x770] sm:$0xff]
        %v1172 = vld [vmem:[#allocation7 + $0x778] sm:$0xff]
        %v1173 = vld [vmem:[#allocation7 + $0x780] sm:$0xff]
        %v1174 = vld [vmem:[#allocation7 + $0x788] sm:$0xff]
        %v1175 = vld [vmem:[#allocation7 + $0x790] sm:$0xff]
        %v1176 = vld [vmem:[#allocation7 + $0x798] sm:$0xff]
        %v1177 = vld [vmem:[#allocation7 + $0x7a0] sm:$0xff]
        %v1178 = vld [vmem:[#allocation7 + $0x7a8] sm:$0xff]
        %v1179 = vld [vmem:[#allocation7 + $0x7b0] sm:$0xff]
        %v1180 = vld [vmem:[#allocation7 + $0x7b8] sm:$0xff]
        %v1181 = vld [vmem:[#allocation7 + $0x7c0] sm:$0xff]
        %v1182 = vld [vmem:[#allocation7 + $0x7c8] sm:$0xff]
        %v1183 = vld [vmem:[#allocation7 + $0x7d0] sm:$0xff]
        %v1184 = vld [vmem:[#allocation7 + $0x7d8] sm:$0xff]
        %v1185 = vld [vmem:[#allocation7 + $0x7e0] sm:$0xff]
        %v1186 = vld [vmem:[#allocation7 + $0x7e8] sm:$0xff]
        %v1187 = vld [vmem:[#allocation7 + $0x7f0] sm:$0xff]
        %v1188 = vld [vmem:[#allocation7 + $0x7f8] sm:$0xff]
        %v1193 = vrot.slane %v925, 1
        %v1194 = vrot.slane %v927, 1
        %v1195 = vsel %vm675, %v1193, %v1194
        %v1196 = vrot.slane %v926, 1
        %v1197 = vrot.slane %v928, 1
        %v1198 = vsel %vm675, %v1196, %v1197
        %vm1203 = vcmask 1045504
        %v1204 = vrot.slane %v925, 2
        %v1205 = vrot.slane %v927, 2
        %v1206 = vsel %vm1203, %v1204, %v1205
        %v1207 = vrot.slane %v926, 2
        %v1208 = vrot.slane %v928, 2
        %v1209 = vsel %vm1203, %v1207, %v1208
        %vm1214 = vcmask 1044480
        %v1215 = vrot.slane %v925, 3
        %v1216 = vrot.slane %v927, 3
        %v1217 = vsel %vm1214, %v1215, %v1216
        %v1218 = vrot.slane %v926, 3
        %v1219 = vrot.slane %v928, 3
        %v1220 = vsel %vm1214, %v1218, %v1219
        %v1225 = vpack.c.bf16 %v927, %v925
        %v1226 = vpack.c.bf16 %v928, %v926
        %v1227 = vpack.c.bf16 %v1194, %v1195
        %v1228 = vpack.c.bf16 %v1197, %v1198
        %v1229 = vpack.c.bf16 %v1205, %v1206
        %v1230 = vpack.c.bf16 %v1208, %v1209
        %v1231 = vpack.c.bf16 %v1216, %v1217
        %v1232 = vpack.c.bf16 %v1219, %v1220
        %v1489 = vunpack.c.l.b16 %v933
        %v1490 = vunpack.c.h.b16 %v933
        %v1491 = vunpack.c.l.b16 %v934
        %v1492 = vunpack.c.h.b16 %v934
        %v1493 = vunpack.c.l.b16 %v935
        %v1494 = vunpack.c.h.b16 %v935
        %v1495 = vunpack.c.l.b16 %v936
        %v1496 = vunpack.c.h.b16 %v936
        %v1497 = vunpack.c.l.b16 %v937
        %v1498 = vunpack.c.h.b16 %v937
        %v1499 = vunpack.c.l.b16 %v938
        %v1500 = vunpack.c.h.b16 %v938
        %v1501 = vunpack.c.l.b16 %v939
        %v1502 = vunpack.c.h.b16 %v939
        %v1503 = vunpack.c.l.b16 %v940
        %v1504 = vunpack.c.h.b16 %v940
        %v1505 = vunpack.c.l.b16 %v941
        %v1506 = vunpack.c.h.b16 %v941
        %v1507 = vunpack.c.l.b16 %v942
        %v1508 = vunpack.c.h.b16 %v942
        %v1509 = vunpack.c.l.b16 %v943
        %v1510 = vunpack.c.h.b16 %v943
        %v1511 = vunpack.c.l.b16 %v944
        %v1512 = vunpack.c.h.b16 %v944
        %v1513 = vunpack.c.l.b16 %v945
        %v1514 = vunpack.c.h.b16 %v945
        %v1515 = vunpack.c.l.b16 %v946
        %v1516 = vunpack.c.h.b16 %v946
        %v1517 = vunpack.c.l.b16 %v947
        %v1518 = vunpack.c.h.b16 %v947
        %v1519 = vunpack.c.l.b16 %v948
        %v1520 = vunpack.c.h.b16 %v948
        %v1521 = vunpack.c.l.b16 %v949
        %v1522 = vunpack.c.h.b16 %v949
        %v1523 = vunpack.c.l.b16 %v950
        %v1524 = vunpack.c.h.b16 %v950
        %v1525 = vunpack.c.l.b16 %v951
        %v1526 = vunpack.c.h.b16 %v951
        %v1527 = vunpack.c.l.b16 %v952
        %v1528 = vunpack.c.h.b16 %v952
        %v1529 = vunpack.c.l.b16 %v953
        %v1530 = vunpack.c.h.b16 %v953
        %v1531 = vunpack.c.l.b16 %v954
        %v1532 = vunpack.c.h.b16 %v954
        %v1533 = vunpack.c.l.b16 %v955
        %v1534 = vunpack.c.h.b16 %v955
        %v1535 = vunpack.c.l.b16 %v956
        %v1536 = vunpack.c.h.b16 %v956
        %v1537 = vunpack.c.l.b16 %v957
        %v1538 = vunpack.c.h.b16 %v957
        %v1539 = vunpack.c.l.b16 %v958
        %v1540 = vunpack.c.h.b16 %v958
        %v1541 = vunpack.c.l.b16 %v959
        %v1542 = vunpack.c.h.b16 %v959
        %v1543 = vunpack.c.l.b16 %v960
        %v1544 = vunpack.c.h.b16 %v960
        %v1545 = vunpack.c.l.b16 %v961
        %v1546 = vunpack.c.h.b16 %v961
        %v1547 = vunpack.c.l.b16 %v962
        %v1548 = vunpack.c.h.b16 %v962
        %v1549 = vunpack.c.l.b16 %v963
        %v1550 = vunpack.c.h.b16 %v963
        %v1551 = vunpack.c.l.b16 %v964
        %v1552 = vunpack.c.h.b16 %v964
        %v1553 = vunpack.c.l.b16 %v965
        %v1554 = vunpack.c.h.b16 %v965
        %v1555 = vunpack.c.l.b16 %v966
        %v1556 = vunpack.c.h.b16 %v966
        %v1557 = vunpack.c.l.b16 %v967
        %v1558 = vunpack.c.h.b16 %v967
        %v1559 = vunpack.c.l.b16 %v968
        %v1560 = vunpack.c.h.b16 %v968
        %v1561 = vunpack.c.l.b16 %v969
        %v1562 = vunpack.c.h.b16 %v969
        %v1563 = vunpack.c.l.b16 %v970
        %v1564 = vunpack.c.h.b16 %v970
        %v1565 = vunpack.c.l.b16 %v971
        %v1566 = vunpack.c.h.b16 %v971
        %v1567 = vunpack.c.l.b16 %v972
        %v1568 = vunpack.c.h.b16 %v972
        %v1569 = vunpack.c.l.b16 %v973
        %v1570 = vunpack.c.h.b16 %v973
        %v1571 = vunpack.c.l.b16 %v974
        %v1572 = vunpack.c.h.b16 %v974
        %v1573 = vunpack.c.l.b16 %v975
        %v1574 = vunpack.c.h.b16 %v975
        %v1575 = vunpack.c.l.b16 %v976
        %v1576 = vunpack.c.h.b16 %v976
        %v1577 = vunpack.c.l.b16 %v977
        %v1578 = vunpack.c.h.b16 %v977
        %v1579 = vunpack.c.l.b16 %v978
        %v1580 = vunpack.c.h.b16 %v978
        %v1581 = vunpack.c.l.b16 %v979
        %v1582 = vunpack.c.h.b16 %v979
        %v1583 = vunpack.c.l.b16 %v980
        %v1584 = vunpack.c.h.b16 %v980
        %v1585 = vunpack.c.l.b16 %v981
        %v1586 = vunpack.c.h.b16 %v981
        %v1587 = vunpack.c.l.b16 %v982
        %v1588 = vunpack.c.h.b16 %v982
        %v1589 = vunpack.c.l.b16 %v983
        %v1590 = vunpack.c.h.b16 %v983
        %v1591 = vunpack.c.l.b16 %v984
        %v1592 = vunpack.c.h.b16 %v984
        %v1593 = vunpack.c.l.b16 %v985
        %v1594 = vunpack.c.h.b16 %v985
        %v1595 = vunpack.c.l.b16 %v986
        %v1596 = vunpack.c.h.b16 %v986
        %v1597 = vunpack.c.l.b16 %v987
        %v1598 = vunpack.c.h.b16 %v987
        %v1599 = vunpack.c.l.b16 %v988
        %v1600 = vunpack.c.h.b16 %v988
        %v1601 = vunpack.c.l.b16 %v989
        %v1602 = vunpack.c.h.b16 %v989
        %v1603 = vunpack.c.l.b16 %v990
        %v1604 = vunpack.c.h.b16 %v990
        %v1605 = vunpack.c.l.b16 %v991
        %v1606 = vunpack.c.h.b16 %v991
        %v1607 = vunpack.c.l.b16 %v992
        %v1608 = vunpack.c.h.b16 %v992
        %v1609 = vunpack.c.l.b16 %v993
        %v1610 = vunpack.c.h.b16 %v993
        %v1611 = vunpack.c.l.b16 %v994
        %v1612 = vunpack.c.h.b16 %v994
        %v1613 = vunpack.c.l.b16 %v995
        %v1614 = vunpack.c.h.b16 %v995
        %v1615 = vunpack.c.l.b16 %v996
        %v1616 = vunpack.c.h.b16 %v996
        %v1617 = vunpack.c.l.b16 %v997
        %v1618 = vunpack.c.h.b16 %v997
        %v1619 = vunpack.c.l.b16 %v998
        %v1620 = vunpack.c.h.b16 %v998
        %v1621 = vunpack.c.l.b16 %v999
        %v1622 = vunpack.c.h.b16 %v999
        %v1623 = vunpack.c.l.b16 %v1000
        %v1624 = vunpack.c.h.b16 %v1000
        %v1625 = vunpack.c.l.b16 %v1001
        %v1626 = vunpack.c.h.b16 %v1001
        %v1627 = vunpack.c.l.b16 %v1002
        %v1628 = vunpack.c.h.b16 %v1002
        %v1629 = vunpack.c.l.b16 %v1003
        %v1630 = vunpack.c.h.b16 %v1003
        %v1631 = vunpack.c.l.b16 %v1004
        %v1632 = vunpack.c.h.b16 %v1004
        %v1633 = vunpack.c.l.b16 %v1005
        %v1634 = vunpack.c.h.b16 %v1005
        %v1635 = vunpack.c.l.b16 %v1006
        %v1636 = vunpack.c.h.b16 %v1006
        %v1637 = vunpack.c.l.b16 %v1007
        %v1638 = vunpack.c.h.b16 %v1007
        %v1639 = vunpack.c.l.b16 %v1008
        %v1640 = vunpack.c.h.b16 %v1008
        %v1641 = vunpack.c.l.b16 %v1009
        %v1642 = vunpack.c.h.b16 %v1009
        %v1643 = vunpack.c.l.b16 %v1010
        %v1644 = vunpack.c.h.b16 %v1010
        %v1645 = vunpack.c.l.b16 %v1011
        %v1646 = vunpack.c.h.b16 %v1011
        %v1647 = vunpack.c.l.b16 %v1012
        %v1648 = vunpack.c.h.b16 %v1012
        %v1649 = vunpack.c.l.b16 %v1013
        %v1650 = vunpack.c.h.b16 %v1013
        %v1651 = vunpack.c.l.b16 %v1014
        %v1652 = vunpack.c.h.b16 %v1014
        %v1653 = vunpack.c.l.b16 %v1015
        %v1654 = vunpack.c.h.b16 %v1015
        %v1655 = vunpack.c.l.b16 %v1016
        %v1656 = vunpack.c.h.b16 %v1016
        %v1657 = vunpack.c.l.b16 %v1017
        %v1658 = vunpack.c.h.b16 %v1017
        %v1659 = vunpack.c.l.b16 %v1018
        %v1660 = vunpack.c.h.b16 %v1018
        %v1661 = vunpack.c.l.b16 %v1019
        %v1662 = vunpack.c.h.b16 %v1019
        %v1663 = vunpack.c.l.b16 %v1020
        %v1664 = vunpack.c.h.b16 %v1020
        %v1665 = vunpack.c.l.b16 %v1021
        %v1666 = vunpack.c.h.b16 %v1021
        %v1667 = vunpack.c.l.b16 %v1022
        %v1668 = vunpack.c.h.b16 %v1022
        %v1669 = vunpack.c.l.b16 %v1023
        %v1670 = vunpack.c.h.b16 %v1023
        %v1671 = vunpack.c.l.b16 %v1024
        %v1672 = vunpack.c.h.b16 %v1024
        %v1673 = vunpack.c.l.b16 %v1025
        %v1674 = vunpack.c.h.b16 %v1025
        %v1675 = vunpack.c.l.b16 %v1026
        %v1676 = vunpack.c.h.b16 %v1026
        %v1677 = vunpack.c.l.b16 %v1027
        %v1678 = vunpack.c.h.b16 %v1027
        %v1679 = vunpack.c.l.b16 %v1028
        %v1680 = vunpack.c.h.b16 %v1028
        %v1681 = vunpack.c.l.b16 %v1029
        %v1682 = vunpack.c.h.b16 %v1029
        %v1683 = vunpack.c.l.b16 %v1030
        %v1684 = vunpack.c.h.b16 %v1030
        %v1685 = vunpack.c.l.b16 %v1031
        %v1686 = vunpack.c.h.b16 %v1031
        %v1687 = vunpack.c.l.b16 %v1032
        %v1688 = vunpack.c.h.b16 %v1032
        %v1689 = vunpack.c.l.b16 %v1033
        %v1690 = vunpack.c.h.b16 %v1033
        %v1691 = vunpack.c.l.b16 %v1034
        %v1692 = vunpack.c.h.b16 %v1034
        %v1693 = vunpack.c.l.b16 %v1035
        %v1694 = vunpack.c.h.b16 %v1035
        %v1695 = vunpack.c.l.b16 %v1036
        %v1696 = vunpack.c.h.b16 %v1036
        %v1697 = vunpack.c.l.b16 %v1037
        %v1698 = vunpack.c.h.b16 %v1037
        %v1699 = vunpack.c.l.b16 %v1038
        %v1700 = vunpack.c.h.b16 %v1038
        %v1701 = vunpack.c.l.b16 %v1039
        %v1702 = vunpack.c.h.b16 %v1039
        %v1703 = vunpack.c.l.b16 %v1040
        %v1704 = vunpack.c.h.b16 %v1040
        %v1705 = vunpack.c.l.b16 %v1041
        %v1706 = vunpack.c.h.b16 %v1041
        %v1707 = vunpack.c.l.b16 %v1042
        %v1708 = vunpack.c.h.b16 %v1042
        %v1709 = vunpack.c.l.b16 %v1043
        %v1710 = vunpack.c.h.b16 %v1043
        %v1711 = vunpack.c.l.b16 %v1044
        %v1712 = vunpack.c.h.b16 %v1044
        %v1713 = vunpack.c.l.b16 %v1045
        %v1714 = vunpack.c.h.b16 %v1045
        %v1715 = vunpack.c.l.b16 %v1046
        %v1716 = vunpack.c.h.b16 %v1046
        %v1717 = vunpack.c.l.b16 %v1047
        %v1718 = vunpack.c.h.b16 %v1047
        %v1719 = vunpack.c.l.b16 %v1048
        %v1720 = vunpack.c.h.b16 %v1048
        %v1721 = vunpack.c.l.b16 %v1049
        %v1722 = vunpack.c.h.b16 %v1049
        %v1723 = vunpack.c.l.b16 %v1050
        %v1724 = vunpack.c.h.b16 %v1050
        %v1725 = vunpack.c.l.b16 %v1051
        %v1726 = vunpack.c.h.b16 %v1051
        %v1727 = vunpack.c.l.b16 %v1052
        %v1728 = vunpack.c.h.b16 %v1052
        %v1729 = vunpack.c.l.b16 %v1053
        %v1730 = vunpack.c.h.b16 %v1053
        %v1731 = vunpack.c.l.b16 %v1054
        %v1732 = vunpack.c.h.b16 %v1054
        %v1733 = vunpack.c.l.b16 %v1055
        %v1734 = vunpack.c.h.b16 %v1055
        %v1735 = vunpack.c.l.b16 %v1056
        %v1736 = vunpack.c.h.b16 %v1056
        %v1737 = vunpack.c.l.b16 %v1057
        %v1738 = vunpack.c.h.b16 %v1057
        %v1739 = vunpack.c.l.b16 %v1058
        %v1740 = vunpack.c.h.b16 %v1058
        %v1741 = vunpack.c.l.b16 %v1059
        %v1742 = vunpack.c.h.b16 %v1059
        %v1743 = vunpack.c.l.b16 %v1060
        %v1744 = vunpack.c.h.b16 %v1060
        %v1745 = vunpack.c.l.b16 %v1061
        %v1746 = vunpack.c.h.b16 %v1061
        %v1747 = vunpack.c.l.b16 %v1062
        %v1748 = vunpack.c.h.b16 %v1062
        %v1749 = vunpack.c.l.b16 %v1063
        %v1750 = vunpack.c.h.b16 %v1063
        %v1751 = vunpack.c.l.b16 %v1064
        %v1752 = vunpack.c.h.b16 %v1064
        %v1753 = vunpack.c.l.b16 %v1065
        %v1754 = vunpack.c.h.b16 %v1065
        %v1755 = vunpack.c.l.b16 %v1066
        %v1756 = vunpack.c.h.b16 %v1066
        %v1757 = vunpack.c.l.b16 %v1067
        %v1758 = vunpack.c.h.b16 %v1067
        %v1759 = vunpack.c.l.b16 %v1068
        %v1760 = vunpack.c.h.b16 %v1068
        %v1761 = vunpack.c.l.b16 %v1069
        %v1762 = vunpack.c.h.b16 %v1069
        %v1763 = vunpack.c.l.b16 %v1070
        %v1764 = vunpack.c.h.b16 %v1070
        %v1765 = vunpack.c.l.b16 %v1071
        %v1766 = vunpack.c.h.b16 %v1071
        %v1767 = vunpack.c.l.b16 %v1072
        %v1768 = vunpack.c.h.b16 %v1072
        %v1769 = vunpack.c.l.b16 %v1073
        %v1770 = vunpack.c.h.b16 %v1073
        %v1771 = vunpack.c.l.b16 %v1074
        %v1772 = vunpack.c.h.b16 %v1074
        %v1773 = vunpack.c.l.b16 %v1075
        %v1774 = vunpack.c.h.b16 %v1075
        %v1775 = vunpack.c.l.b16 %v1076
        %v1776 = vunpack.c.h.b16 %v1076
        %v1777 = vunpack.c.l.b16 %v1077
        %v1778 = vunpack.c.h.b16 %v1077
        %v1779 = vunpack.c.l.b16 %v1078
        %v1780 = vunpack.c.h.b16 %v1078
        %v1781 = vunpack.c.l.b16 %v1079
        %v1782 = vunpack.c.h.b16 %v1079
        %v1783 = vunpack.c.l.b16 %v1080
        %v1784 = vunpack.c.h.b16 %v1080
        %v1785 = vunpack.c.l.b16 %v1081
        %v1786 = vunpack.c.h.b16 %v1081
        %v1787 = vunpack.c.l.b16 %v1082
        %v1788 = vunpack.c.h.b16 %v1082
        %v1789 = vunpack.c.l.b16 %v1083
        %v1790 = vunpack.c.h.b16 %v1083
        %v1791 = vunpack.c.l.b16 %v1084
        %v1792 = vunpack.c.h.b16 %v1084
        %v1793 = vunpack.c.l.b16 %v1085
        %v1794 = vunpack.c.h.b16 %v1085
        %v1795 = vunpack.c.l.b16 %v1086
        %v1796 = vunpack.c.h.b16 %v1086
        %v1797 = vunpack.c.l.b16 %v1087
        %v1798 = vunpack.c.h.b16 %v1087
        %v1799 = vunpack.c.l.b16 %v1088
        %v1800 = vunpack.c.h.b16 %v1088
        %v1801 = vunpack.c.l.b16 %v1089
        %v1802 = vunpack.c.h.b16 %v1089
        %v1803 = vunpack.c.l.b16 %v1090
        %v1804 = vunpack.c.h.b16 %v1090
        %v1805 = vunpack.c.l.b16 %v1091
        %v1806 = vunpack.c.h.b16 %v1091
        %v1807 = vunpack.c.l.b16 %v1092
        %v1808 = vunpack.c.h.b16 %v1092
        %v1809 = vunpack.c.l.b16 %v1093
        %v1810 = vunpack.c.h.b16 %v1093
        %v1811 = vunpack.c.l.b16 %v1094
        %v1812 = vunpack.c.h.b16 %v1094
        %v1813 = vunpack.c.l.b16 %v1095
        %v1814 = vunpack.c.h.b16 %v1095
        %v1815 = vunpack.c.l.b16 %v1096
        %v1816 = vunpack.c.h.b16 %v1096
        %v1817 = vunpack.c.l.b16 %v1097
        %v1818 = vunpack.c.h.b16 %v1097
        %v1819 = vunpack.c.l.b16 %v1098
        %v1820 = vunpack.c.h.b16 %v1098
        %v1821 = vunpack.c.l.b16 %v1099
        %v1822 = vunpack.c.h.b16 %v1099
        %v1823 = vunpack.c.l.b16 %v1100
        %v1824 = vunpack.c.h.b16 %v1100
        %v1825 = vunpack.c.l.b16 %v1101
        %v1826 = vunpack.c.h.b16 %v1101
        %v1827 = vunpack.c.l.b16 %v1102
        %v1828 = vunpack.c.h.b16 %v1102
        %v1829 = vunpack.c.l.b16 %v1103
        %v1830 = vunpack.c.h.b16 %v1103
        %v1831 = vunpack.c.l.b16 %v1104
        %v1832 = vunpack.c.h.b16 %v1104
        %v1833 = vunpack.c.l.b16 %v1105
        %v1834 = vunpack.c.h.b16 %v1105
        %v1835 = vunpack.c.l.b16 %v1106
        %v1836 = vunpack.c.h.b16 %v1106
        %v1837 = vunpack.c.l.b16 %v1107
        %v1838 = vunpack.c.h.b16 %v1107
        %v1839 = vunpack.c.l.b16 %v1108
        %v1840 = vunpack.c.h.b16 %v1108
        %v1841 = vunpack.c.l.b16 %v1109
        %v1842 = vunpack.c.h.b16 %v1109
        %v1843 = vunpack.c.l.b16 %v1110
        %v1844 = vunpack.c.h.b16 %v1110
        %v1845 = vunpack.c.l.b16 %v1111
        %v1846 = vunpack.c.h.b16 %v1111
        %v1847 = vunpack.c.l.b16 %v1112
        %v1848 = vunpack.c.h.b16 %v1112
        %v1849 = vunpack.c.l.b16 %v1113
        %v1850 = vunpack.c.h.b16 %v1113
        %v1851 = vunpack.c.l.b16 %v1114
        %v1852 = vunpack.c.h.b16 %v1114
        %v1853 = vunpack.c.l.b16 %v1115
        %v1854 = vunpack.c.h.b16 %v1115
        %v1855 = vunpack.c.l.b16 %v1116
        %v1856 = vunpack.c.h.b16 %v1116
        %v1857 = vunpack.c.l.b16 %v1117
        %v1858 = vunpack.c.h.b16 %v1117
        %v1859 = vunpack.c.l.b16 %v1118
        %v1860 = vunpack.c.h.b16 %v1118
        %v1861 = vunpack.c.l.b16 %v1119
        %v1862 = vunpack.c.h.b16 %v1119
        %v1863 = vunpack.c.l.b16 %v1120
        %v1864 = vunpack.c.h.b16 %v1120
        %v1865 = vunpack.c.l.b16 %v1121
        %v1866 = vunpack.c.h.b16 %v1121
        %v1867 = vunpack.c.l.b16 %v1122
        %v1868 = vunpack.c.h.b16 %v1122
        %v1869 = vunpack.c.l.b16 %v1123
        %v1870 = vunpack.c.h.b16 %v1123
        %v1871 = vunpack.c.l.b16 %v1124
        %v1872 = vunpack.c.h.b16 %v1124
        %v1873 = vunpack.c.l.b16 %v1125
        %v1874 = vunpack.c.h.b16 %v1125
        %v1875 = vunpack.c.l.b16 %v1126
        %v1876 = vunpack.c.h.b16 %v1126
        %v1877 = vunpack.c.l.b16 %v1127
        %v1878 = vunpack.c.h.b16 %v1127
        %v1879 = vunpack.c.l.b16 %v1128
        %v1880 = vunpack.c.h.b16 %v1128
        %v1881 = vunpack.c.l.b16 %v1129
        %v1882 = vunpack.c.h.b16 %v1129
        %v1883 = vunpack.c.l.b16 %v1130
        %v1884 = vunpack.c.h.b16 %v1130
        %v1885 = vunpack.c.l.b16 %v1131
        %v1886 = vunpack.c.h.b16 %v1131
        %v1887 = vunpack.c.l.b16 %v1132
        %v1888 = vunpack.c.h.b16 %v1132
        %v1889 = vunpack.c.l.b16 %v1133
        %v1890 = vunpack.c.h.b16 %v1133
        %v1891 = vunpack.c.l.b16 %v1134
        %v1892 = vunpack.c.h.b16 %v1134
        %v1893 = vunpack.c.l.b16 %v1135
        %v1894 = vunpack.c.h.b16 %v1135
        %v1895 = vunpack.c.l.b16 %v1136
        %v1896 = vunpack.c.h.b16 %v1136
        %v1897 = vunpack.c.l.b16 %v1137
        %v1898 = vunpack.c.h.b16 %v1137
        %v1899 = vunpack.c.l.b16 %v1138
        %v1900 = vunpack.c.h.b16 %v1138
        %v1901 = vunpack.c.l.b16 %v1139
        %v1902 = vunpack.c.h.b16 %v1139
        %v1903 = vunpack.c.l.b16 %v1140
        %v1904 = vunpack.c.h.b16 %v1140
        %v1905 = vunpack.c.l.b16 %v1141
        %v1906 = vunpack.c.h.b16 %v1141
        %v1907 = vunpack.c.l.b16 %v1142
        %v1908 = vunpack.c.h.b16 %v1142
        %v1909 = vunpack.c.l.b16 %v1143
        %v1910 = vunpack.c.h.b16 %v1143
        %v1911 = vunpack.c.l.b16 %v1144
        %v1912 = vunpack.c.h.b16 %v1144
        %v1913 = vunpack.c.l.b16 %v1145
        %v1914 = vunpack.c.h.b16 %v1145
        %v1915 = vunpack.c.l.b16 %v1146
        %v1916 = vunpack.c.h.b16 %v1146
        %v1917 = vunpack.c.l.b16 %v1147
        %v1918 = vunpack.c.h.b16 %v1147
        %v1919 = vunpack.c.l.b16 %v1148
        %v1920 = vunpack.c.h.b16 %v1148
        %v1921 = vunpack.c.l.b16 %v1149
        %v1922 = vunpack.c.h.b16 %v1149
        %v1923 = vunpack.c.l.b16 %v1150
        %v1924 = vunpack.c.h.b16 %v1150
        %v1925 = vunpack.c.l.b16 %v1151
        %v1926 = vunpack.c.h.b16 %v1151
        %v1927 = vunpack.c.l.b16 %v1152
        %v1928 = vunpack.c.h.b16 %v1152
        %v1929 = vunpack.c.l.b16 %v1153
        %v1930 = vunpack.c.h.b16 %v1153
        %v1931 = vunpack.c.l.b16 %v1154
        %v1932 = vunpack.c.h.b16 %v1154
        %v1933 = vunpack.c.l.b16 %v1155
        %v1934 = vunpack.c.h.b16 %v1155
        %v1935 = vunpack.c.l.b16 %v1156
        %v1936 = vunpack.c.h.b16 %v1156
        %v1937 = vunpack.c.l.b16 %v1157
        %v1938 = vunpack.c.h.b16 %v1157
        %v1939 = vunpack.c.l.b16 %v1158
        %v1940 = vunpack.c.h.b16 %v1158
        %v1941 = vunpack.c.l.b16 %v1159
        %v1942 = vunpack.c.h.b16 %v1159
        %v1943 = vunpack.c.l.b16 %v1160
        %v1944 = vunpack.c.h.b16 %v1160
        %v1945 = vunpack.c.l.b16 %v1161
        %v1946 = vunpack.c.h.b16 %v1161
        %v1947 = vunpack.c.l.b16 %v1162
        %v1948 = vunpack.c.h.b16 %v1162
        %v1949 = vunpack.c.l.b16 %v1163
        %v1950 = vunpack.c.h.b16 %v1163
        %v1951 = vunpack.c.l.b16 %v1164
        %v1952 = vunpack.c.h.b16 %v1164
        %v1953 = vunpack.c.l.b16 %v1165
        %v1954 = vunpack.c.h.b16 %v1165
        %v1955 = vunpack.c.l.b16 %v1166
        %v1956 = vunpack.c.h.b16 %v1166
        %v1957 = vunpack.c.l.b16 %v1167
        %v1958 = vunpack.c.h.b16 %v1167
        %v1959 = vunpack.c.l.b16 %v1168
        %v1960 = vunpack.c.h.b16 %v1168
        %v1961 = vunpack.c.l.b16 %v1169
        %v1962 = vunpack.c.h.b16 %v1169
        %v1963 = vunpack.c.l.b16 %v1170
        %v1964 = vunpack.c.h.b16 %v1170
        %v1965 = vunpack.c.l.b16 %v1171
        %v1966 = vunpack.c.h.b16 %v1171
        %v1967 = vunpack.c.l.b16 %v1172
        %v1968 = vunpack.c.h.b16 %v1172
        %v1969 = vunpack.c.l.b16 %v1173
        %v1970 = vunpack.c.h.b16 %v1173
        %v1971 = vunpack.c.l.b16 %v1174
        %v1972 = vunpack.c.h.b16 %v1174
        %v1973 = vunpack.c.l.b16 %v1175
        %v1974 = vunpack.c.h.b16 %v1175
        %v1975 = vunpack.c.l.b16 %v1176
        %v1976 = vunpack.c.h.b16 %v1176
        %v1977 = vunpack.c.l.b16 %v1177
        %v1978 = vunpack.c.h.b16 %v1177
        %v1979 = vunpack.c.l.b16 %v1178
        %v1980 = vunpack.c.h.b16 %v1178
        %v1981 = vunpack.c.l.b16 %v1179
        %v1982 = vunpack.c.h.b16 %v1179
        %v1983 = vunpack.c.l.b16 %v1180
        %v1984 = vunpack.c.h.b16 %v1180
        %v1985 = vunpack.c.l.b16 %v1181
        %v1986 = vunpack.c.h.b16 %v1181
        %v1987 = vunpack.c.l.b16 %v1182
        %v1988 = vunpack.c.h.b16 %v1182
        %v1989 = vunpack.c.l.b16 %v1183
        %v1990 = vunpack.c.h.b16 %v1183
        %v1991 = vunpack.c.l.b16 %v1184
        %v1992 = vunpack.c.h.b16 %v1184
        %v1993 = vunpack.c.l.b16 %v1185
        %v1994 = vunpack.c.h.b16 %v1185
        %v1995 = vunpack.c.l.b16 %v1186
        %v1996 = vunpack.c.h.b16 %v1186
        %v1997 = vunpack.c.l.b16 %v1187
        %v1998 = vunpack.c.h.b16 %v1187
        %v1999 = vunpack.c.l.b16 %v1188
        %v2000 = vunpack.c.h.b16 %v1188
        %v2001 = vpack.c.b16 %v1493, %v1489
        %v2002 = vpack.c.b16 %v1494, %v1490
        %v2003 = vpack.c.b16 %v1495, %v1491
        %v2004 = vpack.c.b16 %v1496, %v1492
        %v2005 = vpack.c.b16 %v1501, %v1497
        %v2006 = vpack.c.b16 %v1502, %v1498
        %v2007 = vpack.c.b16 %v1503, %v1499
        %v2008 = vpack.c.b16 %v1504, %v1500
        %v2009 = vpack.c.b16 %v1509, %v1505
        %v2010 = vpack.c.b16 %v1510, %v1506
        %v2011 = vpack.c.b16 %v1511, %v1507
        %v2012 = vpack.c.b16 %v1512, %v1508
        %v2013 = vpack.c.b16 %v1517, %v1513
        %v2014 = vpack.c.b16 %v1518, %v1514
        %v2015 = vpack.c.b16 %v1519, %v1515
        %v2016 = vpack.c.b16 %v1520, %v1516
        %v2017 = vpack.c.b16 %v1525, %v1521
        %v2018 = vpack.c.b16 %v1526, %v1522
        %v2019 = vpack.c.b16 %v1527, %v1523
        %v2020 = vpack.c.b16 %v1528, %v1524
        %v2021 = vpack.c.b16 %v1533, %v1529
        %v2022 = vpack.c.b16 %v1534, %v1530
        %v2023 = vpack.c.b16 %v1535, %v1531
        %v2024 = vpack.c.b16 %v1536, %v1532
        %v2025 = vpack.c.b16 %v1541, %v1537
        %v2026 = vpack.c.b16 %v1542, %v1538
        %v2027 = vpack.c.b16 %v1543, %v1539
        %v2028 = vpack.c.b16 %v1544, %v1540
        %v2029 = vpack.c.b16 %v1549, %v1545
        %v2030 = vpack.c.b16 %v1550, %v1546
        %v2031 = vpack.c.b16 %v1551, %v1547
        %v2032 = vpack.c.b16 %v1552, %v1548
        %v2033 = vpack.c.b16 %v1557, %v1553
        %v2034 = vpack.c.b16 %v1558, %v1554
        %v2035 = vpack.c.b16 %v1559, %v1555
        %v2036 = vpack.c.b16 %v1560, %v1556
        %v2037 = vpack.c.b16 %v1565, %v1561
        %v2038 = vpack.c.b16 %v1566, %v1562
        %v2039 = vpack.c.b16 %v1567, %v1563
        %v2040 = vpack.c.b16 %v1568, %v1564
        %v2041 = vpack.c.b16 %v1573, %v1569
        %v2042 = vpack.c.b16 %v1574, %v1570
        %v2043 = vpack.c.b16 %v1575, %v1571
        %v2044 = vpack.c.b16 %v1576, %v1572
        %v2045 = vpack.c.b16 %v1581, %v1577
        %v2046 = vpack.c.b16 %v1582, %v1578
        %v2047 = vpack.c.b16 %v1583, %v1579
        %v2048 = vpack.c.b16 %v1584, %v1580
        %v2049 = vpack.c.b16 %v1589, %v1585
        %v2050 = vpack.c.b16 %v1590, %v1586
        %v2051 = vpack.c.b16 %v1591, %v1587
        %v2052 = vpack.c.b16 %v1592, %v1588
        %v2053 = vpack.c.b16 %v1597, %v1593
        %v2054 = vpack.c.b16 %v1598, %v1594
        %v2055 = vpack.c.b16 %v1599, %v1595
        %v2056 = vpack.c.b16 %v1600, %v1596
        %v2057 = vpack.c.b16 %v1605, %v1601
        %v2058 = vpack.c.b16 %v1606, %v1602
        %v2059 = vpack.c.b16 %v1607, %v1603
        %v2060 = vpack.c.b16 %v1608, %v1604
        %v2061 = vpack.c.b16 %v1613, %v1609
        %v2062 = vpack.c.b16 %v1614, %v1610
        %v2063 = vpack.c.b16 %v1615, %v1611
        %v2064 = vpack.c.b16 %v1616, %v1612
        %v2065 = vpack.c.b16 %v1621, %v1617
        %v2066 = vpack.c.b16 %v1622, %v1618
        %v2067 = vpack.c.b16 %v1623, %v1619
        %v2068 = vpack.c.b16 %v1624, %v1620
        %v2069 = vpack.c.b16 %v1629, %v1625
        %v2070 = vpack.c.b16 %v1630, %v1626
        %v2071 = vpack.c.b16 %v1631, %v1627
        %v2072 = vpack.c.b16 %v1632, %v1628
        %v2073 = vpack.c.b16 %v1637, %v1633
        %v2074 = vpack.c.b16 %v1638, %v1634
        %v2075 = vpack.c.b16 %v1639, %v1635
        %v2076 = vpack.c.b16 %v1640, %v1636
        %v2077 = vpack.c.b16 %v1645, %v1641
        %v2078 = vpack.c.b16 %v1646, %v1642
        %v2079 = vpack.c.b16 %v1647, %v1643
        %v2080 = vpack.c.b16 %v1648, %v1644
        %v2081 = vpack.c.b16 %v1653, %v1649
        %v2082 = vpack.c.b16 %v1654, %v1650
        %v2083 = vpack.c.b16 %v1655, %v1651
        %v2084 = vpack.c.b16 %v1656, %v1652
        %v2085 = vpack.c.b16 %v1661, %v1657
        %v2086 = vpack.c.b16 %v1662, %v1658
        %v2087 = vpack.c.b16 %v1663, %v1659
        %v2088 = vpack.c.b16 %v1664, %v1660
        %v2089 = vpack.c.b16 %v1669, %v1665
        %v2090 = vpack.c.b16 %v1670, %v1666
        %v2091 = vpack.c.b16 %v1671, %v1667
        %v2092 = vpack.c.b16 %v1672, %v1668
        %v2093 = vpack.c.b16 %v1677, %v1673
        %v2094 = vpack.c.b16 %v1678, %v1674
        %v2095 = vpack.c.b16 %v1679, %v1675
        %v2096 = vpack.c.b16 %v1680, %v1676
        %v2097 = vpack.c.b16 %v1685, %v1681
        %v2098 = vpack.c.b16 %v1686, %v1682
        %v2099 = vpack.c.b16 %v1687, %v1683
        %v2100 = vpack.c.b16 %v1688, %v1684
        %v2101 = vpack.c.b16 %v1693, %v1689
        %v2102 = vpack.c.b16 %v1694, %v1690
        %v2103 = vpack.c.b16 %v1695, %v1691
        %v2104 = vpack.c.b16 %v1696, %v1692
        %v2105 = vpack.c.b16 %v1701, %v1697
        %v2106 = vpack.c.b16 %v1702, %v1698
        %v2107 = vpack.c.b16 %v1703, %v1699
        %v2108 = vpack.c.b16 %v1704, %v1700
        %v2109 = vpack.c.b16 %v1709, %v1705
        %v2110 = vpack.c.b16 %v1710, %v1706
        %v2111 = vpack.c.b16 %v1711, %v1707
        %v2112 = vpack.c.b16 %v1712, %v1708
        %v2113 = vpack.c.b16 %v1717, %v1713
        %v2114 = vpack.c.b16 %v1718, %v1714
        %v2115 = vpack.c.b16 %v1719, %v1715
        %v2116 = vpack.c.b16 %v1720, %v1716
        %v2117 = vpack.c.b16 %v1725, %v1721
        %v2118 = vpack.c.b16 %v1726, %v1722
        %v2119 = vpack.c.b16 %v1727, %v1723
        %v2120 = vpack.c.b16 %v1728, %v1724
        %v2121 = vpack.c.b16 %v1733, %v1729
        %v2122 = vpack.c.b16 %v1734, %v1730
        %v2123 = vpack.c.b16 %v1735, %v1731
        %v2124 = vpack.c.b16 %v1736, %v1732
        %v2125 = vpack.c.b16 %v1741, %v1737
        %v2126 = vpack.c.b16 %v1742, %v1738
        %v2127 = vpack.c.b16 %v1743, %v1739
        %v2128 = vpack.c.b16 %v1744, %v1740
        %v2129 = vpack.c.b16 %v1749, %v1745
        %v2130 = vpack.c.b16 %v1750, %v1746
        %v2131 = vpack.c.b16 %v1751, %v1747
        %v2132 = vpack.c.b16 %v1752, %v1748
        %v2133 = vpack.c.b16 %v1757, %v1753
        %v2134 = vpack.c.b16 %v1758, %v1754
        %v2135 = vpack.c.b16 %v1759, %v1755
        %v2136 = vpack.c.b16 %v1760, %v1756
        %v2137 = vpack.c.b16 %v1765, %v1761
        %v2138 = vpack.c.b16 %v1766, %v1762
        %v2139 = vpack.c.b16 %v1767, %v1763
        %v2140 = vpack.c.b16 %v1768, %v1764
        %v2141 = vpack.c.b16 %v1773, %v1769
        %v2142 = vpack.c.b16 %v1774, %v1770
        %v2143 = vpack.c.b16 %v1775, %v1771
        %v2144 = vpack.c.b16 %v1776, %v1772
        %v2145 = vpack.c.b16 %v1781, %v1777
        %v2146 = vpack.c.b16 %v1782, %v1778
        %v2147 = vpack.c.b16 %v1783, %v1779
        %v2148 = vpack.c.b16 %v1784, %v1780
        %v2149 = vpack.c.b16 %v1789, %v1785
        %v2150 = vpack.c.b16 %v1790, %v1786
        %v2151 = vpack.c.b16 %v1791, %v1787
        %v2152 = vpack.c.b16 %v1792, %v1788
        %v2153 = vpack.c.b16 %v1797, %v1793
        %v2154 = vpack.c.b16 %v1798, %v1794
        %v2155 = vpack.c.b16 %v1799, %v1795
        %v2156 = vpack.c.b16 %v1800, %v1796
        %v2157 = vpack.c.b16 %v1805, %v1801
        %v2158 = vpack.c.b16 %v1806, %v1802
        %v2159 = vpack.c.b16 %v1807, %v1803
        %v2160 = vpack.c.b16 %v1808, %v1804
        %v2161 = vpack.c.b16 %v1813, %v1809
        %v2162 = vpack.c.b16 %v1814, %v1810
        %v2163 = vpack.c.b16 %v1815, %v1811
        %v2164 = vpack.c.b16 %v1816, %v1812
        %v2165 = vpack.c.b16 %v1821, %v1817
        %v2166 = vpack.c.b16 %v1822, %v1818
        %v2167 = vpack.c.b16 %v1823, %v1819
        %v2168 = vpack.c.b16 %v1824, %v1820
        %v2169 = vpack.c.b16 %v1829, %v1825
        %v2170 = vpack.c.b16 %v1830, %v1826
        %v2171 = vpack.c.b16 %v1831, %v1827
        %v2172 = vpack.c.b16 %v1832, %v1828
        %v2173 = vpack.c.b16 %v1837, %v1833
        %v2174 = vpack.c.b16 %v1838, %v1834
        %v2175 = vpack.c.b16 %v1839, %v1835
        %v2176 = vpack.c.b16 %v1840, %v1836
        %v2177 = vpack.c.b16 %v1845, %v1841
        %v2178 = vpack.c.b16 %v1846, %v1842
        %v2179 = vpack.c.b16 %v1847, %v1843
        %v2180 = vpack.c.b16 %v1848, %v1844
        %v2181 = vpack.c.b16 %v1853, %v1849
        %v2182 = vpack.c.b16 %v1854, %v1850
        %v2183 = vpack.c.b16 %v1855, %v1851
        %v2184 = vpack.c.b16 %v1856, %v1852
        %v2185 = vpack.c.b16 %v1861, %v1857
        %v2186 = vpack.c.b16 %v1862, %v1858
        %v2187 = vpack.c.b16 %v1863, %v1859
        %v2188 = vpack.c.b16 %v1864, %v1860
        %v2189 = vpack.c.b16 %v1869, %v1865
        %v2190 = vpack.c.b16 %v1870, %v1866
        %v2191 = vpack.c.b16 %v1871, %v1867
        %v2192 = vpack.c.b16 %v1872, %v1868
        %v2193 = vpack.c.b16 %v1877, %v1873
        %v2194 = vpack.c.b16 %v1878, %v1874
        %v2195 = vpack.c.b16 %v1879, %v1875
        %v2196 = vpack.c.b16 %v1880, %v1876
        %v2197 = vpack.c.b16 %v1885, %v1881
        %v2198 = vpack.c.b16 %v1886, %v1882
        %v2199 = vpack.c.b16 %v1887, %v1883
        %v2200 = vpack.c.b16 %v1888, %v1884
        %v2201 = vpack.c.b16 %v1893, %v1889
        %v2202 = vpack.c.b16 %v1894, %v1890
        %v2203 = vpack.c.b16 %v1895, %v1891
        %v2204 = vpack.c.b16 %v1896, %v1892
        %v2205 = vpack.c.b16 %v1901, %v1897
        %v2206 = vpack.c.b16 %v1902, %v1898
        %v2207 = vpack.c.b16 %v1903, %v1899
        %v2208 = vpack.c.b16 %v1904, %v1900
        %v2209 = vpack.c.b16 %v1909, %v1905
        %v2210 = vpack.c.b16 %v1910, %v1906
        %v2211 = vpack.c.b16 %v1911, %v1907
        %v2212 = vpack.c.b16 %v1912, %v1908
        %v2213 = vpack.c.b16 %v1917, %v1913
        %v2214 = vpack.c.b16 %v1918, %v1914
        %v2215 = vpack.c.b16 %v1919, %v1915
        %v2216 = vpack.c.b16 %v1920, %v1916
        %v2217 = vpack.c.b16 %v1925, %v1921
        %v2218 = vpack.c.b16 %v1926, %v1922
        %v2219 = vpack.c.b16 %v1927, %v1923
        %v2220 = vpack.c.b16 %v1928, %v1924
        %v2221 = vpack.c.b16 %v1933, %v1929
        %v2222 = vpack.c.b16 %v1934, %v1930
        %v2223 = vpack.c.b16 %v1935, %v1931
        %v2224 = vpack.c.b16 %v1936, %v1932
        %v2225 = vpack.c.b16 %v1941, %v1937
        %v2226 = vpack.c.b16 %v1942, %v1938
        %v2227 = vpack.c.b16 %v1943, %v1939
        %v2228 = vpack.c.b16 %v1944, %v1940
        %v2229 = vpack.c.b16 %v1949, %v1945
        %v2230 = vpack.c.b16 %v1950, %v1946
        %v2231 = vpack.c.b16 %v1951, %v1947
        %v2232 = vpack.c.b16 %v1952, %v1948
        %v2233 = vpack.c.b16 %v1957, %v1953
        %v2234 = vpack.c.b16 %v1958, %v1954
        %v2235 = vpack.c.b16 %v1959, %v1955
        %v2236 = vpack.c.b16 %v1960, %v1956
        %v2237 = vpack.c.b16 %v1965, %v1961
        %v2238 = vpack.c.b16 %v1966, %v1962
        %v2239 = vpack.c.b16 %v1967, %v1963
        %v2240 = vpack.c.b16 %v1968, %v1964
        %v2241 = vpack.c.b16 %v1973, %v1969
        %v2242 = vpack.c.b16 %v1974, %v1970
        %v2243 = vpack.c.b16 %v1975, %v1971
        %v2244 = vpack.c.b16 %v1976, %v1972
        %v2245 = vpack.c.b16 %v1981, %v1977
        %v2246 = vpack.c.b16 %v1982, %v1978
        %v2247 = vpack.c.b16 %v1983, %v1979
        %v2248 = vpack.c.b16 %v1984, %v1980
        %v2249 = vpack.c.b16 %v1989, %v1985
        %v2250 = vpack.c.b16 %v1990, %v1986
        %v2251 = vpack.c.b16 %v1991, %v1987
        %v2252 = vpack.c.b16 %v1992, %v1988
        %v2253 = vpack.c.b16 %v1997, %v1993
        %v2254 = vpack.c.b16 %v1998, %v1994
        %v2255 = vpack.c.b16 %v1999, %v1995
        %v2256 = vpack.c.b16 %v2000, %v1996
        %2513 = vmatprep.subr.bf16.mxu0 %v2002
        %2514 = vmatpush1.bf16.msra.mxu0 %v2001
        %2515 = vmatprep.subr.bf16.mxu0 %v2006
        %2516 = vmatpush1.bf16.msra.mxu0 %v2005
        %2517 = vmatprep.subr.bf16.mxu0 %v2010
        %2518 = vmatpush1.bf16.msra.mxu0 %v2009
        %2519 = vmatprep.subr.bf16.mxu0 %v2014
        %2520 = vmatpush1.bf16.msra.mxu0 %v2013
        %2521 = vmatprep.subr.bf16.mxu0 %v2018
        %2522 = vmatpush1.bf16.msra.mxu0 %v2017
        %2523 = vmatprep.subr.bf16.mxu0 %v2022
        %2524 = vmatpush1.bf16.msra.mxu0 %v2021
        %2525 = vmatprep.subr.bf16.mxu0 %v2026
        %2526 = vmatpush1.bf16.msra.mxu0 %v2025
        %2527 = vmatprep.subr.bf16.mxu0 %v2030
        %2528 = vmatpush1.bf16.msra.mxu0 %v2029
        %2529 = vmatprep.subr.bf16.mxu0 %v2034
        %2530 = vmatpush1.bf16.msra.mxu0 %v2033
        %2531 = vmatprep.subr.bf16.mxu0 %v2038
        %2532 = vmatpush1.bf16.msra.mxu0 %v2037
        %2533 = vmatprep.subr.bf16.mxu0 %v2042
        %2534 = vmatpush1.bf16.msra.mxu0 %v2041
        %2535 = vmatprep.subr.bf16.mxu0 %v2046
        %2536 = vmatpush1.bf16.msra.mxu0 %v2045
        %2537 = vmatprep.subr.bf16.mxu0 %v2050
        %2538 = vmatpush1.bf16.msra.mxu0 %v2049
        %2539 = vmatprep.subr.bf16.mxu0 %v2054
        %2540 = vmatpush1.bf16.msra.mxu0 %v2053
        %2541 = vmatprep.subr.bf16.mxu0 %v2058
        %2542 = vmatpush1.bf16.msra.mxu0 %v2057
        %2543 = vmatprep.subr.bf16.mxu0 %v2062
        %2544 = vmatpush1.bf16.msra.mxu0 %v2061
        %2545 = vmatprep.mubr.bf16.mxu0 %v1226
        %2546 = vmatmul.mubr.bf16.gmra.mrb[0].mxu0 %v1225
        %v2547 = vpop.f32.mrb[0].mxu0
        %v2548 = vadd.f32 0.0, %v2547
        %v2549 = vpop.f32.mrb[0].mxu0
        %v2550 = vadd.f32 0.0, %v2549
        %v2551 = vpop.f32.mrb[0].mxu0
        %v2552 = vadd.f32 0.0, %v2551
        %v2553 = vpop.f32.mrb[0].mxu0
        %v2554 = vadd.f32 0.0, %v2553
        %2555 = vdwg.mxu0
        %2556 = vmatprep.subr.bf16.mxu0 %v2066
        %2557 = vmatpush1.bf16.msra.mxu0 %v2065
        %2558 = vmatprep.subr.bf16.mxu0 %v2070
        %2559 = vmatpush1.bf16.msra.mxu0 %v2069
        %2560 = vmatprep.subr.bf16.mxu0 %v2074
        %2561 = vmatpush1.bf16.msra.mxu0 %v2073
        %2562 = vmatprep.subr.bf16.mxu0 %v2078
        %2563 = vmatpush1.bf16.msra.mxu0 %v2077
        %2564 = vmatprep.subr.bf16.mxu0 %v2082
        %2565 = vmatpush1.bf16.msra.mxu0 %v2081
        %2566 = vmatprep.subr.bf16.mxu0 %v2086
        %2567 = vmatpush1.bf16.msra.mxu0 %v2085
        %2568 = vmatprep.subr.bf16.mxu0 %v2090
        %2569 = vmatpush1.bf16.msra.mxu0 %v2089
        %2570 = vmatprep.subr.bf16.mxu0 %v2094
        %2571 = vmatpush1.bf16.msra.mxu0 %v2093
        %2572 = vmatprep.subr.bf16.mxu0 %v2098
        %2573 = vmatpush1.bf16.msra.mxu0 %v2097
        %2574 = vmatprep.subr.bf16.mxu0 %v2102
        %2575 = vmatpush1.bf16.msra.mxu0 %v2101
        %2576 = vmatprep.subr.bf16.mxu0 %v2106
        %2577 = vmatpush1.bf16.msra.mxu0 %v2105
        %2578 = vmatprep.subr.bf16.mxu0 %v2110
        %2579 = vmatpush1.bf16.msra.mxu0 %v2109
        %2580 = vmatprep.subr.bf16.mxu0 %v2114
        %2581 = vmatpush1.bf16.msra.mxu0 %v2113
        %2582 = vmatprep.subr.bf16.mxu0 %v2118
        %2583 = vmatpush1.bf16.msra.mxu0 %v2117
        %2584 = vmatprep.subr.bf16.mxu0 %v2122
        %2585 = vmatpush1.bf16.msra.mxu0 %v2121
        %2586 = vmatprep.subr.bf16.mxu0 %v2126
        %2587 = vmatpush1.bf16.msra.mxu0 %v2125
        %2588 = vmatprep.mubr.bf16.mxu0 %v1228
        %2589 = vmatmul.mubr.bf16.gmra.mrb[0].mxu0 %v1227
        %v2590 = vpop.f32.mrb[0].mxu0
        %v2591 = vadd.f32 %v2548, %v2590
        %v2592 = vpop.f32.mrb[0].mxu0
        %v2593 = vadd.f32 %v2550, %v2592
        %v2594 = vpop.f32.mrb[0].mxu0
        %v2595 = vadd.f32 %v2552, %v2594
        %v2596 = vpop.f32.mrb[0].mxu0
        %v2597 = vadd.f32 %v2554, %v2596
        %2598 = vdwg.mxu0
        %2599 = vmatprep.subr.bf16.mxu0 %v2130
        %2600 = vmatpush1.bf16.msra.mxu0 %v2129
        %2601 = vmatprep.subr.bf16.mxu0 %v2134
        %2602 = vmatpush1.bf16.msra.mxu0 %v2133
        %2603 = vmatprep.subr.bf16.mxu0 %v2138
        %2604 = vmatpush1.bf16.msra.mxu0 %v2137
        %2605 = vmatprep.subr.bf16.mxu0 %v2142
        %2606 = vmatpush1.bf16.msra.mxu0 %v2141
        %2607 = vmatprep.subr.bf16.mxu0 %v2146
        %2608 = vmatpush1.bf16.msra.mxu0 %v2145
        %2609 = vmatprep.subr.bf16.mxu0 %v2150
        %2610 = vmatpush1.bf16.msra.mxu0 %v2149
        %2611 = vmatprep.subr.bf16.mxu0 %v2154
        %2612 = vmatpush1.bf16.msra.mxu0 %v2153
        %2613 = vmatprep.subr.bf16.mxu0 %v2158
        %2614 = vmatpush1.bf16.msra.mxu0 %v2157
        %2615 = vmatprep.subr.bf16.mxu0 %v2162
        %2616 = vmatpush1.bf16.msra.mxu0 %v2161
        %2617 = vmatprep.subr.bf16.mxu0 %v2166
        %2618 = vmatpush1.bf16.msra.mxu0 %v2165
        %2619 = vmatprep.subr.bf16.mxu0 %v2170
        %2620 = vmatpush1.bf16.msra.mxu0 %v2169
        %2621 = vmatprep.subr.bf16.mxu0 %v2174
        %2622 = vmatpush1.bf16.msra.mxu0 %v2173
        %2623 = vmatprep.subr.bf16.mxu0 %v2178
        %2624 = vmatpush1.bf16.msra.mxu0 %v2177
        %2625 = vmatprep.subr.bf16.mxu0 %v2182
        %2626 = vmatpush1.bf16.msra.mxu0 %v2181
        %2627 = vmatprep.subr.bf16.mxu0 %v2186
        %2628 = vmatpush1.bf16.msra.mxu0 %v2185
        %2629 = vmatprep.subr.bf16.mxu0 %v2190
        %2630 = vmatpush1.bf16.msra.mxu0 %v2189
        %2631 = vmatprep.mubr.bf16.mxu0 %v1230
        %2632 = vmatmul.mubr.bf16.gmra.mrb[0].mxu0 %v1229
        %v2633 = vpop.f32.mrb[0].mxu0
        %v2634 = vadd.f32 %v2591, %v2633
        %v2635 = vpop.f32.mrb[0].mxu0
        %v2636 = vadd.f32 %v2593, %v2635
        %v2637 = vpop.f32.mrb[0].mxu0
        %v2638 = vadd.f32 %v2595, %v2637
        %v2639 = vpop.f32.mrb[0].mxu0
        %v2640 = vadd.f32 %v2597, %v2639
        %2641 = vdwg.mxu0
        %2642 = vmatprep.subr.bf16.mxu0 %v2194
        %2643 = vmatpush1.bf16.msra.mxu0 %v2193
        %2644 = vmatprep.subr.bf16.mxu0 %v2198
        %2645 = vmatpush1.bf16.msra.mxu0 %v2197
        %2646 = vmatprep.subr.bf16.mxu0 %v2202
        %2647 = vmatpush1.bf16.msra.mxu0 %v2201
        %2648 = vmatprep.subr.bf16.mxu0 %v2206
        %2649 = vmatpush1.bf16.msra.mxu0 %v2205
        %2650 = vmatprep.subr.bf16.mxu0 %v2210
        %2651 = vmatpush1.bf16.msra.mxu0 %v2209
        %2652 = vmatprep.subr.bf16.mxu0 %v2214
        %2653 = vmatpush1.bf16.msra.mxu0 %v2213
        %2654 = vmatprep.subr.bf16.mxu0 %v2218
        %2655 = vmatpush1.bf16.msra.mxu0 %v2217
        %2656 = vmatprep.subr.bf16.mxu0 %v2222
        %2657 = vmatpush1.bf16.msra.mxu0 %v2221
        %2658 = vmatprep.subr.bf16.mxu0 %v2226
        %2659 = vmatpush1.bf16.msra.mxu0 %v2225
        %2660 = vmatprep.subr.bf16.mxu0 %v2230
        %2661 = vmatpush1.bf16.msra.mxu0 %v2229
        %2662 = vmatprep.subr.bf16.mxu0 %v2234
        %2663 = vmatpush1.bf16.msra.mxu0 %v2233
        %2664 = vmatprep.subr.bf16.mxu0 %v2238
        %2665 = vmatpush1.bf16.msra.mxu0 %v2237
        %2666 = vmatprep.subr.bf16.mxu0 %v2242
        %2667 = vmatpush1.bf16.msra.mxu0 %v2241
        %2668 = vmatprep.subr.bf16.mxu0 %v2246
        %2669 = vmatpush1.bf16.msra.mxu0 %v2245
        %2670 = vmatprep.subr.bf16.mxu0 %v2250
        %2671 = vmatpush1.bf16.msra.mxu0 %v2249
        %2672 = vmatprep.subr.bf16.mxu0 %v2254
        %2673 = vmatpush1.bf16.msra.mxu0 %v2253
        %2674 = vmatprep.mubr.bf16.mxu0 %v1232
        %2675 = vmatmul.mubr.bf16.gmra.mrb[0].mxu0 %v1231
        %v2676 = vpop.f32.mrb[0].mxu0
        %v2677 = vadd.f32 %v2634, %v2676
        %v2678 = vpop.f32.mrb[0].mxu0
        %v2679 = vadd.f32 %v2636, %v2678
        %v2680 = vpop.f32.mrb[0].mxu0
        %v2681 = vadd.f32 %v2638, %v2680
        %v2682 = vpop.f32.mrb[0].mxu0
        %v2683 = vadd.f32 %v2640, %v2682
        %2684 = vdwg.mxu0
        %2685 = vmatprep.subr.bf16.mxu0 %v2004
        %2686 = vmatpush1.bf16.msra.mxu0 %v2003
        %2687 = vmatprep.subr.bf16.mxu0 %v2008
        %2688 = vmatpush1.bf16.msra.mxu0 %v2007
        %2689 = vmatprep.subr.bf16.mxu0 %v2012
        %2690 = vmatpush1.bf16.msra.mxu0 %v2011
        %2691 = vmatprep.subr.bf16.mxu0 %v2016
        %2692 = vmatpush1.bf16.msra.mxu0 %v2015
        %2693 = vmatprep.subr.bf16.mxu0 %v2020
        %2694 = vmatpush1.bf16.msra.mxu0 %v2019
        %2695 = vmatprep.subr.bf16.mxu0 %v2024
        %2696 = vmatpush1.bf16.msra.mxu0 %v2023
        %2697 = vmatprep.subr.bf16.mxu0 %v2028
        %2698 = vmatpush1.bf16.msra.mxu0 %v2027
        %2699 = vmatprep.subr.bf16.mxu0 %v2032
        %2700 = vmatpush1.bf16.msra.mxu0 %v2031
        %2701 = vmatprep.subr.bf16.mxu0 %v2036
        %2702 = vmatpush1.bf16.msra.mxu0 %v2035
        %2703 = vmatprep.subr.bf16.mxu0 %v2040
        %2704 = vmatpush1.bf16.msra.mxu0 %v2039
        %2705 = vmatprep.subr.bf16.mxu0 %v2044
        %2706 = vmatpush1.bf16.msra.mxu0 %v2043
        %2707 = vmatprep.subr.bf16.mxu0 %v2048
        %2708 = vmatpush1.bf16.msra.mxu0 %v2047
        %2709 = vmatprep.subr.bf16.mxu0 %v2052
        %2710 = vmatpush1.bf16.msra.mxu0 %v2051
        %2711 = vmatprep.subr.bf16.mxu0 %v2056
        %2712 = vmatpush1.bf16.msra.mxu0 %v2055
        %2713 = vmatprep.subr.bf16.mxu0 %v2060
        %2714 = vmatpush1.bf16.msra.mxu0 %v2059
        %2715 = vmatprep.subr.bf16.mxu0 %v2064
        %2716 = vmatpush1.bf16.msra.mxu0 %v2063
        %2717 = vmatprep.mubr.bf16.mxu0 %v1226
        %2718 = vmatmul.mubr.bf16.gmra.mrb[0].mxu0 %v1225
        %v2719 = vpop.f32.mrb[0].mxu0
        %v2720 = vadd.f32 0.0, %v2719
        %v2721 = vpop.f32.mrb[0].mxu0
        %v2722 = vadd.f32 0.0, %v2721
        %v2723 = vpop.f32.mrb[0].mxu0
        %v2724 = vadd.f32 0.0, %v2723
        %v2725 = vpop.f32.mrb[0].mxu0
        %v2726 = vadd.f32 0.0, %v2725
        %2727 = vdwg.mxu0
        %2728 = vmatprep.subr.bf16.mxu0 %v2068
        %2729 = vmatpush1.bf16.msra.mxu0 %v2067
        %2730 = vmatprep.subr.bf16.mxu0 %v2072
        %2731 = vmatpush1.bf16.msra.mxu0 %v2071
        %2732 = vmatprep.subr.bf16.mxu0 %v2076
        %2733 = vmatpush1.bf16.msra.mxu0 %v2075
        %2734 = vmatprep.subr.bf16.mxu0 %v2080
        %2735 = vmatpush1.bf16.msra.mxu0 %v2079
        %2736 = vmatprep.subr.bf16.mxu0 %v2084
        %2737 = vmatpush1.bf16.msra.mxu0 %v2083
        %2738 = vmatprep.subr.bf16.mxu0 %v2088
        %2739 = vmatpush1.bf16.msra.mxu0 %v2087
        %2740 = vmatprep.subr.bf16.mxu0 %v2092
        %2741 = vmatpush1.bf16.msra.mxu0 %v2091
        %2742 = vmatprep.subr.bf16.mxu0 %v2096
        %2743 = vmatpush1.bf16.msra.mxu0 %v2095
        %2744 = vmatprep.subr.bf16.mxu0 %v2100
        %2745 = vmatpush1.bf16.msra.mxu0 %v2099
        %2746 = vmatprep.subr.bf16.mxu0 %v2104
        %2747 = vmatpush1.bf16.msra.mxu0 %v2103
        %2748 = vmatprep.subr.bf16.mxu0 %v2108
        %2749 = vmatpush1.bf16.msra.mxu0 %v2107
        %2750 = vmatprep.subr.bf16.mxu0 %v2112
        %2751 = vmatpush1.bf16.msra.mxu0 %v2111
        %2752 = vmatprep.subr.bf16.mxu0 %v2116
        %2753 = vmatpush1.bf16.msra.mxu0 %v2115
        %2754 = vmatprep.subr.bf16.mxu0 %v2120
        %2755 = vmatpush1.bf16.msra.mxu0 %v2119
        %2756 = vmatprep.subr.bf16.mxu0 %v2124
        %2757 = vmatpush1.bf16.msra.mxu0 %v2123
        %2758 = vmatprep.subr.bf16.mxu0 %v2128
        %2759 = vmatpush1.bf16.msra.mxu0 %v2127
        %2760 = vmatprep.mubr.bf16.mxu0 %v1228
        %2761 = vmatmul.mubr.bf16.gmra.mrb[0].mxu0 %v1227
        %v2762 = vpop.f32.mrb[0].mxu0
        %v2763 = vadd.f32 %v2720, %v2762
        %v2764 = vpop.f32.mrb[0].mxu0
        %v2765 = vadd.f32 %v2722, %v2764
        %v2766 = vpop.f32.mrb[0].mxu0
        %v2767 = vadd.f32 %v2724, %v2766
        %v2768 = vpop.f32.mrb[0].mxu0
        %v2769 = vadd.f32 %v2726, %v2768
        %2770 = vdwg.mxu0
        %2771 = vmatprep.subr.bf16.mxu0 %v2132
        %2772 = vmatpush1.bf16.msra.mxu0 %v2131
        %2773 = vmatprep.subr.bf16.mxu0 %v2136
        %2774 = vmatpush1.bf16.msra.mxu0 %v2135
        %2775 = vmatprep.subr.bf16.mxu0 %v2140
        %2776 = vmatpush1.bf16.msra.mxu0 %v2139
        %2777 = vmatprep.subr.bf16.mxu0 %v2144
        %2778 = vmatpush1.bf16.msra.mxu0 %v2143
        %2779 = vmatprep.subr.bf16.mxu0 %v2148
        %2780 = vmatpush1.bf16.msra.mxu0 %v2147
        %2781 = vmatprep.subr.bf16.mxu0 %v2152
        %2782 = vmatpush1.bf16.msra.mxu0 %v2151
        %2783 = vmatprep.subr.bf16.mxu0 %v2156
        %2784 = vmatpush1.bf16.msra.mxu0 %v2155
        %2785 = vmatprep.subr.bf16.mxu0 %v2160
        %2786 = vmatpush1.bf16.msra.mxu0 %v2159
        %2787 = vmatprep.subr.bf16.mxu0 %v2164
        %2788 = vmatpush1.bf16.msra.mxu0 %v2163
        %2789 = vmatprep.subr.bf16.mxu0 %v2168
        %2790 = vmatpush1.bf16.msra.mxu0 %v2167
        %2791 = vmatprep.subr.bf16.mxu0 %v2172
        %2792 = vmatpush1.bf16.msra.mxu0 %v2171
        %2793 = vmatprep.subr.bf16.mxu0 %v2176
        %2794 = vmatpush1.bf16.msra.mxu0 %v2175
        %2795 = vmatprep.subr.bf16.mxu0 %v2180
        %2796 = vmatpush1.bf16.msra.mxu0 %v2179
        %2797 = vmatprep.subr.bf16.mxu0 %v2184
        %2798 = vmatpush1.bf16.msra.mxu0 %v2183
        %2799 = vmatprep.subr.bf16.mxu0 %v2188
        %2800 = vmatpush1.bf16.msra.mxu0 %v2187
        %2801 = vmatprep.subr.bf16.mxu0 %v2192
        %2802 = vmatpush1.bf16.msra.mxu0 %v2191
        %2803 = vmatprep.mubr.bf16.mxu0 %v1230
        %2804 = vmatmul.mubr.bf16.gmra.mrb[0].mxu0 %v1229
        %v2805 = vpop.f32.mrb[0].mxu0
        %v2806 = vadd.f32 %v2763, %v2805
        %v2807 = vpop.f32.mrb[0].mxu0
        %v2808 = vadd.f32 %v2765, %v2807
        %v2809 = vpop.f32.mrb[0].mxu0
        %v2810 = vadd.f32 %v2767, %v2809
        %v2811 = vpop.f32.mrb[0].mxu0
        %v2812 = vadd.f32 %v2769, %v2811
        %2813 = vdwg.mxu0
        %2814 = vmatprep.subr.bf16.mxu0 %v2196
        %2815 = vmatpush1.bf16.msra.mxu0 %v2195
        %2816 = vmatprep.subr.bf16.mxu0 %v2200
        %2817 = vmatpush1.bf16.msra.mxu0 %v2199
        %2818 = vmatprep.subr.bf16.mxu0 %v2204
        %2819 = vmatpush1.bf16.msra.mxu0 %v2203
        %2820 = vmatprep.subr.bf16.mxu0 %v2208
        %2821 = vmatpush1.bf16.msra.mxu0 %v2207
        %2822 = vmatprep.subr.bf16.mxu0 %v2212
        %2823 = vmatpush1.bf16.msra.mxu0 %v2211
        %2824 = vmatprep.subr.bf16.mxu0 %v2216
        %2825 = vmatpush1.bf16.msra.mxu0 %v2215
        %2826 = vmatprep.subr.bf16.mxu0 %v2220
        %2827 = vmatpush1.bf16.msra.mxu0 %v2219
        %2828 = vmatprep.subr.bf16.mxu0 %v2224
        %2829 = vmatpush1.bf16.msra.mxu0 %v2223
        %2830 = vmatprep.subr.bf16.mxu0 %v2228
        %2831 = vmatpush1.bf16.msra.mxu0 %v2227
        %2832 = vmatprep.subr.bf16.mxu0 %v2232
        %2833 = vmatpush1.bf16.msra.mxu0 %v2231
        %2834 = vmatprep.subr.bf16.mxu0 %v2236
        %2835 = vmatpush1.bf16.msra.mxu0 %v2235
        %2836 = vmatprep.subr.bf16.mxu0 %v2240
        %2837 = vmatpush1.bf16.msra.mxu0 %v2239
        %2838 = vmatprep.subr.bf16.mxu0 %v2244
        %2839 = vmatpush1.bf16.msra.mxu0 %v2243
        %2840 = vmatprep.subr.bf16.mxu0 %v2248
        %2841 = vmatpush1.bf16.msra.mxu0 %v2247
        %2842 = vmatprep.subr.bf16.mxu0 %v2252
        %2843 = vmatpush1.bf16.msra.mxu0 %v2251
        %2844 = vmatprep.subr.bf16.mxu0 %v2256
        %2845 = vmatpush1.bf16.msra.mxu0 %v2255
        %2846 = vmatprep.mubr.bf16.mxu0 %v1232
        %2847 = vmatmul.mubr.bf16.gmra.mrb[0].mxu0 %v1231
        %v2848 = vpop.f32.mrb[0].mxu0
        %v2849 = vadd.f32 %v2806, %v2848
        %v2850 = vpop.f32.mrb[0].mxu0
        %v2851 = vadd.f32 %v2808, %v2850
        %v2852 = vpop.f32.mrb[0].mxu0
        %v2853 = vadd.f32 %v2810, %v2852
        %v2854 = vpop.f32.mrb[0].mxu0
        %v2855 = vadd.f32 %v2812, %v2854
        %2856 = vdwg.mxu0
        %v2861 = vrot.slane %v929, 1
        %v2862 = vrot.slane %v931, 1
        %v2863 = vsel %vm675, %v2861, %v2862
        %v2864 = vrot.slane %v930, 1
        %v2865 = vrot.slane %v932, 1
        %v2866 = vsel %vm675, %v2864, %v2865
        %v2871 = vrot.slane %v929, 2
        %v2872 = vrot.slane %v931, 2
        %v2873 = vsel %vm1203, %v2871, %v2872
        %v2874 = vrot.slane %v930, 2
        %v2875 = vrot.slane %v932, 2
        %v2876 = vsel %vm1203, %v2874, %v2875
        %v2881 = vrot.slane %v929, 3
        %v2882 = vrot.slane %v931, 3
        %v2883 = vsel %vm1214, %v2881, %v2882
        %v2884 = vrot.slane %v930, 3
        %v2885 = vrot.slane %v932, 3
        %v2886 = vsel %vm1214, %v2884, %v2885
        %v2891 = vpack.c.bf16 %v931, %v929
        %v2892 = vpack.c.bf16 %v932, %v930
        %v2893 = vpack.c.bf16 %v2862, %v2863
        %v2894 = vpack.c.bf16 %v2865, %v2866
        %v2895 = vpack.c.bf16 %v2872, %v2873
        %v2896 = vpack.c.bf16 %v2875, %v2876
        %v2897 = vpack.c.bf16 %v2882, %v2883
        %v2898 = vpack.c.bf16 %v2885, %v2886
        %2899 = vmatprep.subr.bf16.mxu0 %v2002
        %2900 = vmatpush1.bf16.msra.mxu0 %v2001
        %2901 = vmatprep.subr.bf16.mxu0 %v2006
        %2902 = vmatpush1.bf16.msra.mxu0 %v2005
        %2903 = vmatprep.subr.bf16.mxu0 %v2010
        %2904 = vmatpush1.bf16.msra.mxu0 %v2009
        %2905 = vmatprep.subr.bf16.mxu0 %v2014
        %2906 = vmatpush1.bf16.msra.mxu0 %v2013
        %2907 = vmatprep.subr.bf16.mxu0 %v2018
        %2908 = vmatpush1.bf16.msra.mxu0 %v2017
        %2909 = vmatprep.subr.bf16.mxu0 %v2022
        %2910 = vmatpush1.bf16.msra.mxu0 %v2021
        %2911 = vmatprep.subr.bf16.mxu0 %v2026
        %2912 = vmatpush1.bf16.msra.mxu0 %v2025
        %2913 = vmatprep.subr.bf16.mxu0 %v2030
        %2914 = vmatpush1.bf16.msra.mxu0 %v2029
        %2915 = vmatprep.subr.bf16.mxu0 %v2034
        %2916 = vmatpush1.bf16.msra.mxu0 %v2033
        %2917 = vmatprep.subr.bf16.mxu0 %v2038
        %2918 = vmatpush1.bf16.msra.mxu0 %v2037
        %2919 = vmatprep.subr.bf16.mxu0 %v2042
        %2920 = vmatpush1.bf16.msra.mxu0 %v2041
        %2921 = vmatprep.subr.bf16.mxu0 %v2046
        %2922 = vmatpush1.bf16.msra.mxu0 %v2045
        %2923 = vmatprep.subr.bf16.mxu0 %v2050
        %2924 = vmatpush1.bf16.msra.mxu0 %v2049
        %2925 = vmatprep.subr.bf16.mxu0 %v2054
        %2926 = vmatpush1.bf16.msra.mxu0 %v2053
        %2927 = vmatprep.subr.bf16.mxu0 %v2058
        %2928 = vmatpush1.bf16.msra.mxu0 %v2057
        %2929 = vmatprep.subr.bf16.mxu0 %v2062
        %2930 = vmatpush1.bf16.msra.mxu0 %v2061
        %2931 = vmatprep.mubr.bf16.mxu0 %v2892
        %2932 = vmatmul.mubr.bf16.gmra.mrb[0].mxu0 %v2891
        %v2933 = vpop.f32.mrb[0].mxu0
        %v2934 = vadd.f32 0.0, %v2933
        %v2935 = vpop.f32.mrb[0].mxu0
        %v2936 = vadd.f32 0.0, %v2935
        %v2937 = vpop.f32.mrb[0].mxu0
        %v2938 = vadd.f32 0.0, %v2937
        %v2939 = vpop.f32.mrb[0].mxu0
        %v2940 = vadd.f32 0.0, %v2939
        %2941 = vdwg.mxu0
        %2942 = vmatprep.subr.bf16.mxu0 %v2066
        %2943 = vmatpush1.bf16.msra.mxu0 %v2065
        %2944 = vmatprep.subr.bf16.mxu0 %v2070
        %2945 = vmatpush1.bf16.msra.mxu0 %v2069
        %2946 = vmatprep.subr.bf16.mxu0 %v2074
        %2947 = vmatpush1.bf16.msra.mxu0 %v2073
        %2948 = vmatprep.subr.bf16.mxu0 %v2078
        %2949 = vmatpush1.bf16.msra.mxu0 %v2077
        %2950 = vmatprep.subr.bf16.mxu0 %v2082
        %2951 = vmatpush1.bf16.msra.mxu0 %v2081
        %2952 = vmatprep.subr.bf16.mxu0 %v2086
        %2953 = vmatpush1.bf16.msra.mxu0 %v2085
        %2954 = vmatprep.subr.bf16.mxu0 %v2090
        %2955 = vmatpush1.bf16.msra.mxu0 %v2089
        %2956 = vmatprep.subr.bf16.mxu0 %v2094
        %2957 = vmatpush1.bf16.msra.mxu0 %v2093
        %2958 = vmatprep.subr.bf16.mxu0 %v2098
        %2959 = vmatpush1.bf16.msra.mxu0 %v2097
        %2960 = vmatprep.subr.bf16.mxu0 %v2102
        %2961 = vmatpush1.bf16.msra.mxu0 %v2101
        %2962 = vmatprep.subr.bf16.mxu0 %v2106
        %2963 = vmatpush1.bf16.msra.mxu0 %v2105
        %2964 = vmatprep.subr.bf16.mxu0 %v2110
        %2965 = vmatpush1.bf16.msra.mxu0 %v2109
        %2966 = vmatprep.subr.bf16.mxu0 %v2114
        %2967 = vmatpush1.bf16.msra.mxu0 %v2113
        %2968 = vmatprep.subr.bf16.mxu0 %v2118
        %2969 = vmatpush1.bf16.msra.mxu0 %v2117
        %2970 = vmatprep.subr.bf16.mxu0 %v2122
        %2971 = vmatpush1.bf16.msra.mxu0 %v2121
        %2972 = vmatprep.subr.bf16.mxu0 %v2126
        %2973 = vmatpush1.bf16.msra.mxu0 %v2125
        %2974 = vmatprep.mubr.bf16.mxu0 %v2894
        %2975 = vmatmul.mubr.bf16.gmra.mrb[0].mxu0 %v2893
        %v2976 = vpop.f32.mrb[0].mxu0
        %v2977 = vadd.f32 %v2934, %v2976
        %v2978 = vpop.f32.mrb[0].mxu0
        %v2979 = vadd.f32 %v2936, %v2978
        %v2980 = vpop.f32.mrb[0].mxu0
        %v2981 = vadd.f32 %v2938, %v2980
        %v2982 = vpop.f32.mrb[0].mxu0
        %v2983 = vadd.f32 %v2940, %v2982
        %2984 = vdwg.mxu0
        %2985 = vmatprep.subr.bf16.mxu0 %v2130
        %2986 = vmatpush1.bf16.msra.mxu0 %v2129
        %2987 = vmatprep.subr.bf16.mxu0 %v2134
        %2988 = vmatpush1.bf16.msra.mxu0 %v2133
        %2989 = vmatprep.subr.bf16.mxu0 %v2138
        %2990 = vmatpush1.bf16.msra.mxu0 %v2137
        %2991 = vmatprep.subr.bf16.mxu0 %v2142
        %2992 = vmatpush1.bf16.msra.mxu0 %v2141
        %2993 = vmatprep.subr.bf16.mxu0 %v2146
        %2994 = vmatpush1.bf16.msra.mxu0 %v2145
        %2995 = vmatprep.subr.bf16.mxu0 %v2150
        %2996 = vmatpush1.bf16.msra.mxu0 %v2149
        %2997 = vmatprep.subr.bf16.mxu0 %v2154
        %2998 = vmatpush1.bf16.msra.mxu0 %v2153
        %2999 = vmatprep.subr.bf16.mxu0 %v2158
        %3000 = vmatpush1.bf16.msra.mxu0 %v2157
        %3001 = vmatprep.subr.bf16.mxu0 %v2162
        %3002 = vmatpush1.bf16.msra.mxu0 %v2161
        %3003 = vmatprep.subr.bf16.mxu0 %v2166
        %3004 = vmatpush1.bf16.msra.mxu0 %v2165
        %3005 = vmatprep.subr.bf16.mxu0 %v2170
        %3006 = vmatpush1.bf16.msra.mxu0 %v2169
        %3007 = vmatprep.subr.bf16.mxu0 %v2174
        %3008 = vmatpush1.bf16.msra.mxu0 %v2173
        %3009 = vmatprep.subr.bf16.mxu0 %v2178
        %3010 = vmatpush1.bf16.msra.mxu0 %v2177
        %3011 = vmatprep.subr.bf16.mxu0 %v2182
        %3012 = vmatpush1.bf16.msra.mxu0 %v2181
        %3013 = vmatprep.subr.bf16.mxu0 %v2186
        %3014 = vmatpush1.bf16.msra.mxu0 %v2185
        %3015 = vmatprep.subr.bf16.mxu0 %v2190
        %3016 = vmatpush1.bf16.msra.mxu0 %v2189
        %3017 = vmatprep.mubr.bf16.mxu0 %v2896
        %3018 = vmatmul.mubr.bf16.gmra.mrb[0].mxu0 %v2895
        %v3019 = vpop.f32.mrb[0].mxu0
        %v3020 = vadd.f32 %v2977, %v3019
        %v3021 = vpop.f32.mrb[0].mxu0
        %v3022 = vadd.f32 %v2979, %v3021
        %v3023 = vpop.f32.mrb[0].mxu0
        %v3024 = vadd.f32 %v2981, %v3023
        %v3025 = vpop.f32.mrb[0].mxu0
        %v3026 = vadd.f32 %v2983, %v3025
        %3027 = vdwg.mxu0
        %3028 = vmatprep.subr.bf16.mxu0 %v2194
        %3029 = vmatpush1.bf16.msra.mxu0 %v2193
        %3030 = vmatprep.subr.bf16.mxu0 %v2198
        %3031 = vmatpush1.bf16.msra.mxu0 %v2197
        %3032 = vmatprep.subr.bf16.mxu0 %v2202
        %3033 = vmatpush1.bf16.msra.mxu0 %v2201
        %3034 = vmatprep.subr.bf16.mxu0 %v2206
        %3035 = vmatpush1.bf16.msra.mxu0 %v2205
        %3036 = vmatprep.subr.bf16.mxu0 %v2210
        %3037 = vmatpush1.bf16.msra.mxu0 %v2209
        %3038 = vmatprep.subr.bf16.mxu0 %v2214
        %3039 = vmatpush1.bf16.msra.mxu0 %v2213
        %3040 = vmatprep.subr.bf16.mxu0 %v2218
        %3041 = vmatpush1.bf16.msra.mxu0 %v2217
        %3042 = vmatprep.subr.bf16.mxu0 %v2222
        %3043 = vmatpush1.bf16.msra.mxu0 %v2221
        %3044 = vmatprep.subr.bf16.mxu0 %v2226
        %3045 = vmatpush1.bf16.msra.mxu0 %v2225
        %3046 = vmatprep.subr.bf16.mxu0 %v2230
        %3047 = vmatpush1.bf16.msra.mxu0 %v2229
        %3048 = vmatprep.subr.bf16.mxu0 %v2234
        %3049 = vmatpush1.bf16.msra.mxu0 %v2233
        %3050 = vmatprep.subr.bf16.mxu0 %v2238
        %3051 = vmatpush1.bf16.msra.mxu0 %v2237
        %3052 = vmatprep.subr.bf16.mxu0 %v2242
        %3053 = vmatpush1.bf16.msra.mxu0 %v2241
        %3054 = vmatprep.subr.bf16.mxu0 %v2246
        %3055 = vmatpush1.bf16.msra.mxu0 %v2245
        %3056 = vmatprep.subr.bf16.mxu0 %v2250
        %3057 = vmatpush1.bf16.msra.mxu0 %v2249
        %3058 = vmatprep.subr.bf16.mxu0 %v2254
        %3059 = vmatpush1.bf16.msra.mxu0 %v2253
        %3060 = vmatprep.mubr.bf16.mxu0 %v2898
        %3061 = vmatmul.mubr.bf16.gmra.mrb[0].mxu0 %v2897
        %v3062 = vpop.f32.mrb[0].mxu0
        %v3063 = vadd.f32 %v3020, %v3062
        %v3064 = vpop.f32.mrb[0].mxu0
        %v3065 = vadd.f32 %v3022, %v3064
        %v3066 = vpop.f32.mrb[0].mxu0
        %v3067 = vadd.f32 %v3024, %v3066
        %v3068 = vpop.f32.mrb[0].mxu0
        %v3069 = vadd.f32 %v3026, %v3068
        %3070 = vdwg.mxu0
        %3071 = vmatprep.subr.bf16.mxu0 %v2004
        %3072 = vmatpush1.bf16.msra.mxu0 %v2003
        %3073 = vmatprep.subr.bf16.mxu0 %v2008
        %3074 = vmatpush1.bf16.msra.mxu0 %v2007
        %3075 = vmatprep.subr.bf16.mxu0 %v2012
        %3076 = vmatpush1.bf16.msra.mxu0 %v2011
        %3077 = vmatprep.subr.bf16.mxu0 %v2016
        %3078 = vmatpush1.bf16.msra.mxu0 %v2015
        %3079 = vmatprep.subr.bf16.mxu0 %v2020
        %3080 = vmatpush1.bf16.msra.mxu0 %v2019
        %3081 = vmatprep.subr.bf16.mxu0 %v2024
        %3082 = vmatpush1.bf16.msra.mxu0 %v2023
        %3083 = vmatprep.subr.bf16.mxu0 %v2028
        %3084 = vmatpush1.bf16.msra.mxu0 %v2027
        %3085 = vmatprep.subr.bf16.mxu0 %v2032
        %3086 = vmatpush1.bf16.msra.mxu0 %v2031
        %3087 = vmatprep.subr.bf16.mxu0 %v2036
        %3088 = vmatpush1.bf16.msra.mxu0 %v2035
        %3089 = vmatprep.subr.bf16.mxu0 %v2040
        %3090 = vmatpush1.bf16.msra.mxu0 %v2039
        %3091 = vmatprep.subr.bf16.mxu0 %v2044
        %3092 = vmatpush1.bf16.msra.mxu0 %v2043
        %3093 = vmatprep.subr.bf16.mxu0 %v2048
        %3094 = vmatpush1.bf16.msra.mxu0 %v2047
        %3095 = vmatprep.subr.bf16.mxu0 %v2052
        %3096 = vmatpush1.bf16.msra.mxu0 %v2051
        %3097 = vmatprep.subr.bf16.mxu0 %v2056
        %3098 = vmatpush1.bf16.msra.mxu0 %v2055
        %3099 = vmatprep.subr.bf16.mxu0 %v2060
        %3100 = vmatpush1.bf16.msra.mxu0 %v2059
        %3101 = vmatprep.subr.bf16.mxu0 %v2064
        %3102 = vmatpush1.bf16.msra.mxu0 %v2063
        %3103 = vmatprep.mubr.bf16.mxu0 %v2892
        %3104 = vmatmul.mubr.bf16.gmra.mrb[0].mxu0 %v2891
        %v3105 = vpop.f32.mrb[0].mxu0
        %v3106 = vadd.f32 0.0, %v3105
        %v3107 = vpop.f32.mrb[0].mxu0
        %v3108 = vadd.f32 0.0, %v3107
        %v3109 = vpop.f32.mrb[0].mxu0
        %v3110 = vadd.f32 0.0, %v3109
        %v3111 = vpop.f32.mrb[0].mxu0
        %v3112 = vadd.f32 0.0, %v3111
        %3113 = vdwg.mxu0
        %3114 = vmatprep.subr.bf16.mxu0 %v2068
        %3115 = vmatpush1.bf16.msra.mxu0 %v2067
        %3116 = vmatprep.subr.bf16.mxu0 %v2072
        %3117 = vmatpush1.bf16.msra.mxu0 %v2071
        %3118 = vmatprep.subr.bf16.mxu0 %v2076
        %3119 = vmatpush1.bf16.msra.mxu0 %v2075
        %3120 = vmatprep.subr.bf16.mxu0 %v2080
        %3121 = vmatpush1.bf16.msra.mxu0 %v2079
        %3122 = vmatprep.subr.bf16.mxu0 %v2084
        %3123 = vmatpush1.bf16.msra.mxu0 %v2083
        %3124 = vmatprep.subr.bf16.mxu0 %v2088
        %3125 = vmatpush1.bf16.msra.mxu0 %v2087
        %3126 = vmatprep.subr.bf16.mxu0 %v2092
        %3127 = vmatpush1.bf16.msra.mxu0 %v2091
        %3128 = vmatprep.subr.bf16.mxu0 %v2096
        %3129 = vmatpush1.bf16.msra.mxu0 %v2095
        %3130 = vmatprep.subr.bf16.mxu0 %v2100
        %3131 = vmatpush1.bf16.msra.mxu0 %v2099
        %3132 = vmatprep.subr.bf16.mxu0 %v2104
        %3133 = vmatpush1.bf16.msra.mxu0 %v2103
        %3134 = vmatprep.subr.bf16.mxu0 %v2108
        %3135 = vmatpush1.bf16.msra.mxu0 %v2107
        %3136 = vmatprep.subr.bf16.mxu0 %v2112
        %3137 = vmatpush1.bf16.msra.mxu0 %v2111
        %3138 = vmatprep.subr.bf16.mxu0 %v2116
        %3139 = vmatpush1.bf16.msra.mxu0 %v2115
        %3140 = vmatprep.subr.bf16.mxu0 %v2120
        %3141 = vmatpush1.bf16.msra.mxu0 %v2119
        %3142 = vmatprep.subr.bf16.mxu0 %v2124
        %3143 = vmatpush1.bf16.msra.mxu0 %v2123
        %3144 = vmatprep.subr.bf16.mxu0 %v2128
        %3145 = vmatpush1.bf16.msra.mxu0 %v2127
        %3146 = vmatprep.mubr.bf16.mxu0 %v2894
        %3147 = vmatmul.mubr.bf16.gmra.mrb[0].mxu0 %v2893
        %v3148 = vpop.f32.mrb[0].mxu0
        %v3149 = vadd.f32 %v3106, %v3148
        %v3150 = vpop.f32.mrb[0].mxu0
        %v3151 = vadd.f32 %v3108, %v3150
        %v3152 = vpop.f32.mrb[0].mxu0
        %v3153 = vadd.f32 %v3110, %v3152
        %v3154 = vpop.f32.mrb[0].mxu0
        %v3155 = vadd.f32 %v3112, %v3154
        %3156 = vdwg.mxu0
        %3157 = vmatprep.subr.bf16.mxu0 %v2132
        %3158 = vmatpush1.bf16.msra.mxu0 %v2131
        %3159 = vmatprep.subr.bf16.mxu0 %v2136
        %3160 = vmatpush1.bf16.msra.mxu0 %v2135
        %3161 = vmatprep.subr.bf16.mxu0 %v2140
        %3162 = vmatpush1.bf16.msra.mxu0 %v2139
        %3163 = vmatprep.subr.bf16.mxu0 %v2144
        %3164 = vmatpush1.bf16.msra.mxu0 %v2143
        %3165 = vmatprep.subr.bf16.mxu0 %v2148
        %3166 = vmatpush1.bf16.msra.mxu0 %v2147
        %3167 = vmatprep.subr.bf16.mxu0 %v2152
        %3168 = vmatpush1.bf16.msra.mxu0 %v2151
        %3169 = vmatprep.subr.bf16.mxu0 %v2156
        %3170 = vmatpush1.bf16.msra.mxu0 %v2155
        %3171 = vmatprep.subr.bf16.mxu0 %v2160
        %3172 = vmatpush1.bf16.msra.mxu0 %v2159
        %3173 = vmatprep.subr.bf16.mxu0 %v2164
        %3174 = vmatpush1.bf16.msra.mxu0 %v2163
        %3175 = vmatprep.subr.bf16.mxu0 %v2168
        %3176 = vmatpush1.bf16.msra.mxu0 %v2167
        %3177 = vmatprep.subr.bf16.mxu0 %v2172
        %3178 = vmatpush1.bf16.msra.mxu0 %v2171
        %3179 = vmatprep.subr.bf16.mxu0 %v2176
        %3180 = vmatpush1.bf16.msra.mxu0 %v2175
        %3181 = vmatprep.subr.bf16.mxu0 %v2180
        %3182 = vmatpush1.bf16.msra.mxu0 %v2179
        %3183 = vmatprep.subr.bf16.mxu0 %v2184
        %3184 = vmatpush1.bf16.msra.mxu0 %v2183
        %3185 = vmatprep.subr.bf16.mxu0 %v2188
        %3186 = vmatpush1.bf16.msra.mxu0 %v2187
        %3187 = vmatprep.subr.bf16.mxu0 %v2192
        %3188 = vmatpush1.bf16.msra.mxu0 %v2191
        %3189 = vmatprep.mubr.bf16.mxu0 %v2896
        %3190 = vmatmul.mubr.bf16.gmra.mrb[0].mxu0 %v2895
        %v3191 = vpop.f32.mrb[0].mxu0
        %v3192 = vadd.f32 %v3149, %v3191
        %v3193 = vpop.f32.mrb[0].mxu0
        %v3194 = vadd.f32 %v3151, %v3193
        %v3195 = vpop.f32.mrb[0].mxu0
        %v3196 = vadd.f32 %v3153, %v3195
        %v3197 = vpop.f32.mrb[0].mxu0
        %v3198 = vadd.f32 %v3155, %v3197
        %3199 = vdwg.mxu0
        %3200 = vmatprep.subr.bf16.mxu0 %v2196
        %3201 = vmatpush1.bf16.msra.mxu0 %v2195
        %3202 = vmatprep.subr.bf16.mxu0 %v2200
        %3203 = vmatpush1.bf16.msra.mxu0 %v2199
        %3204 = vmatprep.subr.bf16.mxu0 %v2204
        %3205 = vmatpush1.bf16.msra.mxu0 %v2203
        %3206 = vmatprep.subr.bf16.mxu0 %v2208
        %3207 = vmatpush1.bf16.msra.mxu0 %v2207
        %3208 = vmatprep.subr.bf16.mxu0 %v2212
        %3209 = vmatpush1.bf16.msra.mxu0 %v2211
        %3210 = vmatprep.subr.bf16.mxu0 %v2216
        %3211 = vmatpush1.bf16.msra.mxu0 %v2215
        %3212 = vmatprep.subr.bf16.mxu0 %v2220
        %3213 = vmatpush1.bf16.msra.mxu0 %v2219
        %3214 = vmatprep.subr.bf16.mxu0 %v2224
        %3215 = vmatpush1.bf16.msra.mxu0 %v2223
        %3216 = vmatprep.subr.bf16.mxu0 %v2228
        %3217 = vmatpush1.bf16.msra.mxu0 %v2227
        %3218 = vmatprep.subr.bf16.mxu0 %v2232
        %3219 = vmatpush1.bf16.msra.mxu0 %v2231
        %3220 = vmatprep.subr.bf16.mxu0 %v2236
        %3221 = vmatpush1.bf16.msra.mxu0 %v2235
        %3222 = vmatprep.subr.bf16.mxu0 %v2240
        %3223 = vmatpush1.bf16.msra.mxu0 %v2239
        %3224 = vmatprep.subr.bf16.mxu0 %v2244
        %3225 = vmatpush1.bf16.msra.mxu0 %v2243
        %3226 = vmatprep.subr.bf16.mxu0 %v2248
        %3227 = vmatpush1.bf16.msra.mxu0 %v2247
        %3228 = vmatprep.subr.bf16.mxu0 %v2252
        %3229 = vmatpush1.bf16.msra.mxu0 %v2251
        %3230 = vmatprep.subr.bf16.mxu0 %v2256
        %3231 = vmatpush1.bf16.msra.mxu0 %v2255
        %3232 = vmatprep.mubr.bf16.mxu0 %v2898
        %3233 = vmatmul.mubr.bf16.gmra.mrb[0].mxu0 %v2897
        %v3234 = vpop.f32.mrb[0].mxu0
        %v3235 = vadd.f32 %v3192, %v3234
        %v3236 = vpop.f32.mrb[0].mxu0
        %v3237 = vadd.f32 %v3194, %v3236
        %v3238 = vpop.f32.mrb[0].mxu0
        %v3239 = vadd.f32 %v3196, %v3238
        %v3240 = vpop.f32.mrb[0].mxu0
        %v3241 = vadd.f32 %v3198, %v3240
        %3242 = vdwg.mxu0
        %v3243 = vld [vmem:[#allocation8] sm:$0xf]
        %v3244 = vld [vmem:[#allocation10] sm:$0xf]
        %vm3245 = vcmask 1043456
        %v3246 = vsel %vm3245, %v2681, 0.0
        %v3247 = vadd.f32 %v2677, %v3246
        %v3248 = vadd.f32 %v3247, %v3063
        %v3249 = vsel %vm3245, %v3067, 0.0
        %v3250 = vadd.f32 %v3248, %v3249
        %v3251 = vrot.slane %v3250, 4
        %v3252 = vadd.f32 %v3250, %v3251
        %v3253 = vrot.slane %v3252, 2
        %v3254 = vadd.f32 %v3252, %v3253
        %v3255 = vrot.slane %v3254, 1
        %v3256 = vadd.f32 %v3254, %v3255
        %v3257 = vsel %vm3245, %v2683, 0.0
        %v3258 = vadd.f32 %v2679, %v3257
        %v3259 = vadd.f32 %v3258, %v3065
        %v3260 = vsel %vm3245, %v3069, 0.0
        %v3261 = vadd.f32 %v3259, %v3260
        %v3262 = vrot.slane %v3261, 4
        %v3263 = vadd.f32 %v3261, %v3262
        %v3264 = vrot.slane %v3263, 2
        %v3265 = vadd.f32 %v3263, %v3264
        %v3266 = vrot.slane %v3265, 1
        %v3267 = vadd.f32 %v3265, %v3266
        %v3268 = vsel %vm3245, %v2853, 0.0
        %v3269 = vadd.f32 %v2849, %v3268
        %v3270 = vadd.f32 %v3269, %v3235
        %v3271 = vsel %vm3245, %v3239, 0.0
        %v3272 = vadd.f32 %v3270, %v3271
        %v3273 = vrot.slane %v3272, 4
        %v3274 = vadd.f32 %v3272, %v3273
        %v3275 = vrot.slane %v3274, 2
        %v3276 = vadd.f32 %v3274, %v3275
        %v3277 = vrot.slane %v3276, 1
        %v3278 = vadd.f32 %v3276, %v3277
        %v3279 = vsel %vm3245, %v2855, 0.0
        %v3280 = vadd.f32 %v2851, %v3279
        %v3281 = vadd.f32 %v3280, %v3237
        %v3282 = vsel %vm3245, %v3241, 0.0
        %v3283 = vadd.f32 %v3281, %v3282
        %v3284 = vrot.slane %v3283, 4
        %v3285 = vadd.f32 %v3283, %v3284
        %v3286 = vrot.slane %v3285, 2
        %v3287 = vadd.f32 %v3285, %v3286
        %v3288 = vrot.slane %v3287, 1
        %v3289 = vadd.f32 %v3287, %v3288
        %v3290 = vrcp.pop 24.0
        %v3291 = vmul.f32 %v3256, %v3290
        %v3292 = vmul.f32 %v3267, %v3290
        %v3293 = vmul.f32 %v3278, %v3290
        %v3294 = vmul.f32 %v3289, %v3290
        %v3295 = vsub.f32 %v2677, %v3291
        %v3296 = vsub.f32 %v2679, %v3292
        %v3297 = vsub.f32 %v2849, %v3293
        %v3298 = vsub.f32 %v2851, %v3294
        %v3299 = vsub.f32 %v2681, %v3291
        %v3300 = vsub.f32 %v2683, %v3292
        %v3301 = vsub.f32 %v2853, %v3293
        %v3302 = vsub.f32 %v2855, %v3294
        %v3303 = vsub.f32 %v3063, %v3291
        %v3304 = vsub.f32 %v3065, %v3292
        %v3305 = vsub.f32 %v3235, %v3293
        %v3306 = vsub.f32 %v3237, %v3294
        %v3307 = vsub.f32 %v3067, %v3291
        %v3308 = vsub.f32 %v3069, %v3292
        %v3309 = vsub.f32 %v3239, %v3293
        %v3310 = vsub.f32 %v3241, %v3294
        %v3311 = vmul.f32 %v3295, %v3295
        %v3312 = vmul.f32 %v3296, %v3296
        %v3313 = vmul.f32 %v3297, %v3297
        %v3314 = vmul.f32 %v3298, %v3298
        %v3315 = vmul.f32 %v3299, %v3299
        %v3316 = vmul.f32 %v3300, %v3300
        %v3317 = vmul.f32 %v3301, %v3301
        %v3318 = vmul.f32 %v3302, %v3302
        %v3319 = vmul.f32 %v3303, %v3303
        %v3320 = vmul.f32 %v3304, %v3304
        %v3321 = vmul.f32 %v3305, %v3305
        %v3322 = vmul.f32 %v3306, %v3306
        %v3323 = vmul.f32 %v3307, %v3307
        %v3324 = vmul.f32 %v3308, %v3308
        %v3325 = vmul.f32 %v3309, %v3309
        %v3326 = vmul.f32 %v3310, %v3310
        %v3327 = vsel %vm3245, %v3315, 0.0
        %v3328 = vadd.f32 %v3311, %v3327
        %v3329 = vadd.f32 %v3328, %v3319
        %v3330 = vsel %vm3245, %v3323, 0.0
        %v3331 = vadd.f32 %v3329, %v3330
        %v3332 = vrot.slane %v3331, 4
        %v3333 = vadd.f32 %v3331, %v3332
        %v3334 = vrot.slane %v3333, 2
        %v3335 = vadd.f32 %v3333, %v3334
        %v3336 = vrot.slane %v3335, 1
        %v3337 = vadd.f32 %v3335, %v3336
        %v3338 = vsel %vm3245, %v3316, 0.0
        %v3339 = vadd.f32 %v3312, %v3338
        %v3340 = vadd.f32 %v3339, %v3320
        %v3341 = vsel %vm3245, %v3324, 0.0
        %v3342 = vadd.f32 %v3340, %v3341
        %v3343 = vrot.slane %v3342, 4
        %v3344 = vadd.f32 %v3342, %v3343
        %v3345 = vrot.slane %v3344, 2
        %v3346 = vadd.f32 %v3344, %v3345
        %v3347 = vrot.slane %v3346, 1
        %v3348 = vadd.f32 %v3346, %v3347
        %v3349 = vsel %vm3245, %v3317, 0.0
        %v3350 = vadd.f32 %v3313, %v3349
        %v3351 = vadd.f32 %v3350, %v3321
        %v3352 = vsel %vm3245, %v3325, 0.0
        %v3353 = vadd.f32 %v3351, %v3352
        %v3354 = vrot.slane %v3353, 4
        %v3355 = vadd.f32 %v3353, %v3354
        %v3356 = vrot.slane %v3355, 2
        %v3357 = vadd.f32 %v3355, %v3356
        %v3358 = vrot.slane %v3357, 1
        %v3359 = vadd.f32 %v3357, %v3358
        %v3360 = vsel %vm3245, %v3318, 0.0
        %v3361 = vadd.f32 %v3314, %v3360
        %v3362 = vadd.f32 %v3361, %v3322
        %v3363 = vsel %vm3245, %v3326, 0.0
        %v3364 = vadd.f32 %v3362, %v3363
        %v3365 = vrot.slane %v3364, 4
        %v3366 = vadd.f32 %v3364, %v3365
        %v3367 = vrot.slane %v3366, 2
        %v3368 = vadd.f32 %v3366, %v3367
        %v3369 = vrot.slane %v3368, 1
        %v3370 = vadd.f32 %v3368, %v3369
        %v3371 = vmul.f32 %v3337, %v3290
        %v3372 = vmul.f32 %v3348, %v3290
        %v3373 = vmul.f32 %v3359, %v3290
        %v3374 = vmul.f32 %v3370, %v3290
        %v3375 = vadd.f32 %v3371, 1e-05
        %v3376 = vadd.f32 %v3372, 1e-05
        %v3377 = vadd.f32 %v3373, 1e-05
        %v3378 = vadd.f32 %v3374, 1e-05
        %v3379 = vrsqrt.pop %v3375
        %v3380 = vrsqrt.pop %v3376
        %v3381 = vrsqrt.pop %v3377
        %v3382 = vrsqrt.pop %v3378
        %v3383 = vmul.f32 %v3295, %v3379
        %v3384 = vmul.f32 %v3296, %v3380
        %v3385 = vmul.f32 %v3297, %v3381
        %v3386 = vmul.f32 %v3298, %v3382
        %v3387 = vmul.f32 %v3299, %v3379
        %v3388 = vmul.f32 %v3300, %v3380
        %v3389 = vmul.f32 %v3301, %v3381
        %v3390 = vmul.f32 %v3302, %v3382
        %v3391 = vmul.f32 %v3303, %v3379
        %v3392 = vmul.f32 %v3304, %v3380
        %v3393 = vmul.f32 %v3305, %v3381
        %v3394 = vmul.f32 %v3306, %v3382
        %v3395 = vmul.f32 %v3307, %v3379
        %v3396 = vmul.f32 %v3308, %v3380
        %v3397 = vmul.f32 %v3309, %v3381
        %v3398 = vmul.f32 %v3310, %v3382
        %v3400 = vlaneseq
        %v3401 = vshrl.u32 %v3400, 7
        %v3402 = vsub.s32 0, %v3401
        %v3403 = vrot.slane %v3243, %v3402
        %v3404 = vlaneseq
        %v3405 = vshrl.u32 %v3404, 7
        %v3406 = vsub.s32 1, %v3405
        %v3407 = vrot.slane %v3243, %v3406
        %v3408 = vlaneseq
        %v3409 = vshrl.u32 %v3408, 7
        %v3410 = vsub.s32 2, %v3409
        %v3411 = vrot.slane %v3243, %v3410
        %v3412 = vlaneseq
        %v3413 = vshrl.u32 %v3412, 7
        %v3414 = vsub.s32 3, %v3413
        %v3415 = vrot.slane %v3243, %v3414
        %v3420 = vmul.f32 %v3383, %v3403
        %v3421 = vmul.f32 %v3384, %v3407
        %v3422 = vmul.f32 %v3385, %v3411
        %v3423 = vmul.f32 %v3386, %v3415
        %v3424 = vmul.f32 %v3387, %v3403
        %v3425 = vmul.f32 %v3388, %v3407
        %v3426 = vmul.f32 %v3389, %v3411
        %v3427 = vmul.f32 %v3390, %v3415
        %v3428 = vmul.f32 %v3391, %v3403
        %v3429 = vmul.f32 %v3392, %v3407
        %v3430 = vmul.f32 %v3393, %v3411
        %v3431 = vmul.f32 %v3394, %v3415
        %v3432 = vmul.f32 %v3395, %v3403
        %v3433 = vmul.f32 %v3396, %v3407
        %v3434 = vmul.f32 %v3397, %v3411
        %v3435 = vmul.f32 %v3398, %v3415
        %v3437 = vlaneseq
        %v3438 = vshrl.u32 %v3437, 7
        %v3439 = vsub.s32 0, %v3438
        %v3440 = vrot.slane %v3244, %v3439
        %v3441 = vlaneseq
        %v3442 = vshrl.u32 %v3441, 7
        %v3443 = vsub.s32 1, %v3442
        %v3444 = vrot.slane %v3244, %v3443
        %v3445 = vlaneseq
        %v3446 = vshrl.u32 %v3445, 7
        %v3447 = vsub.s32 2, %v3446
        %v3448 = vrot.slane %v3244, %v3447
        %v3449 = vlaneseq
        %v3450 = vshrl.u32 %v3449, 7
        %v3451 = vsub.s32 3, %v3450
        %v3452 = vrot.slane %v3244, %v3451
        %v3457 = vadd.f32 %v3420, %v3440
        %v3458 = vadd.f32 %v3421, %v3444
        %v3459 = vadd.f32 %v3422, %v3448
        %v3460 = vadd.f32 %v3423, %v3452
        %v3461 = vadd.f32 %v3424, %v3440
        %v3462 = vadd.f32 %v3425, %v3444
        %v3463 = vadd.f32 %v3426, %v3448
        %v3464 = vadd.f32 %v3427, %v3452
        %v3465 = vadd.f32 %v3428, %v3440
        %v3466 = vadd.f32 %v3429, %v3444
        %v3467 = vadd.f32 %v3430, %v3448
        %v3468 = vadd.f32 %v3431, %v3452
        %v3469 = vadd.f32 %v3432, %v3440
        %v3470 = vadd.f32 %v3433, %v3444
        %v3471 = vadd.f32 %v3434, %v3448
        %v3472 = vadd.f32 %v3435, %v3452
        %v3473 = vmax.f32 %v3457, 0.0
        %v3474 = vmax.f32 %v3458, 0.0
        %v3475 = vmax.f32 %v3459, 0.0
        %v3476 = vmax.f32 %v3460, 0.0
        %v3477 = vmax.f32 %v3461, 0.0
        %v3478 = vmax.f32 %v3462, 0.0
        %v3479 = vmax.f32 %v3463, 0.0
        %v3480 = vmax.f32 %v3464, 0.0
        %v3481 = vmax.f32 %v3465, 0.0
        %v3482 = vmax.f32 %v3466, 0.0
        %v3483 = vmax.f32 %v3467, 0.0
        %v3484 = vmax.f32 %v3468, 0.0
        %v3485 = vmax.f32 %v3469, 0.0
        %v3486 = vmax.f32 %v3470, 0.0
        %v3487 = vmax.f32 %v3471, 0.0
        %v3488 = vmax.f32 %v3472, 0.0
        %v3489 = vld [vmem:[%s451] sm:$0xff]
        %v3490 = vld [vmem:[%s451 + $0x8] sm:$0xff]
        %v3491 = vld [vmem:[%s451 + $0x10] sm:$0xff]
        %v3492 = vld [vmem:[%s451 + $0x18] sm:$0xff]
        %v3493 = vld [vmem:[%s451 + $0x20] sm:$0xff]
        %v3494 = vld [vmem:[%s451 + $0x28] sm:$0xff]
        %v3495 = vld [vmem:[%s451 + $0x30] sm:$0xff]
        %v3496 = vld [vmem:[%s451 + $0x38] sm:$0xff]
        %v3497 = vld [vmem:[%s451 + $0x40] sm:$0xff]
        %v3498 = vld [vmem:[%s451 + $0x48] sm:$0xff]
        %v3499 = vld [vmem:[%s451 + $0x50] sm:$0xff]
        %v3500 = vld [vmem:[%s451 + $0x58] sm:$0xff]
        %v3501 = vld [vmem:[%s451 + $0x60] sm:$0xff]
        %v3502 = vld [vmem:[%s451 + $0x68] sm:$0xff]
        %v3503 = vld [vmem:[%s451 + $0x70] sm:$0xff]
        %v3504 = vld [vmem:[%s451 + $0x78] sm:$0xff]
        %v3505 = vld [vmem:[%s451 + $0x80] sm:$0xff]
        %v3506 = vld [vmem:[%s451 + $0x88] sm:$0xff]
        %v3507 = vld [vmem:[%s451 + $0x90] sm:$0xff]
        %v3508 = vld [vmem:[%s451 + $0x98] sm:$0xff]
        %v3509 = vld [vmem:[%s451 + $0xa0] sm:$0xff]
        %v3510 = vld [vmem:[%s451 + $0xa8] sm:$0xff]
        %v3511 = vld [vmem:[%s451 + $0xb0] sm:$0xff]
        %v3512 = vld [vmem:[%s451 + $0xb8] sm:$0xff]
        %v3513 = vld [vmem:[%s451 + $0xc0] sm:$0xff]
        %v3514 = vld [vmem:[%s451 + $0xc8] sm:$0xff]
        %v3515 = vld [vmem:[%s451 + $0xd0] sm:$0xff]
        %v3516 = vld [vmem:[%s451 + $0xd8] sm:$0xff]
        %v3517 = vld [vmem:[%s451 + $0xe0] sm:$0xff]
        %v3518 = vld [vmem:[%s451 + $0xe8] sm:$0xff]
        %v3519 = vld [vmem:[%s451 + $0xf0] sm:$0xff]
        %v3520 = vld [vmem:[%s451 + $0xf8] sm:$0xff]
        %v3521 = vld [vmem:[%s451 + $0x100] sm:$0xff]
        %v3522 = vld [vmem:[%s451 + $0x108] sm:$0xff]
        %v3523 = vld [vmem:[%s451 + $0x110] sm:$0xff]
        %v3524 = vld [vmem:[%s451 + $0x118] sm:$0xff]
        %v3525 = vld [vmem:[%s451 + $0x120] sm:$0xff]
        %v3526 = vld [vmem:[%s451 + $0x128] sm:$0xff]
        %v3527 = vld [vmem:[%s451 + $0x130] sm:$0xff]
        %v3528 = vld [vmem:[%s451 + $0x138] sm:$0xff]
        %v3529 = vld [vmem:[%s451 + $0x140] sm:$0xff]
        %v3530 = vld [vmem:[%s451 + $0x148] sm:$0xff]
        %v3531 = vld [vmem:[%s451 + $0x150] sm:$0xff]
        %v3532 = vld [vmem:[%s451 + $0x158] sm:$0xff]
        %v3533 = vld [vmem:[%s451 + $0x160] sm:$0xff]
        %v3534 = vld [vmem:[%s451 + $0x168] sm:$0xff]
        %v3535 = vld [vmem:[%s451 + $0x170] sm:$0xff]
        %v3536 = vld [vmem:[%s451 + $0x178] sm:$0xff]
        %v3537 = vld [vmem:[%s451 + $0x180] sm:$0xff]
        %v3538 = vld [vmem:[%s451 + $0x188] sm:$0xff]
        %v3539 = vld [vmem:[%s451 + $0x190] sm:$0xff]
        %v3540 = vld [vmem:[%s451 + $0x198] sm:$0xff]
        %v3541 = vld [vmem:[%s451 + $0x1a0] sm:$0xff]
        %v3542 = vld [vmem:[%s451 + $0x1a8] sm:$0xff]
        %v3543 = vld [vmem:[%s451 + $0x1b0] sm:$0xff]
        %v3544 = vld [vmem:[%s451 + $0x1b8] sm:$0xff]
        %v3545 = vld [vmem:[%s451 + $0x1c0] sm:$0xff]
        %v3546 = vld [vmem:[%s451 + $0x1c8] sm:$0xff]
        %v3547 = vld [vmem:[%s451 + $0x1d0] sm:$0xff]
        %v3548 = vld [vmem:[%s451 + $0x1d8] sm:$0xff]
        %v3549 = vld [vmem:[%s451 + $0x1e0] sm:$0xff]
        %v3550 = vld [vmem:[%s451 + $0x1e8] sm:$0xff]
        %v3551 = vld [vmem:[%s451 + $0x1f0] sm:$0xff]
        %v3552 = vld [vmem:[%s451 + $0x1f8] sm:$0xff]
        %v3553 = vld [vmem:[%s451 + $0x200] sm:$0xff]
        %v3554 = vld [vmem:[%s451 + $0x208] sm:$0xff]
        %v3555 = vld [vmem:[%s451 + $0x210] sm:$0xff]
        %v3556 = vld [vmem:[%s451 + $0x218] sm:$0xff]
        %v3557 = vld [vmem:[%s451 + $0x220] sm:$0xff]
        %v3558 = vld [vmem:[%s451 + $0x228] sm:$0xff]
        %v3559 = vld [vmem:[%s451 + $0x230] sm:$0xff]
        %v3560 = vld [vmem:[%s451 + $0x238] sm:$0xff]
        %v3561 = vld [vmem:[%s451 + $0x240] sm:$0xff]
        %v3562 = vld [vmem:[%s451 + $0x248] sm:$0xff]
        %v3563 = vld [vmem:[%s451 + $0x250] sm:$0xff]
        %v3564 = vld [vmem:[%s451 + $0x258] sm:$0xff]
        %v3565 = vld [vmem:[%s451 + $0x260] sm:$0xff]
        %v3566 = vld [vmem:[%s451 + $0x268] sm:$0xff]
        %v3567 = vld [vmem:[%s451 + $0x270] sm:$0xff]
        %v3568 = vld [vmem:[%s451 + $0x278] sm:$0xff]
        %v3569 = vld [vmem:[%s451 + $0x280] sm:$0xff]
        %v3570 = vld [vmem:[%s451 + $0x288] sm:$0xff]
        %v3571 = vld [vmem:[%s451 + $0x290] sm:$0xff]
        %v3572 = vld [vmem:[%s451 + $0x298] sm:$0xff]
        %v3573 = vld [vmem:[%s451 + $0x2a0] sm:$0xff]
        %v3574 = vld [vmem:[%s451 + $0x2a8] sm:$0xff]
        %v3575 = vld [vmem:[%s451 + $0x2b0] sm:$0xff]
        %v3576 = vld [vmem:[%s451 + $0x2b8] sm:$0xff]
        %v3577 = vld [vmem:[%s451 + $0x2c0] sm:$0xff]
        %v3578 = vld [vmem:[%s451 + $0x2c8] sm:$0xff]
        %v3579 = vld [vmem:[%s451 + $0x2d0] sm:$0xff]
        %v3580 = vld [vmem:[%s451 + $0x2d8] sm:$0xff]
        %v3581 = vld [vmem:[%s451 + $0x2e0] sm:$0xff]
        %v3582 = vld [vmem:[%s451 + $0x2e8] sm:$0xff]
        %v3583 = vld [vmem:[%s451 + $0x2f0] sm:$0xff]
        %v3584 = vld [vmem:[%s451 + $0x2f8] sm:$0xff]
        %v3585 = vld [vmem:[%s451 + $0x300] sm:$0xff]
        %v3586 = vld [vmem:[%s451 + $0x308] sm:$0xff]
        %v3587 = vld [vmem:[%s451 + $0x310] sm:$0xff]
        %v3588 = vld [vmem:[%s451 + $0x318] sm:$0xff]
        %v3589 = vld [vmem:[%s451 + $0x320] sm:$0xff]
        %v3590 = vld [vmem:[%s451 + $0x328] sm:$0xff]
        %v3591 = vld [vmem:[%s451 + $0x330] sm:$0xff]
        %v3592 = vld [vmem:[%s451 + $0x338] sm:$0xff]
        %v3593 = vld [vmem:[%s451 + $0x340] sm:$0xff]
        %v3594 = vld [vmem:[%s451 + $0x348] sm:$0xff]
        %v3595 = vld [vmem:[%s451 + $0x350] sm:$0xff]
        %v3596 = vld [vmem:[%s451 + $0x358] sm:$0xff]
        %v3597 = vld [vmem:[%s451 + $0x360] sm:$0xff]
        %v3598 = vld [vmem:[%s451 + $0x368] sm:$0xff]
        %v3599 = vld [vmem:[%s451 + $0x370] sm:$0xff]
        %v3600 = vld [vmem:[%s451 + $0x378] sm:$0xff]
        %v3601 = vld [vmem:[%s451 + $0x380] sm:$0xff]
        %v3602 = vld [vmem:[%s451 + $0x388] sm:$0xff]
        %v3603 = vld [vmem:[%s451 + $0x390] sm:$0xff]
        %v3604 = vld [vmem:[%s451 + $0x398] sm:$0xff]
        %v3605 = vld [vmem:[%s451 + $0x3a0] sm:$0xff]
        %v3606 = vld [vmem:[%s451 + $0x3a8] sm:$0xff]
        %v3607 = vld [vmem:[%s451 + $0x3b0] sm:$0xff]
        %v3608 = vld [vmem:[%s451 + $0x3b8] sm:$0xff]
        %v3609 = vld [vmem:[%s451 + $0x3c0] sm:$0xff]
        %v3610 = vld [vmem:[%s451 + $0x3c8] sm:$0xff]
        %v3611 = vld [vmem:[%s451 + $0x3d0] sm:$0xff]
        %v3612 = vld [vmem:[%s451 + $0x3d8] sm:$0xff]
        %v3613 = vld [vmem:[%s451 + $0x3e0] sm:$0xff]
        %v3614 = vld [vmem:[%s451 + $0x3e8] sm:$0xff]
        %v3615 = vld [vmem:[%s451 + $0x3f0] sm:$0xff]
        %v3616 = vld [vmem:[%s451 + $0x3f8] sm:$0xff]
        %v3617 = vld [vmem:[%s451 + $0x400] sm:$0xff]
        %v3618 = vld [vmem:[%s451 + $0x408] sm:$0xff]
        %v3619 = vld [vmem:[%s451 + $0x410] sm:$0xff]
        %v3620 = vld [vmem:[%s451 + $0x418] sm:$0xff]
        %v3621 = vld [vmem:[%s451 + $0x420] sm:$0xff]
        %v3622 = vld [vmem:[%s451 + $0x428] sm:$0xff]
        %v3623 = vld [vmem:[%s451 + $0x430] sm:$0xff]
        %v3624 = vld [vmem:[%s451 + $0x438] sm:$0xff]
        %v3625 = vld [vmem:[%s451 + $0x440] sm:$0xff]
        %v3626 = vld [vmem:[%s451 + $0x448] sm:$0xff]
        %v3627 = vld [vmem:[%s451 + $0x450] sm:$0xff]
        %v3628 = vld [vmem:[%s451 + $0x458] sm:$0xff]
        %v3629 = vld [vmem:[%s451 + $0x460] sm:$0xff]
        %v3630 = vld [vmem:[%s451 + $0x468] sm:$0xff]
        %v3631 = vld [vmem:[%s451 + $0x470] sm:$0xff]
        %v3632 = vld [vmem:[%s451 + $0x478] sm:$0xff]
        %v3633 = vld [vmem:[%s451 + $0x480] sm:$0xff]
        %v3634 = vld [vmem:[%s451 + $0x488] sm:$0xff]
        %v3635 = vld [vmem:[%s451 + $0x490] sm:$0xff]
        %v3636 = vld [vmem:[%s451 + $0x498] sm:$0xff]
        %v3637 = vld [vmem:[%s451 + $0x4a0] sm:$0xff]
        %v3638 = vld [vmem:[%s451 + $0x4a8] sm:$0xff]
        %v3639 = vld [vmem:[%s451 + $0x4b0] sm:$0xff]
        %v3640 = vld [vmem:[%s451 + $0x4b8] sm:$0xff]
        %v3641 = vld [vmem:[%s451 + $0x4c0] sm:$0xff]
        %v3642 = vld [vmem:[%s451 + $0x4c8] sm:$0xff]
        %v3643 = vld [vmem:[%s451 + $0x4d0] sm:$0xff]
        %v3644 = vld [vmem:[%s451 + $0x4d8] sm:$0xff]
        %v3645 = vld [vmem:[%s451 + $0x4e0] sm:$0xff]
        %v3646 = vld [vmem:[%s451 + $0x4e8] sm:$0xff]
        %v3647 = vld [vmem:[%s451 + $0x4f0] sm:$0xff]
        %v3648 = vld [vmem:[%s451 + $0x4f8] sm:$0xff]
        %v3649 = vld [vmem:[%s451 + $0x500] sm:$0xff]
        %v3650 = vld [vmem:[%s451 + $0x508] sm:$0xff]
        %v3651 = vld [vmem:[%s451 + $0x510] sm:$0xff]
        %v3652 = vld [vmem:[%s451 + $0x518] sm:$0xff]
        %v3653 = vld [vmem:[%s451 + $0x520] sm:$0xff]
        %v3654 = vld [vmem:[%s451 + $0x528] sm:$0xff]
        %v3655 = vld [vmem:[%s451 + $0x530] sm:$0xff]
        %v3656 = vld [vmem:[%s451 + $0x538] sm:$0xff]
        %v3657 = vld [vmem:[%s451 + $0x540] sm:$0xff]
        %v3658 = vld [vmem:[%s451 + $0x548] sm:$0xff]
        %v3659 = vld [vmem:[%s451 + $0x550] sm:$0xff]
        %v3660 = vld [vmem:[%s451 + $0x558] sm:$0xff]
        %v3661 = vld [vmem:[%s451 + $0x560] sm:$0xff]
        %v3662 = vld [vmem:[%s451 + $0x568] sm:$0xff]
        %v3663 = vld [vmem:[%s451 + $0x570] sm:$0xff]
        %v3664 = vld [vmem:[%s451 + $0x578] sm:$0xff]
        %v3665 = vld [vmem:[%s451 + $0x580] sm:$0xff]
        %v3666 = vld [vmem:[%s451 + $0x588] sm:$0xff]
        %v3667 = vld [vmem:[%s451 + $0x590] sm:$0xff]
        %v3668 = vld [vmem:[%s451 + $0x598] sm:$0xff]
        %v3669 = vld [vmem:[%s451 + $0x5a0] sm:$0xff]
        %v3670 = vld [vmem:[%s451 + $0x5a8] sm:$0xff]
        %v3671 = vld [vmem:[%s451 + $0x5b0] sm:$0xff]
        %v3672 = vld [vmem:[%s451 + $0x5b8] sm:$0xff]
        %v3673 = vld [vmem:[%s451 + $0x5c0] sm:$0xff]
        %v3674 = vld [vmem:[%s451 + $0x5c8] sm:$0xff]
        %v3675 = vld [vmem:[%s451 + $0x5d0] sm:$0xff]
        %v3676 = vld [vmem:[%s451 + $0x5d8] sm:$0xff]
        %v3677 = vld [vmem:[%s451 + $0x5e0] sm:$0xff]
        %v3678 = vld [vmem:[%s451 + $0x5e8] sm:$0xff]
        %v3679 = vld [vmem:[%s451 + $0x5f0] sm:$0xff]
        %v3680 = vld [vmem:[%s451 + $0x5f8] sm:$0xff]
        %v3681 = vld [vmem:[%s451 + $0x600] sm:$0xff]
        %v3682 = vld [vmem:[%s451 + $0x608] sm:$0xff]
        %v3683 = vld [vmem:[%s451 + $0x610] sm:$0xff]
        %v3684 = vld [vmem:[%s451 + $0x618] sm:$0xff]
        %v3685 = vld [vmem:[%s451 + $0x620] sm:$0xff]
        %v3686 = vld [vmem:[%s451 + $0x628] sm:$0xff]
        %v3687 = vld [vmem:[%s451 + $0x630] sm:$0xff]
        %v3688 = vld [vmem:[%s451 + $0x638] sm:$0xff]
        %v3689 = vld [vmem:[%s451 + $0x640] sm:$0xff]
        %v3690 = vld [vmem:[%s451 + $0x648] sm:$0xff]
        %v3691 = vld [vmem:[%s451 + $0x650] sm:$0xff]
        %v3692 = vld [vmem:[%s451 + $0x658] sm:$0xff]
        %v3693 = vld [vmem:[%s451 + $0x660] sm:$0xff]
        %v3694 = vld [vmem:[%s451 + $0x668] sm:$0xff]
        %v3695 = vld [vmem:[%s451 + $0x670] sm:$0xff]
        %v3696 = vld [vmem:[%s451 + $0x678] sm:$0xff]
        %v3697 = vld [vmem:[%s451 + $0x680] sm:$0xff]
        %v3698 = vld [vmem:[%s451 + $0x688] sm:$0xff]
        %v3699 = vld [vmem:[%s451 + $0x690] sm:$0xff]
        %v3700 = vld [vmem:[%s451 + $0x698] sm:$0xff]
        %v3701 = vld [vmem:[%s451 + $0x6a0] sm:$0xff]
        %v3702 = vld [vmem:[%s451 + $0x6a8] sm:$0xff]
        %v3703 = vld [vmem:[%s451 + $0x6b0] sm:$0xff]
        %v3704 = vld [vmem:[%s451 + $0x6b8] sm:$0xff]
        %v3705 = vld [vmem:[%s451 + $0x6c0] sm:$0xff]
        %v3706 = vld [vmem:[%s451 + $0x6c8] sm:$0xff]
        %v3707 = vld [vmem:[%s451 + $0x6d0] sm:$0xff]
        %v3708 = vld [vmem:[%s451 + $0x6d8] sm:$0xff]
        %v3709 = vld [vmem:[%s451 + $0x6e0] sm:$0xff]
        %v3710 = vld [vmem:[%s451 + $0x6e8] sm:$0xff]
        %v3711 = vld [vmem:[%s451 + $0x6f0] sm:$0xff]
        %v3712 = vld [vmem:[%s451 + $0x6f8] sm:$0xff]
        %v3713 = vld [vmem:[%s451 + $0x700] sm:$0xff]
        %v3714 = vld [vmem:[%s451 + $0x708] sm:$0xff]
        %v3715 = vld [vmem:[%s451 + $0x710] sm:$0xff]
        %v3716 = vld [vmem:[%s451 + $0x718] sm:$0xff]
        %v3717 = vld [vmem:[%s451 + $0x720] sm:$0xff]
        %v3718 = vld [vmem:[%s451 + $0x728] sm:$0xff]
        %v3719 = vld [vmem:[%s451 + $0x730] sm:$0xff]
        %v3720 = vld [vmem:[%s451 + $0x738] sm:$0xff]
        %v3721 = vld [vmem:[%s451 + $0x740] sm:$0xff]
        %v3722 = vld [vmem:[%s451 + $0x748] sm:$0xff]
        %v3723 = vld [vmem:[%s451 + $0x750] sm:$0xff]
        %v3724 = vld [vmem:[%s451 + $0x758] sm:$0xff]
        %v3725 = vld [vmem:[%s451 + $0x760] sm:$0xff]
        %v3726 = vld [vmem:[%s451 + $0x768] sm:$0xff]
        %v3727 = vld [vmem:[%s451 + $0x770] sm:$0xff]
        %v3728 = vld [vmem:[%s451 + $0x778] sm:$0xff]
        %v3729 = vld [vmem:[%s451 + $0x780] sm:$0xff]
        %v3730 = vld [vmem:[%s451 + $0x788] sm:$0xff]
        %v3731 = vld [vmem:[%s451 + $0x790] sm:$0xff]
        %v3732 = vld [vmem:[%s451 + $0x798] sm:$0xff]
        %v3733 = vld [vmem:[%s451 + $0x7a0] sm:$0xff]
        %v3734 = vld [vmem:[%s451 + $0x7a8] sm:$0xff]
        %v3735 = vld [vmem:[%s451 + $0x7b0] sm:$0xff]
        %v3736 = vld [vmem:[%s451 + $0x7b8] sm:$0xff]
        %v3737 = vld [vmem:[%s451 + $0x7c0] sm:$0xff]
        %v3738 = vld [vmem:[%s451 + $0x7c8] sm:$0xff]
        %v3739 = vld [vmem:[%s451 + $0x7d0] sm:$0xff]
        %v3740 = vld [vmem:[%s451 + $0x7d8] sm:$0xff]
        %v3741 = vld [vmem:[%s451 + $0x7e0] sm:$0xff]
        %v3742 = vld [vmem:[%s451 + $0x7e8] sm:$0xff]
        %v3743 = vld [vmem:[%s451 + $0x7f0] sm:$0xff]
        %v3744 = vld [vmem:[%s451 + $0x7f8] sm:$0xff]
        %v3745 = vld [vmem:[%s451 + $0x800] sm:$0xff]
        %v3746 = vld [vmem:[%s451 + $0x808] sm:$0xff]
        %v3747 = vld [vmem:[%s451 + $0x810] sm:$0xff]
        %v3748 = vld [vmem:[%s451 + $0x818] sm:$0xff]
        %v3749 = vld [vmem:[%s451 + $0x820] sm:$0xff]
        %v3750 = vld [vmem:[%s451 + $0x828] sm:$0xff]
        %v3751 = vld [vmem:[%s451 + $0x830] sm:$0xff]
        %v3752 = vld [vmem:[%s451 + $0x838] sm:$0xff]
        %v3753 = vld [vmem:[%s451 + $0x840] sm:$0xff]
        %v3754 = vld [vmem:[%s451 + $0x848] sm:$0xff]
        %v3755 = vld [vmem:[%s451 + $0x850] sm:$0xff]
        %v3756 = vld [vmem:[%s451 + $0x858] sm:$0xff]
        %v3757 = vld [vmem:[%s451 + $0x860] sm:$0xff]
        %v3758 = vld [vmem:[%s451 + $0x868] sm:$0xff]
        %v3759 = vld [vmem:[%s451 + $0x870] sm:$0xff]
        %v3760 = vld [vmem:[%s451 + $0x878] sm:$0xff]
        %v3761 = vld [vmem:[%s451 + $0x880] sm:$0xff]
        %v3762 = vld [vmem:[%s451 + $0x888] sm:$0xff]
        %v3763 = vld [vmem:[%s451 + $0x890] sm:$0xff]
        %v3764 = vld [vmem:[%s451 + $0x898] sm:$0xff]
        %v3765 = vld [vmem:[%s451 + $0x8a0] sm:$0xff]
        %v3766 = vld [vmem:[%s451 + $0x8a8] sm:$0xff]
        %v3767 = vld [vmem:[%s451 + $0x8b0] sm:$0xff]
        %v3768 = vld [vmem:[%s451 + $0x8b8] sm:$0xff]
        %v3769 = vld [vmem:[%s451 + $0x8c0] sm:$0xff]
        %v3770 = vld [vmem:[%s451 + $0x8c8] sm:$0xff]
        %v3771 = vld [vmem:[%s451 + $0x8d0] sm:$0xff]
        %v3772 = vld [vmem:[%s451 + $0x8d8] sm:$0xff]
        %v3773 = vld [vmem:[%s451 + $0x8e0] sm:$0xff]
        %v3774 = vld [vmem:[%s451 + $0x8e8] sm:$0xff]
        %v3775 = vld [vmem:[%s451 + $0x8f0] sm:$0xff]
        %v3776 = vld [vmem:[%s451 + $0x8f8] sm:$0xff]
        %v3777 = vld [vmem:[%s451 + $0x900] sm:$0xff]
        %v3778 = vld [vmem:[%s451 + $0x908] sm:$0xff]
        %v3779 = vld [vmem:[%s451 + $0x910] sm:$0xff]
        %v3780 = vld [vmem:[%s451 + $0x918] sm:$0xff]
        %v3781 = vld [vmem:[%s451 + $0x920] sm:$0xff]
        %v3782 = vld [vmem:[%s451 + $0x928] sm:$0xff]
        %v3783 = vld [vmem:[%s451 + $0x930] sm:$0xff]
        %v3784 = vld [vmem:[%s451 + $0x938] sm:$0xff]
        %v3785 = vld [vmem:[%s451 + $0x940] sm:$0xff]
        %v3786 = vld [vmem:[%s451 + $0x948] sm:$0xff]
        %v3787 = vld [vmem:[%s451 + $0x950] sm:$0xff]
        %v3788 = vld [vmem:[%s451 + $0x958] sm:$0xff]
        %v3789 = vld [vmem:[%s451 + $0x960] sm:$0xff]
        %v3790 = vld [vmem:[%s451 + $0x968] sm:$0xff]
        %v3791 = vld [vmem:[%s451 + $0x970] sm:$0xff]
        %v3792 = vld [vmem:[%s451 + $0x978] sm:$0xff]
        %v3793 = vld [vmem:[%s451 + $0x980] sm:$0xff]
        %v3794 = vld [vmem:[%s451 + $0x988] sm:$0xff]
        %v3795 = vld [vmem:[%s451 + $0x990] sm:$0xff]
        %v3796 = vld [vmem:[%s451 + $0x998] sm:$0xff]
        %v3797 = vld [vmem:[%s451 + $0x9a0] sm:$0xff]
        %v3798 = vld [vmem:[%s451 + $0x9a8] sm:$0xff]
        %v3799 = vld [vmem:[%s451 + $0x9b0] sm:$0xff]
        %v3800 = vld [vmem:[%s451 + $0x9b8] sm:$0xff]
        %v3801 = vld [vmem:[%s451 + $0x9c0] sm:$0xff]
        %v3802 = vld [vmem:[%s451 + $0x9c8] sm:$0xff]
        %v3803 = vld [vmem:[%s451 + $0x9d0] sm:$0xff]
        %v3804 = vld [vmem:[%s451 + $0x9d8] sm:$0xff]
        %v3805 = vld [vmem:[%s451 + $0x9e0] sm:$0xff]
        %v3806 = vld [vmem:[%s451 + $0x9e8] sm:$0xff]
        %v3807 = vld [vmem:[%s451 + $0x9f0] sm:$0xff]
        %v3808 = vld [vmem:[%s451 + $0x9f8] sm:$0xff]
        %v3809 = vld [vmem:[%s451 + $0xa00] sm:$0xff]
        %v3810 = vld [vmem:[%s451 + $0xa08] sm:$0xff]
        %v3811 = vld [vmem:[%s451 + $0xa10] sm:$0xff]
        %v3812 = vld [vmem:[%s451 + $0xa18] sm:$0xff]
        %v3813 = vld [vmem:[%s451 + $0xa20] sm:$0xff]
        %v3814 = vld [vmem:[%s451 + $0xa28] sm:$0xff]
        %v3815 = vld [vmem:[%s451 + $0xa30] sm:$0xff]
        %v3816 = vld [vmem:[%s451 + $0xa38] sm:$0xff]
        %v3817 = vld [vmem:[%s451 + $0xa40] sm:$0xff]
        %v3818 = vld [vmem:[%s451 + $0xa48] sm:$0xff]
        %v3819 = vld [vmem:[%s451 + $0xa50] sm:$0xff]
        %v3820 = vld [vmem:[%s451 + $0xa58] sm:$0xff]
        %v3821 = vld [vmem:[%s451 + $0xa60] sm:$0xff]
        %v3822 = vld [vmem:[%s451 + $0xa68] sm:$0xff]
        %v3823 = vld [vmem:[%s451 + $0xa70] sm:$0xff]
        %v3824 = vld [vmem:[%s451 + $0xa78] sm:$0xff]
        %v3825 = vld [vmem:[%s451 + $0xa80] sm:$0xff]
        %v3826 = vld [vmem:[%s451 + $0xa88] sm:$0xff]
        %v3827 = vld [vmem:[%s451 + $0xa90] sm:$0xff]
        %v3828 = vld [vmem:[%s451 + $0xa98] sm:$0xff]
        %v3829 = vld [vmem:[%s451 + $0xaa0] sm:$0xff]
        %v3830 = vld [vmem:[%s451 + $0xaa8] sm:$0xff]
        %v3831 = vld [vmem:[%s451 + $0xab0] sm:$0xff]
        %v3832 = vld [vmem:[%s451 + $0xab8] sm:$0xff]
        %v3833 = vld [vmem:[%s451 + $0xac0] sm:$0xff]
        %v3834 = vld [vmem:[%s451 + $0xac8] sm:$0xff]
        %v3835 = vld [vmem:[%s451 + $0xad0] sm:$0xff]
        %v3836 = vld [vmem:[%s451 + $0xad8] sm:$0xff]
        %v3837 = vld [vmem:[%s451 + $0xae0] sm:$0xff]
        %v3838 = vld [vmem:[%s451 + $0xae8] sm:$0xff]
        %v3839 = vld [vmem:[%s451 + $0xaf0] sm:$0xff]
        %v3840 = vld [vmem:[%s451 + $0xaf8] sm:$0xff]
        %v3841 = vld [vmem:[%s451 + $0xb00] sm:$0xff]
        %v3842 = vld [vmem:[%s451 + $0xb08] sm:$0xff]
        %v3843 = vld [vmem:[%s451 + $0xb10] sm:$0xff]
        %v3844 = vld [vmem:[%s451 + $0xb18] sm:$0xff]
        %v3845 = vld [vmem:[%s451 + $0xb20] sm:$0xff]
        %v3846 = vld [vmem:[%s451 + $0xb28] sm:$0xff]
        %v3847 = vld [vmem:[%s451 + $0xb30] sm:$0xff]
        %v3848 = vld [vmem:[%s451 + $0xb38] sm:$0xff]
        %v3849 = vld [vmem:[%s451 + $0xb40] sm:$0xff]
        %v3850 = vld [vmem:[%s451 + $0xb48] sm:$0xff]
        %v3851 = vld [vmem:[%s451 + $0xb50] sm:$0xff]
        %v3852 = vld [vmem:[%s451 + $0xb58] sm:$0xff]
        %v3853 = vld [vmem:[%s451 + $0xb60] sm:$0xff]
        %v3854 = vld [vmem:[%s451 + $0xb68] sm:$0xff]
        %v3855 = vld [vmem:[%s451 + $0xb70] sm:$0xff]
        %v3856 = vld [vmem:[%s451 + $0xb78] sm:$0xff]
        %v3857 = vld [vmem:[%s451 + $0xb80] sm:$0xff]
        %v3858 = vld [vmem:[%s451 + $0xb88] sm:$0xff]
        %v3859 = vld [vmem:[%s451 + $0xb90] sm:$0xff]
        %v3860 = vld [vmem:[%s451 + $0xb98] sm:$0xff]
        %v3861 = vld [vmem:[%s451 + $0xba0] sm:$0xff]
        %v3862 = vld [vmem:[%s451 + $0xba8] sm:$0xff]
        %v3863 = vld [vmem:[%s451 + $0xbb0] sm:$0xff]
        %v3864 = vld [vmem:[%s451 + $0xbb8] sm:$0xff]
        %v3865 = vld [vmem:[%s451 + $0xbc0] sm:$0xff]
        %v3866 = vld [vmem:[%s451 + $0xbc8] sm:$0xff]
        %v3867 = vld [vmem:[%s451 + $0xbd0] sm:$0xff]
        %v3868 = vld [vmem:[%s451 + $0xbd8] sm:$0xff]
        %v3869 = vld [vmem:[%s451 + $0xbe0] sm:$0xff]
        %v3870 = vld [vmem:[%s451 + $0xbe8] sm:$0xff]
        %v3871 = vld [vmem:[%s451 + $0xbf0] sm:$0xff]
        %v3872 = vld [vmem:[%s451 + $0xbf8] sm:$0xff]
        %v3873 = vld [vmem:[%s451 + $0xc00] sm:$0xff]
        %v3874 = vld [vmem:[%s451 + $0xc08] sm:$0xff]
        %v3875 = vld [vmem:[%s451 + $0xc10] sm:$0xff]
        %v3876 = vld [vmem:[%s451 + $0xc18] sm:$0xff]
        %v3877 = vld [vmem:[%s451 + $0xc20] sm:$0xff]
        %v3878 = vld [vmem:[%s451 + $0xc28] sm:$0xff]
        %v3879 = vld [vmem:[%s451 + $0xc30] sm:$0xff]
        %v3880 = vld [vmem:[%s451 + $0xc38] sm:$0xff]
        %v3881 = vld [vmem:[%s451 + $0xc40] sm:$0xff]
        %v3882 = vld [vmem:[%s451 + $0xc48] sm:$0xff]
        %v3883 = vld [vmem:[%s451 + $0xc50] sm:$0xff]
        %v3884 = vld [vmem:[%s451 + $0xc58] sm:$0xff]
        %v3885 = vld [vmem:[%s451 + $0xc60] sm:$0xff]
        %v3886 = vld [vmem:[%s451 + $0xc68] sm:$0xff]
        %v3887 = vld [vmem:[%s451 + $0xc70] sm:$0xff]
        %v3888 = vld [vmem:[%s451 + $0xc78] sm:$0xff]
        %v3889 = vld [vmem:[%s451 + $0xc80] sm:$0xff]
        %v3890 = vld [vmem:[%s451 + $0xc88] sm:$0xff]
        %v3891 = vld [vmem:[%s451 + $0xc90] sm:$0xff]
        %v3892 = vld [vmem:[%s451 + $0xc98] sm:$0xff]
        %v3893 = vld [vmem:[%s451 + $0xca0] sm:$0xff]
        %v3894 = vld [vmem:[%s451 + $0xca8] sm:$0xff]
        %v3895 = vld [vmem:[%s451 + $0xcb0] sm:$0xff]
        %v3896 = vld [vmem:[%s451 + $0xcb8] sm:$0xff]
        %v3897 = vld [vmem:[%s451 + $0xcc0] sm:$0xff]
        %v3898 = vld [vmem:[%s451 + $0xcc8] sm:$0xff]
        %v3899 = vld [vmem:[%s451 + $0xcd0] sm:$0xff]
        %v3900 = vld [vmem:[%s451 + $0xcd8] sm:$0xff]
        %v3901 = vld [vmem:[%s451 + $0xce0] sm:$0xff]
        %v3902 = vld [vmem:[%s451 + $0xce8] sm:$0xff]
        %v3903 = vld [vmem:[%s451 + $0xcf0] sm:$0xff]
        %v3904 = vld [vmem:[%s451 + $0xcf8] sm:$0xff]
        %v3905 = vld [vmem:[%s451 + $0xd00] sm:$0xff]
        %v3906 = vld [vmem:[%s451 + $0xd08] sm:$0xff]
        %v3907 = vld [vmem:[%s451 + $0xd10] sm:$0xff]
        %v3908 = vld [vmem:[%s451 + $0xd18] sm:$0xff]
        %v3909 = vld [vmem:[%s451 + $0xd20] sm:$0xff]
        %v3910 = vld [vmem:[%s451 + $0xd28] sm:$0xff]
        %v3911 = vld [vmem:[%s451 + $0xd30] sm:$0xff]
        %v3912 = vld [vmem:[%s451 + $0xd38] sm:$0xff]
        %v3913 = vld [vmem:[%s451 + $0xd40] sm:$0xff]
        %v3914 = vld [vmem:[%s451 + $0xd48] sm:$0xff]
        %v3915 = vld [vmem:[%s451 + $0xd50] sm:$0xff]
        %v3916 = vld [vmem:[%s451 + $0xd58] sm:$0xff]
        %v3917 = vld [vmem:[%s451 + $0xd60] sm:$0xff]
        %v3918 = vld [vmem:[%s451 + $0xd68] sm:$0xff]
        %v3919 = vld [vmem:[%s451 + $0xd70] sm:$0xff]
        %v3920 = vld [vmem:[%s451 + $0xd78] sm:$0xff]
        %v3921 = vld [vmem:[%s451 + $0xd80] sm:$0xff]
        %v3922 = vld [vmem:[%s451 + $0xd88] sm:$0xff]
        %v3923 = vld [vmem:[%s451 + $0xd90] sm:$0xff]
        %v3924 = vld [vmem:[%s451 + $0xd98] sm:$0xff]
        %v3925 = vld [vmem:[%s451 + $0xda0] sm:$0xff]
        %v3926 = vld [vmem:[%s451 + $0xda8] sm:$0xff]
        %v3927 = vld [vmem:[%s451 + $0xdb0] sm:$0xff]
        %v3928 = vld [vmem:[%s451 + $0xdb8] sm:$0xff]
        %v3929 = vld [vmem:[%s451 + $0xdc0] sm:$0xff]
        %v3930 = vld [vmem:[%s451 + $0xdc8] sm:$0xff]
        %v3931 = vld [vmem:[%s451 + $0xdd0] sm:$0xff]
        %v3932 = vld [vmem:[%s451 + $0xdd8] sm:$0xff]
        %v3933 = vld [vmem:[%s451 + $0xde0] sm:$0xff]
        %v3934 = vld [vmem:[%s451 + $0xde8] sm:$0xff]
        %v3935 = vld [vmem:[%s451 + $0xdf0] sm:$0xff]
        %v3936 = vld [vmem:[%s451 + $0xdf8] sm:$0xff]
        %v3937 = vld [vmem:[%s451 + $0xe00] sm:$0xff]
        %v3938 = vld [vmem:[%s451 + $0xe08] sm:$0xff]
        %v3939 = vld [vmem:[%s451 + $0xe10] sm:$0xff]
        %v3940 = vld [vmem:[%s451 + $0xe18] sm:$0xff]
        %v3941 = vld [vmem:[%s451 + $0xe20] sm:$0xff]
        %v3942 = vld [vmem:[%s451 + $0xe28] sm:$0xff]
        %v3943 = vld [vmem:[%s451 + $0xe30] sm:$0xff]
        %v3944 = vld [vmem:[%s451 + $0xe38] sm:$0xff]
        %v3945 = vld [vmem:[%s451 + $0xe40] sm:$0xff]
        %v3946 = vld [vmem:[%s451 + $0xe48] sm:$0xff]
        %v3947 = vld [vmem:[%s451 + $0xe50] sm:$0xff]
        %v3948 = vld [vmem:[%s451 + $0xe58] sm:$0xff]
        %v3949 = vld [vmem:[%s451 + $0xe60] sm:$0xff]
        %v3950 = vld [vmem:[%s451 + $0xe68] sm:$0xff]
        %v3951 = vld [vmem:[%s451 + $0xe70] sm:$0xff]
        %v3952 = vld [vmem:[%s451 + $0xe78] sm:$0xff]
        %v3953 = vld [vmem:[%s451 + $0xe80] sm:$0xff]
        %v3954 = vld [vmem:[%s451 + $0xe88] sm:$0xff]
        %v3955 = vld [vmem:[%s451 + $0xe90] sm:$0xff]
        %v3956 = vld [vmem:[%s451 + $0xe98] sm:$0xff]
        %v3957 = vld [vmem:[%s451 + $0xea0] sm:$0xff]
        %v3958 = vld [vmem:[%s451 + $0xea8] sm:$0xff]
        %v3959 = vld [vmem:[%s451 + $0xeb0] sm:$0xff]
        %v3960 = vld [vmem:[%s451 + $0xeb8] sm:$0xff]
        %v3961 = vld [vmem:[%s451 + $0xec0] sm:$0xff]
        %v3962 = vld [vmem:[%s451 + $0xec8] sm:$0xff]
        %v3963 = vld [vmem:[%s451 + $0xed0] sm:$0xff]
        %v3964 = vld [vmem:[%s451 + $0xed8] sm:$0xff]
        %v3965 = vld [vmem:[%s451 + $0xee0] sm:$0xff]
        %v3966 = vld [vmem:[%s451 + $0xee8] sm:$0xff]
        %v3967 = vld [vmem:[%s451 + $0xef0] sm:$0xff]
        %v3968 = vld [vmem:[%s451 + $0xef8] sm:$0xff]
        %v3969 = vld [vmem:[%s451 + $0xf00] sm:$0xff]
        %v3970 = vld [vmem:[%s451 + $0xf08] sm:$0xff]
        %v3971 = vld [vmem:[%s451 + $0xf10] sm:$0xff]
        %v3972 = vld [vmem:[%s451 + $0xf18] sm:$0xff]
        %v3973 = vld [vmem:[%s451 + $0xf20] sm:$0xff]
        %v3974 = vld [vmem:[%s451 + $0xf28] sm:$0xff]
        %v3975 = vld [vmem:[%s451 + $0xf30] sm:$0xff]
        %v3976 = vld [vmem:[%s451 + $0xf38] sm:$0xff]
        %v3977 = vld [vmem:[%s451 + $0xf40] sm:$0xff]
        %v3978 = vld [vmem:[%s451 + $0xf48] sm:$0xff]
        %v3979 = vld [vmem:[%s451 + $0xf50] sm:$0xff]
        %v3980 = vld [vmem:[%s451 + $0xf58] sm:$0xff]
        %v3981 = vld [vmem:[%s451 + $0xf60] sm:$0xff]
        %v3982 = vld [vmem:[%s451 + $0xf68] sm:$0xff]
        %v3983 = vld [vmem:[%s451 + $0xf70] sm:$0xff]
        %v3984 = vld [vmem:[%s451 + $0xf78] sm:$0xff]
        %v3985 = vld [vmem:[%s451 + $0xf80] sm:$0xff]
        %v3986 = vld [vmem:[%s451 + $0xf88] sm:$0xff]
        %v3987 = vld [vmem:[%s451 + $0xf90] sm:$0xff]
        %v3988 = vld [vmem:[%s451 + $0xf98] sm:$0xff]
        %v3989 = vld [vmem:[%s451 + $0xfa0] sm:$0xff]
        %v3990 = vld [vmem:[%s451 + $0xfa8] sm:$0xff]
        %v3991 = vld [vmem:[%s451 + $0xfb0] sm:$0xff]
        %v3992 = vld [vmem:[%s451 + $0xfb8] sm:$0xff]
        %v3993 = vld [vmem:[%s451 + $0xfc0] sm:$0xff]
        %v3994 = vld [vmem:[%s451 + $0xfc8] sm:$0xff]
        %v3995 = vld [vmem:[%s451 + $0xfd0] sm:$0xff]
        %v3996 = vld [vmem:[%s451 + $0xfd8] sm:$0xff]
        %v3997 = vld [vmem:[%s451 + $0xfe0] sm:$0xff]
        %v3998 = vld [vmem:[%s451 + $0xfe8] sm:$0xff]
        %v3999 = vld [vmem:[%s451 + $0xff0] sm:$0xff]
        %v4000 = vld [vmem:[%s451 + $0xff8] sm:$0xff]
        %v4005 = vrot.slane %v3473, 1
        %v4006 = vrot.slane %v3474, 1
        %v4007 = vrot.slane %v3475, 1
        %v4008 = vrot.slane %v3476, 1
        %v4013 = vrot.slane %v3473, 2
        %v4014 = vrot.slane %v3474, 2
        %v4015 = vrot.slane %v3475, 2
        %v4016 = vrot.slane %v3476, 2
        %v4021 = vrot.slane %v3473, 3
        %v4022 = vrot.slane %v3474, 3
        %v4023 = vrot.slane %v3475, 3
        %v4024 = vrot.slane %v3476, 3
        %v4033 = vrot.slane %v3473, 4
        %v4034 = vrot.slane %v3477, 4
        %v4035 = vsel %vm3245, %v4033, %v4034
        %v4036 = vrot.slane %v3474, 4
        %v4037 = vrot.slane %v3478, 4
        %v4038 = vsel %vm3245, %v4036, %v4037
        %v4039 = vrot.slane %v3475, 4
        %v4040 = vrot.slane %v3479, 4
        %v4041 = vsel %vm3245, %v4039, %v4040
        %v4042 = vrot.slane %v3476, 4
        %v4043 = vrot.slane %v3480, 4
        %v4044 = vsel %vm3245, %v4042, %v4043
        %vm4049 = vcmask 1042432
        %v4050 = vrot.slane %v3473, 5
        %v4051 = vrot.slane %v3477, 5
        %v4052 = vsel %vm4049, %v4050, %v4051
        %v4053 = vrot.slane %v3474, 5
        %v4054 = vrot.slane %v3478, 5
        %v4055 = vsel %vm4049, %v4053, %v4054
        %v4056 = vrot.slane %v3475, 5
        %v4057 = vrot.slane %v3479, 5
        %v4058 = vsel %vm4049, %v4056, %v4057
        %v4059 = vrot.slane %v3476, 5
        %v4060 = vrot.slane %v3480, 5
        %v4061 = vsel %vm4049, %v4059, %v4060
        %vm4066 = vcmask 1041408
        %v4067 = vrot.slane %v3473, 6
        %v4068 = vrot.slane %v3477, 6
        %v4069 = vsel %vm4066, %v4067, %v4068
        %v4070 = vrot.slane %v3474, 6
        %v4071 = vrot.slane %v3478, 6
        %v4072 = vsel %vm4066, %v4070, %v4071
        %v4073 = vrot.slane %v3475, 6
        %v4074 = vrot.slane %v3479, 6
        %v4075 = vsel %vm4066, %v4073, %v4074
        %v4076 = vrot.slane %v3476, 6
        %v4077 = vrot.slane %v3480, 6
        %v4078 = vsel %vm4066, %v4076, %v4077
        %vm4083 = vcmask 1040384
        %v4084 = vrot.slane %v3473, 7
        %v4085 = vrot.slane %v3477, 7
        %v4086 = vsel %vm4083, %v4084, %v4085
        %v4087 = vrot.slane %v3474, 7
        %v4088 = vrot.slane %v3478, 7
        %v4089 = vsel %vm4083, %v4087, %v4088
        %v4090 = vrot.slane %v3475, 7
        %v4091 = vrot.slane %v3479, 7
        %v4092 = vsel %vm4083, %v4090, %v4091
        %v4093 = vrot.slane %v3476, 7
        %v4094 = vrot.slane %v3480, 7
        %v4095 = vsel %vm4083, %v4093, %v4094
        %v4100 = vpack.c.bf16 %v3473, %v3473
        %v4101 = vpack.c.bf16 %v3474, %v3474
        %v4102 = vpack.c.bf16 %v3475, %v3475
        %v4103 = vpack.c.bf16 %v3476, %v3476
        %v4104 = vpack.c.bf16 %v4005, %v4005
        %v4105 = vpack.c.bf16 %v4006, %v4006
        %v4106 = vpack.c.bf16 %v4007, %v4007
        %v4107 = vpack.c.bf16 %v4008, %v4008
        %v4108 = vpack.c.bf16 %v4013, %v4013
        %v4109 = vpack.c.bf16 %v4014, %v4014
        %v4110 = vpack.c.bf16 %v4015, %v4015
        %v4111 = vpack.c.bf16 %v4016, %v4016
        %v4112 = vpack.c.bf16 %v4021, %v4021
        %v4113 = vpack.c.bf16 %v4022, %v4022
        %v4114 = vpack.c.bf16 %v4023, %v4023
        %v4115 = vpack.c.bf16 %v4024, %v4024
        %v4116 = vpack.c.bf16 %v4035, %v4035
        %v4117 = vpack.c.bf16 %v4038, %v4038
        %v4118 = vpack.c.bf16 %v4041, %v4041
        %v4119 = vpack.c.bf16 %v4044, %v4044
        %v4120 = vpack.c.bf16 %v4052, %v4052
        %v4121 = vpack.c.bf16 %v4055, %v4055
        %v4122 = vpack.c.bf16 %v4058, %v4058
        %v4123 = vpack.c.bf16 %v4061, %v4061
        %v4124 = vpack.c.bf16 %v4069, %v4069
        %v4125 = vpack.c.bf16 %v4072, %v4072
        %v4126 = vpack.c.bf16 %v4075, %v4075
        %v4127 = vpack.c.bf16 %v4078, %v4078
        %v4128 = vpack.c.bf16 %v4086, %v4086
        %v4129 = vpack.c.bf16 %v4089, %v4089
        %v4130 = vpack.c.bf16 %v4092, %v4092
        %v4131 = vpack.c.bf16 %v4095, %v4095
        %v4644 = vunpack.c.l.b16 %v3489
        %v4645 = vunpack.c.h.b16 %v3489
        %v4646 = vunpack.c.l.b16 %v3490
        %v4647 = vunpack.c.h.b16 %v3490
        %v4648 = vunpack.c.l.b16 %v3491
        %v4649 = vunpack.c.h.b16 %v3491
        %v4650 = vunpack.c.l.b16 %v3492
        %v4651 = vunpack.c.h.b16 %v3492
        %v4652 = vunpack.c.l.b16 %v3493
        %v4653 = vunpack.c.h.b16 %v3493
        %v4654 = vunpack.c.l.b16 %v3494
        %v4655 = vunpack.c.h.b16 %v3494
        %v4656 = vunpack.c.l.b16 %v3495
        %v4657 = vunpack.c.h.b16 %v3495
        %v4658 = vunpack.c.l.b16 %v3496
        %v4659 = vunpack.c.h.b16 %v3496
        %v4660 = vunpack.c.l.b16 %v3497
        %v4661 = vunpack.c.h.b16 %v3497
        %v4662 = vunpack.c.l.b16 %v3498
        %v4663 = vunpack.c.h.b16 %v3498
        %v4664 = vunpack.c.l.b16 %v3499
        %v4665 = vunpack.c.h.b16 %v3499
        %v4666 = vunpack.c.l.b16 %v3500
        %v4667 = vunpack.c.h.b16 %v3500
        %v4668 = vunpack.c.l.b16 %v3501
        %v4669 = vunpack.c.h.b16 %v3501
        %v4670 = vunpack.c.l.b16 %v3502
        %v4671 = vunpack.c.h.b16 %v3502
        %v4672 = vunpack.c.l.b16 %v3503
        %v4673 = vunpack.c.h.b16 %v3503
        %v4674 = vunpack.c.l.b16 %v3504
        %v4675 = vunpack.c.h.b16 %v3504
        %v4676 = vunpack.c.l.b16 %v3505
        %v4677 = vunpack.c.h.b16 %v3505
        %v4678 = vunpack.c.l.b16 %v3506
        %v4679 = vunpack.c.h.b16 %v3506
        %v4680 = vunpack.c.l.b16 %v3507
        %v4681 = vunpack.c.h.b16 %v3507
        %v4682 = vunpack.c.l.b16 %v3508
        %v4683 = vunpack.c.h.b16 %v3508
        %v4684 = vunpack.c.l.b16 %v3509
        %v4685 = vunpack.c.h.b16 %v3509
        %v4686 = vunpack.c.l.b16 %v3510
        %v4687 = vunpack.c.h.b16 %v3510
        %v4688 = vunpack.c.l.b16 %v3511
        %v4689 = vunpack.c.h.b16 %v3511
        %v4690 = vunpack.c.l.b16 %v3512
        %v4691 = vunpack.c.h.b16 %v3512
        %v4692 = vunpack.c.l.b16 %v3513
        %v4693 = vunpack.c.h.b16 %v3513
        %v4694 = vunpack.c.l.b16 %v3514
        %v4695 = vunpack.c.h.b16 %v3514
        %v4696 = vunpack.c.l.b16 %v3515
        %v4697 = vunpack.c.h.b16 %v3515
        %v4698 = vunpack.c.l.b16 %v3516
        %v4699 = vunpack.c.h.b16 %v3516
        %v4700 = vunpack.c.l.b16 %v3517
        %v4701 = vunpack.c.h.b16 %v3517
        %v4702 = vunpack.c.l.b16 %v3518
        %v4703 = vunpack.c.h.b16 %v3518
        %v4704 = vunpack.c.l.b16 %v3519
        %v4705 = vunpack.c.h.b16 %v3519
        %v4706 = vunpack.c.l.b16 %v3520
        %v4707 = vunpack.c.h.b16 %v3520
        %v4708 = vunpack.c.l.b16 %v3521
        %v4709 = vunpack.c.h.b16 %v3521
        %v4710 = vunpack.c.l.b16 %v3522
        %v4711 = vunpack.c.h.b16 %v3522
        %v4712 = vunpack.c.l.b16 %v3523
        %v4713 = vunpack.c.h.b16 %v3523
        %v4714 = vunpack.c.l.b16 %v3524
        %v4715 = vunpack.c.h.b16 %v3524
        %v4716 = vunpack.c.l.b16 %v3525
        %v4717 = vunpack.c.h.b16 %v3525
        %v4718 = vunpack.c.l.b16 %v3526
        %v4719 = vunpack.c.h.b16 %v3526
        %v4720 = vunpack.c.l.b16 %v3527
        %v4721 = vunpack.c.h.b16 %v3527
        %v4722 = vunpack.c.l.b16 %v3528
        %v4723 = vunpack.c.h.b16 %v3528
        %v4724 = vunpack.c.l.b16 %v3529
        %v4725 = vunpack.c.h.b16 %v3529
        %v4726 = vunpack.c.l.b16 %v3530
        %v4727 = vunpack.c.h.b16 %v3530
        %v4728 = vunpack.c.l.b16 %v3531
        %v4729 = vunpack.c.h.b16 %v3531
        %v4730 = vunpack.c.l.b16 %v3532
        %v4731 = vunpack.c.h.b16 %v3532
        %v4732 = vunpack.c.l.b16 %v3533
        %v4733 = vunpack.c.h.b16 %v3533
        %v4734 = vunpack.c.l.b16 %v3534
        %v4735 = vunpack.c.h.b16 %v3534
        %v4736 = vunpack.c.l.b16 %v3535
        %v4737 = vunpack.c.h.b16 %v3535
        %v4738 = vunpack.c.l.b16 %v3536
        %v4739 = vunpack.c.h.b16 %v3536
        %v4740 = vunpack.c.l.b16 %v3537
        %v4741 = vunpack.c.h.b16 %v3537
        %v4742 = vunpack.c.l.b16 %v3538
        %v4743 = vunpack.c.h.b16 %v3538
        %v4744 = vunpack.c.l.b16 %v3539
        %v4745 = vunpack.c.h.b16 %v3539
        %v4746 = vunpack.c.l.b16 %v3540
        %v4747 = vunpack.c.h.b16 %v3540
        %v4748 = vunpack.c.l.b16 %v3541
        %v4749 = vunpack.c.h.b16 %v3541
        %v4750 = vunpack.c.l.b16 %v3542
        %v4751 = vunpack.c.h.b16 %v3542
        %v4752 = vunpack.c.l.b16 %v3543
        %v4753 = vunpack.c.h.b16 %v3543
        %v4754 = vunpack.c.l.b16 %v3544
        %v4755 = vunpack.c.h.b16 %v3544
        %v4756 = vunpack.c.l.b16 %v3545
        %v4757 = vunpack.c.h.b16 %v3545
        %v4758 = vunpack.c.l.b16 %v3546
        %v4759 = vunpack.c.h.b16 %v3546
        %v4760 = vunpack.c.l.b16 %v3547
        %v4761 = vunpack.c.h.b16 %v3547
        %v4762 = vunpack.c.l.b16 %v3548
        %v4763 = vunpack.c.h.b16 %v3548
        %v4764 = vunpack.c.l.b16 %v3549
        %v4765 = vunpack.c.h.b16 %v3549
        %v4766 = vunpack.c.l.b16 %v3550
        %v4767 = vunpack.c.h.b16 %v3550
        %v4768 = vunpack.c.l.b16 %v3551
        %v4769 = vunpack.c.h.b16 %v3551
        %v4770 = vunpack.c.l.b16 %v3552
        %v4771 = vunpack.c.h.b16 %v3552
        %v4772 = vunpack.c.l.b16 %v3553
        %v4773 = vunpack.c.h.b16 %v3553
        %v4774 = vunpack.c.l.b16 %v3554
        %v4775 = vunpack.c.h.b16 %v3554
        %v4776 = vunpack.c.l.b16 %v3555
        %v4777 = vunpack.c.h.b16 %v3555
        %v4778 = vunpack.c.l.b16 %v3556
        %v4779 = vunpack.c.h.b16 %v3556
        %v4780 = vunpack.c.l.b16 %v3557
        %v4781 = vunpack.c.h.b16 %v3557
        %v4782 = vunpack.c.l.b16 %v3558
        %v4783 = vunpack.c.h.b16 %v3558
        %v4784 = vunpack.c.l.b16 %v3559
        %v4785 = vunpack.c.h.b16 %v3559
        %v4786 = vunpack.c.l.b16 %v3560
        %v4787 = vunpack.c.h.b16 %v3560
        %v4788 = vunpack.c.l.b16 %v3561
        %v4789 = vunpack.c.h.b16 %v3561
        %v4790 = vunpack.c.l.b16 %v3562
        %v4791 = vunpack.c.h.b16 %v3562
        %v4792 = vunpack.c.l.b16 %v3563
        %v4793 = vunpack.c.h.b16 %v3563
        %v4794 = vunpack.c.l.b16 %v3564
        %v4795 = vunpack.c.h.b16 %v3564
        %v4796 = vunpack.c.l.b16 %v3565
        %v4797 = vunpack.c.h.b16 %v3565
        %v4798 = vunpack.c.l.b16 %v3566
        %v4799 = vunpack.c.h.b16 %v3566
        %v4800 = vunpack.c.l.b16 %v3567
        %v4801 = vunpack.c.h.b16 %v3567
        %v4802 = vunpack.c.l.b16 %v3568
        %v4803 = vunpack.c.h.b16 %v3568
        %v4804 = vunpack.c.l.b16 %v3569
        %v4805 = vunpack.c.h.b16 %v3569
        %v4806 = vunpack.c.l.b16 %v3570
        %v4807 = vunpack.c.h.b16 %v3570
        %v4808 = vunpack.c.l.b16 %v3571
        %v4809 = vunpack.c.h.b16 %v3571
        %v4810 = vunpack.c.l.b16 %v3572
        %v4811 = vunpack.c.h.b16 %v3572
        %v4812 = vunpack.c.l.b16 %v3573
        %v4813 = vunpack.c.h.b16 %v3573
        %v4814 = vunpack.c.l.b16 %v3574
        %v4815 = vunpack.c.h.b16 %v3574
        %v4816 = vunpack.c.l.b16 %v3575
        %v4817 = vunpack.c.h.b16 %v3575
        %v4818 = vunpack.c.l.b16 %v3576
        %v4819 = vunpack.c.h.b16 %v3576
        %v4820 = vunpack.c.l.b16 %v3577
        %v4821 = vunpack.c.h.b16 %v3577
        %v4822 = vunpack.c.l.b16 %v3578
        %v4823 = vunpack.c.h.b16 %v3578
        %v4824 = vunpack.c.l.b16 %v3579
        %v4825 = vunpack.c.h.b16 %v3579
        %v4826 = vunpack.c.l.b16 %v3580
        %v4827 = vunpack.c.h.b16 %v3580
        %v4828 = vunpack.c.l.b16 %v3581
        %v4829 = vunpack.c.h.b16 %v3581
        %v4830 = vunpack.c.l.b16 %v3582
        %v4831 = vunpack.c.h.b16 %v3582
        %v4832 = vunpack.c.l.b16 %v3583
        %v4833 = vunpack.c.h.b16 %v3583
        %v4834 = vunpack.c.l.b16 %v3584
        %v4835 = vunpack.c.h.b16 %v3584
        %v4836 = vunpack.c.l.b16 %v3585
        %v4837 = vunpack.c.h.b16 %v3585
        %v4838 = vunpack.c.l.b16 %v3586
        %v4839 = vunpack.c.h.b16 %v3586
        %v4840 = vunpack.c.l.b16 %v3587
        %v4841 = vunpack.c.h.b16 %v3587
        %v4842 = vunpack.c.l.b16 %v3588
        %v4843 = vunpack.c.h.b16 %v3588
        %v4844 = vunpack.c.l.b16 %v3589
        %v4845 = vunpack.c.h.b16 %v3589
        %v4846 = vunpack.c.l.b16 %v3590
        %v4847 = vunpack.c.h.b16 %v3590
        %v4848 = vunpack.c.l.b16 %v3591
        %v4849 = vunpack.c.h.b16 %v3591
        %v4850 = vunpack.c.l.b16 %v3592
        %v4851 = vunpack.c.h.b16 %v3592
        %v4852 = vunpack.c.l.b16 %v3593
        %v4853 = vunpack.c.h.b16 %v3593
        %v4854 = vunpack.c.l.b16 %v3594
        %v4855 = vunpack.c.h.b16 %v3594
        %v4856 = vunpack.c.l.b16 %v3595
        %v4857 = vunpack.c.h.b16 %v3595
        %v4858 = vunpack.c.l.b16 %v3596
        %v4859 = vunpack.c.h.b16 %v3596
        %v4860 = vunpack.c.l.b16 %v3597
        %v4861 = vunpack.c.h.b16 %v3597
        %v4862 = vunpack.c.l.b16 %v3598
        %v4863 = vunpack.c.h.b16 %v3598
        %v4864 = vunpack.c.l.b16 %v3599
        %v4865 = vunpack.c.h.b16 %v3599
        %v4866 = vunpack.c.l.b16 %v3600
        %v4867 = vunpack.c.h.b16 %v3600
        %v4868 = vunpack.c.l.b16 %v3601
        %v4869 = vunpack.c.h.b16 %v3601
        %v4870 = vunpack.c.l.b16 %v3602
        %v4871 = vunpack.c.h.b16 %v3602
        %v4872 = vunpack.c.l.b16 %v3603
        %v4873 = vunpack.c.h.b16 %v3603
        %v4874 = vunpack.c.l.b16 %v3604
        %v4875 = vunpack.c.h.b16 %v3604
        %v4876 = vunpack.c.l.b16 %v3605
        %v4877 = vunpack.c.h.b16 %v3605
        %v4878 = vunpack.c.l.b16 %v3606
        %v4879 = vunpack.c.h.b16 %v3606
        %v4880 = vunpack.c.l.b16 %v3607
        %v4881 = vunpack.c.h.b16 %v3607
        %v4882 = vunpack.c.l.b16 %v3608
        %v4883 = vunpack.c.h.b16 %v3608
        %v4884 = vunpack.c.l.b16 %v3609
        %v4885 = vunpack.c.h.b16 %v3609
        %v4886 = vunpack.c.l.b16 %v3610
        %v4887 = vunpack.c.h.b16 %v3610
        %v4888 = vunpack.c.l.b16 %v3611
        %v4889 = vunpack.c.h.b16 %v3611
        %v4890 = vunpack.c.l.b16 %v3612
        %v4891 = vunpack.c.h.b16 %v3612
        %v4892 = vunpack.c.l.b16 %v3613
        %v4893 = vunpack.c.h.b16 %v3613
        %v4894 = vunpack.c.l.b16 %v3614
        %v4895 = vunpack.c.h.b16 %v3614
        %v4896 = vunpack.c.l.b16 %v3615
        %v4897 = vunpack.c.h.b16 %v3615
        %v4898 = vunpack.c.l.b16 %v3616
        %v4899 = vunpack.c.h.b16 %v3616
        %v4900 = vunpack.c.l.b16 %v3617
        %v4901 = vunpack.c.h.b16 %v3617
        %v4902 = vunpack.c.l.b16 %v3618
        %v4903 = vunpack.c.h.b16 %v3618
        %v4904 = vunpack.c.l.b16 %v3619
        %v4905 = vunpack.c.h.b16 %v3619
        %v4906 = vunpack.c.l.b16 %v3620
        %v4907 = vunpack.c.h.b16 %v3620
        %v4908 = vunpack.c.l.b16 %v3621
        %v4909 = vunpack.c.h.b16 %v3621
        %v4910 = vunpack.c.l.b16 %v3622
        %v4911 = vunpack.c.h.b16 %v3622
        %v4912 = vunpack.c.l.b16 %v3623
        %v4913 = vunpack.c.h.b16 %v3623
        %v4914 = vunpack.c.l.b16 %v3624
        %v4915 = vunpack.c.h.b16 %v3624
        %v4916 = vunpack.c.l.b16 %v3625
        %v4917 = vunpack.c.h.b16 %v3625
        %v4918 = vunpack.c.l.b16 %v3626
        %v4919 = vunpack.c.h.b16 %v3626
        %v4920 = vunpack.c.l.b16 %v3627
        %v4921 = vunpack.c.h.b16 %v3627
        %v4922 = vunpack.c.l.b16 %v3628
        %v4923 = vunpack.c.h.b16 %v3628
        %v4924 = vunpack.c.l.b16 %v3629
        %v4925 = vunpack.c.h.b16 %v3629
        %v4926 = vunpack.c.l.b16 %v3630
        %v4927 = vunpack.c.h.b16 %v3630
        %v4928 = vunpack.c.l.b16 %v3631
        %v4929 = vunpack.c.h.b16 %v3631
        %v4930 = vunpack.c.l.b16 %v3632
        %v4931 = vunpack.c.h.b16 %v3632
        %v4932 = vunpack.c.l.b16 %v3633
        %v4933 = vunpack.c.h.b16 %v3633
        %v4934 = vunpack.c.l.b16 %v3634
        %v4935 = vunpack.c.h.b16 %v3634
        %v4936 = vunpack.c.l.b16 %v3635
        %v4937 = vunpack.c.h.b16 %v3635
        %v4938 = vunpack.c.l.b16 %v3636
        %v4939 = vunpack.c.h.b16 %v3636
        %v4940 = vunpack.c.l.b16 %v3637
        %v4941 = vunpack.c.h.b16 %v3637
        %v4942 = vunpack.c.l.b16 %v3638
        %v4943 = vunpack.c.h.b16 %v3638
        %v4944 = vunpack.c.l.b16 %v3639
        %v4945 = vunpack.c.h.b16 %v3639
        %v4946 = vunpack.c.l.b16 %v3640
        %v4947 = vunpack.c.h.b16 %v3640
        %v4948 = vunpack.c.l.b16 %v3641
        %v4949 = vunpack.c.h.b16 %v3641
        %v4950 = vunpack.c.l.b16 %v3642
        %v4951 = vunpack.c.h.b16 %v3642
        %v4952 = vunpack.c.l.b16 %v3643
        %v4953 = vunpack.c.h.b16 %v3643
        %v4954 = vunpack.c.l.b16 %v3644
        %v4955 = vunpack.c.h.b16 %v3644
        %v4956 = vunpack.c.l.b16 %v3645
        %v4957 = vunpack.c.h.b16 %v3645
        %v4958 = vunpack.c.l.b16 %v3646
        %v4959 = vunpack.c.h.b16 %v3646
        %v4960 = vunpack.c.l.b16 %v3647
        %v4961 = vunpack.c.h.b16 %v3647
        %v4962 = vunpack.c.l.b16 %v3648
        %v4963 = vunpack.c.h.b16 %v3648
        %v4964 = vunpack.c.l.b16 %v3649
        %v4965 = vunpack.c.h.b16 %v3649
        %v4966 = vunpack.c.l.b16 %v3650
        %v4967 = vunpack.c.h.b16 %v3650
        %v4968 = vunpack.c.l.b16 %v3651
        %v4969 = vunpack.c.h.b16 %v3651
        %v4970 = vunpack.c.l.b16 %v3652
        %v4971 = vunpack.c.h.b16 %v3652
        %v4972 = vunpack.c.l.b16 %v3653
        %v4973 = vunpack.c.h.b16 %v3653
        %v4974 = vunpack.c.l.b16 %v3654
        %v4975 = vunpack.c.h.b16 %v3654
        %v4976 = vunpack.c.l.b16 %v3655
        %v4977 = vunpack.c.h.b16 %v3655
        %v4978 = vunpack.c.l.b16 %v3656
        %v4979 = vunpack.c.h.b16 %v3656
        %v4980 = vunpack.c.l.b16 %v3657
        %v4981 = vunpack.c.h.b16 %v3657
        %v4982 = vunpack.c.l.b16 %v3658
        %v4983 = vunpack.c.h.b16 %v3658
        %v4984 = vunpack.c.l.b16 %v3659
        %v4985 = vunpack.c.h.b16 %v3659
        %v4986 = vunpack.c.l.b16 %v3660
        %v4987 = vunpack.c.h.b16 %v3660
        %v4988 = vunpack.c.l.b16 %v3661
        %v4989 = vunpack.c.h.b16 %v3661
        %v4990 = vunpack.c.l.b16 %v3662
        %v4991 = vunpack.c.h.b16 %v3662
        %v4992 = vunpack.c.l.b16 %v3663
        %v4993 = vunpack.c.h.b16 %v3663
        %v4994 = vunpack.c.l.b16 %v3664
        %v4995 = vunpack.c.h.b16 %v3664
        %v4996 = vunpack.c.l.b16 %v3665
        %v4997 = vunpack.c.h.b16 %v3665
        %v4998 = vunpack.c.l.b16 %v3666
        %v4999 = vunpack.c.h.b16 %v3666
        %v5000 = vunpack.c.l.b16 %v3667
        %v5001 = vunpack.c.h.b16 %v3667
        %v5002 = vunpack.c.l.b16 %v3668
        %v5003 = vunpack.c.h.b16 %v3668
        %v5004 = vunpack.c.l.b16 %v3669
        %v5005 = vunpack.c.h.b16 %v3669
        %v5006 = vunpack.c.l.b16 %v3670
        %v5007 = vunpack.c.h.b16 %v3670
        %v5008 = vunpack.c.l.b16 %v3671
        %v5009 = vunpack.c.h.b16 %v3671
        %v5010 = vunpack.c.l.b16 %v3672
        %v5011 = vunpack.c.h.b16 %v3672
        %v5012 = vunpack.c.l.b16 %v3673
        %v5013 = vunpack.c.h.b16 %v3673
        %v5014 = vunpack.c.l.b16 %v3674
        %v5015 = vunpack.c.h.b16 %v3674
        %v5016 = vunpack.c.l.b16 %v3675
        %v5017 = vunpack.c.h.b16 %v3675
        %v5018 = vunpack.c.l.b16 %v3676
        %v5019 = vunpack.c.h.b16 %v3676
        %v5020 = vunpack.c.l.b16 %v3677
        %v5021 = vunpack.c.h.b16 %v3677
        %v5022 = vunpack.c.l.b16 %v3678
        %v5023 = vunpack.c.h.b16 %v3678
        %v5024 = vunpack.c.l.b16 %v3679
        %v5025 = vunpack.c.h.b16 %v3679
        %v5026 = vunpack.c.l.b16 %v3680
        %v5027 = vunpack.c.h.b16 %v3680
        %v5028 = vunpack.c.l.b16 %v3681
        %v5029 = vunpack.c.h.b16 %v3681
        %v5030 = vunpack.c.l.b16 %v3682
        %v5031 = vunpack.c.h.b16 %v3682
        %v5032 = vunpack.c.l.b16 %v3683
        %v5033 = vunpack.c.h.b16 %v3683
        %v5034 = vunpack.c.l.b16 %v3684
        %v5035 = vunpack.c.h.b16 %v3684
        %v5036 = vunpack.c.l.b16 %v3685
        %v5037 = vunpack.c.h.b16 %v3685
        %v5038 = vunpack.c.l.b16 %v3686
        %v5039 = vunpack.c.h.b16 %v3686
        %v5040 = vunpack.c.l.b16 %v3687
        %v5041 = vunpack.c.h.b16 %v3687
        %v5042 = vunpack.c.l.b16 %v3688
        %v5043 = vunpack.c.h.b16 %v3688
        %v5044 = vunpack.c.l.b16 %v3689
        %v5045 = vunpack.c.h.b16 %v3689
        %v5046 = vunpack.c.l.b16 %v3690
        %v5047 = vunpack.c.h.b16 %v3690
        %v5048 = vunpack.c.l.b16 %v3691
        %v5049 = vunpack.c.h.b16 %v3691
        %v5050 = vunpack.c.l.b16 %v3692
        %v5051 = vunpack.c.h.b16 %v3692
        %v5052 = vunpack.c.l.b16 %v3693
        %v5053 = vunpack.c.h.b16 %v3693
        %v5054 = vunpack.c.l.b16 %v3694
        %v5055 = vunpack.c.h.b16 %v3694
        %v5056 = vunpack.c.l.b16 %v3695
        %v5057 = vunpack.c.h.b16 %v3695
        %v5058 = vunpack.c.l.b16 %v3696
        %v5059 = vunpack.c.h.b16 %v3696
        %v5060 = vunpack.c.l.b16 %v3697
        %v5061 = vunpack.c.h.b16 %v3697
        %v5062 = vunpack.c.l.b16 %v3698
        %v5063 = vunpack.c.h.b16 %v3698
        %v5064 = vunpack.c.l.b16 %v3699
        %v5065 = vunpack.c.h.b16 %v3699
        %v5066 = vunpack.c.l.b16 %v3700
        %v5067 = vunpack.c.h.b16 %v3700
        %v5068 = vunpack.c.l.b16 %v3701
        %v5069 = vunpack.c.h.b16 %v3701
        %v5070 = vunpack.c.l.b16 %v3702
        %v5071 = vunpack.c.h.b16 %v3702
        %v5072 = vunpack.c.l.b16 %v3703
        %v5073 = vunpack.c.h.b16 %v3703
        %v5074 = vunpack.c.l.b16 %v3704
        %v5075 = vunpack.c.h.b16 %v3704
        %v5076 = vunpack.c.l.b16 %v3705
        %v5077 = vunpack.c.h.b16 %v3705
        %v5078 = vunpack.c.l.b16 %v3706
        %v5079 = vunpack.c.h.b16 %v3706
        %v5080 = vunpack.c.l.b16 %v3707
        %v5081 = vunpack.c.h.b16 %v3707
        %v5082 = vunpack.c.l.b16 %v3708
        %v5083 = vunpack.c.h.b16 %v3708
        %v5084 = vunpack.c.l.b16 %v3709
        %v5085 = vunpack.c.h.b16 %v3709
        %v5086 = vunpack.c.l.b16 %v3710
        %v5087 = vunpack.c.h.b16 %v3710
        %v5088 = vunpack.c.l.b16 %v3711
        %v5089 = vunpack.c.h.b16 %v3711
        %v5090 = vunpack.c.l.b16 %v3712
        %v5091 = vunpack.c.h.b16 %v3712
        %v5092 = vunpack.c.l.b16 %v3713
        %v5093 = vunpack.c.h.b16 %v3713
        %v5094 = vunpack.c.l.b16 %v3714
        %v5095 = vunpack.c.h.b16 %v3714
        %v5096 = vunpack.c.l.b16 %v3715
        %v5097 = vunpack.c.h.b16 %v3715
        %v5098 = vunpack.c.l.b16 %v3716
        %v5099 = vunpack.c.h.b16 %v3716
        %v5100 = vunpack.c.l.b16 %v3717
        %v5101 = vunpack.c.h.b16 %v3717
        %v5102 = vunpack.c.l.b16 %v3718
        %v5103 = vunpack.c.h.b16 %v3718
        %v5104 = vunpack.c.l.b16 %v3719
        %v5105 = vunpack.c.h.b16 %v3719
        %v5106 = vunpack.c.l.b16 %v3720
        %v5107 = vunpack.c.h.b16 %v3720
        %v5108 = vunpack.c.l.b16 %v3721
        %v5109 = vunpack.c.h.b16 %v3721
        %v5110 = vunpack.c.l.b16 %v3722
        %v5111 = vunpack.c.h.b16 %v3722
        %v5112 = vunpack.c.l.b16 %v3723
        %v5113 = vunpack.c.h.b16 %v3723
        %v5114 = vunpack.c.l.b16 %v3724
        %v5115 = vunpack.c.h.b16 %v3724
        %v5116 = vunpack.c.l.b16 %v3725
        %v5117 = vunpack.c.h.b16 %v3725
        %v5118 = vunpack.c.l.b16 %v3726
        %v5119 = vunpack.c.h.b16 %v3726
        %v5120 = vunpack.c.l.b16 %v3727
        %v5121 = vunpack.c.h.b16 %v3727
        %v5122 = vunpack.c.l.b16 %v3728
        %v5123 = vunpack.c.h.b16 %v3728
        %v5124 = vunpack.c.l.b16 %v3729
        %v5125 = vunpack.c.h.b16 %v3729
        %v5126 = vunpack.c.l.b16 %v3730
        %v5127 = vunpack.c.h.b16 %v3730
        %v5128 = vunpack.c.l.b16 %v3731
        %v5129 = vunpack.c.h.b16 %v3731
        %v5130 = vunpack.c.l.b16 %v3732
        %v5131 = vunpack.c.h.b16 %v3732
        %v5132 = vunpack.c.l.b16 %v3733
        %v5133 = vunpack.c.h.b16 %v3733
        %v5134 = vunpack.c.l.b16 %v3734
        %v5135 = vunpack.c.h.b16 %v3734
        %v5136 = vunpack.c.l.b16 %v3735
        %v5137 = vunpack.c.h.b16 %v3735
        %v5138 = vunpack.c.l.b16 %v3736
        %v5139 = vunpack.c.h.b16 %v3736
        %v5140 = vunpack.c.l.b16 %v3737
        %v5141 = vunpack.c.h.b16 %v3737
        %v5142 = vunpack.c.l.b16 %v3738
        %v5143 = vunpack.c.h.b16 %v3738
        %v5144 = vunpack.c.l.b16 %v3739
        %v5145 = vunpack.c.h.b16 %v3739
        %v5146 = vunpack.c.l.b16 %v3740
        %v5147 = vunpack.c.h.b16 %v3740
        %v5148 = vunpack.c.l.b16 %v3741
        %v5149 = vunpack.c.h.b16 %v3741
        %v5150 = vunpack.c.l.b16 %v3742
        %v5151 = vunpack.c.h.b16 %v3742
        %v5152 = vunpack.c.l.b16 %v3743
        %v5153 = vunpack.c.h.b16 %v3743
        %v5154 = vunpack.c.l.b16 %v3744
        %v5155 = vunpack.c.h.b16 %v3744
        %v5156 = vunpack.c.l.b16 %v3745
        %v5157 = vunpack.c.h.b16 %v3745
        %v5158 = vunpack.c.l.b16 %v3746
        %v5159 = vunpack.c.h.b16 %v3746
        %v5160 = vunpack.c.l.b16 %v3747
        %v5161 = vunpack.c.h.b16 %v3747
        %v5162 = vunpack.c.l.b16 %v3748
        %v5163 = vunpack.c.h.b16 %v3748
        %v5164 = vunpack.c.l.b16 %v3749
        %v5165 = vunpack.c.h.b16 %v3749
        %v5166 = vunpack.c.l.b16 %v3750
        %v5167 = vunpack.c.h.b16 %v3750
        %v5168 = vunpack.c.l.b16 %v3751
        %v5169 = vunpack.c.h.b16 %v3751
        %v5170 = vunpack.c.l.b16 %v3752
        %v5171 = vunpack.c.h.b16 %v3752
        %v5172 = vunpack.c.l.b16 %v3753
        %v5173 = vunpack.c.h.b16 %v3753
        %v5174 = vunpack.c.l.b16 %v3754
        %v5175 = vunpack.c.h.b16 %v3754
        %v5176 = vunpack.c.l.b16 %v3755
        %v5177 = vunpack.c.h.b16 %v3755
        %v5178 = vunpack.c.l.b16 %v3756
        %v5179 = vunpack.c.h.b16 %v3756
        %v5180 = vunpack.c.l.b16 %v3757
        %v5181 = vunpack.c.h.b16 %v3757
        %v5182 = vunpack.c.l.b16 %v3758
        %v5183 = vunpack.c.h.b16 %v3758
        %v5184 = vunpack.c.l.b16 %v3759
        %v5185 = vunpack.c.h.b16 %v3759
        %v5186 = vunpack.c.l.b16 %v3760
        %v5187 = vunpack.c.h.b16 %v3760
        %v5188 = vunpack.c.l.b16 %v3761
        %v5189 = vunpack.c.h.b16 %v3761
        %v5190 = vunpack.c.l.b16 %v3762
        %v5191 = vunpack.c.h.b16 %v3762
        %v5192 = vunpack.c.l.b16 %v3763
        %v5193 = vunpack.c.h.b16 %v3763
        %v5194 = vunpack.c.l.b16 %v3764
        %v5195 = vunpack.c.h.b16 %v3764
        %v5196 = vunpack.c.l.b16 %v3765
        %v5197 = vunpack.c.h.b16 %v3765
        %v5198 = vunpack.c.l.b16 %v3766
        %v5199 = vunpack.c.h.b16 %v3766
        %v5200 = vunpack.c.l.b16 %v3767
        %v5201 = vunpack.c.h.b16 %v3767
        %v5202 = vunpack.c.l.b16 %v3768
        %v5203 = vunpack.c.h.b16 %v3768
        %v5204 = vunpack.c.l.b16 %v3769
        %v5205 = vunpack.c.h.b16 %v3769
        %v5206 = vunpack.c.l.b16 %v3770
        %v5207 = vunpack.c.h.b16 %v3770
        %v5208 = vunpack.c.l.b16 %v3771
        %v5209 = vunpack.c.h.b16 %v3771
        %v5210 = vunpack.c.l.b16 %v3772
        %v5211 = vunpack.c.h.b16 %v3772
        %v5212 = vunpack.c.l.b16 %v3773
        %v5213 = vunpack.c.h.b16 %v3773
        %v5214 = vunpack.c.l.b16 %v3774
        %v5215 = vunpack.c.h.b16 %v3774
        %v5216 = vunpack.c.l.b16 %v3775
        %v5217 = vunpack.c.h.b16 %v3775
        %v5218 = vunpack.c.l.b16 %v3776
        %v5219 = vunpack.c.h.b16 %v3776
        %v5220 = vunpack.c.l.b16 %v3777
        %v5221 = vunpack.c.h.b16 %v3777
        %v5222 = vunpack.c.l.b16 %v3778
        %v5223 = vunpack.c.h.b16 %v3778
        %v5224 = vunpack.c.l.b16 %v3779
        %v5225 = vunpack.c.h.b16 %v3779
        %v5226 = vunpack.c.l.b16 %v3780
        %v5227 = vunpack.c.h.b16 %v3780
        %v5228 = vunpack.c.l.b16 %v3781
        %v5229 = vunpack.c.h.b16 %v3781
        %v5230 = vunpack.c.l.b16 %v3782
        %v5231 = vunpack.c.h.b16 %v3782
        %v5232 = vunpack.c.l.b16 %v3783
        %v5233 = vunpack.c.h.b16 %v3783
        %v5234 = vunpack.c.l.b16 %v3784
        %v5235 = vunpack.c.h.b16 %v3784
        %v5236 = vunpack.c.l.b16 %v3785
        %v5237 = vunpack.c.h.b16 %v3785
        %v5238 = vunpack.c.l.b16 %v3786
        %v5239 = vunpack.c.h.b16 %v3786
        %v5240 = vunpack.c.l.b16 %v3787
        %v5241 = vunpack.c.h.b16 %v3787
        %v5242 = vunpack.c.l.b16 %v3788
        %v5243 = vunpack.c.h.b16 %v3788
        %v5244 = vunpack.c.l.b16 %v3789
        %v5245 = vunpack.c.h.b16 %v3789
        %v5246 = vunpack.c.l.b16 %v3790
        %v5247 = vunpack.c.h.b16 %v3790
        %v5248 = vunpack.c.l.b16 %v3791
        %v5249 = vunpack.c.h.b16 %v3791
        %v5250 = vunpack.c.l.b16 %v3792
        %v5251 = vunpack.c.h.b16 %v3792
        %v5252 = vunpack.c.l.b16 %v3793
        %v5253 = vunpack.c.h.b16 %v3793
        %v5254 = vunpack.c.l.b16 %v3794
        %v5255 = vunpack.c.h.b16 %v3794
        %v5256 = vunpack.c.l.b16 %v3795
        %v5257 = vunpack.c.h.b16 %v3795
        %v5258 = vunpack.c.l.b16 %v3796
        %v5259 = vunpack.c.h.b16 %v3796
        %v5260 = vunpack.c.l.b16 %v3797
        %v5261 = vunpack.c.h.b16 %v3797
        %v5262 = vunpack.c.l.b16 %v3798
        %v5263 = vunpack.c.h.b16 %v3798
        %v5264 = vunpack.c.l.b16 %v3799
        %v5265 = vunpack.c.h.b16 %v3799
        %v5266 = vunpack.c.l.b16 %v3800
        %v5267 = vunpack.c.h.b16 %v3800
        %v5268 = vunpack.c.l.b16 %v3801
        %v5269 = vunpack.c.h.b16 %v3801
        %v5270 = vunpack.c.l.b16 %v3802
        %v5271 = vunpack.c.h.b16 %v3802
        %v5272 = vunpack.c.l.b16 %v3803
        %v5273 = vunpack.c.h.b16 %v3803
        %v5274 = vunpack.c.l.b16 %v3804
        %v5275 = vunpack.c.h.b16 %v3804
        %v5276 = vunpack.c.l.b16 %v3805
        %v5277 = vunpack.c.h.b16 %v3805
        %v5278 = vunpack.c.l.b16 %v3806
        %v5279 = vunpack.c.h.b16 %v3806
        %v5280 = vunpack.c.l.b16 %v3807
        %v5281 = vunpack.c.h.b16 %v3807
        %v5282 = vunpack.c.l.b16 %v3808
        %v5283 = vunpack.c.h.b16 %v3808
        %v5284 = vunpack.c.l.b16 %v3809
        %v5285 = vunpack.c.h.b16 %v3809
        %v5286 = vunpack.c.l.b16 %v3810
        %v5287 = vunpack.c.h.b16 %v3810
        %v5288 = vunpack.c.l.b16 %v3811
        %v5289 = vunpack.c.h.b16 %v3811
        %v5290 = vunpack.c.l.b16 %v3812
        %v5291 = vunpack.c.h.b16 %v3812
        %v5292 = vunpack.c.l.b16 %v3813
        %v5293 = vunpack.c.h.b16 %v3813
        %v5294 = vunpack.c.l.b16 %v3814
        %v5295 = vunpack.c.h.b16 %v3814
        %v5296 = vunpack.c.l.b16 %v3815
        %v5297 = vunpack.c.h.b16 %v3815
        %v5298 = vunpack.c.l.b16 %v3816
        %v5299 = vunpack.c.h.b16 %v3816
        %v5300 = vunpack.c.l.b16 %v3817
        %v5301 = vunpack.c.h.b16 %v3817
        %v5302 = vunpack.c.l.b16 %v3818
        %v5303 = vunpack.c.h.b16 %v3818
        %v5304 = vunpack.c.l.b16 %v3819
        %v5305 = vunpack.c.h.b16 %v3819
        %v5306 = vunpack.c.l.b16 %v3820
        %v5307 = vunpack.c.h.b16 %v3820
        %v5308 = vunpack.c.l.b16 %v3821
        %v5309 = vunpack.c.h.b16 %v3821
        %v5310 = vunpack.c.l.b16 %v3822
        %v5311 = vunpack.c.h.b16 %v3822
        %v5312 = vunpack.c.l.b16 %v3823
        %v5313 = vunpack.c.h.b16 %v3823
        %v5314 = vunpack.c.l.b16 %v3824
        %v5315 = vunpack.c.h.b16 %v3824
        %v5316 = vunpack.c.l.b16 %v3825
        %v5317 = vunpack.c.h.b16 %v3825
        %v5318 = vunpack.c.l.b16 %v3826
        %v5319 = vunpack.c.h.b16 %v3826
        %v5320 = vunpack.c.l.b16 %v3827
        %v5321 = vunpack.c.h.b16 %v3827
        %v5322 = vunpack.c.l.b16 %v3828
        %v5323 = vunpack.c.h.b16 %v3828
        %v5324 = vunpack.c.l.b16 %v3829
        %v5325 = vunpack.c.h.b16 %v3829
        %v5326 = vunpack.c.l.b16 %v3830
        %v5327 = vunpack.c.h.b16 %v3830
        %v5328 = vunpack.c.l.b16 %v3831
        %v5329 = vunpack.c.h.b16 %v3831
        %v5330 = vunpack.c.l.b16 %v3832
        %v5331 = vunpack.c.h.b16 %v3832
        %v5332 = vunpack.c.l.b16 %v3833
        %v5333 = vunpack.c.h.b16 %v3833
        %v5334 = vunpack.c.l.b16 %v3834
        %v5335 = vunpack.c.h.b16 %v3834
        %v5336 = vunpack.c.l.b16 %v3835
        %v5337 = vunpack.c.h.b16 %v3835
        %v5338 = vunpack.c.l.b16 %v3836
        %v5339 = vunpack.c.h.b16 %v3836
        %v5340 = vunpack.c.l.b16 %v3837
        %v5341 = vunpack.c.h.b16 %v3837
        %v5342 = vunpack.c.l.b16 %v3838
        %v5343 = vunpack.c.h.b16 %v3838
        %v5344 = vunpack.c.l.b16 %v3839
        %v5345 = vunpack.c.h.b16 %v3839
        %v5346 = vunpack.c.l.b16 %v3840
        %v5347 = vunpack.c.h.b16 %v3840
        %v5348 = vunpack.c.l.b16 %v3841
        %v5349 = vunpack.c.h.b16 %v3841
        %v5350 = vunpack.c.l.b16 %v3842
        %v5351 = vunpack.c.h.b16 %v3842
        %v5352 = vunpack.c.l.b16 %v3843
        %v5353 = vunpack.c.h.b16 %v3843
        %v5354 = vunpack.c.l.b16 %v3844
        %v5355 = vunpack.c.h.b16 %v3844
        %v5356 = vunpack.c.l.b16 %v3845
        %v5357 = vunpack.c.h.b16 %v3845
        %v5358 = vunpack.c.l.b16 %v3846
        %v5359 = vunpack.c.h.b16 %v3846
        %v5360 = vunpack.c.l.b16 %v3847
        %v5361 = vunpack.c.h.b16 %v3847
        %v5362 = vunpack.c.l.b16 %v3848
        %v5363 = vunpack.c.h.b16 %v3848
        %v5364 = vunpack.c.l.b16 %v3849
        %v5365 = vunpack.c.h.b16 %v3849
        %v5366 = vunpack.c.l.b16 %v3850
        %v5367 = vunpack.c.h.b16 %v3850
        %v5368 = vunpack.c.l.b16 %v3851
        %v5369 = vunpack.c.h.b16 %v3851
        %v5370 = vunpack.c.l.b16 %v3852
        %v5371 = vunpack.c.h.b16 %v3852
        %v5372 = vunpack.c.l.b16 %v3853
        %v5373 = vunpack.c.h.b16 %v3853
        %v5374 = vunpack.c.l.b16 %v3854
        %v5375 = vunpack.c.h.b16 %v3854
        %v5376 = vunpack.c.l.b16 %v3855
        %v5377 = vunpack.c.h.b16 %v3855
        %v5378 = vunpack.c.l.b16 %v3856
        %v5379 = vunpack.c.h.b16 %v3856
        %v5380 = vunpack.c.l.b16 %v3857
        %v5381 = vunpack.c.h.b16 %v3857
        %v5382 = vunpack.c.l.b16 %v3858
        %v5383 = vunpack.c.h.b16 %v3858
        %v5384 = vunpack.c.l.b16 %v3859
        %v5385 = vunpack.c.h.b16 %v3859
        %v5386 = vunpack.c.l.b16 %v3860
        %v5387 = vunpack.c.h.b16 %v3860
        %v5388 = vunpack.c.l.b16 %v3861
        %v5389 = vunpack.c.h.b16 %v3861
        %v5390 = vunpack.c.l.b16 %v3862
        %v5391 = vunpack.c.h.b16 %v3862
        %v5392 = vunpack.c.l.b16 %v3863
        %v5393 = vunpack.c.h.b16 %v3863
        %v5394 = vunpack.c.l.b16 %v3864
        %v5395 = vunpack.c.h.b16 %v3864
        %v5396 = vunpack.c.l.b16 %v3865
        %v5397 = vunpack.c.h.b16 %v3865
        %v5398 = vunpack.c.l.b16 %v3866
        %v5399 = vunpack.c.h.b16 %v3866
        %v5400 = vunpack.c.l.b16 %v3867
        %v5401 = vunpack.c.h.b16 %v3867
        %v5402 = vunpack.c.l.b16 %v3868
        %v5403 = vunpack.c.h.b16 %v3868
        %v5404 = vunpack.c.l.b16 %v3869
        %v5405 = vunpack.c.h.b16 %v3869
        %v5406 = vunpack.c.l.b16 %v3870
        %v5407 = vunpack.c.h.b16 %v3870
        %v5408 = vunpack.c.l.b16 %v3871
        %v5409 = vunpack.c.h.b16 %v3871
        %v5410 = vunpack.c.l.b16 %v3872
        %v5411 = vunpack.c.h.b16 %v3872
        %v5412 = vunpack.c.l.b16 %v3873
        %v5413 = vunpack.c.h.b16 %v3873
        %v5414 = vunpack.c.l.b16 %v3874
        %v5415 = vunpack.c.h.b16 %v3874
        %v5416 = vunpack.c.l.b16 %v3875
        %v5417 = vunpack.c.h.b16 %v3875
        %v5418 = vunpack.c.l.b16 %v3876
        %v5419 = vunpack.c.h.b16 %v3876
        %v5420 = vunpack.c.l.b16 %v3877
        %v5421 = vunpack.c.h.b16 %v3877
        %v5422 = vunpack.c.l.b16 %v3878
        %v5423 = vunpack.c.h.b16 %v3878
        %v5424 = vunpack.c.l.b16 %v3879
        %v5425 = vunpack.c.h.b16 %v3879
        %v5426 = vunpack.c.l.b16 %v3880
        %v5427 = vunpack.c.h.b16 %v3880
        %v5428 = vunpack.c.l.b16 %v3881
        %v5429 = vunpack.c.h.b16 %v3881
        %v5430 = vunpack.c.l.b16 %v3882
        %v5431 = vunpack.c.h.b16 %v3882
        %v5432 = vunpack.c.l.b16 %v3883
        %v5433 = vunpack.c.h.b16 %v3883
        %v5434 = vunpack.c.l.b16 %v3884
        %v5435 = vunpack.c.h.b16 %v3884
        %v5436 = vunpack.c.l.b16 %v3885
        %v5437 = vunpack.c.h.b16 %v3885
        %v5438 = vunpack.c.l.b16 %v3886
        %v5439 = vunpack.c.h.b16 %v3886
        %v5440 = vunpack.c.l.b16 %v3887
        %v5441 = vunpack.c.h.b16 %v3887
        %v5442 = vunpack.c.l.b16 %v3888
        %v5443 = vunpack.c.h.b16 %v3888
        %v5444 = vunpack.c.l.b16 %v3889
        %v5445 = vunpack.c.h.b16 %v3889
        %v5446 = vunpack.c.l.b16 %v3890
        %v5447 = vunpack.c.h.b16 %v3890
        %v5448 = vunpack.c.l.b16 %v3891
        %v5449 = vunpack.c.h.b16 %v3891
        %v5450 = vunpack.c.l.b16 %v3892
        %v5451 = vunpack.c.h.b16 %v3892
        %v5452 = vunpack.c.l.b16 %v3893
        %v5453 = vunpack.c.h.b16 %v3893
        %v5454 = vunpack.c.l.b16 %v3894
        %v5455 = vunpack.c.h.b16 %v3894
        %v5456 = vunpack.c.l.b16 %v3895
        %v5457 = vunpack.c.h.b16 %v3895
        %v5458 = vunpack.c.l.b16 %v3896
        %v5459 = vunpack.c.h.b16 %v3896
        %v5460 = vunpack.c.l.b16 %v3897
        %v5461 = vunpack.c.h.b16 %v3897
        %v5462 = vunpack.c.l.b16 %v3898
        %v5463 = vunpack.c.h.b16 %v3898
        %v5464 = vunpack.c.l.b16 %v3899
        %v5465 = vunpack.c.h.b16 %v3899
        %v5466 = vunpack.c.l.b16 %v3900
        %v5467 = vunpack.c.h.b16 %v3900
        %v5468 = vunpack.c.l.b16 %v3901
        %v5469 = vunpack.c.h.b16 %v3901
        %v5470 = vunpack.c.l.b16 %v3902
        %v5471 = vunpack.c.h.b16 %v3902
        %v5472 = vunpack.c.l.b16 %v3903
        %v5473 = vunpack.c.h.b16 %v3903
        %v5474 = vunpack.c.l.b16 %v3904
        %v5475 = vunpack.c.h.b16 %v3904
        %v5476 = vunpack.c.l.b16 %v3905
        %v5477 = vunpack.c.h.b16 %v3905
        %v5478 = vunpack.c.l.b16 %v3906
        %v5479 = vunpack.c.h.b16 %v3906
        %v5480 = vunpack.c.l.b16 %v3907
        %v5481 = vunpack.c.h.b16 %v3907
        %v5482 = vunpack.c.l.b16 %v3908
        %v5483 = vunpack.c.h.b16 %v3908
        %v5484 = vunpack.c.l.b16 %v3909
        %v5485 = vunpack.c.h.b16 %v3909
        %v5486 = vunpack.c.l.b16 %v3910
        %v5487 = vunpack.c.h.b16 %v3910
        %v5488 = vunpack.c.l.b16 %v3911
        %v5489 = vunpack.c.h.b16 %v3911
        %v5490 = vunpack.c.l.b16 %v3912
        %v5491 = vunpack.c.h.b16 %v3912
        %v5492 = vunpack.c.l.b16 %v3913
        %v5493 = vunpack.c.h.b16 %v3913
        %v5494 = vunpack.c.l.b16 %v3914
        %v5495 = vunpack.c.h.b16 %v3914
        %v5496 = vunpack.c.l.b16 %v3915
        %v5497 = vunpack.c.h.b16 %v3915
        %v5498 = vunpack.c.l.b16 %v3916
        %v5499 = vunpack.c.h.b16 %v3916
        %v5500 = vunpack.c.l.b16 %v3917
        %v5501 = vunpack.c.h.b16 %v3917
        %v5502 = vunpack.c.l.b16 %v3918
        %v5503 = vunpack.c.h.b16 %v3918
        %v5504 = vunpack.c.l.b16 %v3919
        %v5505 = vunpack.c.h.b16 %v3919
        %v5506 = vunpack.c.l.b16 %v3920
        %v5507 = vunpack.c.h.b16 %v3920
        %v5508 = vunpack.c.l.b16 %v3921
        %v5509 = vunpack.c.h.b16 %v3921
        %v5510 = vunpack.c.l.b16 %v3922
        %v5511 = vunpack.c.h.b16 %v3922
        %v5512 = vunpack.c.l.b16 %v3923
        %v5513 = vunpack.c.h.b16 %v3923
        %v5514 = vunpack.c.l.b16 %v3924
        %v5515 = vunpack.c.h.b16 %v3924
        %v5516 = vunpack.c.l.b16 %v3925
        %v5517 = vunpack.c.h.b16 %v3925
        %v5518 = vunpack.c.l.b16 %v3926
        %v5519 = vunpack.c.h.b16 %v3926
        %v5520 = vunpack.c.l.b16 %v3927
        %v5521 = vunpack.c.h.b16 %v3927
        %v5522 = vunpack.c.l.b16 %v3928
        %v5523 = vunpack.c.h.b16 %v3928
        %v5524 = vunpack.c.l.b16 %v3929
        %v5525 = vunpack.c.h.b16 %v3929
        %v5526 = vunpack.c.l.b16 %v3930
        %v5527 = vunpack.c.h.b16 %v3930
        %v5528 = vunpack.c.l.b16 %v3931
        %v5529 = vunpack.c.h.b16 %v3931
        %v5530 = vunpack.c.l.b16 %v3932
        %v5531 = vunpack.c.h.b16 %v3932
        %v5532 = vunpack.c.l.b16 %v3933
        %v5533 = vunpack.c.h.b16 %v3933
        %v5534 = vunpack.c.l.b16 %v3934
        %v5535 = vunpack.c.h.b16 %v3934
        %v5536 = vunpack.c.l.b16 %v3935
        %v5537 = vunpack.c.h.b16 %v3935
        %v5538 = vunpack.c.l.b16 %v3936
        %v5539 = vunpack.c.h.b16 %v3936
        %v5540 = vunpack.c.l.b16 %v3937
        %v5541 = vunpack.c.h.b16 %v3937
        %v5542 = vunpack.c.l.b16 %v3938
        %v5543 = vunpack.c.h.b16 %v3938
        %v5544 = vunpack.c.l.b16 %v3939
        %v5545 = vunpack.c.h.b16 %v3939
        %v5546 = vunpack.c.l.b16 %v3940
        %v5547 = vunpack.c.h.b16 %v3940
        %v5548 = vunpack.c.l.b16 %v3941
        %v5549 = vunpack.c.h.b16 %v3941
        %v5550 = vunpack.c.l.b16 %v3942
        %v5551 = vunpack.c.h.b16 %v3942
        %v5552 = vunpack.c.l.b16 %v3943
        %v5553 = vunpack.c.h.b16 %v3943
        %v5554 = vunpack.c.l.b16 %v3944
        %v5555 = vunpack.c.h.b16 %v3944
        %v5556 = vunpack.c.l.b16 %v3945
        %v5557 = vunpack.c.h.b16 %v3945
        %v5558 = vunpack.c.l.b16 %v3946
        %v5559 = vunpack.c.h.b16 %v3946
        %v5560 = vunpack.c.l.b16 %v3947
        %v5561 = vunpack.c.h.b16 %v3947
        %v5562 = vunpack.c.l.b16 %v3948
        %v5563 = vunpack.c.h.b16 %v3948
        %v5564 = vunpack.c.l.b16 %v3949
        %v5565 = vunpack.c.h.b16 %v3949
        %v5566 = vunpack.c.l.b16 %v3950
        %v5567 = vunpack.c.h.b16 %v3950
        %v5568 = vunpack.c.l.b16 %v3951
        %v5569 = vunpack.c.h.b16 %v3951
        %v5570 = vunpack.c.l.b16 %v3952
        %v5571 = vunpack.c.h.b16 %v3952
        %v5572 = vunpack.c.l.b16 %v3953
        %v5573 = vunpack.c.h.b16 %v3953
        %v5574 = vunpack.c.l.b16 %v3954
        %v5575 = vunpack.c.h.b16 %v3954
        %v5576 = vunpack.c.l.b16 %v3955
        %v5577 = vunpack.c.h.b16 %v3955
        %v5578 = vunpack.c.l.b16 %v3956
        %v5579 = vunpack.c.h.b16 %v3956
        %v5580 = vunpack.c.l.b16 %v3957
        %v5581 = vunpack.c.h.b16 %v3957
        %v5582 = vunpack.c.l.b16 %v3958
        %v5583 = vunpack.c.h.b16 %v3958
        %v5584 = vunpack.c.l.b16 %v3959
        %v5585 = vunpack.c.h.b16 %v3959
        %v5586 = vunpack.c.l.b16 %v3960
        %v5587 = vunpack.c.h.b16 %v3960
        %v5588 = vunpack.c.l.b16 %v3961
        %v5589 = vunpack.c.h.b16 %v3961
        %v5590 = vunpack.c.l.b16 %v3962
        %v5591 = vunpack.c.h.b16 %v3962
        %v5592 = vunpack.c.l.b16 %v3963
        %v5593 = vunpack.c.h.b16 %v3963
        %v5594 = vunpack.c.l.b16 %v3964
        %v5595 = vunpack.c.h.b16 %v3964
        %v5596 = vunpack.c.l.b16 %v3965
        %v5597 = vunpack.c.h.b16 %v3965
        %v5598 = vunpack.c.l.b16 %v3966
        %v5599 = vunpack.c.h.b16 %v3966
        %v5600 = vunpack.c.l.b16 %v3967
        %v5601 = vunpack.c.h.b16 %v3967
        %v5602 = vunpack.c.l.b16 %v3968
        %v5603 = vunpack.c.h.b16 %v3968
        %v5604 = vunpack.c.l.b16 %v3969
        %v5605 = vunpack.c.h.b16 %v3969
        %v5606 = vunpack.c.l.b16 %v3970
        %v5607 = vunpack.c.h.b16 %v3970
        %v5608 = vunpack.c.l.b16 %v3971
        %v5609 = vunpack.c.h.b16 %v3971
        %v5610 = vunpack.c.l.b16 %v3972
        %v5611 = vunpack.c.h.b16 %v3972
        %v5612 = vunpack.c.l.b16 %v3973
        %v5613 = vunpack.c.h.b16 %v3973
        %v5614 = vunpack.c.l.b16 %v3974
        %v5615 = vunpack.c.h.b16 %v3974
        %v5616 = vunpack.c.l.b16 %v3975
        %v5617 = vunpack.c.h.b16 %v3975
        %v5618 = vunpack.c.l.b16 %v3976
        %v5619 = vunpack.c.h.b16 %v3976
        %v5620 = vunpack.c.l.b16 %v3977
        %v5621 = vunpack.c.h.b16 %v3977
        %v5622 = vunpack.c.l.b16 %v3978
        %v5623 = vunpack.c.h.b16 %v3978
        %v5624 = vunpack.c.l.b16 %v3979
        %v5625 = vunpack.c.h.b16 %v3979
        %v5626 = vunpack.c.l.b16 %v3980
        %v5627 = vunpack.c.h.b16 %v3980
        %v5628 = vunpack.c.l.b16 %v3981
        %v5629 = vunpack.c.h.b16 %v3981
        %v5630 = vunpack.c.l.b16 %v3982
        %v5631 = vunpack.c.h.b16 %v3982
        %v5632 = vunpack.c.l.b16 %v3983
        %v5633 = vunpack.c.h.b16 %v3983
        %v5634 = vunpack.c.l.b16 %v3984
        %v5635 = vunpack.c.h.b16 %v3984
        %v5636 = vunpack.c.l.b16 %v3985
        %v5637 = vunpack.c.h.b16 %v3985
        %v5638 = vunpack.c.l.b16 %v3986
        %v5639 = vunpack.c.h.b16 %v3986
        %v5640 = vunpack.c.l.b16 %v3987
        %v5641 = vunpack.c.h.b16 %v3987
        %v5642 = vunpack.c.l.b16 %v3988
        %v5643 = vunpack.c.h.b16 %v3988
        %v5644 = vunpack.c.l.b16 %v3989
        %v5645 = vunpack.c.h.b16 %v3989
        %v5646 = vunpack.c.l.b16 %v3990
        %v5647 = vunpack.c.h.b16 %v3990
        %v5648 = vunpack.c.l.b16 %v3991
        %v5649 = vunpack.c.h.b16 %v3991
        %v5650 = vunpack.c.l.b16 %v3992
        %v5651 = vunpack.c.h.b16 %v3992
        %v5652 = vunpack.c.l.b16 %v3993
        %v5653 = vunpack.c.h.b16 %v3993
        %v5654 = vunpack.c.l.b16 %v3994
        %v5655 = vunpack.c.h.b16 %v3994
        %v5656 = vunpack.c.l.b16 %v3995
        %v5657 = vunpack.c.h.b16 %v3995
        %v5658 = vunpack.c.l.b16 %v3996
        %v5659 = vunpack.c.h.b16 %v3996
        %v5660 = vunpack.c.l.b16 %v3997
        %v5661 = vunpack.c.h.b16 %v3997
        %v5662 = vunpack.c.l.b16 %v3998
        %v5663 = vunpack.c.h.b16 %v3998
        %v5664 = vunpack.c.l.b16 %v3999
        %v5665 = vunpack.c.h.b16 %v3999
        %v5666 = vunpack.c.l.b16 %v4000
        %v5667 = vunpack.c.h.b16 %v4000
        %v5668 = vpack.c.b16 %v4646, %v4644
        %v5669 = vpack.c.b16 %v4647, %v4645
        %v5670 = vpack.c.b16 %v4650, %v4648
        %v5671 = vpack.c.b16 %v4651, %v4649
        %v5672 = vpack.c.b16 %v4654, %v4652
        %v5673 = vpack.c.b16 %v4655, %v4653
        %v5674 = vpack.c.b16 %v4658, %v4656
        %v5675 = vpack.c.b16 %v4659, %v4657
        %v5676 = vpack.c.b16 %v4662, %v4660
        %v5677 = vpack.c.b16 %v4663, %v4661
        %v5678 = vpack.c.b16 %v4666, %v4664
        %v5679 = vpack.c.b16 %v4667, %v4665
        %v5680 = vpack.c.b16 %v4670, %v4668
        %v5681 = vpack.c.b16 %v4671, %v4669
        %v5682 = vpack.c.b16 %v4674, %v4672
        %v5683 = vpack.c.b16 %v4675, %v4673
        %v5684 = vpack.c.b16 %v4678, %v4676
        %v5685 = vpack.c.b16 %v4679, %v4677
        %v5686 = vpack.c.b16 %v4682, %v4680
        %v5687 = vpack.c.b16 %v4683, %v4681
        %v5688 = vpack.c.b16 %v4686, %v4684
        %v5689 = vpack.c.b16 %v4687, %v4685
        %v5690 = vpack.c.b16 %v4690, %v4688
        %v5691 = vpack.c.b16 %v4691, %v4689
        %v5692 = vpack.c.b16 %v4694, %v4692
        %v5693 = vpack.c.b16 %v4695, %v4693
        %v5694 = vpack.c.b16 %v4698, %v4696
        %v5695 = vpack.c.b16 %v4699, %v4697
        %v5696 = vpack.c.b16 %v4702, %v4700
        %v5697 = vpack.c.b16 %v4703, %v4701
        %v5698 = vpack.c.b16 %v4706, %v4704
        %v5699 = vpack.c.b16 %v4707, %v4705
        %v5700 = vpack.c.b16 %v4710, %v4708
        %v5701 = vpack.c.b16 %v4711, %v4709
        %v5702 = vpack.c.b16 %v4714, %v4712
        %v5703 = vpack.c.b16 %v4715, %v4713
        %v5704 = vpack.c.b16 %v4718, %v4716
        %v5705 = vpack.c.b16 %v4719, %v4717
        %v5706 = vpack.c.b16 %v4722, %v4720
        %v5707 = vpack.c.b16 %v4723, %v4721
        %v5708 = vpack.c.b16 %v4726, %v4724
        %v5709 = vpack.c.b16 %v4727, %v4725
        %v5710 = vpack.c.b16 %v4730, %v4728
        %v5711 = vpack.c.b16 %v4731, %v4729
        %v5712 = vpack.c.b16 %v4734, %v4732
        %v5713 = vpack.c.b16 %v4735, %v4733
        %v5714 = vpack.c.b16 %v4738, %v4736
        %v5715 = vpack.c.b16 %v4739, %v4737
        %v5716 = vpack.c.b16 %v4742, %v4740
        %v5717 = vpack.c.b16 %v4743, %v4741
        %v5718 = vpack.c.b16 %v4746, %v4744
        %v5719 = vpack.c.b16 %v4747, %v4745
        %v5720 = vpack.c.b16 %v4750, %v4748
        %v5721 = vpack.c.b16 %v4751, %v4749
        %v5722 = vpack.c.b16 %v4754, %v4752
        %v5723 = vpack.c.b16 %v4755, %v4753
        %v5724 = vpack.c.b16 %v4758, %v4756
        %v5725 = vpack.c.b16 %v4759, %v4757
        %v5726 = vpack.c.b16 %v4762, %v4760
        %v5727 = vpack.c.b16 %v4763, %v4761
        %v5728 = vpack.c.b16 %v4766, %v4764
        %v5729 = vpack.c.b16 %v4767, %v4765
        %v5730 = vpack.c.b16 %v4770, %v4768
        %v5731 = vpack.c.b16 %v4771, %v4769
        %v5732 = vpack.c.b16 %v4774, %v4772
        %v5733 = vpack.c.b16 %v4775, %v4773
        %v5734 = vpack.c.b16 %v4778, %v4776
        %v5735 = vpack.c.b16 %v4779, %v4777
        %v5736 = vpack.c.b16 %v4782, %v4780
        %v5737 = vpack.c.b16 %v4783, %v4781
        %v5738 = vpack.c.b16 %v4786, %v4784
        %v5739 = vpack.c.b16 %v4787, %v4785
        %v5740 = vpack.c.b16 %v4790, %v4788
        %v5741 = vpack.c.b16 %v4791, %v4789
        %v5742 = vpack.c.b16 %v4794, %v4792
        %v5743 = vpack.c.b16 %v4795, %v4793
        %v5744 = vpack.c.b16 %v4798, %v4796
        %v5745 = vpack.c.b16 %v4799, %v4797
        %v5746 = vpack.c.b16 %v4802, %v4800
        %v5747 = vpack.c.b16 %v4803, %v4801
        %v5748 = vpack.c.b16 %v4806, %v4804
        %v5749 = vpack.c.b16 %v4807, %v4805
        %v5750 = vpack.c.b16 %v4810, %v4808
        %v5751 = vpack.c.b16 %v4811, %v4809
        %v5752 = vpack.c.b16 %v4814, %v4812
        %v5753 = vpack.c.b16 %v4815, %v4813
        %v5754 = vpack.c.b16 %v4818, %v4816
        %v5755 = vpack.c.b16 %v4819, %v4817
        %v5756 = vpack.c.b16 %v4822, %v4820
        %v5757 = vpack.c.b16 %v4823, %v4821
        %v5758 = vpack.c.b16 %v4826, %v4824
        %v5759 = vpack.c.b16 %v4827, %v4825
        %v5760 = vpack.c.b16 %v4830, %v4828
        %v5761 = vpack.c.b16 %v4831, %v4829
        %v5762 = vpack.c.b16 %v4834, %v4832
        %v5763 = vpack.c.b16 %v4835, %v4833
        %v5764 = vpack.c.b16 %v4838, %v4836
        %v5765 = vpack.c.b16 %v4839, %v4837
        %v5766 = vpack.c.b16 %v4842, %v4840
        %v5767 = vpack.c.b16 %v4843, %v4841
        %v5768 = vpack.c.b16 %v4846, %v4844
        %v5769 = vpack.c.b16 %v4847, %v4845
        %v5770 = vpack.c.b16 %v4850, %v4848
        %v5771 = vpack.c.b16 %v4851, %v4849
        %v5772 = vpack.c.b16 %v4854, %v4852
        %v5773 = vpack.c.b16 %v4855, %v4853
        %v5774 = vpack.c.b16 %v4858, %v4856
        %v5775 = vpack.c.b16 %v4859, %v4857
        %v5776 = vpack.c.b16 %v4862, %v4860
        %v5777 = vpack.c.b16 %v4863, %v4861
        %v5778 = vpack.c.b16 %v4866, %v4864
        %v5779 = vpack.c.b16 %v4867, %v4865
        %v5780 = vpack.c.b16 %v4870, %v4868
        %v5781 = vpack.c.b16 %v4871, %v4869
        %v5782 = vpack.c.b16 %v4874, %v4872
        %v5783 = vpack.c.b16 %v4875, %v4873
        %v5784 = vpack.c.b16 %v4878, %v4876
        %v5785 = vpack.c.b16 %v4879, %v4877
        %v5786 = vpack.c.b16 %v4882, %v4880
        %v5787 = vpack.c.b16 %v4883, %v4881
        %v5788 = vpack.c.b16 %v4886, %v4884
        %v5789 = vpack.c.b16 %v4887, %v4885
        %v5790 = vpack.c.b16 %v4890, %v4888
        %v5791 = vpack.c.b16 %v4891, %v4889
        %v5792 = vpack.c.b16 %v4894, %v4892
        %v5793 = vpack.c.b16 %v4895, %v4893
        %v5794 = vpack.c.b16 %v4898, %v4896
        %v5795 = vpack.c.b16 %v4899, %v4897
        %v5796 = vpack.c.b16 %v4902, %v4900
        %v5797 = vpack.c.b16 %v4903, %v4901
        %v5798 = vpack.c.b16 %v4906, %v4904
        %v5799 = vpack.c.b16 %v4907, %v4905
        %v5800 = vpack.c.b16 %v4910, %v4908
        %v5801 = vpack.c.b16 %v4911, %v4909
        %v5802 = vpack.c.b16 %v4914, %v4912
        %v5803 = vpack.c.b16 %v4915, %v4913
        %v5804 = vpack.c.b16 %v4918, %v4916
        %v5805 = vpack.c.b16 %v4919, %v4917
        %v5806 = vpack.c.b16 %v4922, %v4920
        %v5807 = vpack.c.b16 %v4923, %v4921
        %v5808 = vpack.c.b16 %v4926, %v4924
        %v5809 = vpack.c.b16 %v4927, %v4925
        %v5810 = vpack.c.b16 %v4930, %v4928
        %v5811 = vpack.c.b16 %v4931, %v4929
        %v5812 = vpack.c.b16 %v4934, %v4932
        %v5813 = vpack.c.b16 %v4935, %v4933
        %v5814 = vpack.c.b16 %v4938, %v4936
        %v5815 = vpack.c.b16 %v4939, %v4937
        %v5816 = vpack.c.b16 %v4942, %v4940
        %v5817 = vpack.c.b16 %v4943, %v4941
        %v5818 = vpack.c.b16 %v4946, %v4944
        %v5819 = vpack.c.b16 %v4947, %v4945
        %v5820 = vpack.c.b16 %v4950, %v4948
        %v5821 = vpack.c.b16 %v4951, %v4949
        %v5822 = vpack.c.b16 %v4954, %v4952
        %v5823 = vpack.c.b16 %v4955, %v4953
        %v5824 = vpack.c.b16 %v4958, %v4956
        %v5825 = vpack.c.b16 %v4959, %v4957
        %v5826 = vpack.c.b16 %v4962, %v4960
        %v5827 = vpack.c.b16 %v4963, %v4961
        %v5828 = vpack.c.b16 %v4966, %v4964
        %v5829 = vpack.c.b16 %v4967, %v4965
        %v5830 = vpack.c.b16 %v4970, %v4968
        %v5831 = vpack.c.b16 %v4971, %v4969
        %v5832 = vpack.c.b16 %v4974, %v4972
        %v5833 = vpack.c.b16 %v4975, %v4973
        %v5834 = vpack.c.b16 %v4978, %v4976
        %v5835 = vpack.c.b16 %v4979, %v4977
        %v5836 = vpack.c.b16 %v4982, %v4980
        %v5837 = vpack.c.b16 %v4983, %v4981
        %v5838 = vpack.c.b16 %v4986, %v4984
        %v5839 = vpack.c.b16 %v4987, %v4985
        %v5840 = vpack.c.b16 %v4990, %v4988
        %v5841 = vpack.c.b16 %v4991, %v4989
        %v5842 = vpack.c.b16 %v4994, %v4992
        %v5843 = vpack.c.b16 %v4995, %v4993
        %v5844 = vpack.c.b16 %v4998, %v4996
        %v5845 = vpack.c.b16 %v4999, %v4997
        %v5846 = vpack.c.b16 %v5002, %v5000
        %v5847 = vpack.c.b16 %v5003, %v5001
        %v5848 = vpack.c.b16 %v5006, %v5004
        %v5849 = vpack.c.b16 %v5007, %v5005
        %v5850 = vpack.c.b16 %v5010, %v5008
        %v5851 = vpack.c.b16 %v5011, %v5009
        %v5852 = vpack.c.b16 %v5014, %v5012
        %v5853 = vpack.c.b16 %v5015, %v5013
        %v5854 = vpack.c.b16 %v5018, %v5016
        %v5855 = vpack.c.b16 %v5019, %v5017
        %v5856 = vpack.c.b16 %v5022, %v5020
        %v5857 = vpack.c.b16 %v5023, %v5021
        %v5858 = vpack.c.b16 %v5026, %v5024
        %v5859 = vpack.c.b16 %v5027, %v5025
        %v5860 = vpack.c.b16 %v5030, %v5028
        %v5861 = vpack.c.b16 %v5031, %v5029
        %v5862 = vpack.c.b16 %v5034, %v5032
        %v5863 = vpack.c.b16 %v5035, %v5033
        %v5864 = vpack.c.b16 %v5038, %v5036
        %v5865 = vpack.c.b16 %v5039, %v5037
        %v5866 = vpack.c.b16 %v5042, %v5040
        %v5867 = vpack.c.b16 %v5043, %v5041
        %v5868 = vpack.c.b16 %v5046, %v5044
        %v5869 = vpack.c.b16 %v5047, %v5045
        %v5870 = vpack.c.b16 %v5050, %v5048
        %v5871 = vpack.c.b16 %v5051, %v5049
        %v5872 = vpack.c.b16 %v5054, %v5052
        %v5873 = vpack.c.b16 %v5055, %v5053
        %v5874 = vpack.c.b16 %v5058, %v5056
        %v5875 = vpack.c.b16 %v5059, %v5057
        %v5876 = vpack.c.b16 %v5062, %v5060
        %v5877 = vpack.c.b16 %v5063, %v5061
        %v5878 = vpack.c.b16 %v5066, %v5064
        %v5879 = vpack.c.b16 %v5067, %v5065
        %v5880 = vpack.c.b16 %v5070, %v5068
        %v5881 = vpack.c.b16 %v5071, %v5069
        %v5882 = vpack.c.b16 %v5074, %v5072
        %v5883 = vpack.c.b16 %v5075, %v5073
        %v5884 = vpack.c.b16 %v5078, %v5076
        %v5885 = vpack.c.b16 %v5079, %v5077
        %v5886 = vpack.c.b16 %v5082, %v5080
        %v5887 = vpack.c.b16 %v5083, %v5081
        %v5888 = vpack.c.b16 %v5086, %v5084
        %v5889 = vpack.c.b16 %v5087, %v5085
        %v5890 = vpack.c.b16 %v5090, %v5088
        %v5891 = vpack.c.b16 %v5091, %v5089
        %v5892 = vpack.c.b16 %v5094, %v5092
        %v5893 = vpack.c.b16 %v5095, %v5093
        %v5894 = vpack.c.b16 %v5098, %v5096
        %v5895 = vpack.c.b16 %v5099, %v5097
        %v5896 = vpack.c.b16 %v5102, %v5100
        %v5897 = vpack.c.b16 %v5103, %v5101
        %v5898 = vpack.c.b16 %v5106, %v5104
        %v5899 = vpack.c.b16 %v5107, %v5105
        %v5900 = vpack.c.b16 %v5110, %v5108
        %v5901 = vpack.c.b16 %v5111, %v5109
        %v5902 = vpack.c.b16 %v5114, %v5112
        %v5903 = vpack.c.b16 %v5115, %v5113
        %v5904 = vpack.c.b16 %v5118, %v5116
        %v5905 = vpack.c.b16 %v5119, %v5117
        %v5906 = vpack.c.b16 %v5122, %v5120
        %v5907 = vpack.c.b16 %v5123, %v5121
        %v5908 = vpack.c.b16 %v5126, %v5124
        %v5909 = vpack.c.b16 %v5127, %v5125
        %v5910 = vpack.c.b16 %v5130, %v5128
        %v5911 = vpack.c.b16 %v5131, %v5129
        %v5912 = vpack.c.b16 %v5134, %v5132
        %v5913 = vpack.c.b16 %v5135, %v5133
        %v5914 = vpack.c.b16 %v5138, %v5136
        %v5915 = vpack.c.b16 %v5139, %v5137
        %v5916 = vpack.c.b16 %v5142, %v5140
        %v5917 = vpack.c.b16 %v5143, %v5141
        %v5918 = vpack.c.b16 %v5146, %v5144
        %v5919 = vpack.c.b16 %v5147, %v5145
        %v5920 = vpack.c.b16 %v5150, %v5148
        %v5921 = vpack.c.b16 %v5151, %v5149
        %v5922 = vpack.c.b16 %v5154, %v5152
        %v5923 = vpack.c.b16 %v5155, %v5153
        %v5924 = vpack.c.b16 %v5158, %v5156
        %v5925 = vpack.c.b16 %v5159, %v5157
        %v5926 = vpack.c.b16 %v5162, %v5160
        %v5927 = vpack.c.b16 %v5163, %v5161
        %v5928 = vpack.c.b16 %v5166, %v5164
        %v5929 = vpack.c.b16 %v5167, %v5165
        %v5930 = vpack.c.b16 %v5170, %v5168
        %v5931 = vpack.c.b16 %v5171, %v5169
        %v5932 = vpack.c.b16 %v5174, %v5172
        %v5933 = vpack.c.b16 %v5175, %v5173
        %v5934 = vpack.c.b16 %v5178, %v5176
        %v5935 = vpack.c.b16 %v5179, %v5177
        %v5936 = vpack.c.b16 %v5182, %v5180
        %v5937 = vpack.c.b16 %v5183, %v5181
        %v5938 = vpack.c.b16 %v5186, %v5184
        %v5939 = vpack.c.b16 %v5187, %v5185
        %v5940 = vpack.c.b16 %v5190, %v5188
        %v5941 = vpack.c.b16 %v5191, %v5189
        %v5942 = vpack.c.b16 %v5194, %v5192
        %v5943 = vpack.c.b16 %v5195, %v5193
        %v5944 = vpack.c.b16 %v5198, %v5196
        %v5945 = vpack.c.b16 %v5199, %v5197
        %v5946 = vpack.c.b16 %v5202, %v5200
        %v5947 = vpack.c.b16 %v5203, %v5201
        %v5948 = vpack.c.b16 %v5206, %v5204
        %v5949 = vpack.c.b16 %v5207, %v5205
        %v5950 = vpack.c.b16 %v5210, %v5208
        %v5951 = vpack.c.b16 %v5211, %v5209
        %v5952 = vpack.c.b16 %v5214, %v5212
        %v5953 = vpack.c.b16 %v5215, %v5213
        %v5954 = vpack.c.b16 %v5218, %v5216
        %v5955 = vpack.c.b16 %v5219, %v5217
        %v5956 = vpack.c.b16 %v5222, %v5220
        %v5957 = vpack.c.b16 %v5223, %v5221
        %v5958 = vpack.c.b16 %v5226, %v5224
        %v5959 = vpack.c.b16 %v5227, %v5225
        %v5960 = vpack.c.b16 %v5230, %v5228
        %v5961 = vpack.c.b16 %v5231, %v5229
        %v5962 = vpack.c.b16 %v5234, %v5232
        %v5963 = vpack.c.b16 %v5235, %v5233
        %v5964 = vpack.c.b16 %v5238, %v5236
        %v5965 = vpack.c.b16 %v5239, %v5237
        %v5966 = vpack.c.b16 %v5242, %v5240
        %v5967 = vpack.c.b16 %v5243, %v5241
        %v5968 = vpack.c.b16 %v5246, %v5244
        %v5969 = vpack.c.b16 %v5247, %v5245
        %v5970 = vpack.c.b16 %v5250, %v5248
        %v5971 = vpack.c.b16 %v5251, %v5249
        %v5972 = vpack.c.b16 %v5254, %v5252
        %v5973 = vpack.c.b16 %v5255, %v5253
        %v5974 = vpack.c.b16 %v5258, %v5256
        %v5975 = vpack.c.b16 %v5259, %v5257
        %v5976 = vpack.c.b16 %v5262, %v5260
        %v5977 = vpack.c.b16 %v5263, %v5261
        %v5978 = vpack.c.b16 %v5266, %v5264
        %v5979 = vpack.c.b16 %v5267, %v5265
        %v5980 = vpack.c.b16 %v5270, %v5268
        %v5981 = vpack.c.b16 %v5271, %v5269
        %v5982 = vpack.c.b16 %v5274, %v5272
        %v5983 = vpack.c.b16 %v5275, %v5273
        %v5984 = vpack.c.b16 %v5278, %v5276
        %v5985 = vpack.c.b16 %v5279, %v5277
        %v5986 = vpack.c.b16 %v5282, %v5280
        %v5987 = vpack.c.b16 %v5283, %v5281
        %v5988 = vpack.c.b16 %v5286, %v5284
        %v5989 = vpack.c.b16 %v5287, %v5285
        %v5990 = vpack.c.b16 %v5290, %v5288
        %v5991 = vpack.c.b16 %v5291, %v5289
        %v5992 = vpack.c.b16 %v5294, %v5292
        %v5993 = vpack.c.b16 %v5295, %v5293
        %v5994 = vpack.c.b16 %v5298, %v5296
        %v5995 = vpack.c.b16 %v5299, %v5297
        %v5996 = vpack.c.b16 %v5302, %v5300
        %v5997 = vpack.c.b16 %v5303, %v5301
        %v5998 = vpack.c.b16 %v5306, %v5304
        %v5999 = vpack.c.b16 %v5307, %v5305
        %v6000 = vpack.c.b16 %v5310, %v5308
        %v6001 = vpack.c.b16 %v5311, %v5309
        %v6002 = vpack.c.b16 %v5314, %v5312
        %v6003 = vpack.c.b16 %v5315, %v5313
        %v6004 = vpack.c.b16 %v5318, %v5316
        %v6005 = vpack.c.b16 %v5319, %v5317
        %v6006 = vpack.c.b16 %v5322, %v5320
        %v6007 = vpack.c.b16 %v5323, %v5321
        %v6008 = vpack.c.b16 %v5326, %v5324
        %v6009 = vpack.c.b16 %v5327, %v5325
        %v6010 = vpack.c.b16 %v5330, %v5328
        %v6011 = vpack.c.b16 %v5331, %v5329
        %v6012 = vpack.c.b16 %v5334, %v5332
        %v6013 = vpack.c.b16 %v5335, %v5333
        %v6014 = vpack.c.b16 %v5338, %v5336
        %v6015 = vpack.c.b16 %v5339, %v5337
        %v6016 = vpack.c.b16 %v5342, %v5340
        %v6017 = vpack.c.b16 %v5343, %v5341
        %v6018 = vpack.c.b16 %v5346, %v5344
        %v6019 = vpack.c.b16 %v5347, %v5345
        %v6020 = vpack.c.b16 %v5350, %v5348
        %v6021 = vpack.c.b16 %v5351, %v5349
        %v6022 = vpack.c.b16 %v5354, %v5352
        %v6023 = vpack.c.b16 %v5355, %v5353
        %v6024 = vpack.c.b16 %v5358, %v5356
        %v6025 = vpack.c.b16 %v5359, %v5357
        %v6026 = vpack.c.b16 %v5362, %v5360
        %v6027 = vpack.c.b16 %v5363, %v5361
        %v6028 = vpack.c.b16 %v5366, %v5364
        %v6029 = vpack.c.b16 %v5367, %v5365
        %v6030 = vpack.c.b16 %v5370, %v5368
        %v6031 = vpack.c.b16 %v5371, %v5369
        %v6032 = vpack.c.b16 %v5374, %v5372
        %v6033 = vpack.c.b16 %v5375, %v5373
        %v6034 = vpack.c.b16 %v5378, %v5376
        %v6035 = vpack.c.b16 %v5379, %v5377
        %v6036 = vpack.c.b16 %v5382, %v5380
        %v6037 = vpack.c.b16 %v5383, %v5381
        %v6038 = vpack.c.b16 %v5386, %v5384
        %v6039 = vpack.c.b16 %v5387, %v5385
        %v6040 = vpack.c.b16 %v5390, %v5388
        %v6041 = vpack.c.b16 %v5391, %v5389
        %v6042 = vpack.c.b16 %v5394, %v5392
        %v6043 = vpack.c.b16 %v5395, %v5393
        %v6044 = vpack.c.b16 %v5398, %v5396
        %v6045 = vpack.c.b16 %v5399, %v5397
        %v6046 = vpack.c.b16 %v5402, %v5400
        %v6047 = vpack.c.b16 %v5403, %v5401
        %v6048 = vpack.c.b16 %v5406, %v5404
        %v6049 = vpack.c.b16 %v5407, %v5405
        %v6050 = vpack.c.b16 %v5410, %v5408
        %v6051 = vpack.c.b16 %v5411, %v5409
        %v6052 = vpack.c.b16 %v5414, %v5412
        %v6053 = vpack.c.b16 %v5415, %v5413
        %v6054 = vpack.c.b16 %v5418, %v5416
        %v6055 = vpack.c.b16 %v5419, %v5417
        %v6056 = vpack.c.b16 %v5422, %v5420
        %v6057 = vpack.c.b16 %v5423, %v5421
        %v6058 = vpack.c.b16 %v5426, %v5424
        %v6059 = vpack.c.b16 %v5427, %v5425
        %v6060 = vpack.c.b16 %v5430, %v5428
        %v6061 = vpack.c.b16 %v5431, %v5429
        %v6062 = vpack.c.b16 %v5434, %v5432
        %v6063 = vpack.c.b16 %v5435, %v5433
        %v6064 = vpack.c.b16 %v5438, %v5436
        %v6065 = vpack.c.b16 %v5439, %v5437
        %v6066 = vpack.c.b16 %v5442, %v5440
        %v6067 = vpack.c.b16 %v5443, %v5441
        %v6068 = vpack.c.b16 %v5446, %v5444
        %v6069 = vpack.c.b16 %v5447, %v5445
        %v6070 = vpack.c.b16 %v5450, %v5448
        %v6071 = vpack.c.b16 %v5451, %v5449
        %v6072 = vpack.c.b16 %v5454, %v5452
        %v6073 = vpack.c.b16 %v5455, %v5453
        %v6074 = vpack.c.b16 %v5458, %v5456
        %v6075 = vpack.c.b16 %v5459, %v5457
        %v6076 = vpack.c.b16 %v5462, %v5460
        %v6077 = vpack.c.b16 %v5463, %v5461
        %v6078 = vpack.c.b16 %v5466, %v5464
        %v6079 = vpack.c.b16 %v5467, %v5465
        %v6080 = vpack.c.b16 %v5470, %v5468
        %v6081 = vpack.c.b16 %v5471, %v5469
        %v6082 = vpack.c.b16 %v5474, %v5472
        %v6083 = vpack.c.b16 %v5475, %v5473
        %v6084 = vpack.c.b16 %v5478, %v5476
        %v6085 = vpack.c.b16 %v5479, %v5477
        %v6086 = vpack.c.b16 %v5482, %v5480
        %v6087 = vpack.c.b16 %v5483, %v5481
        %v6088 = vpack.c.b16 %v5486, %v5484
        %v6089 = vpack.c.b16 %v5487, %v5485
        %v6090 = vpack.c.b16 %v5490, %v5488
        %v6091 = vpack.c.b16 %v5491, %v5489
        %v6092 = vpack.c.b16 %v5494, %v5492
        %v6093 = vpack.c.b16 %v5495, %v5493
        %v6094 = vpack.c.b16 %v5498, %v5496
        %v6095 = vpack.c.b16 %v5499, %v5497
        %v6096 = vpack.c.b16 %v5502, %v5500
        %v6097 = vpack.c.b16 %v5503, %v5501
        %v6098 = vpack.c.b16 %v5506, %v5504
        %v6099 = vpack.c.b16 %v5507, %v5505
        %v6100 = vpack.c.b16 %v5510, %v5508
        %v6101 = vpack.c.b16 %v5511, %v5509
        %v6102 = vpack.c.b16 %v5514, %v5512
        %v6103 = vpack.c.b16 %v5515, %v5513
        %v6104 = vpack.c.b16 %v5518, %v5516
        %v6105 = vpack.c.b16 %v5519, %v5517
        %v6106 = vpack.c.b16 %v5522, %v5520
        %v6107 = vpack.c.b16 %v5523, %v5521
        %v6108 = vpack.c.b16 %v5526, %v5524
        %v6109 = vpack.c.b16 %v5527, %v5525
        %v6110 = vpack.c.b16 %v5530, %v5528
        %v6111 = vpack.c.b16 %v5531, %v5529
        %v6112 = vpack.c.b16 %v5534, %v5532
        %v6113 = vpack.c.b16 %v5535, %v5533
        %v6114 = vpack.c.b16 %v5538, %v5536
        %v6115 = vpack.c.b16 %v5539, %v5537
        %v6116 = vpack.c.b16 %v5542, %v5540
        %v6117 = vpack.c.b16 %v5543, %v5541
        %v6118 = vpack.c.b16 %v5546, %v5544
        %v6119 = vpack.c.b16 %v5547, %v5545
        %v6120 = vpack.c.b16 %v5550, %v5548
        %v6121 = vpack.c.b16 %v5551, %v5549
        %v6122 = vpack.c.b16 %v5554, %v5552
        %v6123 = vpack.c.b16 %v5555, %v5553
        %v6124 = vpack.c.b16 %v5558, %v5556
        %v6125 = vpack.c.b16 %v5559, %v5557
        %v6126 = vpack.c.b16 %v5562, %v5560
        %v6127 = vpack.c.b16 %v5563, %v5561
        %v6128 = vpack.c.b16 %v5566, %v5564
        %v6129 = vpack.c.b16 %v5567, %v5565
        %v6130 = vpack.c.b16 %v5570, %v5568
        %v6131 = vpack.c.b16 %v5571, %v5569
        %v6132 = vpack.c.b16 %v5574, %v5572
        %v6133 = vpack.c.b16 %v5575, %v5573
        %v6134 = vpack.c.b16 %v5578, %v5576
        %v6135 = vpack.c.b16 %v5579, %v5577
        %v6136 = vpack.c.b16 %v5582, %v5580
        %v6137 = vpack.c.b16 %v5583, %v5581
        %v6138 = vpack.c.b16 %v5586, %v5584
        %v6139 = vpack.c.b16 %v5587, %v5585
        %v6140 = vpack.c.b16 %v5590, %v5588
        %v6141 = vpack.c.b16 %v5591, %v5589
        %v6142 = vpack.c.b16 %v5594, %v5592
        %v6143 = vpack.c.b16 %v5595, %v5593
        %v6144 = vpack.c.b16 %v5598, %v5596
        %v6145 = vpack.c.b16 %v5599, %v5597
        %v6146 = vpack.c.b16 %v5602, %v5600
        %v6147 = vpack.c.b16 %v5603, %v5601
        %v6148 = vpack.c.b16 %v5606, %v5604
        %v6149 = vpack.c.b16 %v5607, %v5605
        %v6150 = vpack.c.b16 %v5610, %v5608
        %v6151 = vpack.c.b16 %v5611, %v5609
        %v6152 = vpack.c.b16 %v5614, %v5612
        %v6153 = vpack.c.b16 %v5615, %v5613
        %v6154 = vpack.c.b16 %v5618, %v5616
        %v6155 = vpack.c.b16 %v5619, %v5617
        %v6156 = vpack.c.b16 %v5622, %v5620
        %v6157 = vpack.c.b16 %v5623, %v5621
        %v6158 = vpack.c.b16 %v5626, %v5624
        %v6159 = vpack.c.b16 %v5627, %v5625
        %v6160 = vpack.c.b16 %v5630, %v5628
        %v6161 = vpack.c.b16 %v5631, %v5629
        %v6162 = vpack.c.b16 %v5634, %v5632
        %v6163 = vpack.c.b16 %v5635, %v5633
        %v6164 = vpack.c.b16 %v5638, %v5636
        %v6165 = vpack.c.b16 %v5639, %v5637
        %v6166 = vpack.c.b16 %v5642, %v5640
        %v6167 = vpack.c.b16 %v5643, %v5641
        %v6168 = vpack.c.b16 %v5646, %v5644
        %v6169 = vpack.c.b16 %v5647, %v5645
        %v6170 = vpack.c.b16 %v5650, %v5648
        %v6171 = vpack.c.b16 %v5651, %v5649
        %v6172 = vpack.c.b16 %v5654, %v5652
        %v6173 = vpack.c.b16 %v5655, %v5653
        %v6174 = vpack.c.b16 %v5658, %v5656
        %v6175 = vpack.c.b16 %v5659, %v5657
        %v6176 = vpack.c.b16 %v5662, %v5660
        %v6177 = vpack.c.b16 %v5663, %v5661
        %v6178 = vpack.c.b16 %v5666, %v5664
        %v6179 = vpack.c.b16 %v5667, %v5665
        %6692 = vmatprep.subr.bf16.mxu0 %v5669
        %6693 = vmatpush1.bf16.msra.mxu0 %v5668
        %6694 = vmatprep.subr.bf16.mxu0 %v5671
        %6695 = vmatpush1.bf16.msra.mxu0 %v5670
        %6696 = vmatprep.subr.bf16.mxu0 %v5673
        %6697 = vmatpush1.bf16.msra.mxu0 %v5672
        %6698 = vmatprep.subr.bf16.mxu0 %v5675
        %6699 = vmatpush1.bf16.msra.mxu0 %v5674
        %6700 = vmatprep.subr.bf16.mxu0 %v5677
        %6701 = vmatpush1.bf16.msra.mxu0 %v5676
        %6702 = vmatprep.subr.bf16.mxu0 %v5679
        %6703 = vmatpush1.bf16.msra.mxu0 %v5678
        %6704 = vmatprep.subr.bf16.mxu0 %v5681
        %6705 = vmatpush1.bf16.msra.mxu0 %v5680
        %6706 = vmatprep.subr.bf16.mxu0 %v5683
        %6707 = vmatpush1.bf16.msra.mxu0 %v5682
        %6708 = vmatprep.subr.bf16.mxu0 %v5685
        %6709 = vmatpush1.bf16.msra.mxu0 %v5684
        %6710 = vmatprep.subr.bf16.mxu0 %v5687
        %6711 = vmatpush1.bf16.msra.mxu0 %v5686
        %6712 = vmatprep.subr.bf16.mxu0 %v5689
        %6713 = vmatpush1.bf16.msra.mxu0 %v5688
        %6714 = vmatprep.subr.bf16.mxu0 %v5691
        %6715 = vmatpush1.bf16.msra.mxu0 %v5690
        %6716 = vmatprep.subr.bf16.mxu0 %v5693
        %6717 = vmatpush1.bf16.msra.mxu0 %v5692
        %6718 = vmatprep.subr.bf16.mxu0 %v5695
        %6719 = vmatpush1.bf16.msra.mxu0 %v5694
        %6720 = vmatprep.subr.bf16.mxu0 %v5697
        %6721 = vmatpush1.bf16.msra.mxu0 %v5696
        %6722 = vmatprep.subr.bf16.mxu0 %v5699
        %6723 = vmatpush1.bf16.msra.mxu0 %v5698
        %6724 = vmatprep.mubr.bf16.mxu0 %v4101
        %6725 = vmatmul.mubr.bf16.gmra.mrb[0].mxu0 %v4100
        %v6726 = vpop.f32.mrb[0].mxu0
        %v6727 = vadd.f32 0.0, %v6726
        %v6728 = vpop.f32.mrb[0].mxu0
        %v6729 = vadd.f32 0.0, %v6728
        %v6730 = vpop.f32.mrb[0].mxu0
        %v6731 = vpop.f32.mrb[0].mxu0
        %6732 = vdwg.mxu0
        %6733 = vmatprep.subr.bf16.mxu0 %v5701
        %6734 = vmatpush1.bf16.msra.mxu0 %v5700
        %6735 = vmatprep.subr.bf16.mxu0 %v5703
        %6736 = vmatpush1.bf16.msra.mxu0 %v5702
        %6737 = vmatprep.subr.bf16.mxu0 %v5705
        %6738 = vmatpush1.bf16.msra.mxu0 %v5704
        %6739 = vmatprep.subr.bf16.mxu0 %v5707
        %6740 = vmatpush1.bf16.msra.mxu0 %v5706
        %6741 = vmatprep.subr.bf16.mxu0 %v5709
        %6742 = vmatpush1.bf16.msra.mxu0 %v5708
        %6743 = vmatprep.subr.bf16.mxu0 %v5711
        %6744 = vmatpush1.bf16.msra.mxu0 %v5710
        %6745 = vmatprep.subr.bf16.mxu0 %v5713
        %6746 = vmatpush1.bf16.msra.mxu0 %v5712
        %6747 = vmatprep.subr.bf16.mxu0 %v5715
        %6748 = vmatpush1.bf16.msra.mxu0 %v5714
        %6749 = vmatprep.subr.bf16.mxu0 %v5717
        %6750 = vmatpush1.bf16.msra.mxu0 %v5716
        %6751 = vmatprep.subr.bf16.mxu0 %v5719
        %6752 = vmatpush1.bf16.msra.mxu0 %v5718
        %6753 = vmatprep.subr.bf16.mxu0 %v5721
        %6754 = vmatpush1.bf16.msra.mxu0 %v5720
        %6755 = vmatprep.subr.bf16.mxu0 %v5723
        %6756 = vmatpush1.bf16.msra.mxu0 %v5722
        %6757 = vmatprep.subr.bf16.mxu0 %v5725
        %6758 = vmatpush1.bf16.msra.mxu0 %v5724
        %6759 = vmatprep.subr.bf16.mxu0 %v5727
        %6760 = vmatpush1.bf16.msra.mxu0 %v5726
        %6761 = vmatprep.subr.bf16.mxu0 %v5729
        %6762 = vmatpush1.bf16.msra.mxu0 %v5728
        %6763 = vmatprep.subr.bf16.mxu0 %v5731
        %6764 = vmatpush1.bf16.msra.mxu0 %v5730
        %6765 = vmatprep.mubr.bf16.mxu0 %v4103
        %6766 = vmatmul.mubr.bf16.gmra.mrb[0].mxu0 %v4102
        %v6767 = vpop.f32.mrb[0].mxu0
        %v6768 = vadd.f32 %v6727, %v6767
        %v6769 = vpop.f32.mrb[0].mxu0
        %v6770 = vadd.f32 %v6729, %v6769
        %v6771 = vpop.f32.mrb[0].mxu0
        %v6772 = vpop.f32.mrb[0].mxu0
        %6773 = vdwg.mxu0
        %6774 = vmatprep.subr.bf16.mxu0 %v5733
        %6775 = vmatpush1.bf16.msra.mxu0 %v5732
        %6776 = vmatprep.subr.bf16.mxu0 %v5735
        %6777 = vmatpush1.bf16.msra.mxu0 %v5734
        %6778 = vmatprep.subr.bf16.mxu0 %v5737
        %6779 = vmatpush1.bf16.msra.mxu0 %v5736
        %6780 = vmatprep.subr.bf16.mxu0 %v5739
        %6781 = vmatpush1.bf16.msra.mxu0 %v5738
        %6782 = vmatprep.subr.bf16.mxu0 %v5741
        %6783 = vmatpush1.bf16.msra.mxu0 %v5740
        %6784 = vmatprep.subr.bf16.mxu0 %v5743
        %6785 = vmatpush1.bf16.msra.mxu0 %v5742
        %6786 = vmatprep.subr.bf16.mxu0 %v5745
        %6787 = vmatpush1.bf16.msra.mxu0 %v5744
        %6788 = vmatprep.subr.bf16.mxu0 %v5747
        %6789 = vmatpush1.bf16.msra.mxu0 %v5746
        %6790 = vmatprep.subr.bf16.mxu0 %v5749
        %6791 = vmatpush1.bf16.msra.mxu0 %v5748
        %6792 = vmatprep.subr.bf16.mxu0 %v5751
        %6793 = vmatpush1.bf16.msra.mxu0 %v5750
        %6794 = vmatprep.subr.bf16.mxu0 %v5753
        %6795 = vmatpush1.bf16.msra.mxu0 %v5752
        %6796 = vmatprep.subr.bf16.mxu0 %v5755
        %6797 = vmatpush1.bf16.msra.mxu0 %v5754
        %6798 = vmatprep.subr.bf16.mxu0 %v5757
        %6799 = vmatpush1.bf16.msra.mxu0 %v5756
        %6800 = vmatprep.subr.bf16.mxu0 %v5759
        %6801 = vmatpush1.bf16.msra.mxu0 %v5758
        %6802 = vmatprep.subr.bf16.mxu0 %v5761
        %6803 = vmatpush1.bf16.msra.mxu0 %v5760
        %6804 = vmatprep.subr.bf16.mxu0 %v5763
        %6805 = vmatpush1.bf16.msra.mxu0 %v5762
        %6806 = vmatprep.mubr.bf16.mxu0 %v4105
        %6807 = vmatmul.mubr.bf16.gmra.mrb[0].mxu0 %v4104
        %v6808 = vpop.f32.mrb[0].mxu0
        %v6809 = vadd.f32 %v6768, %v6808
        %v6810 = vpop.f32.mrb[0].mxu0
        %v6811 = vadd.f32 %v6770, %v6810
        %v6812 = vpop.f32.mrb[0].mxu0
        %v6813 = vpop.f32.mrb[0].mxu0
        %6814 = vdwg.mxu0
        %6815 = vmatprep.subr.bf16.mxu0 %v5765
        %6816 = vmatpush1.bf16.msra.mxu0 %v5764
        %6817 = vmatprep.subr.bf16.mxu0 %v5767
        %6818 = vmatpush1.bf16.msra.mxu0 %v5766
        %6819 = vmatprep.subr.bf16.mxu0 %v5769
        %6820 = vmatpush1.bf16.msra.mxu0 %v5768
        %6821 = vmatprep.subr.bf16.mxu0 %v5771
        %6822 = vmatpush1.bf16.msra.mxu0 %v5770
        %6823 = vmatprep.subr.bf16.mxu0 %v5773
        %6824 = vmatpush1.bf16.msra.mxu0 %v5772
        %6825 = vmatprep.subr.bf16.mxu0 %v5775
        %6826 = vmatpush1.bf16.msra.mxu0 %v5774
        %6827 = vmatprep.subr.bf16.mxu0 %v5777
        %6828 = vmatpush1.bf16.msra.mxu0 %v5776
        %6829 = vmatprep.subr.bf16.mxu0 %v5779
        %6830 = vmatpush1.bf16.msra.mxu0 %v5778
        %6831 = vmatprep.subr.bf16.mxu0 %v5781
        %6832 = vmatpush1.bf16.msra.mxu0 %v5780
        %6833 = vmatprep.subr.bf16.mxu0 %v5783
        %6834 = vmatpush1.bf16.msra.mxu0 %v5782
        %6835 = vmatprep.subr.bf16.mxu0 %v5785
        %6836 = vmatpush1.bf16.msra.mxu0 %v5784
        %6837 = vmatprep.subr.bf16.mxu0 %v5787
        %6838 = vmatpush1.bf16.msra.mxu0 %v5786
        %6839 = vmatprep.subr.bf16.mxu0 %v5789
        %6840 = vmatpush1.bf16.msra.mxu0 %v5788
        %6841 = vmatprep.subr.bf16.mxu0 %v5791
        %6842 = vmatpush1.bf16.msra.mxu0 %v5790
        %6843 = vmatprep.subr.bf16.mxu0 %v5793
        %6844 = vmatpush1.bf16.msra.mxu0 %v5792
        %6845 = vmatprep.subr.bf16.mxu0 %v5795
        %6846 = vmatpush1.bf16.msra.mxu0 %v5794
        %6847 = vmatprep.mubr.bf16.mxu0 %v4107
        %6848 = vmatmul.mubr.bf16.gmra.mrb[0].mxu0 %v4106
        %v6849 = vpop.f32.mrb[0].mxu0
        %v6850 = vadd.f32 %v6809, %v6849
        %v6851 = vpop.f32.mrb[0].mxu0
        %v6852 = vadd.f32 %v6811, %v6851
        %v6853 = vpop.f32.mrb[0].mxu0
        %v6854 = vpop.f32.mrb[0].mxu0
        %6855 = vdwg.mxu0
        %6856 = vmatprep.subr.bf16.mxu0 %v5797
        %6857 = vmatpush1.bf16.msra.mxu0 %v5796
        %6858 = vmatprep.subr.bf16.mxu0 %v5799
        %6859 = vmatpush1.bf16.msra.mxu0 %v5798
        %6860 = vmatprep.subr.bf16.mxu0 %v5801
        %6861 = vmatpush1.bf16.msra.mxu0 %v5800
        %6862 = vmatprep.subr.bf16.mxu0 %v5803
        %6863 = vmatpush1.bf16.msra.mxu0 %v5802
        %6864 = vmatprep.subr.bf16.mxu0 %v5805
        %6865 = vmatpush1.bf16.msra.mxu0 %v5804
        %6866 = vmatprep.subr.bf16.mxu0 %v5807
        %6867 = vmatpush1.bf16.msra.mxu0 %v5806
        %6868 = vmatprep.subr.bf16.mxu0 %v5809
        %6869 = vmatpush1.bf16.msra.mxu0 %v5808
        %6870 = vmatprep.subr.bf16.mxu0 %v5811
        %6871 = vmatpush1.bf16.msra.mxu0 %v5810
        %6872 = vmatprep.subr.bf16.mxu0 %v5813
        %6873 = vmatpush1.bf16.msra.mxu0 %v5812
        %6874 = vmatprep.subr.bf16.mxu0 %v5815
        %6875 = vmatpush1.bf16.msra.mxu0 %v5814
        %6876 = vmatprep.subr.bf16.mxu0 %v5817
        %6877 = vmatpush1.bf16.msra.mxu0 %v5816
        %6878 = vmatprep.subr.bf16.mxu0 %v5819
        %6879 = vmatpush1.bf16.msra.mxu0 %v5818
        %6880 = vmatprep.subr.bf16.mxu0 %v5821
        %6881 = vmatpush1.bf16.msra.mxu0 %v5820
        %6882 = vmatprep.subr.bf16.mxu0 %v5823
        %6883 = vmatpush1.bf16.msra.mxu0 %v5822
        %6884 = vmatprep.subr.bf16.mxu0 %v5825
        %6885 = vmatpush1.bf16.msra.mxu0 %v5824
        %6886 = vmatprep.subr.bf16.mxu0 %v5827
        %6887 = vmatpush1.bf16.msra.mxu0 %v5826
        %6888 = vmatprep.mubr.bf16.mxu0 %v4109
        %6889 = vmatmul.mubr.bf16.gmra.mrb[0].mxu0 %v4108
        %v6890 = vpop.f32.mrb[0].mxu0
        %v6891 = vadd.f32 %v6850, %v6890
        %v6892 = vpop.f32.mrb[0].mxu0
        %v6893 = vadd.f32 %v6852, %v6892
        %v6894 = vpop.f32.mrb[0].mxu0
        %v6895 = vpop.f32.mrb[0].mxu0
        %6896 = vdwg.mxu0
        %6897 = vmatprep.subr.bf16.mxu0 %v5829
        %6898 = vmatpush1.bf16.msra.mxu0 %v5828
        %6899 = vmatprep.subr.bf16.mxu0 %v5831
        %6900 = vmatpush1.bf16.msra.mxu0 %v5830
        %6901 = vmatprep.subr.bf16.mxu0 %v5833
        %6902 = vmatpush1.bf16.msra.mxu0 %v5832
        %6903 = vmatprep.subr.bf16.mxu0 %v5835
        %6904 = vmatpush1.bf16.msra.mxu0 %v5834
        %6905 = vmatprep.subr.bf16.mxu0 %v5837
        %6906 = vmatpush1.bf16.msra.mxu0 %v5836
        %6907 = vmatprep.subr.bf16.mxu0 %v5839
        %6908 = vmatpush1.bf16.msra.mxu0 %v5838
        %6909 = vmatprep.subr.bf16.mxu0 %v5841
        %6910 = vmatpush1.bf16.msra.mxu0 %v5840
        %6911 = vmatprep.subr.bf16.mxu0 %v5843
        %6912 = vmatpush1.bf16.msra.mxu0 %v5842
        %6913 = vmatprep.subr.bf16.mxu0 %v5845
        %6914 = vmatpush1.bf16.msra.mxu0 %v5844
        %6915 = vmatprep.subr.bf16.mxu0 %v5847
        %6916 = vmatpush1.bf16.msra.mxu0 %v5846
        %6917 = vmatprep.subr.bf16.mxu0 %v5849
        %6918 = vmatpush1.bf16.msra.mxu0 %v5848
        %6919 = vmatprep.subr.bf16.mxu0 %v5851
        %6920 = vmatpush1.bf16.msra.mxu0 %v5850
        %6921 = vmatprep.subr.bf16.mxu0 %v5853
        %6922 = vmatpush1.bf16.msra.mxu0 %v5852
        %6923 = vmatprep.subr.bf16.mxu0 %v5855
        %6924 = vmatpush1.bf16.msra.mxu0 %v5854
        %6925 = vmatprep.subr.bf16.mxu0 %v5857
        %6926 = vmatpush1.bf16.msra.mxu0 %v5856
        %6927 = vmatprep.subr.bf16.mxu0 %v5859
        %6928 = vmatpush1.bf16.msra.mxu0 %v5858
        %6929 = vmatprep.mubr.bf16.mxu0 %v4111
        %6930 = vmatmul.mubr.bf16.gmra.mrb[0].mxu0 %v4110
        %v6931 = vpop.f32.mrb[0].mxu0
        %v6932 = vadd.f32 %v6891, %v6931
        %v6933 = vpop.f32.mrb[0].mxu0
        %v6934 = vadd.f32 %v6893, %v6933
        %v6935 = vpop.f32.mrb[0].mxu0
        %v6936 = vpop.f32.mrb[0].mxu0
        %6937 = vdwg.mxu0
        %6938 = vmatprep.subr.bf16.mxu0 %v5861
        %6939 = vmatpush1.bf16.msra.mxu0 %v5860
        %6940 = vmatprep.subr.bf16.mxu0 %v5863
        %6941 = vmatpush1.bf16.msra.mxu0 %v5862
        %6942 = vmatprep.subr.bf16.mxu0 %v5865
        %6943 = vmatpush1.bf16.msra.mxu0 %v5864
        %6944 = vmatprep.subr.bf16.mxu0 %v5867
        %6945 = vmatpush1.bf16.msra.mxu0 %v5866
        %6946 = vmatprep.subr.bf16.mxu0 %v5869
        %6947 = vmatpush1.bf16.msra.mxu0 %v5868
        %6948 = vmatprep.subr.bf16.mxu0 %v5871
        %6949 = vmatpush1.bf16.msra.mxu0 %v5870
        %6950 = vmatprep.subr.bf16.mxu0 %v5873
        %6951 = vmatpush1.bf16.msra.mxu0 %v5872
        %6952 = vmatprep.subr.bf16.mxu0 %v5875
        %6953 = vmatpush1.bf16.msra.mxu0 %v5874
        %6954 = vmatprep.subr.bf16.mxu0 %v5877
        %6955 = vmatpush1.bf16.msra.mxu0 %v5876
        %6956 = vmatprep.subr.bf16.mxu0 %v5879
        %6957 = vmatpush1.bf16.msra.mxu0 %v5878
        %6958 = vmatprep.subr.bf16.mxu0 %v5881
        %6959 = vmatpush1.bf16.msra.mxu0 %v5880
        %6960 = vmatprep.subr.bf16.mxu0 %v5883
        %6961 = vmatpush1.bf16.msra.mxu0 %v5882
        %6962 = vmatprep.subr.bf16.mxu0 %v5885
        %6963 = vmatpush1.bf16.msra.mxu0 %v5884
        %6964 = vmatprep.subr.bf16.mxu0 %v5887
        %6965 = vmatpush1.bf16.msra.mxu0 %v5886
        %6966 = vmatprep.subr.bf16.mxu0 %v5889
        %6967 = vmatpush1.bf16.msra.mxu0 %v5888
        %6968 = vmatprep.subr.bf16.mxu0 %v5891
        %6969 = vmatpush1.bf16.msra.mxu0 %v5890
        %6970 = vmatprep.mubr.bf16.mxu0 %v4113
        %6971 = vmatmul.mubr.bf16.gmra.mrb[0].mxu0 %v4112
        %v6972 = vpop.f32.mrb[0].mxu0
        %v6973 = vadd.f32 %v6932, %v6972
        %v6974 = vpop.f32.mrb[0].mxu0
        %v6975 = vadd.f32 %v6934, %v6974
        %v6976 = vpop.f32.mrb[0].mxu0
        %v6977 = vpop.f32.mrb[0].mxu0
        %6978 = vdwg.mxu0
        %6979 = vmatprep.subr.bf16.mxu0 %v5893
        %6980 = vmatpush1.bf16.msra.mxu0 %v5892
        %6981 = vmatprep.subr.bf16.mxu0 %v5895
        %6982 = vmatpush1.bf16.msra.mxu0 %v5894
        %6983 = vmatprep.subr.bf16.mxu0 %v5897
        %6984 = vmatpush1.bf16.msra.mxu0 %v5896
        %6985 = vmatprep.subr.bf16.mxu0 %v5899
        %6986 = vmatpush1.bf16.msra.mxu0 %v5898
        %6987 = vmatprep.subr.bf16.mxu0 %v5901
        %6988 = vmatpush1.bf16.msra.mxu0 %v5900
        %6989 = vmatprep.subr.bf16.mxu0 %v5903
        %6990 = vmatpush1.bf16.msra.mxu0 %v5902
        %6991 = vmatprep.subr.bf16.mxu0 %v5905
        %6992 = vmatpush1.bf16.msra.mxu0 %v5904
        %6993 = vmatprep.subr.bf16.mxu0 %v5907
        %6994 = vmatpush1.bf16.msra.mxu0 %v5906
        %6995 = vmatprep.subr.bf16.mxu0 %v5909
        %6996 = vmatpush1.bf16.msra.mxu0 %v5908
        %6997 = vmatprep.subr.bf16.mxu0 %v5911
        %6998 = vmatpush1.bf16.msra.mxu0 %v5910
        %6999 = vmatprep.subr.bf16.mxu0 %v5913
        %7000 = vmatpush1.bf16.msra.mxu0 %v5912
        %7001 = vmatprep.subr.bf16.mxu0 %v5915
        %7002 = vmatpush1.bf16.msra.mxu0 %v5914
        %7003 = vmatprep.subr.bf16.mxu0 %v5917
        %7004 = vmatpush1.bf16.msra.mxu0 %v5916
        %7005 = vmatprep.subr.bf16.mxu0 %v5919
        %7006 = vmatpush1.bf16.msra.mxu0 %v5918
        %7007 = vmatprep.subr.bf16.mxu0 %v5921
        %7008 = vmatpush1.bf16.msra.mxu0 %v5920
        %7009 = vmatprep.subr.bf16.mxu0 %v5923
        %7010 = vmatpush1.bf16.msra.mxu0 %v5922
        %7011 = vmatprep.mubr.bf16.mxu0 %v4115
        %7012 = vmatmul.mubr.bf16.gmra.mrb[0].mxu0 %v4114
        %v7013 = vpop.f32.mrb[0].mxu0
        %v7014 = vadd.f32 %v6973, %v7013
        %v7015 = vpop.f32.mrb[0].mxu0
        %v7016 = vadd.f32 %v6975, %v7015
        %v7017 = vpop.f32.mrb[0].mxu0
        %v7018 = vpop.f32.mrb[0].mxu0
        %7019 = vdwg.mxu0
        %7020 = vmatprep.subr.bf16.mxu0 %v5925
        %7021 = vmatpush1.bf16.msra.mxu0 %v5924
        %7022 = vmatprep.subr.bf16.mxu0 %v5927
        %7023 = vmatpush1.bf16.msra.mxu0 %v5926
        %7024 = vmatprep.subr.bf16.mxu0 %v5929
        %7025 = vmatpush1.bf16.msra.mxu0 %v5928
        %7026 = vmatprep.subr.bf16.mxu0 %v5931
        %7027 = vmatpush1.bf16.msra.mxu0 %v5930
        %7028 = vmatprep.subr.bf16.mxu0 %v5933
        %7029 = vmatpush1.bf16.msra.mxu0 %v5932
        %7030 = vmatprep.subr.bf16.mxu0 %v5935
        %7031 = vmatpush1.bf16.msra.mxu0 %v5934
        %7032 = vmatprep.subr.bf16.mxu0 %v5937
        %7033 = vmatpush1.bf16.msra.mxu0 %v5936
        %7034 = vmatprep.subr.bf16.mxu0 %v5939
        %7035 = vmatpush1.bf16.msra.mxu0 %v5938
        %7036 = vmatprep.subr.bf16.mxu0 %v5941
        %7037 = vmatpush1.bf16.msra.mxu0 %v5940
        %7038 = vmatprep.subr.bf16.mxu0 %v5943
        %7039 = vmatpush1.bf16.msra.mxu0 %v5942
        %7040 = vmatprep.subr.bf16.mxu0 %v5945
        %7041 = vmatpush1.bf16.msra.mxu0 %v5944
        %7042 = vmatprep.subr.bf16.mxu0 %v5947
        %7043 = vmatpush1.bf16.msra.mxu0 %v5946
        %7044 = vmatprep.subr.bf16.mxu0 %v5949
        %7045 = vmatpush1.bf16.msra.mxu0 %v5948
        %7046 = vmatprep.subr.bf16.mxu0 %v5951
        %7047 = vmatpush1.bf16.msra.mxu0 %v5950
        %7048 = vmatprep.subr.bf16.mxu0 %v5953
        %7049 = vmatpush1.bf16.msra.mxu0 %v5952
        %7050 = vmatprep.subr.bf16.mxu0 %v5955
        %7051 = vmatpush1.bf16.msra.mxu0 %v5954
        %7052 = vmatprep.mubr.bf16.mxu0 %v4117
        %7053 = vmatmul.mubr.bf16.gmra.mrb[0].mxu0 %v4116
        %v7054 = vpop.f32.mrb[0].mxu0
        %v7055 = vadd.f32 %v7014, %v7054
        %v7056 = vpop.f32.mrb[0].mxu0
        %v7057 = vadd.f32 %v7016, %v7056
        %v7058 = vpop.f32.mrb[0].mxu0
        %v7059 = vpop.f32.mrb[0].mxu0
        %7060 = vdwg.mxu0
        %7061 = vmatprep.subr.bf16.mxu0 %v5957
        %7062 = vmatpush1.bf16.msra.mxu0 %v5956
        %7063 = vmatprep.subr.bf16.mxu0 %v5959
        %7064 = vmatpush1.bf16.msra.mxu0 %v5958
        %7065 = vmatprep.subr.bf16.mxu0 %v5961
        %7066 = vmatpush1.bf16.msra.mxu0 %v5960
        %7067 = vmatprep.subr.bf16.mxu0 %v5963
        %7068 = vmatpush1.bf16.msra.mxu0 %v5962
        %7069 = vmatprep.subr.bf16.mxu0 %v5965
        %7070 = vmatpush1.bf16.msra.mxu0 %v5964
        %7071 = vmatprep.subr.bf16.mxu0 %v5967
        %7072 = vmatpush1.bf16.msra.mxu0 %v5966
        %7073 = vmatprep.subr.bf16.mxu0 %v5969
        %7074 = vmatpush1.bf16.msra.mxu0 %v5968
        %7075 = vmatprep.subr.bf16.mxu0 %v5971
        %7076 = vmatpush1.bf16.msra.mxu0 %v5970
        %7077 = vmatprep.subr.bf16.mxu0 %v5973
        %7078 = vmatpush1.bf16.msra.mxu0 %v5972
        %7079 = vmatprep.subr.bf16.mxu0 %v5975
        %7080 = vmatpush1.bf16.msra.mxu0 %v5974
        %7081 = vmatprep.subr.bf16.mxu0 %v5977
        %7082 = vmatpush1.bf16.msra.mxu0 %v5976
        %7083 = vmatprep.subr.bf16.mxu0 %v5979
        %7084 = vmatpush1.bf16.msra.mxu0 %v5978
        %7085 = vmatprep.subr.bf16.mxu0 %v5981
        %7086 = vmatpush1.bf16.msra.mxu0 %v5980
        %7087 = vmatprep.subr.bf16.mxu0 %v5983
        %7088 = vmatpush1.bf16.msra.mxu0 %v5982
        %7089 = vmatprep.subr.bf16.mxu0 %v5985
        %7090 = vmatpush1.bf16.msra.mxu0 %v5984
        %7091 = vmatprep.subr.bf16.mxu0 %v5987
        %7092 = vmatpush1.bf16.msra.mxu0 %v5986
        %7093 = vmatprep.mubr.bf16.mxu0 %v4119
        %7094 = vmatmul.mubr.bf16.gmra.mrb[0].mxu0 %v4118
        %v7095 = vpop.f32.mrb[0].mxu0
        %v7096 = vadd.f32 %v7055, %v7095
        %v7097 = vpop.f32.mrb[0].mxu0
        %v7098 = vadd.f32 %v7057, %v7097
        %v7099 = vpop.f32.mrb[0].mxu0
        %v7100 = vpop.f32.mrb[0].mxu0
        %7101 = vdwg.mxu0
        %7102 = vmatprep.subr.bf16.mxu0 %v5989
        %7103 = vmatpush1.bf16.msra.mxu0 %v5988
        %7104 = vmatprep.subr.bf16.mxu0 %v5991
        %7105 = vmatpush1.bf16.msra.mxu0 %v5990
        %7106 = vmatprep.subr.bf16.mxu0 %v5993
        %7107 = vmatpush1.bf16.msra.mxu0 %v5992
        %7108 = vmatprep.subr.bf16.mxu0 %v5995
        %7109 = vmatpush1.bf16.msra.mxu0 %v5994
        %7110 = vmatprep.subr.bf16.mxu0 %v5997
        %7111 = vmatpush1.bf16.msra.mxu0 %v5996
        %7112 = vmatprep.subr.bf16.mxu0 %v5999
        %7113 = vmatpush1.bf16.msra.mxu0 %v5998
        %7114 = vmatprep.subr.bf16.mxu0 %v6001
        %7115 = vmatpush1.bf16.msra.mxu0 %v6000
        %7116 = vmatprep.subr.bf16.mxu0 %v6003
        %7117 = vmatpush1.bf16.msra.mxu0 %v6002
        %7118 = vmatprep.subr.bf16.mxu0 %v6005
        %7119 = vmatpush1.bf16.msra.mxu0 %v6004
        %7120 = vmatprep.subr.bf16.mxu0 %v6007
        %7121 = vmatpush1.bf16.msra.mxu0 %v6006
        %7122 = vmatprep.subr.bf16.mxu0 %v6009
        %7123 = vmatpush1.bf16.msra.mxu0 %v6008
        %7124 = vmatprep.subr.bf16.mxu0 %v6011
        %7125 = vmatpush1.bf16.msra.mxu0 %v6010
        %7126 = vmatprep.subr.bf16.mxu0 %v6013
        %7127 = vmatpush1.bf16.msra.mxu0 %v6012
        %7128 = vmatprep.subr.bf16.mxu0 %v6015
        %7129 = vmatpush1.bf16.msra.mxu0 %v6014
        %7130 = vmatprep.subr.bf16.mxu0 %v6017
        %7131 = vmatpush1.bf16.msra.mxu0 %v6016
        %7132 = vmatprep.subr.bf16.mxu0 %v6019
        %7133 = vmatpush1.bf16.msra.mxu0 %v6018
        %7134 = vmatprep.mubr.bf16.mxu0 %v4121
        %7135 = vmatmul.mubr.bf16.gmra.mrb[0].mxu0 %v4120
        %v7136 = vpop.f32.mrb[0].mxu0
        %v7137 = vadd.f32 %v7096, %v7136
        %v7138 = vpop.f32.mrb[0].mxu0
        %v7139 = vadd.f32 %v7098, %v7138
        %v7140 = vpop.f32.mrb[0].mxu0
        %v7141 = vpop.f32.mrb[0].mxu0
        %7142 = vdwg.mxu0
        %7143 = vmatprep.subr.bf16.mxu0 %v6021
        %7144 = vmatpush1.bf16.msra.mxu0 %v6020
        %7145 = vmatprep.subr.bf16.mxu0 %v6023
        %7146 = vmatpush1.bf16.msra.mxu0 %v6022
        %7147 = vmatprep.subr.bf16.mxu0 %v6025
        %7148 = vmatpush1.bf16.msra.mxu0 %v6024
        %7149 = vmatprep.subr.bf16.mxu0 %v6027
        %7150 = vmatpush1.bf16.msra.mxu0 %v6026
        %7151 = vmatprep.subr.bf16.mxu0 %v6029
        %7152 = vmatpush1.bf16.msra.mxu0 %v6028
        %7153 = vmatprep.subr.bf16.mxu0 %v6031
        %7154 = vmatpush1.bf16.msra.mxu0 %v6030
        %7155 = vmatprep.subr.bf16.mxu0 %v6033
        %7156 = vmatpush1.bf16.msra.mxu0 %v6032
        %7157 = vmatprep.subr.bf16.mxu0 %v6035
        %7158 = vmatpush1.bf16.msra.mxu0 %v6034
        %7159 = vmatprep.subr.bf16.mxu0 %v6037
        %7160 = vmatpush1.bf16.msra.mxu0 %v6036
        %7161 = vmatprep.subr.bf16.mxu0 %v6039
        %7162 = vmatpush1.bf16.msra.mxu0 %v6038
        %7163 = vmatprep.subr.bf16.mxu0 %v6041
        %7164 = vmatpush1.bf16.msra.mxu0 %v6040
        %7165 = vmatprep.subr.bf16.mxu0 %v6043
        %7166 = vmatpush1.bf16.msra.mxu0 %v6042
        %7167 = vmatprep.subr.bf16.mxu0 %v6045
        %7168 = vmatpush1.bf16.msra.mxu0 %v6044
        %7169 = vmatprep.subr.bf16.mxu0 %v6047
        %7170 = vmatpush1.bf16.msra.mxu0 %v6046
        %7171 = vmatprep.subr.bf16.mxu0 %v6049
        %7172 = vmatpush1.bf16.msra.mxu0 %v6048
        %7173 = vmatprep.subr.bf16.mxu0 %v6051
        %7174 = vmatpush1.bf16.msra.mxu0 %v6050
        %7175 = vmatprep.mubr.bf16.mxu0 %v4123
        %7176 = vmatmul.mubr.bf16.gmra.mrb[0].mxu0 %v4122
        %v7177 = vpop.f32.mrb[0].mxu0
        %v7178 = vadd.f32 %v7137, %v7177
        %v7179 = vpop.f32.mrb[0].mxu0
        %v7180 = vadd.f32 %v7139, %v7179
        %v7181 = vpop.f32.mrb[0].mxu0
        %v7182 = vpop.f32.mrb[0].mxu0
        %7183 = vdwg.mxu0
        %7184 = vmatprep.subr.bf16.mxu0 %v6053
        %7185 = vmatpush1.bf16.msra.mxu0 %v6052
        %7186 = vmatprep.subr.bf16.mxu0 %v6055
        %7187 = vmatpush1.bf16.msra.mxu0 %v6054
        %7188 = vmatprep.subr.bf16.mxu0 %v6057
        %7189 = vmatpush1.bf16.msra.mxu0 %v6056
        %7190 = vmatprep.subr.bf16.mxu0 %v6059
        %7191 = vmatpush1.bf16.msra.mxu0 %v6058
        %7192 = vmatprep.subr.bf16.mxu0 %v6061
        %7193 = vmatpush1.bf16.msra.mxu0 %v6060
        %7194 = vmatprep.subr.bf16.mxu0 %v6063
        %7195 = vmatpush1.bf16.msra.mxu0 %v6062
        %7196 = vmatprep.subr.bf16.mxu0 %v6065
        %7197 = vmatpush1.bf16.msra.mxu0 %v6064
        %7198 = vmatprep.subr.bf16.mxu0 %v6067
        %7199 = vmatpush1.bf16.msra.mxu0 %v6066
        %7200 = vmatprep.subr.bf16.mxu0 %v6069
        %7201 = vmatpush1.bf16.msra.mxu0 %v6068
        %7202 = vmatprep.subr.bf16.mxu0 %v6071
        %7203 = vmatpush1.bf16.msra.mxu0 %v6070
        %7204 = vmatprep.subr.bf16.mxu0 %v6073
        %7205 = vmatpush1.bf16.msra.mxu0 %v6072
        %7206 = vmatprep.subr.bf16.mxu0 %v6075
        %7207 = vmatpush1.bf16.msra.mxu0 %v6074
        %7208 = vmatprep.subr.bf16.mxu0 %v6077
        %7209 = vmatpush1.bf16.msra.mxu0 %v6076
        %7210 = vmatprep.subr.bf16.mxu0 %v6079
        %7211 = vmatpush1.bf16.msra.mxu0 %v6078
        %7212 = vmatprep.subr.bf16.mxu0 %v6081
        %7213 = vmatpush1.bf16.msra.mxu0 %v6080
        %7214 = vmatprep.subr.bf16.mxu0 %v6083
        %7215 = vmatpush1.bf16.msra.mxu0 %v6082
        %7216 = vmatprep.mubr.bf16.mxu0 %v4125
        %7217 = vmatmul.mubr.bf16.gmra.mrb[0].mxu0 %v4124
        %v7218 = vpop.f32.mrb[0].mxu0
        %v7219 = vadd.f32 %v7178, %v7218
        %v7220 = vpop.f32.mrb[0].mxu0
        %v7221 = vadd.f32 %v7180, %v7220
        %v7222 = vpop.f32.mrb[0].mxu0
        %v7223 = vpop.f32.mrb[0].mxu0
        %7224 = vdwg.mxu0
        %7225 = vmatprep.subr.bf16.mxu0 %v6085
        %7226 = vmatpush1.bf16.msra.mxu0 %v6084
        %7227 = vmatprep.subr.bf16.mxu0 %v6087
        %7228 = vmatpush1.bf16.msra.mxu0 %v6086
        %7229 = vmatprep.subr.bf16.mxu0 %v6089
        %7230 = vmatpush1.bf16.msra.mxu0 %v6088
        %7231 = vmatprep.subr.bf16.mxu0 %v6091
        %7232 = vmatpush1.bf16.msra.mxu0 %v6090
        %7233 = vmatprep.subr.bf16.mxu0 %v6093
        %7234 = vmatpush1.bf16.msra.mxu0 %v6092
        %7235 = vmatprep.subr.bf16.mxu0 %v6095
        %7236 = vmatpush1.bf16.msra.mxu0 %v6094
        %7237 = vmatprep.subr.bf16.mxu0 %v6097
        %7238 = vmatpush1.bf16.msra.mxu0 %v6096
        %7239 = vmatprep.subr.bf16.mxu0 %v6099
        %7240 = vmatpush1.bf16.msra.mxu0 %v6098
        %7241 = vmatprep.subr.bf16.mxu0 %v6101
        %7242 = vmatpush1.bf16.msra.mxu0 %v6100
        %7243 = vmatprep.subr.bf16.mxu0 %v6103
        %7244 = vmatpush1.bf16.msra.mxu0 %v6102
        %7245 = vmatprep.subr.bf16.mxu0 %v6105
        %7246 = vmatpush1.bf16.msra.mxu0 %v6104
        %7247 = vmatprep.subr.bf16.mxu0 %v6107
        %7248 = vmatpush1.bf16.msra.mxu0 %v6106
        %7249 = vmatprep.subr.bf16.mxu0 %v6109
        %7250 = vmatpush1.bf16.msra.mxu0 %v6108
        %7251 = vmatprep.subr.bf16.mxu0 %v6111
        %7252 = vmatpush1.bf16.msra.mxu0 %v6110
        %7253 = vmatprep.subr.bf16.mxu0 %v6113
        %7254 = vmatpush1.bf16.msra.mxu0 %v6112
        %7255 = vmatprep.subr.bf16.mxu0 %v6115
        %7256 = vmatpush1.bf16.msra.mxu0 %v6114
        %7257 = vmatprep.mubr.bf16.mxu0 %v4127
        %7258 = vmatmul.mubr.bf16.gmra.mrb[0].mxu0 %v4126
        %v7259 = vpop.f32.mrb[0].mxu0
        %v7260 = vadd.f32 %v7219, %v7259
        %v7261 = vpop.f32.mrb[0].mxu0
        %v7262 = vadd.f32 %v7221, %v7261
        %v7263 = vpop.f32.mrb[0].mxu0
        %v7264 = vpop.f32.mrb[0].mxu0
        %7265 = vdwg.mxu0
        %7266 = vmatprep.subr.bf16.mxu0 %v6117
        %7267 = vmatpush1.bf16.msra.mxu0 %v6116
        %7268 = vmatprep.subr.bf16.mxu0 %v6119
        %7269 = vmatpush1.bf16.msra.mxu0 %v6118
        %7270 = vmatprep.subr.bf16.mxu0 %v6121
        %7271 = vmatpush1.bf16.msra.mxu0 %v6120
        %7272 = vmatprep.subr.bf16.mxu0 %v6123
        %7273 = vmatpush1.bf16.msra.mxu0 %v6122
        %7274 = vmatprep.subr.bf16.mxu0 %v6125
        %7275 = vmatpush1.bf16.msra.mxu0 %v6124
        %7276 = vmatprep.subr.bf16.mxu0 %v6127
        %7277 = vmatpush1.bf16.msra.mxu0 %v6126
        %7278 = vmatprep.subr.bf16.mxu0 %v6129
        %7279 = vmatpush1.bf16.msra.mxu0 %v6128
        %7280 = vmatprep.subr.bf16.mxu0 %v6131
        %7281 = vmatpush1.bf16.msra.mxu0 %v6130
        %7282 = vmatprep.subr.bf16.mxu0 %v6133
        %7283 = vmatpush1.bf16.msra.mxu0 %v6132
        %7284 = vmatprep.subr.bf16.mxu0 %v6135
        %7285 = vmatpush1.bf16.msra.mxu0 %v6134
        %7286 = vmatprep.subr.bf16.mxu0 %v6137
        %7287 = vmatpush1.bf16.msra.mxu0 %v6136
        %7288 = vmatprep.subr.bf16.mxu0 %v6139
        %7289 = vmatpush1.bf16.msra.mxu0 %v6138
        %7290 = vmatprep.subr.bf16.mxu0 %v6141
        %7291 = vmatpush1.bf16.msra.mxu0 %v6140
        %7292 = vmatprep.subr.bf16.mxu0 %v6143
        %7293 = vmatpush1.bf16.msra.mxu0 %v6142
        %7294 = vmatprep.subr.bf16.mxu0 %v6145
        %7295 = vmatpush1.bf16.msra.mxu0 %v6144
        %7296 = vmatprep.subr.bf16.mxu0 %v6147
        %7297 = vmatpush1.bf16.msra.mxu0 %v6146
        %7298 = vmatprep.mubr.bf16.mxu0 %v4129
        %7299 = vmatmul.mubr.bf16.gmra.mrb[0].mxu0 %v4128
        %v7300 = vpop.f32.mrb[0].mxu0
        %v7301 = vadd.f32 %v7260, %v7300
        %v7302 = vpop.f32.mrb[0].mxu0
        %v7303 = vadd.f32 %v7262, %v7302
        %v7304 = vpop.f32.mrb[0].mxu0
        %v7305 = vpop.f32.mrb[0].mxu0
        %7306 = vdwg.mxu0
        %7307 = vmatprep.subr.bf16.mxu0 %v6149
        %7308 = vmatpush1.bf16.msra.mxu0 %v6148
        %7309 = vmatprep.subr.bf16.mxu0 %v6151
        %7310 = vmatpush1.bf16.msra.mxu0 %v6150
        %7311 = vmatprep.subr.bf16.mxu0 %v6153
        %7312 = vmatpush1.bf16.msra.mxu0 %v6152
        %7313 = vmatprep.subr.bf16.mxu0 %v6155
        %7314 = vmatpush1.bf16.msra.mxu0 %v6154
        %7315 = vmatprep.subr.bf16.mxu0 %v6157
        %7316 = vmatpush1.bf16.msra.mxu0 %v6156
        %7317 = vmatprep.subr.bf16.mxu0 %v6159
        %7318 = vmatpush1.bf16.msra.mxu0 %v6158
        %7319 = vmatprep.subr.bf16.mxu0 %v6161
        %7320 = vmatpush1.bf16.msra.mxu0 %v6160
        %7321 = vmatprep.subr.bf16.mxu0 %v6163
        %7322 = vmatpush1.bf16.msra.mxu0 %v6162
        %7323 = vmatprep.subr.bf16.mxu0 %v6165
        %7324 = vmatpush1.bf16.msra.mxu0 %v6164
        %7325 = vmatprep.subr.bf16.mxu0 %v6167
        %7326 = vmatpush1.bf16.msra.mxu0 %v6166
        %7327 = vmatprep.subr.bf16.mxu0 %v6169
        %7328 = vmatpush1.bf16.msra.mxu0 %v6168
        %7329 = vmatprep.subr.bf16.mxu0 %v6171
        %7330 = vmatpush1.bf16.msra.mxu0 %v6170
        %7331 = vmatprep.subr.bf16.mxu0 %v6173
        %7332 = vmatpush1.bf16.msra.mxu0 %v6172
        %7333 = vmatprep.subr.bf16.mxu0 %v6175
        %7334 = vmatpush1.bf16.msra.mxu0 %v6174
        %7335 = vmatprep.subr.bf16.mxu0 %v6177
        %7336 = vmatpush1.bf16.msra.mxu0 %v6176
        %7337 = vmatprep.subr.bf16.mxu0 %v6179
        %7338 = vmatpush1.bf16.msra.mxu0 %v6178
        %7339 = vmatprep.mubr.bf16.mxu0 %v4131
        %7340 = vmatmul.mubr.bf16.gmra.mrb[0].mxu0 %v4130
        %v7341 = vpop.f32.mrb[0].mxu0
        %v7342 = vadd.f32 %v7301, %v7341
        %v7343 = vpop.f32.mrb[0].mxu0
        %v7344 = vadd.f32 %v7303, %v7343
        %v7345 = vpop.f32.mrb[0].mxu0
        %v7346 = vpop.f32.mrb[0].mxu0
        %7347 = vdwg.mxu0
        %v7352 = vrot.slane %v3481, 1
        %v7353 = vrot.slane %v3482, 1
        %v7354 = vrot.slane %v3483, 1
        %v7355 = vrot.slane %v3484, 1
        %v7360 = vrot.slane %v3481, 2
        %v7361 = vrot.slane %v3482, 2
        %v7362 = vrot.slane %v3483, 2
        %v7363 = vrot.slane %v3484, 2
        %v7368 = vrot.slane %v3481, 3
        %v7369 = vrot.slane %v3482, 3
        %v7370 = vrot.slane %v3483, 3
        %v7371 = vrot.slane %v3484, 3
        %v7380 = vrot.slane %v3481, 4
        %v7381 = vrot.slane %v3485, 4
        %v7382 = vsel %vm3245, %v7380, %v7381
        %v7383 = vrot.slane %v3482, 4
        %v7384 = vrot.slane %v3486, 4
        %v7385 = vsel %vm3245, %v7383, %v7384
        %v7386 = vrot.slane %v3483, 4
        %v7387 = vrot.slane %v3487, 4
        %v7388 = vsel %vm3245, %v7386, %v7387
        %v7389 = vrot.slane %v3484, 4
        %v7390 = vrot.slane %v3488, 4
        %v7391 = vsel %vm3245, %v7389, %v7390
        %v7396 = vrot.slane %v3481, 5
        %v7397 = vrot.slane %v3485, 5
        %v7398 = vsel %vm4049, %v7396, %v7397
        %v7399 = vrot.slane %v3482, 5
        %v7400 = vrot.slane %v3486, 5
        %v7401 = vsel %vm4049, %v7399, %v7400
        %v7402 = vrot.slane %v3483, 5
        %v7403 = vrot.slane %v3487, 5
        %v7404 = vsel %vm4049, %v7402, %v7403
        %v7405 = vrot.slane %v3484, 5
        %v7406 = vrot.slane %v3488, 5
        %v7407 = vsel %vm4049, %v7405, %v7406
        %v7412 = vrot.slane %v3481, 6
        %v7413 = vrot.slane %v3485, 6
        %v7414 = vsel %vm4066, %v7412, %v7413
        %v7415 = vrot.slane %v3482, 6
        %v7416 = vrot.slane %v3486, 6
        %v7417 = vsel %vm4066, %v7415, %v7416
        %v7418 = vrot.slane %v3483, 6
        %v7419 = vrot.slane %v3487, 6
        %v7420 = vsel %vm4066, %v7418, %v7419
        %v7421 = vrot.slane %v3484, 6
        %v7422 = vrot.slane %v3488, 6
        %v7423 = vsel %vm4066, %v7421, %v7422
        %v7428 = vrot.slane %v3481, 7
        %v7429 = vrot.slane %v3485, 7
        %v7430 = vsel %vm4083, %v7428, %v7429
        %v7431 = vrot.slane %v3482, 7
        %v7432 = vrot.slane %v3486, 7
        %v7433 = vsel %vm4083, %v7431, %v7432
        %v7434 = vrot.slane %v3483, 7
        %v7435 = vrot.slane %v3487, 7
        %v7436 = vsel %vm4083, %v7434, %v7435
        %v7437 = vrot.slane %v3484, 7
        %v7438 = vrot.slane %v3488, 7
        %v7439 = vsel %vm4083, %v7437, %v7438
        %v7444 = vpack.c.bf16 %v3481, %v3481
        %v7445 = vpack.c.bf16 %v3482, %v3482
        %v7446 = vpack.c.bf16 %v3483, %v3483
        %v7447 = vpack.c.bf16 %v3484, %v3484
        %v7448 = vpack.c.bf16 %v7352, %v7352
        %v7449 = vpack.c.bf16 %v7353, %v7353
        %v7450 = vpack.c.bf16 %v7354, %v7354
        %v7451 = vpack.c.bf16 %v7355, %v7355
        %v7452 = vpack.c.bf16 %v7360, %v7360
        %v7453 = vpack.c.bf16 %v7361, %v7361
        %v7454 = vpack.c.bf16 %v7362, %v7362
        %v7455 = vpack.c.bf16 %v7363, %v7363
        %v7456 = vpack.c.bf16 %v7368, %v7368
        %v7457 = vpack.c.bf16 %v7369, %v7369
        %v7458 = vpack.c.bf16 %v7370, %v7370
        %v7459 = vpack.c.bf16 %v7371, %v7371
        %v7460 = vpack.c.bf16 %v7382, %v7382
        %v7461 = vpack.c.bf16 %v7385, %v7385
        %v7462 = vpack.c.bf16 %v7388, %v7388
        %v7463 = vpack.c.bf16 %v7391, %v7391
        %v7464 = vpack.c.bf16 %v7398, %v7398
        %v7465 = vpack.c.bf16 %v7401, %v7401
        %v7466 = vpack.c.bf16 %v7404, %v7404
        %v7467 = vpack.c.bf16 %v7407, %v7407
        %v7468 = vpack.c.bf16 %v7414, %v7414
        %v7469 = vpack.c.bf16 %v7417, %v7417
        %v7470 = vpack.c.bf16 %v7420, %v7420
        %v7471 = vpack.c.bf16 %v7423, %v7423
        %v7472 = vpack.c.bf16 %v7430, %v7430
        %v7473 = vpack.c.bf16 %v7433, %v7433
        %v7474 = vpack.c.bf16 %v7436, %v7436
        %v7475 = vpack.c.bf16 %v7439, %v7439
        %7476 = vmatprep.subr.bf16.mxu0 %v5669
        %7477 = vmatpush1.bf16.msra.mxu0 %v5668
        %7478 = vmatprep.subr.bf16.mxu0 %v5671
        %7479 = vmatpush1.bf16.msra.mxu0 %v5670
        %7480 = vmatprep.subr.bf16.mxu0 %v5673
        %7481 = vmatpush1.bf16.msra.mxu0 %v5672
        %7482 = vmatprep.subr.bf16.mxu0 %v5675
        %7483 = vmatpush1.bf16.msra.mxu0 %v5674
        %7484 = vmatprep.subr.bf16.mxu0 %v5677
        %7485 = vmatpush1.bf16.msra.mxu0 %v5676
        %7486 = vmatprep.subr.bf16.mxu0 %v5679
        %7487 = vmatpush1.bf16.msra.mxu0 %v5678
        %7488 = vmatprep.subr.bf16.mxu0 %v5681
        %7489 = vmatpush1.bf16.msra.mxu0 %v5680
        %7490 = vmatprep.subr.bf16.mxu0 %v5683
        %7491 = vmatpush1.bf16.msra.mxu0 %v5682
        %7492 = vmatprep.subr.bf16.mxu0 %v5685
        %7493 = vmatpush1.bf16.msra.mxu0 %v5684
        %7494 = vmatprep.subr.bf16.mxu0 %v5687
        %7495 = vmatpush1.bf16.msra.mxu0 %v5686
        %7496 = vmatprep.subr.bf16.mxu0 %v5689
        %7497 = vmatpush1.bf16.msra.mxu0 %v5688
        %7498 = vmatprep.subr.bf16.mxu0 %v5691
        %7499 = vmatpush1.bf16.msra.mxu0 %v5690
        %7500 = vmatprep.subr.bf16.mxu0 %v5693
        %7501 = vmatpush1.bf16.msra.mxu0 %v5692
        %7502 = vmatprep.subr.bf16.mxu0 %v5695
        %7503 = vmatpush1.bf16.msra.mxu0 %v5694
        %7504 = vmatprep.subr.bf16.mxu0 %v5697
        %7505 = vmatpush1.bf16.msra.mxu0 %v5696
        %7506 = vmatprep.subr.bf16.mxu0 %v5699
        %7507 = vmatpush1.bf16.msra.mxu0 %v5698
        %7508 = vmatprep.mubr.bf16.mxu0 %v7445
        %7509 = vmatmul.mubr.bf16.gmra.mrb[0].mxu0 %v7444
        %v7510 = vpop.f32.mrb[0].mxu0
        %v7511 = vadd.f32 0.0, %v7510
        %v7512 = vpop.f32.mrb[0].mxu0
        %v7513 = vadd.f32 0.0, %v7512
        %v7514 = vpop.f32.mrb[0].mxu0
        %v7515 = vpop.f32.mrb[0].mxu0
        %7516 = vdwg.mxu0
        %7517 = vmatprep.subr.bf16.mxu0 %v5701
        %7518 = vmatpush1.bf16.msra.mxu0 %v5700
        %7519 = vmatprep.subr.bf16.mxu0 %v5703
        %7520 = vmatpush1.bf16.msra.mxu0 %v5702
        %7521 = vmatprep.subr.bf16.mxu0 %v5705
        %7522 = vmatpush1.bf16.msra.mxu0 %v5704
        %7523 = vmatprep.subr.bf16.mxu0 %v5707
        %7524 = vmatpush1.bf16.msra.mxu0 %v5706
        %7525 = vmatprep.subr.bf16.mxu0 %v5709
        %7526 = vmatpush1.bf16.msra.mxu0 %v5708
        %7527 = vmatprep.subr.bf16.mxu0 %v5711
        %7528 = vmatpush1.bf16.msra.mxu0 %v5710
        %7529 = vmatprep.subr.bf16.mxu0 %v5713
        %7530 = vmatpush1.bf16.msra.mxu0 %v5712
        %7531 = vmatprep.subr.bf16.mxu0 %v5715
        %7532 = vmatpush1.bf16.msra.mxu0 %v5714
        %7533 = vmatprep.subr.bf16.mxu0 %v5717
        %7534 = vmatpush1.bf16.msra.mxu0 %v5716
        %7535 = vmatprep.subr.bf16.mxu0 %v5719
        %7536 = vmatpush1.bf16.msra.mxu0 %v5718
        %7537 = vmatprep.subr.bf16.mxu0 %v5721
        %7538 = vmatpush1.bf16.msra.mxu0 %v5720
        %7539 = vmatprep.subr.bf16.mxu0 %v5723
        %7540 = vmatpush1.bf16.msra.mxu0 %v5722
        %7541 = vmatprep.subr.bf16.mxu0 %v5725
        %7542 = vmatpush1.bf16.msra.mxu0 %v5724
        %7543 = vmatprep.subr.bf16.mxu0 %v5727
        %7544 = vmatpush1.bf16.msra.mxu0 %v5726
        %7545 = vmatprep.subr.bf16.mxu0 %v5729
        %7546 = vmatpush1.bf16.msra.mxu0 %v5728
        %7547 = vmatprep.subr.bf16.mxu0 %v5731
        %7548 = vmatpush1.bf16.msra.mxu0 %v5730
        %7549 = vmatprep.mubr.bf16.mxu0 %v7447
        %7550 = vmatmul.mubr.bf16.gmra.mrb[0].mxu0 %v7446
        %v7551 = vpop.f32.mrb[0].mxu0
        %v7552 = vadd.f32 %v7511, %v7551
        %v7553 = vpop.f32.mrb[0].mxu0
        %v7554 = vadd.f32 %v7513, %v7553
        %v7555 = vpop.f32.mrb[0].mxu0
        %v7556 = vpop.f32.mrb[0].mxu0
        %7557 = vdwg.mxu0
        %7558 = vmatprep.subr.bf16.mxu0 %v5733
        %7559 = vmatpush1.bf16.msra.mxu0 %v5732
        %7560 = vmatprep.subr.bf16.mxu0 %v5735
        %7561 = vmatpush1.bf16.msra.mxu0 %v5734
        %7562 = vmatprep.subr.bf16.mxu0 %v5737
        %7563 = vmatpush1.bf16.msra.mxu0 %v5736
        %7564 = vmatprep.subr.bf16.mxu0 %v5739
        %7565 = vmatpush1.bf16.msra.mxu0 %v5738
        %7566 = vmatprep.subr.bf16.mxu0 %v5741
        %7567 = vmatpush1.bf16.msra.mxu0 %v5740
        %7568 = vmatprep.subr.bf16.mxu0 %v5743
        %7569 = vmatpush1.bf16.msra.mxu0 %v5742
        %7570 = vmatprep.subr.bf16.mxu0 %v5745
        %7571 = vmatpush1.bf16.msra.mxu0 %v5744
        %7572 = vmatprep.subr.bf16.mxu0 %v5747
        %7573 = vmatpush1.bf16.msra.mxu0 %v5746
        %7574 = vmatprep.subr.bf16.mxu0 %v5749
        %7575 = vmatpush1.bf16.msra.mxu0 %v5748
        %7576 = vmatprep.subr.bf16.mxu0 %v5751
        %7577 = vmatpush1.bf16.msra.mxu0 %v5750
        %7578 = vmatprep.subr.bf16.mxu0 %v5753
        %7579 = vmatpush1.bf16.msra.mxu0 %v5752
        %7580 = vmatprep.subr.bf16.mxu0 %v5755
        %7581 = vmatpush1.bf16.msra.mxu0 %v5754
        %7582 = vmatprep.subr.bf16.mxu0 %v5757
        %7583 = vmatpush1.bf16.msra.mxu0 %v5756
        %7584 = vmatprep.subr.bf16.mxu0 %v5759
        %7585 = vmatpush1.bf16.msra.mxu0 %v5758
        %7586 = vmatprep.subr.bf16.mxu0 %v5761
        %7587 = vmatpush1.bf16.msra.mxu0 %v5760
        %7588 = vmatprep.subr.bf16.mxu0 %v5763
        %7589 = vmatpush1.bf16.msra.mxu0 %v5762
        %7590 = vmatprep.mubr.bf16.mxu0 %v7449
        %7591 = vmatmul.mubr.bf16.gmra.mrb[0].mxu0 %v7448
        %v7592 = vpop.f32.mrb[0].mxu0
        %v7593 = vadd.f32 %v7552, %v7592
        %v7594 = vpop.f32.mrb[0].mxu0
        %v7595 = vadd.f32 %v7554, %v7594
        %v7596 = vpop.f32.mrb[0].mxu0
        %v7597 = vpop.f32.mrb[0].mxu0
        %7598 = vdwg.mxu0
        %7599 = vmatprep.subr.bf16.mxu0 %v5765
        %7600 = vmatpush1.bf16.msra.mxu0 %v5764
        %7601 = vmatprep.subr.bf16.mxu0 %v5767
        %7602 = vmatpush1.bf16.msra.mxu0 %v5766
        %7603 = vmatprep.subr.bf16.mxu0 %v5769
        %7604 = vmatpush1.bf16.msra.mxu0 %v5768
        %7605 = vmatprep.subr.bf16.mxu0 %v5771
        %7606 = vmatpush1.bf16.msra.mxu0 %v5770
        %7607 = vmatprep.subr.bf16.mxu0 %v5773
        %7608 = vmatpush1.bf16.msra.mxu0 %v5772
        %7609 = vmatprep.subr.bf16.mxu0 %v5775
        %7610 = vmatpush1.bf16.msra.mxu0 %v5774
        %7611 = vmatprep.subr.bf16.mxu0 %v5777
        %7612 = vmatpush1.bf16.msra.mxu0 %v5776
        %7613 = vmatprep.subr.bf16.mxu0 %v5779
        %7614 = vmatpush1.bf16.msra.mxu0 %v5778
        %7615 = vmatprep.subr.bf16.mxu0 %v5781
        %7616 = vmatpush1.bf16.msra.mxu0 %v5780
        %7617 = vmatprep.subr.bf16.mxu0 %v5783
        %7618 = vmatpush1.bf16.msra.mxu0 %v5782
        %7619 = vmatprep.subr.bf16.mxu0 %v5785
        %7620 = vmatpush1.bf16.msra.mxu0 %v5784
        %7621 = vmatprep.subr.bf16.mxu0 %v5787
        %7622 = vmatpush1.bf16.msra.mxu0 %v5786
        %7623 = vmatprep.subr.bf16.mxu0 %v5789
        %7624 = vmatpush1.bf16.msra.mxu0 %v5788
        %7625 = vmatprep.subr.bf16.mxu0 %v5791
        %7626 = vmatpush1.bf16.msra.mxu0 %v5790
        %7627 = vmatprep.subr.bf16.mxu0 %v5793
        %7628 = vmatpush1.bf16.msra.mxu0 %v5792
        %7629 = vmatprep.subr.bf16.mxu0 %v5795
        %7630 = vmatpush1.bf16.msra.mxu0 %v5794
        %7631 = vmatprep.mubr.bf16.mxu0 %v7451
        %7632 = vmatmul.mubr.bf16.gmra.mrb[0].mxu0 %v7450
        %v7633 = vpop.f32.mrb[0].mxu0
        %v7634 = vadd.f32 %v7593, %v7633
        %v7635 = vpop.f32.mrb[0].mxu0
        %v7636 = vadd.f32 %v7595, %v7635
        %v7637 = vpop.f32.mrb[0].mxu0
        %v7638 = vpop.f32.mrb[0].mxu0
        %7639 = vdwg.mxu0
        %7640 = vmatprep.subr.bf16.mxu0 %v5797
        %7641 = vmatpush1.bf16.msra.mxu0 %v5796
        %7642 = vmatprep.subr.bf16.mxu0 %v5799
        %7643 = vmatpush1.bf16.msra.mxu0 %v5798
        %7644 = vmatprep.subr.bf16.mxu0 %v5801
        %7645 = vmatpush1.bf16.msra.mxu0 %v5800
        %7646 = vmatprep.subr.bf16.mxu0 %v5803
        %7647 = vmatpush1.bf16.msra.mxu0 %v5802
        %7648 = vmatprep.subr.bf16.mxu0 %v5805
        %7649 = vmatpush1.bf16.msra.mxu0 %v5804
        %7650 = vmatprep.subr.bf16.mxu0 %v5807
        %7651 = vmatpush1.bf16.msra.mxu0 %v5806
        %7652 = vmatprep.subr.bf16.mxu0 %v5809
        %7653 = vmatpush1.bf16.msra.mxu0 %v5808
        %7654 = vmatprep.subr.bf16.mxu0 %v5811
        %7655 = vmatpush1.bf16.msra.mxu0 %v5810
        %7656 = vmatprep.subr.bf16.mxu0 %v5813
        %7657 = vmatpush1.bf16.msra.mxu0 %v5812
        %7658 = vmatprep.subr.bf16.mxu0 %v5815
        %7659 = vmatpush1.bf16.msra.mxu0 %v5814
        %7660 = vmatprep.subr.bf16.mxu0 %v5817
        %7661 = vmatpush1.bf16.msra.mxu0 %v5816
        %7662 = vmatprep.subr.bf16.mxu0 %v5819
        %7663 = vmatpush1.bf16.msra.mxu0 %v5818
        %7664 = vmatprep.subr.bf16.mxu0 %v5821
        %7665 = vmatpush1.bf16.msra.mxu0 %v5820
        %7666 = vmatprep.subr.bf16.mxu0 %v5823
        %7667 = vmatpush1.bf16.msra.mxu0 %v5822
        %7668 = vmatprep.subr.bf16.mxu0 %v5825
        %7669 = vmatpush1.bf16.msra.mxu0 %v5824
        %7670 = vmatprep.subr.bf16.mxu0 %v5827
        %7671 = vmatpush1.bf16.msra.mxu0 %v5826
        %7672 = vmatprep.mubr.bf16.mxu0 %v7453
        %7673 = vmatmul.mubr.bf16.gmra.mrb[0].mxu0 %v7452
        %v7674 = vpop.f32.mrb[0].mxu0
        %v7675 = vadd.f32 %v7634, %v7674
        %v7676 = vpop.f32.mrb[0].mxu0
        %v7677 = vadd.f32 %v7636, %v7676
        %v7678 = vpop.f32.mrb[0].mxu0
        %v7679 = vpop.f32.mrb[0].mxu0
        %7680 = vdwg.mxu0
        %7681 = vmatprep.subr.bf16.mxu0 %v5829
        %7682 = vmatpush1.bf16.msra.mxu0 %v5828
        %7683 = vmatprep.subr.bf16.mxu0 %v5831
        %7684 = vmatpush1.bf16.msra.mxu0 %v5830
        %7685 = vmatprep.subr.bf16.mxu0 %v5833
        %7686 = vmatpush1.bf16.msra.mxu0 %v5832
        %7687 = vmatprep.subr.bf16.mxu0 %v5835
        %7688 = vmatpush1.bf16.msra.mxu0 %v5834
        %7689 = vmatprep.subr.bf16.mxu0 %v5837
        %7690 = vmatpush1.bf16.msra.mxu0 %v5836
        %7691 = vmatprep.subr.bf16.mxu0 %v5839
        %7692 = vmatpush1.bf16.msra.mxu0 %v5838
        %7693 = vmatprep.subr.bf16.mxu0 %v5841
        %7694 = vmatpush1.bf16.msra.mxu0 %v5840
        %7695 = vmatprep.subr.bf16.mxu0 %v5843
        %7696 = vmatpush1.bf16.msra.mxu0 %v5842
        %7697 = vmatprep.subr.bf16.mxu0 %v5845
        %7698 = vmatpush1.bf16.msra.mxu0 %v5844
        %7699 = vmatprep.subr.bf16.mxu0 %v5847
        %7700 = vmatpush1.bf16.msra.mxu0 %v5846
        %7701 = vmatprep.subr.bf16.mxu0 %v5849
        %7702 = vmatpush1.bf16.msra.mxu0 %v5848
        %7703 = vmatprep.subr.bf16.mxu0 %v5851
        %7704 = vmatpush1.bf16.msra.mxu0 %v5850
        %7705 = vmatprep.subr.bf16.mxu0 %v5853
        %7706 = vmatpush1.bf16.msra.mxu0 %v5852
        %7707 = vmatprep.subr.bf16.mxu0 %v5855
        %7708 = vmatpush1.bf16.msra.mxu0 %v5854
        %7709 = vmatprep.subr.bf16.mxu0 %v5857
        %7710 = vmatpush1.bf16.msra.mxu0 %v5856
        %7711 = vmatprep.subr.bf16.mxu0 %v5859
        %7712 = vmatpush1.bf16.msra.mxu0 %v5858
        %7713 = vmatprep.mubr.bf16.mxu0 %v7455
        %7714 = vmatmul.mubr.bf16.gmra.mrb[0].mxu0 %v7454
        %v7715 = vpop.f32.mrb[0].mxu0
        %v7716 = vadd.f32 %v7675, %v7715
        %v7717 = vpop.f32.mrb[0].mxu0
        %v7718 = vadd.f32 %v7677, %v7717
        %v7719 = vpop.f32.mrb[0].mxu0
        %v7720 = vpop.f32.mrb[0].mxu0
        %7721 = vdwg.mxu0
        %7722 = vmatprep.subr.bf16.mxu0 %v5861
        %7723 = vmatpush1.bf16.msra.mxu0 %v5860
        %7724 = vmatprep.subr.bf16.mxu0 %v5863
        %7725 = vmatpush1.bf16.msra.mxu0 %v5862
        %7726 = vmatprep.subr.bf16.mxu0 %v5865
        %7727 = vmatpush1.bf16.msra.mxu0 %v5864
        %7728 = vmatprep.subr.bf16.mxu0 %v5867
        %7729 = vmatpush1.bf16.msra.mxu0 %v5866
        %7730 = vmatprep.subr.bf16.mxu0 %v5869
        %7731 = vmatpush1.bf16.msra.mxu0 %v5868
        %7732 = vmatprep.subr.bf16.mxu0 %v5871
        %7733 = vmatpush1.bf16.msra.mxu0 %v5870
        %7734 = vmatprep.subr.bf16.mxu0 %v5873
        %7735 = vmatpush1.bf16.msra.mxu0 %v5872
        %7736 = vmatprep.subr.bf16.mxu0 %v5875
        %7737 = vmatpush1.bf16.msra.mxu0 %v5874
        %7738 = vmatprep.subr.bf16.mxu0 %v5877
        %7739 = vmatpush1.bf16.msra.mxu0 %v5876
        %7740 = vmatprep.subr.bf16.mxu0 %v5879
        %7741 = vmatpush1.bf16.msra.mxu0 %v5878
        %7742 = vmatprep.subr.bf16.mxu0 %v5881
        %7743 = vmatpush1.bf16.msra.mxu0 %v5880
        %7744 = vmatprep.subr.bf16.mxu0 %v5883
        %7745 = vmatpush1.bf16.msra.mxu0 %v5882
        %7746 = vmatprep.subr.bf16.mxu0 %v5885
        %7747 = vmatpush1.bf16.msra.mxu0 %v5884
        %7748 = vmatprep.subr.bf16.mxu0 %v5887
        %7749 = vmatpush1.bf16.msra.mxu0 %v5886
        %7750 = vmatprep.subr.bf16.mxu0 %v5889
        %7751 = vmatpush1.bf16.msra.mxu0 %v5888
        %7752 = vmatprep.subr.bf16.mxu0 %v5891
        %7753 = vmatpush1.bf16.msra.mxu0 %v5890
        %7754 = vmatprep.mubr.bf16.mxu0 %v7457
        %7755 = vmatmul.mubr.bf16.gmra.mrb[0].mxu0 %v7456
        %v7756 = vpop.f32.mrb[0].mxu0
        %v7757 = vadd.f32 %v7716, %v7756
        %v7758 = vpop.f32.mrb[0].mxu0
        %v7759 = vadd.f32 %v7718, %v7758
        %v7760 = vpop.f32.mrb[0].mxu0
        %v7761 = vpop.f32.mrb[0].mxu0
        %7762 = vdwg.mxu0
        %7763 = vmatprep.subr.bf16.mxu0 %v5893
        %7764 = vmatpush1.bf16.msra.mxu0 %v5892
        %7765 = vmatprep.subr.bf16.mxu0 %v5895
        %7766 = vmatpush1.bf16.msra.mxu0 %v5894
        %7767 = vmatprep.subr.bf16.mxu0 %v5897
        %7768 = vmatpush1.bf16.msra.mxu0 %v5896
        %7769 = vmatprep.subr.bf16.mxu0 %v5899
        %7770 = vmatpush1.bf16.msra.mxu0 %v5898
        %7771 = vmatprep.subr.bf16.mxu0 %v5901
        %7772 = vmatpush1.bf16.msra.mxu0 %v5900
        %7773 = vmatprep.subr.bf16.mxu0 %v5903
        %7774 = vmatpush1.bf16.msra.mxu0 %v5902
        %7775 = vmatprep.subr.bf16.mxu0 %v5905
        %7776 = vmatpush1.bf16.msra.mxu0 %v5904
        %7777 = vmatprep.subr.bf16.mxu0 %v5907
        %7778 = vmatpush1.bf16.msra.mxu0 %v5906
        %7779 = vmatprep.subr.bf16.mxu0 %v5909
        %7780 = vmatpush1.bf16.msra.mxu0 %v5908
        %7781 = vmatprep.subr.bf16.mxu0 %v5911
        %7782 = vmatpush1.bf16.msra.mxu0 %v5910
        %7783 = vmatprep.subr.bf16.mxu0 %v5913
        %7784 = vmatpush1.bf16.msra.mxu0 %v5912
        %7785 = vmatprep.subr.bf16.mxu0 %v5915
        %7786 = vmatpush1.bf16.msra.mxu0 %v5914
        %7787 = vmatprep.subr.bf16.mxu0 %v5917
        %7788 = vmatpush1.bf16.msra.mxu0 %v5916
        %7789 = vmatprep.subr.bf16.mxu0 %v5919
        %7790 = vmatpush1.bf16.msra.mxu0 %v5918
        %7791 = vmatprep.subr.bf16.mxu0 %v5921
        %7792 = vmatpush1.bf16.msra.mxu0 %v5920
        %7793 = vmatprep.subr.bf16.mxu0 %v5923
        %7794 = vmatpush1.bf16.msra.mxu0 %v5922
        %7795 = vmatprep.mubr.bf16.mxu0 %v7459
        %7796 = vmatmul.mubr.bf16.gmra.mrb[0].mxu0 %v7458
        %v7797 = vpop.f32.mrb[0].mxu0
        %v7798 = vadd.f32 %v7757, %v7797
        %v7799 = vpop.f32.mrb[0].mxu0
        %v7800 = vadd.f32 %v7759, %v7799
        %v7801 = vpop.f32.mrb[0].mxu0
        %v7802 = vpop.f32.mrb[0].mxu0
        %7803 = vdwg.mxu0
        %7804 = vmatprep.subr.bf16.mxu0 %v5925
        %7805 = vmatpush1.bf16.msra.mxu0 %v5924
        %7806 = vmatprep.subr.bf16.mxu0 %v5927
        %7807 = vmatpush1.bf16.msra.mxu0 %v5926
        %7808 = vmatprep.subr.bf16.mxu0 %v5929
        %7809 = vmatpush1.bf16.msra.mxu0 %v5928
        %7810 = vmatprep.subr.bf16.mxu0 %v5931
        %7811 = vmatpush1.bf16.msra.mxu0 %v5930
        %7812 = vmatprep.subr.bf16.mxu0 %v5933
        %7813 = vmatpush1.bf16.msra.mxu0 %v5932
        %7814 = vmatprep.subr.bf16.mxu0 %v5935
        %7815 = vmatpush1.bf16.msra.mxu0 %v5934
        %7816 = vmatprep.subr.bf16.mxu0 %v5937
        %7817 = vmatpush1.bf16.msra.mxu0 %v5936
        %7818 = vmatprep.subr.bf16.mxu0 %v5939
        %7819 = vmatpush1.bf16.msra.mxu0 %v5938
        %7820 = vmatprep.subr.bf16.mxu0 %v5941
        %7821 = vmatpush1.bf16.msra.mxu0 %v5940
        %7822 = vmatprep.subr.bf16.mxu0 %v5943
        %7823 = vmatpush1.bf16.msra.mxu0 %v5942
        %7824 = vmatprep.subr.bf16.mxu0 %v5945
        %7825 = vmatpush1.bf16.msra.mxu0 %v5944
        %7826 = vmatprep.subr.bf16.mxu0 %v5947
        %7827 = vmatpush1.bf16.msra.mxu0 %v5946
        %7828 = vmatprep.subr.bf16.mxu0 %v5949
        %7829 = vmatpush1.bf16.msra.mxu0 %v5948
        %7830 = vmatprep.subr.bf16.mxu0 %v5951
        %7831 = vmatpush1.bf16.msra.mxu0 %v5950
        %7832 = vmatprep.subr.bf16.mxu0 %v5953
        %7833 = vmatpush1.bf16.msra.mxu0 %v5952
        %7834 = vmatprep.subr.bf16.mxu0 %v5955
        %7835 = vmatpush1.bf16.msra.mxu0 %v5954
        %7836 = vmatprep.mubr.bf16.mxu0 %v7461
        %7837 = vmatmul.mubr.bf16.gmra.mrb[0].mxu0 %v7460
        %v7838 = vpop.f32.mrb[0].mxu0
        %v7839 = vadd.f32 %v7798, %v7838
        %v7840 = vpop.f32.mrb[0].mxu0
        %v7841 = vadd.f32 %v7800, %v7840
        %v7842 = vpop.f32.mrb[0].mxu0
        %v7843 = vpop.f32.mrb[0].mxu0
        %7844 = vdwg.mxu0
        %7845 = vmatprep.subr.bf16.mxu0 %v5957
        %7846 = vmatpush1.bf16.msra.mxu0 %v5956
        %7847 = vmatprep.subr.bf16.mxu0 %v5959
        %7848 = vmatpush1.bf16.msra.mxu0 %v5958
        %7849 = vmatprep.subr.bf16.mxu0 %v5961
        %7850 = vmatpush1.bf16.msra.mxu0 %v5960
        %7851 = vmatprep.subr.bf16.mxu0 %v5963
        %7852 = vmatpush1.bf16.msra.mxu0 %v5962
        %7853 = vmatprep.subr.bf16.mxu0 %v5965
        %7854 = vmatpush1.bf16.msra.mxu0 %v5964
        %7855 = vmatprep.subr.bf16.mxu0 %v5967
        %7856 = vmatpush1.bf16.msra.mxu0 %v5966
        %7857 = vmatprep.subr.bf16.mxu0 %v5969
        %7858 = vmatpush1.bf16.msra.mxu0 %v5968
        %7859 = vmatprep.subr.bf16.mxu0 %v5971
        %7860 = vmatpush1.bf16.msra.mxu0 %v5970
        %7861 = vmatprep.subr.bf16.mxu0 %v5973
        %7862 = vmatpush1.bf16.msra.mxu0 %v5972
        %7863 = vmatprep.subr.bf16.mxu0 %v5975
        %7864 = vmatpush1.bf16.msra.mxu0 %v5974
        %7865 = vmatprep.subr.bf16.mxu0 %v5977
        %7866 = vmatpush1.bf16.msra.mxu0 %v5976
        %7867 = vmatprep.subr.bf16.mxu0 %v5979
        %7868 = vmatpush1.bf16.msra.mxu0 %v5978
        %7869 = vmatprep.subr.bf16.mxu0 %v5981
        %7870 = vmatpush1.bf16.msra.mxu0 %v5980
        %7871 = vmatprep.subr.bf16.mxu0 %v5983
        %7872 = vmatpush1.bf16.msra.mxu0 %v5982
        %7873 = vmatprep.subr.bf16.mxu0 %v5985
        %7874 = vmatpush1.bf16.msra.mxu0 %v5984
        %7875 = vmatprep.subr.bf16.mxu0 %v5987
        %7876 = vmatpush1.bf16.msra.mxu0 %v5986
        %7877 = vmatprep.mubr.bf16.mxu0 %v7463
        %7878 = vmatmul.mubr.bf16.gmra.mrb[0].mxu0 %v7462
        %v7879 = vpop.f32.mrb[0].mxu0
        %v7880 = vadd.f32 %v7839, %v7879
        %v7881 = vpop.f32.mrb[0].mxu0
        %v7882 = vadd.f32 %v7841, %v7881
        %v7883 = vpop.f32.mrb[0].mxu0
        %v7884 = vpop.f32.mrb[0].mxu0
        %7885 = vdwg.mxu0
        %7886 = vmatprep.subr.bf16.mxu0 %v5989
        %7887 = vmatpush1.bf16.msra.mxu0 %v5988
        %7888 = vmatprep.subr.bf16.mxu0 %v5991
        %7889 = vmatpush1.bf16.msra.mxu0 %v5990
        %7890 = vmatprep.subr.bf16.mxu0 %v5993
        %7891 = vmatpush1.bf16.msra.mxu0 %v5992
        %7892 = vmatprep.subr.bf16.mxu0 %v5995
        %7893 = vmatpush1.bf16.msra.mxu0 %v5994
        %7894 = vmatprep.subr.bf16.mxu0 %v5997
        %7895 = vmatpush1.bf16.msra.mxu0 %v5996
        %7896 = vmatprep.subr.bf16.mxu0 %v5999
        %7897 = vmatpush1.bf16.msra.mxu0 %v5998
        %7898 = vmatprep.subr.bf16.mxu0 %v6001
        %7899 = vmatpush1.bf16.msra.mxu0 %v6000
        %7900 = vmatprep.subr.bf16.mxu0 %v6003
        %7901 = vmatpush1.bf16.msra.mxu0 %v6002
        %7902 = vmatprep.subr.bf16.mxu0 %v6005
        %7903 = vmatpush1.bf16.msra.mxu0 %v6004
        %7904 = vmatprep.subr.bf16.mxu0 %v6007
        %7905 = vmatpush1.bf16.msra.mxu0 %v6006
        %7906 = vmatprep.subr.bf16.mxu0 %v6009
        %7907 = vmatpush1.bf16.msra.mxu0 %v6008
        %7908 = vmatprep.subr.bf16.mxu0 %v6011
        %7909 = vmatpush1.bf16.msra.mxu0 %v6010
        %7910 = vmatprep.subr.bf16.mxu0 %v6013
        %7911 = vmatpush1.bf16.msra.mxu0 %v6012
        %7912 = vmatprep.subr.bf16.mxu0 %v6015
        %7913 = vmatpush1.bf16.msra.mxu0 %v6014
        %7914 = vmatprep.subr.bf16.mxu0 %v6017
        %7915 = vmatpush1.bf16.msra.mxu0 %v6016
        %7916 = vmatprep.subr.bf16.mxu0 %v6019
        %7917 = vmatpush1.bf16.msra.mxu0 %v6018
        %7918 = vmatprep.mubr.bf16.mxu0 %v7465
        %7919 = vmatmul.mubr.bf16.gmra.mrb[0].mxu0 %v7464
        %v7920 = vpop.f32.mrb[0].mxu0
        %v7921 = vadd.f32 %v7880, %v7920
        %v7922 = vpop.f32.mrb[0].mxu0
        %v7923 = vadd.f32 %v7882, %v7922
        %v7924 = vpop.f32.mrb[0].mxu0
        %v7925 = vpop.f32.mrb[0].mxu0
        %7926 = vdwg.mxu0
        %7927 = vmatprep.subr.bf16.mxu0 %v6021
        %7928 = vmatpush1.bf16.msra.mxu0 %v6020
        %7929 = vmatprep.subr.bf16.mxu0 %v6023
        %7930 = vmatpush1.bf16.msra.mxu0 %v6022
        %7931 = vmatprep.subr.bf16.mxu0 %v6025
        %7932 = vmatpush1.bf16.msra.mxu0 %v6024
        %7933 = vmatprep.subr.bf16.mxu0 %v6027
        %7934 = vmatpush1.bf16.msra.mxu0 %v6026
        %7935 = vmatprep.subr.bf16.mxu0 %v6029
        %7936 = vmatpush1.bf16.msra.mxu0 %v6028
        %7937 = vmatprep.subr.bf16.mxu0 %v6031
        %7938 = vmatpush1.bf16.msra.mxu0 %v6030
        %7939 = vmatprep.subr.bf16.mxu0 %v6033
        %7940 = vmatpush1.bf16.msra.mxu0 %v6032
        %7941 = vmatprep.subr.bf16.mxu0 %v6035
        %7942 = vmatpush1.bf16.msra.mxu0 %v6034
        %7943 = vmatprep.subr.bf16.mxu0 %v6037
        %7944 = vmatpush1.bf16.msra.mxu0 %v6036
        %7945 = vmatprep.subr.bf16.mxu0 %v6039
        %7946 = vmatpush1.bf16.msra.mxu0 %v6038
        %7947 = vmatprep.subr.bf16.mxu0 %v6041
        %7948 = vmatpush1.bf16.msra.mxu0 %v6040
        %7949 = vmatprep.subr.bf16.mxu0 %v6043
        %7950 = vmatpush1.bf16.msra.mxu0 %v6042
        %7951 = vmatprep.subr.bf16.mxu0 %v6045
        %7952 = vmatpush1.bf16.msra.mxu0 %v6044
        %7953 = vmatprep.subr.bf16.mxu0 %v6047
        %7954 = vmatpush1.bf16.msra.mxu0 %v6046
        %7955 = vmatprep.subr.bf16.mxu0 %v6049
        %7956 = vmatpush1.bf16.msra.mxu0 %v6048
        %7957 = vmatprep.subr.bf16.mxu0 %v6051
        %7958 = vmatpush1.bf16.msra.mxu0 %v6050
        %7959 = vmatprep.mubr.bf16.mxu0 %v7467
        %7960 = vmatmul.mubr.bf16.gmra.mrb[0].mxu0 %v7466
        %v7961 = vpop.f32.mrb[0].mxu0
        %v7962 = vadd.f32 %v7921, %v7961
        %v7963 = vpop.f32.mrb[0].mxu0
        %v7964 = vadd.f32 %v7923, %v7963
        %v7965 = vpop.f32.mrb[0].mxu0
        %v7966 = vpop.f32.mrb[0].mxu0
        %7967 = vdwg.mxu0
        %7968 = vmatprep.subr.bf16.mxu0 %v6053
        %7969 = vmatpush1.bf16.msra.mxu0 %v6052
        %7970 = vmatprep.subr.bf16.mxu0 %v6055
        %7971 = vmatpush1.bf16.msra.mxu0 %v6054
        %7972 = vmatprep.subr.bf16.mxu0 %v6057
        %7973 = vmatpush1.bf16.msra.mxu0 %v6056
        %7974 = vmatprep.subr.bf16.mxu0 %v6059
        %7975 = vmatpush1.bf16.msra.mxu0 %v6058
        %7976 = vmatprep.subr.bf16.mxu0 %v6061
        %7977 = vmatpush1.bf16.msra.mxu0 %v6060
        %7978 = vmatprep.subr.bf16.mxu0 %v6063
        %7979 = vmatpush1.bf16.msra.mxu0 %v6062
        %7980 = vmatprep.subr.bf16.mxu0 %v6065
        %7981 = vmatpush1.bf16.msra.mxu0 %v6064
        %7982 = vmatprep.subr.bf16.mxu0 %v6067
        %7983 = vmatpush1.bf16.msra.mxu0 %v6066
        %7984 = vmatprep.subr.bf16.mxu0 %v6069
        %7985 = vmatpush1.bf16.msra.mxu0 %v6068
        %7986 = vmatprep.subr.bf16.mxu0 %v6071
        %7987 = vmatpush1.bf16.msra.mxu0 %v6070
        %7988 = vmatprep.subr.bf16.mxu0 %v6073
        %7989 = vmatpush1.bf16.msra.mxu0 %v6072
        %7990 = vmatprep.subr.bf16.mxu0 %v6075
        %7991 = vmatpush1.bf16.msra.mxu0 %v6074
        %7992 = vmatprep.subr.bf16.mxu0 %v6077
        %7993 = vmatpush1.bf16.msra.mxu0 %v6076
        %7994 = vmatprep.subr.bf16.mxu0 %v6079
        %7995 = vmatpush1.bf16.msra.mxu0 %v6078
        %7996 = vmatprep.subr.bf16.mxu0 %v6081
        %7997 = vmatpush1.bf16.msra.mxu0 %v6080
        %7998 = vmatprep.subr.bf16.mxu0 %v6083
        %7999 = vmatpush1.bf16.msra.mxu0 %v6082
        %8000 = vmatprep.mubr.bf16.mxu0 %v7469
        %8001 = vmatmul.mubr.bf16.gmra.mrb[0].mxu0 %v7468
        %v8002 = vpop.f32.mrb[0].mxu0
        %v8003 = vadd.f32 %v7962, %v8002
        %v8004 = vpop.f32.mrb[0].mxu0
        %v8005 = vadd.f32 %v7964, %v8004
        %v8006 = vpop.f32.mrb[0].mxu0
        %v8007 = vpop.f32.mrb[0].mxu0
        %8008 = vdwg.mxu0
        %8009 = vmatprep.subr.bf16.mxu0 %v6085
        %8010 = vmatpush1.bf16.msra.mxu0 %v6084
        %8011 = vmatprep.subr.bf16.mxu0 %v6087
        %8012 = vmatpush1.bf16.msra.mxu0 %v6086
        %8013 = vmatprep.subr.bf16.mxu0 %v6089
        %8014 = vmatpush1.bf16.msra.mxu0 %v6088
        %8015 = vmatprep.subr.bf16.mxu0 %v6091
        %8016 = vmatpush1.bf16.msra.mxu0 %v6090
        %8017 = vmatprep.subr.bf16.mxu0 %v6093
        %8018 = vmatpush1.bf16.msra.mxu0 %v6092
        %8019 = vmatprep.subr.bf16.mxu0 %v6095
        %8020 = vmatpush1.bf16.msra.mxu0 %v6094
        %8021 = vmatprep.subr.bf16.mxu0 %v6097
        %8022 = vmatpush1.bf16.msra.mxu0 %v6096
        %8023 = vmatprep.subr.bf16.mxu0 %v6099
        %8024 = vmatpush1.bf16.msra.mxu0 %v6098
        %8025 = vmatprep.subr.bf16.mxu0 %v6101
        %8026 = vmatpush1.bf16.msra.mxu0 %v6100
        %8027 = vmatprep.subr.bf16.mxu0 %v6103
        %8028 = vmatpush1.bf16.msra.mxu0 %v6102
        %8029 = vmatprep.subr.bf16.mxu0 %v6105
        %8030 = vmatpush1.bf16.msra.mxu0 %v6104
        %8031 = vmatprep.subr.bf16.mxu0 %v6107
        %8032 = vmatpush1.bf16.msra.mxu0 %v6106
        %8033 = vmatprep.subr.bf16.mxu0 %v6109
        %8034 = vmatpush1.bf16.msra.mxu0 %v6108
        %8035 = vmatprep.subr.bf16.mxu0 %v6111
        %8036 = vmatpush1.bf16.msra.mxu0 %v6110
        %8037 = vmatprep.subr.bf16.mxu0 %v6113
        %8038 = vmatpush1.bf16.msra.mxu0 %v6112
        %8039 = vmatprep.subr.bf16.mxu0 %v6115
        %8040 = vmatpush1.bf16.msra.mxu0 %v6114
        %8041 = vmatprep.mubr.bf16.mxu0 %v7471
        %8042 = vmatmul.mubr.bf16.gmra.mrb[0].mxu0 %v7470
        %v8043 = vpop.f32.mrb[0].mxu0
        %v8044 = vadd.f32 %v8003, %v8043
        %v8045 = vpop.f32.mrb[0].mxu0
        %v8046 = vadd.f32 %v8005, %v8045
        %v8047 = vpop.f32.mrb[0].mxu0
        %v8048 = vpop.f32.mrb[0].mxu0
        %8049 = vdwg.mxu0
        %8050 = vmatprep.subr.bf16.mxu0 %v6117
        %8051 = vmatpush1.bf16.msra.mxu0 %v6116
        %8052 = vmatprep.subr.bf16.mxu0 %v6119
        %8053 = vmatpush1.bf16.msra.mxu0 %v6118
        %8054 = vmatprep.subr.bf16.mxu0 %v6121
        %8055 = vmatpush1.bf16.msra.mxu0 %v6120
        %8056 = vmatprep.subr.bf16.mxu0 %v6123
        %8057 = vmatpush1.bf16.msra.mxu0 %v6122
        %8058 = vmatprep.subr.bf16.mxu0 %v6125
        %8059 = vmatpush1.bf16.msra.mxu0 %v6124
        %8060 = vmatprep.subr.bf16.mxu0 %v6127
        %8061 = vmatpush1.bf16.msra.mxu0 %v6126
        %8062 = vmatprep.subr.bf16.mxu0 %v6129
        %8063 = vmatpush1.bf16.msra.mxu0 %v6128
        %8064 = vmatprep.subr.bf16.mxu0 %v6131
        %8065 = vmatpush1.bf16.msra.mxu0 %v6130
        %8066 = vmatprep.subr.bf16.mxu0 %v6133
        %8067 = vmatpush1.bf16.msra.mxu0 %v6132
        %8068 = vmatprep.subr.bf16.mxu0 %v6135
        %8069 = vmatpush1.bf16.msra.mxu0 %v6134
        %8070 = vmatprep.subr.bf16.mxu0 %v6137
        %8071 = vmatpush1.bf16.msra.mxu0 %v6136
        %8072 = vmatprep.subr.bf16.mxu0 %v6139
        %8073 = vmatpush1.bf16.msra.mxu0 %v6138
        %8074 = vmatprep.subr.bf16.mxu0 %v6141
        %8075 = vmatpush1.bf16.msra.mxu0 %v6140
        %8076 = vmatprep.subr.bf16.mxu0 %v6143
        %8077 = vmatpush1.bf16.msra.mxu0 %v6142
        %8078 = vmatprep.subr.bf16.mxu0 %v6145
        %8079 = vmatpush1.bf16.msra.mxu0 %v6144
        %8080 = vmatprep.subr.bf16.mxu0 %v6147
        %8081 = vmatpush1.bf16.msra.mxu0 %v6146
        %8082 = vmatprep.mubr.bf16.mxu0 %v7473
        %8083 = vmatmul.mubr.bf16.gmra.mrb[0].mxu0 %v7472
        %v8084 = vpop.f32.mrb[0].mxu0
        %v8085 = vadd.f32 %v8044, %v8084
        %v8086 = vpop.f32.mrb[0].mxu0
        %v8087 = vadd.f32 %v8046, %v8086
        %v8088 = vpop.f32.mrb[0].mxu0
        %v8089 = vpop.f32.mrb[0].mxu0
        %8090 = vdwg.mxu0
        %8091 = vmatprep.subr.bf16.mxu0 %v6149
        %8092 = vmatpush1.bf16.msra.mxu0 %v6148
        %8093 = vmatprep.subr.bf16.mxu0 %v6151
        %8094 = vmatpush1.bf16.msra.mxu0 %v6150
        %8095 = vmatprep.subr.bf16.mxu0 %v6153
        %8096 = vmatpush1.bf16.msra.mxu0 %v6152
        %8097 = vmatprep.subr.bf16.mxu0 %v6155
        %8098 = vmatpush1.bf16.msra.mxu0 %v6154
        %8099 = vmatprep.subr.bf16.mxu0 %v6157
        %8100 = vmatpush1.bf16.msra.mxu0 %v6156
        %8101 = vmatprep.subr.bf16.mxu0 %v6159
        %8102 = vmatpush1.bf16.msra.mxu0 %v6158
        %8103 = vmatprep.subr.bf16.mxu0 %v6161
        %8104 = vmatpush1.bf16.msra.mxu0 %v6160
        %8105 = vmatprep.subr.bf16.mxu0 %v6163
        %8106 = vmatpush1.bf16.msra.mxu0 %v6162
        %8107 = vmatprep.subr.bf16.mxu0 %v6165
        %8108 = vmatpush1.bf16.msra.mxu0 %v6164
        %8109 = vmatprep.subr.bf16.mxu0 %v6167
        %8110 = vmatpush1.bf16.msra.mxu0 %v6166
        %8111 = vmatprep.subr.bf16.mxu0 %v6169
        %8112 = vmatpush1.bf16.msra.mxu0 %v6168
        %8113 = vmatprep.subr.bf16.mxu0 %v6171
        %8114 = vmatpush1.bf16.msra.mxu0 %v6170
        %8115 = vmatprep.subr.bf16.mxu0 %v6173
        %8116 = vmatpush1.bf16.msra.mxu0 %v6172
        %8117 = vmatprep.subr.bf16.mxu0 %v6175
        %8118 = vmatpush1.bf16.msra.mxu0 %v6174
        %8119 = vmatprep.subr.bf16.mxu0 %v6177
        %8120 = vmatpush1.bf16.msra.mxu0 %v6176
        %8121 = vmatprep.subr.bf16.mxu0 %v6179
        %8122 = vmatpush1.bf16.msra.mxu0 %v6178
        %8123 = vmatprep.mubr.bf16.mxu0 %v7475
        %8124 = vmatmul.mubr.bf16.gmra.mrb[0].mxu0 %v7474
        %v8125 = vpop.f32.mrb[0].mxu0
        %v8126 = vadd.f32 %v8085, %v8125
        %v8127 = vpop.f32.mrb[0].mxu0
        %v8128 = vadd.f32 %v8087, %v8127
        %v8129 = vpop.f32.mrb[0].mxu0
        %v8130 = vpop.f32.mrb[0].mxu0
        %8131 = vdwg.mxu0
        %v8132 = vld [vmem:[%s460] sm:$0x3]
        %v8133 = vld [vmem:[%s469] sm:$0x3]
        %v8134 = vsel %vm1214, %v7342, 0.0
        %v8135 = vsel %vm1214, %v8126, 0.0
        %v8136 = vadd.f32 %v8134, %v8135
        %v8137 = vrot.slane %v8136, 4
        %v8138 = vadd.f32 %v8136, %v8137
        %v8139 = vrot.slane %v8138, 2
        %v8140 = vadd.f32 %v8138, %v8139
        %v8141 = vrot.slane %v8140, 1
        %v8142 = vadd.f32 %v8140, %v8141
        %v8143 = vsel %vm1214, %v7344, 0.0
        %v8144 = vsel %vm1214, %v8128, 0.0
        %v8145 = vadd.f32 %v8143, %v8144
        %v8146 = vrot.slane %v8145, 4
        %v8147 = vadd.f32 %v8145, %v8146
        %v8148 = vrot.slane %v8147, 2
        %v8149 = vadd.f32 %v8147, %v8148
        %v8150 = vrot.slane %v8149, 1
        %v8151 = vadd.f32 %v8149, %v8150
        %v8152 = vrcp.pop 10.0
        %v8153 = vmul.f32 %v8142, %v8152
        %v8154 = vmul.f32 %v8151, %v8152
        %v8155 = vsub.f32 %v7342, %v8153
        %v8156 = vsub.f32 %v7344, %v8154
        %v8157 = vsub.f32 %v8126, %v8153
        %v8158 = vsub.f32 %v8128, %v8154
        %v8159 = vmul.f32 %v8155, %v8155
        %v8160 = vmul.f32 %v8156, %v8156
        %v8161 = vmul.f32 %v8157, %v8157
        %v8162 = vmul.f32 %v8158, %v8158
        %v8163 = vsel %vm1214, %v8159, 0.0
        %v8164 = vsel %vm1214, %v8161, 0.0
        %v8165 = vadd.f32 %v8163, %v8164
        %v8166 = vrot.slane %v8165, 4
        %v8167 = vadd.f32 %v8165, %v8166
        %v8168 = vrot.slane %v8167, 2
        %v8169 = vadd.f32 %v8167, %v8168
        %v8170 = vrot.slane %v8169, 1
        %v8171 = vadd.f32 %v8169, %v8170
        %v8172 = vsel %vm1214, %v8160, 0.0
        %v8173 = vsel %vm1214, %v8162, 0.0
        %v8174 = vadd.f32 %v8172, %v8173
        %v8175 = vrot.slane %v8174, 4
        %v8176 = vadd.f32 %v8174, %v8175
        %v8177 = vrot.slane %v8176, 2
        %v8178 = vadd.f32 %v8176, %v8177
        %v8179 = vrot.slane %v8178, 1
        %v8180 = vadd.f32 %v8178, %v8179
        %v8181 = vmul.f32 %v8171, %v8152
        %v8182 = vmul.f32 %v8180, %v8152
        %v8183 = vadd.f32 %v8181, 1e-05
        %v8184 = vadd.f32 %v8182, 1e-05
        %v8185 = vrsqrt.pop %v8183
        %v8186 = vrsqrt.pop %v8184
        %v8187 = vmul.f32 %v8155, %v8185
        %v8188 = vmul.f32 %v8156, %v8186
        %v8189 = vmul.f32 %v8157, %v8185
        %v8190 = vmul.f32 %v8158, %v8186
        %v8192 = vlaneseq
        %v8193 = vshrl.u32 %v8192, 7
        %v8194 = vsub.s32 0, %v8193
        %v8195 = vrot.slane %v8132, %v8194
        %v8196 = vlaneseq
        %v8197 = vshrl.u32 %v8196, 7
        %v8198 = vsub.s32 1, %v8197
        %v8199 = vrot.slane %v8132, %v8198
        %v8202 = vmul.f32 %v8187, %v8195
        %v8203 = vmul.f32 %v8188, %v8199
        %v8204 = vmul.f32 %v8189, %v8195
        %v8205 = vmul.f32 %v8190, %v8199
        %v8207 = vlaneseq
        %v8208 = vshrl.u32 %v8207, 7
        %v8209 = vsub.s32 0, %v8208
        %v8210 = vrot.slane %v8133, %v8209
        %v8211 = vlaneseq
        %v8212 = vshrl.u32 %v8211, 7
        %v8213 = vsub.s32 1, %v8212
        %v8214 = vrot.slane %v8133, %v8213
        %v8217 = vadd.f32 %v8202, %v8210
        %v8218 = vadd.f32 %v8203, %v8214
        %v8219 = vadd.f32 %v8204, %v8210
        %v8220 = vadd.f32 %v8205, %v8214
        %v8221 = vmax.f32 %v8217, 0.0
        %v8222 = vmax.f32 %v8218, 0.0
        %v8223 = vmax.f32 %v8219, 0.0
        %v8224 = vmax.f32 %v8220, 0.0
        %v8229 = vrot.slane %v8221, 1
        %v8230 = vrot.slane %v8222, 1
        %v8231 = vrot.slane %v8223, 1
        %v8232 = vrot.slane %v8224, 1
        %v8237 = vmax.f32 %v8221, %v8229
        %v8238 = vmax.f32 %v8222, %v8230
        %v8239 = vmax.f32 %v8223, %v8231
        %v8240 = vmax.f32 %v8224, %v8232
        %v8245 = vcombine.low %v8237, %v8238
        %v8246 = vcombine.low %v8239, %v8240
        %8249 = vst [vmem:[%s515] sm:$0xff] %v8245
        %8250 = vst [vmem:[%s515 + $0x8] sm:$0xff] %v8246
        %s8251 = sand.u32 %s266, 1
        %s8252 = scalar_lea.sflag [#allocation4], %s8251
        %s8253 = sand.u32 %s266, 1
        %s8254 = smul.addr %s8253, 16
        %s8255 = scalar_lea.vmem [#allocation16], %s8254
        // Predicated region
        $region93: #{convnet_forward.1} parent=59 // pred_check
          %p8256 = pneg %p276
        $region94: #{convnet_forward.1} parent=59 // pred_check_branch
          %8258 = sbr.rel (%p8256) target = $region96
        $region95: #{convnet_forward.1} parent=59 // pred_region
          %s8259 = smul.u32 2, %s33
          %s8261 = ssub.s32 256, 256
          %8262 = vsyncadd %s8252, %s8261
          %s8263 = smul.addr %s8259, 64
          %s8264 = scalar_lea.hbm %s10, %s8263
          %s8265 = sshll.u32 %s8255, 4
          %s8266 = int_to_ptr.vmem [resolvable:$true] %s8265
          %8271 = dma.vmem_to_hbm [thread:$0]  %s8266, 256, %s8264, %s8252, 128, 512, 8
        $region96: #{convnet_forward.1} parent=59 // pred_fallthru
          _
      $region60: #{convnet_forward.1} parent=5 // pred_fallthru
        _
      %p8272 = scmp.le.s32.totalorder 2, %s28
      // Predicated region
      $region97: #{convnet_forward.1} parent=5 // pred_check
        %p8273 = pneg %p8272
      $region98: #{convnet_forward.1} parent=5 // pred_check_branch
        %8275 = sbr.rel (%p8273) target = $region100
      $region99: #{convnet_forward.1} parent=5 // pred_region
        %s8276 = ssub.s32 %s28, 2
        // Predicated region
        $region101: #{convnet_forward.1} parent=99 // pred_check
          %p8277 = pneg %p282
        $region102: #{convnet_forward.1} parent=99 // pred_check_branch
          %8279 = sbr.rel (%p8277) target = $region104
        $region103: #{convnet_forward.1} parent=99 // pred_region
          %s8280 = sand.u32 %s267, 1
          %s8281 = scalar_lea.sflag [#allocation4], %s8280
          %s8282 = sand.u32 %s267, 1
          %s8283 = smul.addr %s8282, 16
          %s8284 = scalar_lea.vmem [#allocation16], %s8283
          %8285 = dma.done %s8281, 256
        $region104: #{convnet_forward.1} parent=99 // pred_fallthru
          _
      $region100: #{convnet_forward.1} parent=5 // pred_fallthru
        _
    $region6: #{convnet_forward.1} parent=1 // loop_footer
      %s32 = sadd.s32 1, %s28
    $region7: #{convnet_forward.1} parent=1 // loop_footer_branch
      %27 = sbr.rel target = $region3
    $region8: #{convnet_forward.1} parent=1 // loop_exit
      _
    %8286 = vsyncpa [#allocation3], 1
    %s8287 = scalar_lea.sflag [#allocation3], 1
    %8288 = vsyncpa %s8287, 1
    %8289 = vsyncpa [#allocation6], 1
    %8290 = vsyncpa [#allocation9], 1
    %8291 = vsyncpa [#allocation12], 1
    %s8292 = scalar_lea.sflag [#allocation12], 1
    %8293 = vsyncpa %s8292, 1
    %8294 = vsyncpa [#allocation15], 1
    %s8295 = scalar_lea.sflag [#allocation15], 1
    %8296 = vsyncpa %s8295, 1
    %8297 = vsyncpa [#allocation4], 1
    %s8298 = scalar_lea.sflag [#allocation4], 1
    %8299 = vsyncpa %s8298, 1

</llo_original>
